<compile_context>
chip_gen: v6e
topology: v6e:2x2x1
jax: 0.10.0
libtpu: 0.0.40
codegen_flags: <defaults>
</compile_context>

<pallas_src>
import functools

import jax
import jax.numpy as jnp
from jax.experimental import pallas as pl
from jax.experimental.pallas import tpu as pltpu


# ----------------------------- Pallas kernel --------------------------------
def _attention_kernel(x_ref, emb_ref, wqkv_ref, bqkv_ref, wproj_ref, bproj_ref,
                      o_ref, k_scr, v_scr, m_scr, l_scr, acc_scr, *,
                      num_heads, block_b, tokens, channels, kv_tile):
    """Fused: (+ pos/time embed) -> wide qkv -> flash attention -> wide proj.

    Block shapes (block_b batch elements per grid step):
      x_ref    : (block_b, N, C) f32 tokens
      emb_ref  : (N, C)          f32 combined spatial+time embedding per token
      wqkv_ref : (C, 3C)         bf16, q columns pre-scaled by head_dim**-0.5
      bqkv_ref : (1, 3C)         f32, q part pre-scaled
      wproj_ref: (C, C)          bf16 (in-major)
      bproj_ref: (1, C)          f32
      o_ref    : (block_b, N, C) f32, lane-dense (C % 128 == 0)
      scratch  : K/V tiles (bf16), running max/denom, output accumulator (flash state)
    """
    H = num_heads
    C = channels
    hd = C // H
    M = block_b * tokens                       # batch folded into the matmul M dimension
    G = block_b * H                            # per-(head, batch) attention groups

    # --- PositionalEmbedding.forward: x = x + pos_embed + time_embed  (f32, module semantics)
    x = x_ref[...].astype(jnp.float32) + emb_ref[...][None]
    xb = x.reshape(M, C).astype(jnp.bfloat16)

    # --- qkv: one wide (M, C) @ (C, 3C) matmul, f32 accumulation.  Attention scale is already
    #     folded into the q columns of the weights/bias (host-side, one time).
    qkv = jnp.dot(xb, wqkv_ref[...], preferred_element_type=jnp.float32) + bqkv_ref[...]

    def split_heads(base):
        # (M, 3C) lanes -> (G, N, hd) per-(head, batch) tiles, g = h * block_b + b.
        # Static lane slices (128-aligned when hd % 128 == 0) + leading-dim stack; the final
        # reshape only splits the sublane dim by N (multiple of 8) and merges leading dims.
        per_head = [qkv[:, base + h * hd: base + (h + 1) * hd] for h in range(H)]
        t = jnp.stack(per_head, axis=0)                       # (H, M, hd)
        return t.reshape(G, tokens, hd)

    q = split_heads(0).astype(jnp.bfloat16)                   # (G, N, hd)
    k_scr[...] = split_heads(C).astype(jnp.bfloat16)
    v_scr[...] = split_heads(2 * C).astype(jnp.bfloat16)

    # --- KV-tiled online softmax (flash): live logits bounded to (G, N, kv_tile).
    #     Softmax math in f32 (v5e-safe); matmul operands bf16 with f32 accumulation.
    m_scr[...] = jnp.full(m_scr.shape, -jnp.inf, jnp.float32)
    l_scr[...] = jnp.zeros(l_scr.shape, jnp.float32)
    acc_scr[...] = jnp.zeros(acc_scr.shape, jnp.float32)

    num_kv = tokens // kv_tile

    @pl.loop(0, num_kv)
    def _(step):
        off = pl.multiple_of(step * kv_tile, kv_tile)
        k_t = k_scr[:, pl.ds(off, kv_tile), :]                 # (G, kv_tile, hd) bf16
        v_t = v_scr[:, pl.ds(off, kv_tile), :]
        s = jnp.einsum("gnd,gmd->gnm", q, k_t,
                       preferred_element_type=jnp.float32)     # (G, N, kv_tile) f32
        m_prev = m_scr[...]
        m_new = jnp.maximum(m_prev, jnp.max(s, axis=-1, keepdims=True))
        alpha = jnp.exp(m_prev - m_new)
        p = jnp.exp(s - m_new)
        l_scr[...] = alpha * l_scr[...] + jnp.sum(p, axis=-1, keepdims=True)
        acc_scr[...] = alpha * acc_scr[...] + jnp.einsum(
            "gnm,gmd->gnd", p.astype(jnp.bfloat16), v_t,
            preferred_element_type=jnp.float32)
        m_scr[...] = m_new

    # attn_drop(p=0) == identity.  approx reciprocal (EUP): documented precision choice,
    # covered by the test tolerance together with the bf16 matmul operands.
    o = acc_scr[...] * pl.reciprocal(l_scr[...], approx=True)  # (G, N, hd) f32

    # --- merge heads back into lanes as a value-level concat (no scratch round-trip, no
    #     masked stores) and run one wide projection matmul with batch folded into M.
    o4 = o.reshape(H, block_b, tokens, hd)
    o_merged = jnp.concatenate([o4[h] for h in range(H)], axis=-1)   # (block_b, N, C)
    xo = o_merged.reshape(M, C).astype(jnp.bfloat16)
    y = jnp.dot(xo, wproj_ref[...], preferred_element_type=jnp.float32) + bproj_ref[...]
    # proj_drop(p=0) == identity.

    # C % 128 == 0 -> full-lane unmasked stores.
    o_ref[...] = y.reshape(block_b, tokens, C).astype(o_ref.dtype)


# ------------------------------- wrapper -------------------------------------
def _device_info():
    kind = ""
    try:
        kind = jax.devices()[0].device_kind.lower()
    except Exception:
        pass
    is_v7 = ("v7" in kind) or ("7x" in kind)
    two_tc = is_v7 or ("v4" in kind) or ("v5p" in kind)
    return is_v7, two_tc


def _choose_block_b(batch, tokens):
    """Generation-aware: single-TC chips fold the whole batch into M (1 grid step);
    2-TC chips keep >= 2 grid steps so both TensorCores get work.  Prefer M % 128 == 0."""
    _, two_tc = _device_info()
    target_steps = 2 if two_tc else 1
    cands = [d for d in range(1, batch + 1)
             if batch % d == 0 and batch // d >= target_steps]
    if not cands:
        return batch
    aligned = [d for d in cands if (d * tokens) % 128 == 0]
    return max(aligned) if aligned else max(cands)


def _choose_kv_tile(tokens, max_tile=512):
    """Largest multiple-of-16 divisor of tokens up to max_tile (bf16 K/V scratch slices stay
    packed-sublane aligned)."""
    best = None
    for cand in range(16, min(tokens, max_tile) + 1, 16):
        if tokens % cand == 0:
            best = cand
    return best if best is not None else tokens


def prepare_attention_params(params, *, num_heads):
    """One-time host-side parameter prep (cache the result across calls).

    Folds the attention scale into the q slab of the qkv weights/bias and produces the bf16
    MXU operands plus the combined per-token (N, C) embedding table."""
    pos = params["pos_embed"][0]                       # (d, h, w, C)
    tim = params["time_embed"][0, :, 0, 0, 0, :]       # (t, C)
    d, h, w, C = pos.shape
    t = tim.shape[0]
    emb = (pos[:, :, :, None, :] + tim[None, None, None, :, :]).reshape(d * h * w * t, C)
    emb = emb.astype(jnp.float32)

    hd = C // num_heads
    scale = hd ** -0.5
    col_scale = jnp.concatenate(
        [jnp.full((C,), scale, jnp.float32), jnp.ones((2 * C,), jnp.float32)])
    wqkv = (params["wqkv"].T * col_scale[None, :]).astype(jnp.bfloat16)      # (C, 3C)
    bqkv = (params["bqkv"] * col_scale).reshape(1, 3 * C).astype(jnp.float32)
    wproj = params["wproj"].T.astype(jnp.bfloat16)                           # (C_in, C_out)
    bproj = params["bproj"].reshape(1, C).astype(jnp.float32)
    return {"emb": emb, "wqkv": wqkv, "bqkv": bqkv, "wproj": wproj, "bproj": bproj}


def attention_forward(x6, prepped, *, num_heads, block_b=None, kv_tile=None):
    """x6: (B, d, h, w, t, C) float32 -> (B, N, C) float32."""
    B, d, h, w, t, C = x6.shape
    N = d * h * w * t
    H = num_heads
    assert C % H == 0
    hd = C // H
    # Guaranteed lane-dense output path (no masked-store fallback).
    assert C % 128 == 0, "lane-dense output requires C % 128 == 0"
    assert N % 8 == 0, "token count must be sublane-aligned"

    if block_b is None:
        block_b = _choose_block_b(B, N)
    assert B % block_b == 0
    num_blocks = B // block_b
    G = block_b * H

    if kv_tile is None:
        kv_tile = _choose_kv_tile(N)
    assert N % kv_tile == 0 and kv_tile % 16 == 0

    is_v7, _ = _device_info()
    vmem_limit = (48 if is_v7 else 64) * 1024 * 1024

    x = x6.reshape(B, N, C)                            # flatten tokens (glue reshape)

    kernel = functools.partial(_attention_kernel, num_heads=H, block_b=block_b,
                               tokens=N, channels=C, kv_tile=kv_tile)

    # Constant-index inputs (emb / weights / biases) are fetched once (their block index never
    # changes across the grid); on v7x one could additionally request pipeline_mode=
    # pl.Buffered(1) on them to drop the second pipeline buffer at realistic C.
    out = pl.pallas_call(
        kernel,
        out_shape=jax.ShapeDtypeStruct((B, N, C), x.dtype),
        grid=(num_blocks,),
        in_specs=[
            pl.BlockSpec((block_b, N, C), lambda i: (i, 0, 0)),
            pl.BlockSpec((N, C), lambda i: (0, 0)),
            pl.BlockSpec((C, 3 * C), lambda i: (0, 0)),
            pl.BlockSpec((1, 3 * C), lambda i: (0, 0)),
            pl.BlockSpec((C, C), lambda i: (0, 0)),
            pl.BlockSpec((1, C), lambda i: (0, 0)),
        ],
        out_specs=pl.BlockSpec((block_b, N, C), lambda i: (i, 0, 0)),
        scratch_shapes=[
            pltpu.VMEM((G, N, hd), jnp.bfloat16),      # K tiles
            pltpu.VMEM((G, N, hd), jnp.bfloat16),      # V tiles
            pltpu.VMEM((G, N, 1), jnp.float32),        # running max
            pltpu.VMEM((G, N, 1), jnp.float32),        # running denominator
            pltpu.VMEM((G, N, hd), jnp.float32),       # output accumulator
        ],
        compiler_params=pltpu.CompilerParams(
            dimension_semantics=("parallel",),
            vmem_limit_bytes=vmem_limit,
        ),
    )(x, prepped["emb"], prepped["wqkv"], prepped["bqkv"],
      prepped["wproj"], prepped["bproj"])
    return out


# --------------------------- reference (plain JAX, f32) ---------------------------
def attention_reference(x6, params, *, num_heads):
    B, d, h, w, t, C = x6.shape
    N = d * h * w * t
    head_dim = C // num_heads
    scale = head_dim ** -0.5

    pos = params["pos_embed"][0]
    tim = params["time_embed"][0, :, 0, 0, 0, :]
    x = x6 + pos[None, :, :, :, None, :] + tim[None, None, None, None, :, :]
    x = x.reshape(B, N, C)

    qkv = x @ params["wqkv"].T + params["bqkv"]                     # (B, N, 3C)
    qkv = qkv.reshape(B, N, 3, num_heads, head_dim).transpose(2, 0, 3, 1, 4)
    q, k, v = qkv[0], qkv[1], qkv[2]                                # (B, H, N, hd)
    attn = jax.nn.softmax((q * scale) @ jnp.swapaxes(k, -2, -1), axis=-1)
    o = (attn @ v).transpose(0, 2, 1, 3).reshape(B, N, C)
    return o @ params["wproj"].T + params["bproj"]


# ---------------------------------- main --------------------------------------
def _trunc_normal(key, shape, std=0.02):
    x = jax.random.normal(key, shape, dtype=jnp.float32) * std
    return jnp.clip(x, -2.0 * std, 2.0 * std)


if __name__ == "__main__":
    # Module config: dim=256, 2 heads -> head_dim=128, so every head slice / concat is
    # lane-tile aligned; patch_dim=(2,2,2,4) -> N=32 tokens; B=8.
    dim = 256
    group_size = (2, 2, 2, 4)        # (d, h, w, t)
    num_heads = 2
    B = 8
    d, h, w, t = group_size

    key = jax.random.PRNGKey(0)
    keys = jax.random.split(key, 7)

    params = {
        # PositionalEmbedding parameters (trunc_normal std=0.02)
        "pos_embed": _trunc_normal(keys[0], (1, d, h, w, dim)),
        "time_embed": _trunc_normal(keys[1], (1, t, 1, 1, 1, dim)),
        # qkv Linear(dim, 3*dim, bias=True)  -- torch convention (out, in)
        "wqkv": jax.random.normal(keys[2], (3 * dim, dim), dtype=jnp.float32) * 0.05,
        "bqkv": jax.random.normal(keys[3], (3 * dim,), dtype=jnp.float32) * 0.05,
        # proj Linear(dim, dim)
        "wproj": jax.random.normal(keys[4], (dim, dim), dtype=jnp.float32) * 0.05,
        "bproj": jax.random.normal(keys[5], (dim,), dtype=jnp.float32) * 0.05,
    }

    # Input tokens: (B, d, h, w, t, C) channels-last
    x6 = jax.random.normal(keys[6], (B, d, h, w, t, dim), dtype=jnp.float32)

    prepped = prepare_attention_params(params, num_heads=num_heads)
    # kv_tile=16 -> 2 KV tiles, so the online-softmax accumulation is exercised.
    out = attention_forward(x6, prepped, num_heads=num_heads, kv_tile=16)
    out = jax.block_until_ready(out)

    ref = attention_reference(x6, params, num_heads=num_heads)
    N = d * h * w * t
    assert out.shape == (B, N, dim)
    # bf16 MXU operands + approx reciprocal vs. f32 reference -> loosened tolerance
    max_err = float(jnp.max(jnp.abs(out - ref)))
    assert jnp.allclose(out, ref, atol=3e-2, rtol=3e-2), max_err

    print("KERNEL_OK")
</pallas_src>

<mosaic_0001>
module attributes {stable_mosaic.version = 11 : i64} {
  func.func @_attention_kernel(%arg0: i32, %arg1: memref<8x32x256xf32, #tpu.memory_space<vmem>>, %arg2: memref<32x256xf32, #tpu.memory_space<vmem>>, %arg3: memref<256x768xbf16, #tpu.memory_space<vmem>>, %arg4: memref<1x768xf32, #tpu.memory_space<vmem>>, %arg5: memref<256x256xbf16, #tpu.memory_space<vmem>>, %arg6: memref<1x256xf32, #tpu.memory_space<vmem>>, %arg7: memref<8x32x256xf32, #tpu.memory_space<vmem>>, %arg8: memref<16x32x128xbf16, #tpu.memory_space<vmem>>, %arg9: memref<16x32x128xbf16, #tpu.memory_space<vmem>>, %arg10: memref<16x32x1xf32, #tpu.memory_space<vmem>>, %arg11: memref<16x32x1xf32, #tpu.memory_space<vmem>>, %arg12: memref<16x32x128xf32, #tpu.memory_space<vmem>>) attributes {dimension_semantics = [#tpu.dimension_semantics<parallel>], iteration_bounds = array<i64: 1>, scalar_prefetch = 0 : i64, scratch_operands = 5 : i64, tpu.core_type = #tpu.core_type<tc>, window_params = [{transform_indices = @transform_0, window_bounds = array<i64: 8, 32, 256>}, {pipeline_mode = #tpu.pipeline_mode<synchronous>, transform_indices = @transform_1, window_bounds = array<i64: 32, 256>}, {pipeline_mode = #tpu.pipeline_mode<synchronous>, transform_indices = @transform_2, window_bounds = array<i64: 256, 768>}, {pipeline_mode = #tpu.pipeline_mode<synchronous>, transform_indices = @transform_3, window_bounds = array<i64: 1, 768>}, {pipeline_mode = #tpu.pipeline_mode<synchronous>, transform_indices = @transform_4, window_bounds = array<i64: 256, 256>}, {pipeline_mode = #tpu.pipeline_mode<synchronous>, transform_indices = @transform_5, window_bounds = array<i64: 1, 256>}, {transform_indices = @transform_6, window_bounds = array<i64: 8, 32, 256>}]} {
    %c0 = arith.constant 0 : index
    %c0_0 = arith.constant 0 : index
    %c0_1 = arith.constant 0 : index
    %0 = vector.load %arg1[%c0, %c0_0, %c0_1] : memref<8x32x256xf32, #tpu.memory_space<vmem>>, vector<8x32x256xf32>
    %c0_2 = arith.constant 0 : index
    %c0_3 = arith.constant 0 : index
    %1 = vector.load %arg2[%c0_2, %c0_3] : memref<32x256xf32, #tpu.memory_space<vmem>>, vector<32x256xf32>
    %2 = vector.shape_cast %1 : vector<32x256xf32> to vector<1x32x256xf32>
    %3 = vector.broadcast %2 : vector<1x32x256xf32> to vector<8x32x256xf32>
    %4 = arith.addf %0, %3 : vector<8x32x256xf32>
    %5 = vector.shape_cast %4 : vector<8x32x256xf32> to vector<256x256xf32>
    %6 = arith.truncf %5 : vector<256x256xf32> to vector<256x256xbf16>
    %c0_4 = arith.constant 0 : index
    %c0_5 = arith.constant 0 : index
    %7 = vector.load %arg3[%c0_4, %c0_5] : memref<256x768xbf16, #tpu.memory_space<vmem>>, vector<256x768xbf16>
    %cst = arith.constant dense<0.000000e+00> : vector<256x768xf32>
    %8 = tpu.matmul %6, %7, %cst {dimension_numbers = #tpu.dot_dimension_numbers<[1], [0], [0], [1], [0, 0, 1, 1], [], []>} : vector<256x256xbf16>, vector<256x768xbf16>, vector<256x768xf32> -> vector<256x768xf32>
    %c0_6 = arith.constant 0 : index
    %c0_7 = arith.constant 0 : index
    %9 = vector.load %arg4[%c0_6, %c0_7] : memref<1x768xf32, #tpu.memory_space<vmem>>, vector<1x768xf32>
    %10 = vector.broadcast %9 : vector<1x768xf32> to vector<256x768xf32>
    %11 = arith.addf %8, %10 : vector<256x768xf32>
    %12 = vector.extract_strided_slice %11 {offsets = [0, 0], sizes = [256, 128], strides = [1, 1]} : vector<256x768xf32> to vector<256x128xf32>
    %13 = vector.extract_strided_slice %11 {offsets = [0, 128], sizes = [256, 128], strides = [1, 1]} : vector<256x768xf32> to vector<256x128xf32>
    %14 = vector.shape_cast %12 : vector<256x128xf32> to vector<1x256x128xf32>
    %15 = vector.shape_cast %13 : vector<256x128xf32> to vector<1x256x128xf32>
    %16 = tpu.concatenate %14, %15 in 0 : vector<1x256x128xf32>, vector<1x256x128xf32> -> vector<2x256x128xf32>
    %17 = vector.shape_cast %16 : vector<2x256x128xf32> to vector<16x32x128xf32>
    %18 = arith.truncf %17 : vector<16x32x128xf32> to vector<16x32x128xbf16>
    %19 = vector.extract_strided_slice %11 {offsets = [0, 256], sizes = [256, 128], strides = [1, 1]} : vector<256x768xf32> to vector<256x128xf32>
    %20 = vector.extract_strided_slice %11 {offsets = [0, 384], sizes = [256, 128], strides = [1, 1]} : vector<256x768xf32> to vector<256x128xf32>
    %21 = vector.shape_cast %19 : vector<256x128xf32> to vector<1x256x128xf32>
    %22 = vector.shape_cast %20 : vector<256x128xf32> to vector<1x256x128xf32>
    %23 = tpu.concatenate %21, %22 in 0 : vector<1x256x128xf32>, vector<1x256x128xf32> -> vector<2x256x128xf32>
    %24 = vector.shape_cast %23 : vector<2x256x128xf32> to vector<16x32x128xf32>
    %25 = arith.truncf %24 : vector<16x32x128xf32> to vector<16x32x128xbf16>
    %c0_8 = arith.constant 0 : index
    %c0_9 = arith.constant 0 : index
    %c0_10 = arith.constant 0 : index
    %26 = vector.load %arg8[%c0_8, %c0_9, %c0_10] : memref<16x32x128xbf16, #tpu.memory_space<vmem>>, vector<16x32x128xbf16>
    tpu.vector_store %arg8[%c0_8, %c0_9, %c0_10], %25 {strides = array<i32>} : memref<16x32x128xbf16, #tpu.memory_space<vmem>>, vector<16x32x128xbf16>,
    %27 = vector.extract_strided_slice %11 {offsets = [0, 512], sizes = [256, 128], strides = [1, 1]} : vector<256x768xf32> to vector<256x128xf32>
    %28 = vector.extract_strided_slice %11 {offsets = [0, 640], sizes = [256, 128], strides = [1, 1]} : vector<256x768xf32> to vector<256x128xf32>
    %29 = vector.shape_cast %27 : vector<256x128xf32> to vector<1x256x128xf32>
    %30 = vector.shape_cast %28 : vector<256x128xf32> to vector<1x256x128xf32>
    %31 = tpu.concatenate %29, %30 in 0 : vector<1x256x128xf32>, vector<1x256x128xf32> -> vector<2x256x128xf32>
    %32 = vector.shape_cast %31 : vector<2x256x128xf32> to vector<16x32x128xf32>
    %33 = arith.truncf %32 : vector<16x32x128xf32> to vector<16x32x128xbf16>
    %c0_11 = arith.constant 0 : index
    %c0_12 = arith.constant 0 : index
    %c0_13 = arith.constant 0 : index
    %34 = vector.load %arg9[%c0_11, %c0_12, %c0_13] : memref<16x32x128xbf16, #tpu.memory_space<vmem>>, vector<16x32x128xbf16>
    tpu.vector_store %arg9[%c0_11, %c0_12, %c0_13], %33 {strides = array<i32>} : memref<16x32x128xbf16, #tpu.memory_space<vmem>>, vector<16x32x128xbf16>,
    %cst_14 = arith.constant 0xFF800000 : f32
    %35 = vector.broadcast %cst_14 : f32 to vector<16x32x1xf32>
    %c0_15 = arith.constant 0 : index
    %c0_16 = arith.constant 0 : index
    %c0_17 = arith.constant 0 : index
    %36 = vector.load %arg10[%c0_15, %c0_16, %c0_17] : memref<16x32x1xf32, #tpu.memory_space<vmem>>, vector<16x32x1xf32>
    tpu.vector_store %arg10[%c0_15, %c0_16, %c0_17], %35 {strides = array<i32>} : memref<16x32x1xf32, #tpu.memory_space<vmem>>, vector<16x32x1xf32>,
    %cst_18 = arith.constant 0.000000e+00 : f32
    %37 = vector.broadcast %cst_18 : f32 to vector<16x32x1xf32>
    %c0_19 = arith.constant 0 : index
    %c0_20 = arith.constant 0 : index
    %c0_21 = arith.constant 0 : index
    %38 = vector.load %arg11[%c0_19, %c0_20, %c0_21] : memref<16x32x1xf32, #tpu.memory_space<vmem>>, vector<16x32x1xf32>
    tpu.vector_store %arg11[%c0_19, %c0_20, %c0_21], %37 {strides = array<i32>} : memref<16x32x1xf32, #tpu.memory_space<vmem>>, vector<16x32x1xf32>,
    %cst_22 = arith.constant 0.000000e+00 : f32
    %39 = vector.broadcast %cst_22 : f32 to vector<16x32x128xf32>
    %c0_23 = arith.constant 0 : index
    %c0_24 = arith.constant 0 : index
    %c0_25 = arith.constant 0 : index
    %40 = vector.load %arg12[%c0_23, %c0_24, %c0_25] : memref<16x32x128xf32, #tpu.memory_space<vmem>>, vector<16x32x128xf32>
    tpu.vector_store %arg12[%c0_23, %c0_24, %c0_25], %39 {strides = array<i32>} : memref<16x32x128xf32, #tpu.memory_space<vmem>>, vector<16x32x128xf32>,
    %c0_i32 = arith.constant 0 : i32
    %c2_i32 = arith.constant 2 : i32
    %41 = arith.addi %c0_i32, %c2_i32 : i32
    %c1_i32 = arith.constant 1 : i32
    scf.for %arg13 = %c0_i32 to %41 step %c1_i32  : i32 {
      %c1_i32_41 = arith.constant 1 : i32
      %62 = arith.muli %arg13, %c1_i32_41 : i32
      %c0_i32_42 = arith.constant 0 : i32
      %63 = arith.addi %c0_i32_42, %62 : i32
      %c16_i32 = arith.constant 16 : i32
      %64 = arith.muli %63, %c16_i32 : i32
      %65 = tpu.assume_multiple %64, 16 : i32
      %c0_43 = arith.constant 0 : index
      %66 = arith.index_cast %65 : i32 to index
      %c0_44 = arith.constant 0 : index
      %67 = vector.load %arg8[%c0_43, %66, %c0_44] : memref<16x32x128xbf16, #tpu.memory_space<vmem>>, vector<16x16x128xbf16>
      %c0_45 = arith.constant 0 : index
      %68 = arith.index_cast %65 : i32 to index
      %c0_46 = arith.constant 0 : index
      %69 = vector.load %arg9[%c0_45, %68, %c0_46] : memref<16x32x128xbf16, #tpu.memory_space<vmem>>, vector<16x16x128xbf16>
      "tpu.trace_start"() <{level = 10 : i32, message = "gnd,gmd->gnm"}> : () -> ()
      %cst_47 = arith.constant dense<0.000000e+00> : vector<16x32x16xf32>
      %70 = tpu.matmul %18, %67, %cst_47 {dimension_numbers = #tpu.dot_dimension_numbers<[2], [2], [1], [1], [0, 0, 0, 1, 1, 1], [0], [0]>} : vector<16x32x128xbf16>, vector<16x16x128xbf16>, vector<16x32x16xf32> -> vector<16x32x16xf32>
      "tpu.trace_stop"() : () -> ()
      %c0_48 = arith.constant 0 : index
      %c0_49 = arith.constant 0 : index
      %c0_50 = arith.constant 0 : index
      %71 = vector.load %arg10[%c0_48, %c0_49, %c0_50] : memref<16x32x1xf32, #tpu.memory_space<vmem>>, vector<16x32x1xf32>
      %cst_51 = arith.constant dense<0xFF800000> : vector<16x32xf32>
      %72 = vector.multi_reduction <maximumf>, %70, %cst_51 [2] : vector<16x32x16xf32> to vector<16x32xf32>
      %73 = vector.shape_cast %72 : vector<16x32xf32> to vector<16x32x1xf32>
      %74 = arith.maximumf %71, %73 : vector<16x32x1xf32>
      %75 = arith.subf %71, %74 : vector<16x32x1xf32>
      %76 = math.exp %75 : vector<16x32x1xf32>
      %77 = vector.broadcast %74 : vector<16x32x1xf32> to vector<16x32x16xf32>
      %78 = arith.subf %70, %77 : vector<16x32x16xf32>
      %79 = math.exp %78 : vector<16x32x16xf32>
      %c0_52 = arith.constant 0 : index
      %c0_53 = arith.constant 0 : index
      %c0_54 = arith.constant 0 : index
      %80 = vector.load %arg11[%c0_52, %c0_53, %c0_54] : memref<16x32x1xf32, #tpu.memory_space<vmem>>, vector<16x32x1xf32>
      %81 = arith.mulf %76, %80 : vector<16x32x1xf32>
      %cst_55 = arith.constant dense<0.000000e+00> : vector<16x32xf32>
      %82 = vector.multi_reduction <add>, %79, %cst_55 [2] : vector<16x32x16xf32> to vector<16x32xf32>
      %83 = vector.shape_cast %82 : vector<16x32xf32> to vector<16x32x1xf32>
      %84 = arith.addf %81, %83 : vector<16x32x1xf32>
      %c0_56 = arith.constant 0 : index
      %c0_57 = arith.constant 0 : index
      %c0_58 = arith.constant 0 : index
      %85 = vector.load %arg11[%c0_56, %c0_57, %c0_58] : memref<16x32x1xf32, #tpu.memory_space<vmem>>, vector<16x32x1xf32>
      tpu.vector_store %arg11[%c0_56, %c0_57, %c0_58], %84 {strides = array<i32>} : memref<16x32x1xf32, #tpu.memory_space<vmem>>, vector<16x32x1xf32>,
      %c0_59 = arith.constant 0 : index
      %c0_60 = arith.constant 0 : index
      %c0_61 = arith.constant 0 : index
      %86 = vector.load %arg12[%c0_59, %c0_60, %c0_61] : memref<16x32x128xf32, #tpu.memory_space<vmem>>, vector<16x32x128xf32>
      %87 = vector.broadcast %76 : vector<16x32x1xf32> to vector<16x32x128xf32>
      %88 = arith.mulf %87, %86 : vector<16x32x128xf32>
      %89 = arith.truncf %79 : vector<16x32x16xf32> to vector<16x32x16xbf16>
      "tpu.trace_start"() <{level = 10 : i32, message = "gnm,gmd->gnd"}> : () -> ()
      %cst_62 = arith.constant dense<0.000000e+00> : vector<16x32x128xf32>
      %90 = tpu.matmul %89, %69, %cst_62 {dimension_numbers = #tpu.dot_dimension_numbers<[2], [1], [1], [2], [0, 0, 0, 1, 1, 2], [0], [0]>} : vector<16x32x16xbf16>, vector<16x16x128xbf16>, vector<16x32x128xf32> -> vector<16x32x128xf32>
      "tpu.trace_stop"() : () -> ()
      %91 = arith.addf %88, %90 : vector<16x32x128xf32>
      %c0_63 = arith.constant 0 : index
      %c0_64 = arith.constant 0 : index
      %c0_65 = arith.constant 0 : index
      %92 = vector.load %arg12[%c0_63, %c0_64, %c0_65] : memref<16x32x128xf32, #tpu.memory_space<vmem>>, vector<16x32x128xf32>
      tpu.vector_store %arg12[%c0_63, %c0_64, %c0_65], %91 {strides = array<i32>} : memref<16x32x128xf32, #tpu.memory_space<vmem>>, vector<16x32x128xf32>,
      %c0_66 = arith.constant 0 : index
      %c0_67 = arith.constant 0 : index
      %c0_68 = arith.constant 0 : index
      %93 = vector.load %arg10[%c0_66, %c0_67, %c0_68] : memref<16x32x1xf32, #tpu.memory_space<vmem>>, vector<16x32x1xf32>
      tpu.vector_store %arg10[%c0_66, %c0_67, %c0_68], %74 {strides = array<i32>} : memref<16x32x1xf32, #tpu.memory_space<vmem>>, vector<16x32x1xf32>,
    }
    %c2_i32_26 = arith.constant 2 : i32
    %c0_27 = arith.constant 0 : index
    %c0_28 = arith.constant 0 : index
    %c0_29 = arith.constant 0 : index
    %42 = vector.load %arg12[%c0_27, %c0_28, %c0_29] : memref<16x32x128xf32, #tpu.memory_space<vmem>>, vector<16x32x128xf32>
    %c0_30 = arith.constant 0 : index
    %c0_31 = arith.constant 0 : index
    %c0_32 = arith.constant 0 : index
    %43 = vector.load %arg11[%c0_30, %c0_31, %c0_32] : memref<16x32x1xf32, #tpu.memory_space<vmem>>, vector<16x32x1xf32>
    %44 = tpu.reciprocal %43 {approx = true} : vector<16x32x1xf32> -> vector<16x32x1xf32>
    %45 = vector.broadcast %44 : vector<16x32x1xf32> to vector<16x32x128xf32>
    %46 = arith.mulf %42, %45 : vector<16x32x128xf32>
    %47 = vector.shape_cast %46 : vector<16x32x128xf32> to vector<2x8x32x128xf32>
    %48 = vector.extract_strided_slice %47 {offsets = [0, 0, 0, 0], sizes = [1, 8, 32, 128], strides = [1, 1, 1, 1]} : vector<2x8x32x128xf32> to vector<1x8x32x128xf32>
    %49 = vector.shape_cast %48 : vector<1x8x32x128xf32> to vector<8x32x128xf32>
    %50 = vector.extract_strided_slice %47 {offsets = [1, 0, 0, 0], sizes = [1, 8, 32, 128], strides = [1, 1, 1, 1]} : vector<2x8x32x128xf32> to vector<1x8x32x128xf32>
    %51 = vector.shape_cast %50 : vector<1x8x32x128xf32> to vector<8x32x128xf32>
    %52 = tpu.concatenate %49, %51 in 2 : vector<8x32x128xf32>, vector<8x32x128xf32> -> vector<8x32x256xf32>
    %53 = vector.shape_cast %52 : vector<8x32x256xf32> to vector<256x256xf32>
    %54 = arith.truncf %53 : vector<256x256xf32> to vector<256x256xbf16>
    %c0_33 = arith.constant 0 : index
    %c0_34 = arith.constant 0 : index
    %55 = vector.load %arg5[%c0_33, %c0_34] : memref<256x256xbf16, #tpu.memory_space<vmem>>, vector<256x256xbf16>
    %cst_35 = arith.constant dense<0.000000e+00> : vector<256x256xf32>
    %56 = tpu.matmul %54, %55, %cst_35 {dimension_numbers = #tpu.dot_dimension_numbers<[1], [0], [0], [1], [0, 0, 1, 1], [], []>} : vector<256x256xbf16>, vector<256x256xbf16>, vector<256x256xf32> -> vector<256x256xf32>
    %c0_36 = arith.constant 0 : index
    %c0_37 = arith.constant 0 : index
    %57 = vector.load %arg6[%c0_36, %c0_37] : memref<1x256xf32, #tpu.memory_space<vmem>>, vector<1x256xf32>
    %58 = vector.broadcast %57 : vector<1x256xf32> to vector<256x256xf32>
    %59 = arith.addf %56, %58 : vector<256x256xf32>
    %60 = vector.shape_cast %59 : vector<256x256xf32> to vector<8x32x256xf32>
    %c0_38 = arith.constant 0 : index
    %c0_39 = arith.constant 0 : index
    %c0_40 = arith.constant 0 : index
    %61 = vector.load %arg7[%c0_38, %c0_39, %c0_40] : memref<8x32x256xf32, #tpu.memory_space<vmem>>, vector<8x32x256xf32>
    tpu.vector_store %arg7[%c0_38, %c0_39, %c0_40], %60 {strides = array<i32>} : memref<8x32x256xf32, #tpu.memory_space<vmem>>, vector<8x32x256xf32>,
    return
  }
  func.func @transform_0(%arg0: i32) -> (i32, i32, i32) {
    %c0_i32 = arith.constant 0 : i32
    %c0_i32_0 = arith.constant 0 : i32
    %c0_i32_1 = arith.constant 0 : i32
    return %arg0, %c0_i32, %c0_i32_0 : i32, i32, i32
  }
  func.func @transform_1(%arg0: i32) -> (i32, i32) {
    %c0_i32 = arith.constant 0 : i32
    %c0_i32_0 = arith.constant 0 : i32
    %c0_i32_1 = arith.constant 0 : i32
    return %c0_i32, %c0_i32_0 : i32, i32
  }
  func.func @transform_2(%arg0: i32) -> (i32, i32) {
    %c0_i32 = arith.constant 0 : i32
    %c0_i32_0 = arith.constant 0 : i32
    %c0_i32_1 = arith.constant 0 : i32
    return %c0_i32, %c0_i32_0 : i32, i32
  }
  func.func @transform_3(%arg0: i32) -> (i32, i32) {
    %c0_i32 = arith.constant 0 : i32
    %c0_i32_0 = arith.constant 0 : i32
    %c0_i32_1 = arith.constant 0 : i32
    return %c0_i32, %c0_i32_0 : i32, i32
  }
  func.func @transform_4(%arg0: i32) -> (i32, i32) {
    %c0_i32 = arith.constant 0 : i32
    %c0_i32_0 = arith.constant 0 : i32
    %c0_i32_1 = arith.constant 0 : i32
    return %c0_i32, %c0_i32_0 : i32, i32
  }
  func.func @transform_5(%arg0: i32) -> (i32, i32) {
    %c0_i32 = arith.constant 0 : i32
    %c0_i32_0 = arith.constant 0 : i32
    %c0_i32_1 = arith.constant 0 : i32
    return %c0_i32, %c0_i32_0 : i32, i32
  }
  func.func @transform_6(%arg0: i32) -> (i32, i32, i32) {
    %c0_i32 = arith.constant 0 : i32
    %c0_i32_0 = arith.constant 0 : i32
    %c0_i32_1 = arith.constant 0 : i32
    return %arg0, %c0_i32, %c0_i32_0 : i32, i32, i32
  }
}

</mosaic_0001>

<llo_original>
// kernel: tpu_custom_call.1
$region0: #{tpu_custom_call.1}
  #allocation0 [shape = 'u32[]', space=smem, size = 0x4, offset = 0x4, fixed_abs, tag = 'smem constant byte address 0x4 - core index']
  #allocation1 [shape = 'u32[144,128]{1,0:T(1,128)}', space=vmem, size = 0x12000, scoped, tag = 'internal scratch']
  #allocation2 [shape = 'bf16[16,32,128]{2,1,0:T(8,128)(2,1)}', space=vmem, size = 0x20000, scoped, tag = 'scratch operand']
  #allocation3 [shape = 'bf16[16,32,128]{2,1,0:T(8,128)(2,1)}', space=vmem, size = 0x20000, scoped, tag = 'scratch operand']
  #allocation4 [shape = 'f32[16,32,1]{2,1,0:T(8,128)}', space=vmem, size = 0x40000, scoped, tag = 'scratch operand']
  #allocation5 [shape = 'f32[16,32,1]{2,1,0:T(8,128)}', space=vmem, size = 0x40000, scoped, tag = 'scratch operand']
  #allocation6 [shape = 'f32[16,32,128]{2,1,0:T(8,128)}', space=vmem, size = 0x40000, scoped, tag = 'scratch operand']
  %s0 = inlined_call_operand.hbm [shape: f32[8,32,256], index: 0, kind: input, shape index: {}]
  %s1 = inlined_call_operand.hbm [shape: f32[32,256], index: 1, kind: input, shape index: {}]
  %s2 = inlined_call_operand.hbm [shape: bf16[256,768], index: 2, kind: input, shape index: {}]
  %s3 = inlined_call_operand.hbm [shape: f32[1,768], index: 3, kind: input, shape index: {}]
  %s4 = inlined_call_operand.hbm [shape: bf16[256,256], index: 4, kind: input, shape index: {}]
  %s5 = inlined_call_operand.vmem [shape: f32[1,256], index: 5, kind: input, shape index: {}]
  %s6 = inlined_call_operand.hbm [shape: f32[8,32,256], index: 6, kind: output, shape index: {}]
  %s7 = sld [smem:[#allocation0]]
  $region61: #{tpu_custom_call.1} parent=0
    _
  %s9 = ssub.s32 1, %s7
  %s10 = scalar_select 0, %s9, %s7
  $region1: #{tpu_custom_call.1} parent=0
    #allocation7 [shape = 'u8[262144]{0}', space=vmem, size = 0x40000, scoped, tag = 'input window, operand 0, single buffered']
    #allocation8 [shape = 's32[1]{0}', space=sflag, size = 0x4, scoped, tag = 'scoped memory for tpu_custom_call.1']
    #allocation9 [shape = 's32[1]{0}', space=sflag, size = 0x4, scoped, tag = 'scoped memory for tpu_custom_call.1']
    #allocation10 [shape = 'u8[32768]{0}', space=vmem, size = 0x8000, scoped, tag = 'input window, operand 1, single buffered']
    #allocation11 [shape = 's32[1]{0}', space=sflag, size = 0x4, scoped, tag = 'scoped memory for tpu_custom_call.1']
    #allocation12 [shape = 'u8[393216]{0}', space=vmem, size = 0x60000, scoped, tag = 'input window, operand 2, single buffered']
    #allocation13 [shape = 'u8[3072]{0}', space=vmem, size = 0xc00, scoped, tag = 'input window, operand 3, single buffered']
    #allocation14 [shape = 's32[1]{0}', space=sflag, size = 0x4, scoped, tag = 'scoped memory for tpu_custom_call.1']
    #allocation15 [shape = 'u8[131072]{0}', space=vmem, size = 0x20000, scoped, tag = 'input window, operand 4, single buffered']
    #allocation16 [shape = 'u8[262144]{0}', space=vmem, size = 0x40000, scoped, tag = 'output window, operand 0, single buffered']
    %11 = vsyncpa [#allocation8], 0
    %12 = vsyncpa [#allocation11], 0
    %13 = vsyncpa [#allocation14], 0
    %14 = vsyncpa [#allocation9], 0
    // Predicated region
    $region2: #{tpu_custom_call.1} parent=1 // pred_check
      _
    $region3: #{tpu_custom_call.1} parent=1 // pred_check_branch
      %16 = sbr.rel (0) target = $region5
    $region4: #{tpu_custom_call.1} parent=1 // pred_region
      %s18 = ssub.s32 8192, 8192
      %19 = vsyncadd [#allocation8], %s18
      %s20 = sshll.u32 [#allocation7], 4
      %s21 = int_to_ptr.vmem [resolvable:$true] %s20
      %26 = dma.hbm_to_vmem [thread:$0]  %s0, 8192, %s21, [#allocation8], 256, 256, 16
    $region5: #{tpu_custom_call.1} parent=1 // pred_fallthru
      _
    // Predicated region
    $region6: #{tpu_custom_call.1} parent=1 // pred_check
      _
    $region7: #{tpu_custom_call.1} parent=1 // pred_check_branch
      %28 = sbr.rel (0) target = $region9
    $region8: #{tpu_custom_call.1} parent=1 // pred_region
      %s30 = ssub.s32 1024, 1024
      %31 = vsyncadd [#allocation11], %s30
      %s32 = sshll.u32 [#allocation10], 4
      %s33 = int_to_ptr.vmem [resolvable:$true] %s32
      %38 = dma.hbm_to_vmem [thread:$0]  %s1, 1024, %s33, [#allocation11], 256, 256, 16
    $region9: #{tpu_custom_call.1} parent=1 // pred_fallthru
      _
    // Predicated region
    $region10: #{tpu_custom_call.1} parent=1 // pred_check
      _
    $region11: #{tpu_custom_call.1} parent=1 // pred_check_branch
      %40 = sbr.rel (0) target = $region13
    $region12: #{tpu_custom_call.1} parent=1 // pred_region
      %s42 = ssub.s32 12288, 12288
      %43 = vsyncadd [#allocation11], %s42
      %s44 = sshll.u32 [#allocation12], 4
      %s45 = int_to_ptr.vmem [resolvable:$true] %s44
      %50 = dma.hbm_to_vmem [thread:$0]  %s2, 12288, %s45, [#allocation11], 384, 384, 24
    $region13: #{tpu_custom_call.1} parent=1 // pred_fallthru
      _
    // Predicated region
    $region14: #{tpu_custom_call.1} parent=1 // pred_check
      _
    $region15: #{tpu_custom_call.1} parent=1 // pred_check_branch
      %52 = sbr.rel (0) target = $region17
    $region16: #{tpu_custom_call.1} parent=1 // pred_region
      %s54 = ssub.s32 96, 96
      %55 = vsyncadd [#allocation14], %s54
      %s57 = sshll.u32 [#allocation13], 4
      %s58 = int_to_ptr.vmem [resolvable:$true] %s57
      %60 = dma.hbm_to_vmem [thread:$0]  %s3, 96, %s58, [#allocation14]
    $region17: #{tpu_custom_call.1} parent=1 // pred_fallthru
      _
    // Predicated region
    $region18: #{tpu_custom_call.1} parent=1 // pred_check
      _
    $region19: #{tpu_custom_call.1} parent=1 // pred_check_branch
      %62 = sbr.rel (0) target = $region21
    $region20: #{tpu_custom_call.1} parent=1 // pred_region
      %s64 = ssub.s32 4096, 4096
      %65 = vsyncadd [#allocation14], %s64
      %s66 = sshll.u32 [#allocation15], 4
      %s67 = int_to_ptr.vmem [resolvable:$true] %s66
      %72 = dma.hbm_to_vmem [thread:$0]  %s4, 4096, %s67, [#allocation14], 128, 128, 8
    $region21: #{tpu_custom_call.1} parent=1 // pred_fallthru
      _
    // Predicated region
    $region22: #{tpu_custom_call.1} parent=1 // pred_check
      _
    $region23: #{tpu_custom_call.1} parent=1 // pred_check_branch
      %74 = sbr.rel (0) target = $region25
    $region24: #{tpu_custom_call.1} parent=1 // pred_region
      _
    $region25: #{tpu_custom_call.1} parent=1 // pred_fallthru
      _
    // Predicated region
    $region26: #{tpu_custom_call.1} parent=1 // pred_check
      _
    $region27: #{tpu_custom_call.1} parent=1 // pred_check_branch
      %76 = sbr.rel (0) target = $region29
    $region28: #{tpu_custom_call.1} parent=1 // pred_region
      %77 = dma.done [#allocation8], 8192
    $region29: #{tpu_custom_call.1} parent=1 // pred_fallthru
      _
    // Predicated region
    $region30: #{tpu_custom_call.1} parent=1 // pred_check
      _
    $region31: #{tpu_custom_call.1} parent=1 // pred_check_branch
      %79 = sbr.rel (0) target = $region33
    $region32: #{tpu_custom_call.1} parent=1 // pred_region
      %80 = dma.done [#allocation11], 1024
    $region33: #{tpu_custom_call.1} parent=1 // pred_fallthru
      _
    // Predicated region
    $region34: #{tpu_custom_call.1} parent=1 // pred_check
      _
    $region35: #{tpu_custom_call.1} parent=1 // pred_check_branch
      %82 = sbr.rel (0) target = $region37
    $region36: #{tpu_custom_call.1} parent=1 // pred_region
      %83 = dma.done [#allocation11], 12288
    $region37: #{tpu_custom_call.1} parent=1 // pred_fallthru
      _
    // Predicated region
    $region38: #{tpu_custom_call.1} parent=1 // pred_check
      _
    $region39: #{tpu_custom_call.1} parent=1 // pred_check_branch
      %85 = sbr.rel (0) target = $region41
    $region40: #{tpu_custom_call.1} parent=1 // pred_region
      %86 = dma.done [#allocation14], 96
    $region41: #{tpu_custom_call.1} parent=1 // pred_fallthru
      _
    // Predicated region
    $region42: #{tpu_custom_call.1} parent=1 // pred_check
      _
    $region43: #{tpu_custom_call.1} parent=1 // pred_check_branch
      %88 = sbr.rel (0) target = $region45
    $region44: #{tpu_custom_call.1} parent=1 // pred_region
      %89 = dma.done [#allocation14], 4096
    $region45: #{tpu_custom_call.1} parent=1 // pred_fallthru
      _
    %v91 = vld [vmem:[#allocation7] sm:$0xff]
    %v92 = vld [vmem:[#allocation7 + $0x8] sm:$0xff]
    %v93 = vld [vmem:[#allocation7 + $0x10] sm:$0xff]
    %v94 = vld [vmem:[#allocation7 + $0x18] sm:$0xff]
    %v95 = vld [vmem:[#allocation7 + $0x20] sm:$0xff]
    %v96 = vld [vmem:[#allocation7 + $0x28] sm:$0xff]
    %v97 = vld [vmem:[#allocation7 + $0x30] sm:$0xff]
    %v98 = vld [vmem:[#allocation7 + $0x38] sm:$0xff]
    %v99 = vld [vmem:[#allocation7 + $0x40] sm:$0xff]
    %v100 = vld [vmem:[#allocation7 + $0x48] sm:$0xff]
    %v101 = vld [vmem:[#allocation7 + $0x50] sm:$0xff]
    %v102 = vld [vmem:[#allocation7 + $0x58] sm:$0xff]
    %v103 = vld [vmem:[#allocation7 + $0x60] sm:$0xff]
    %v104 = vld [vmem:[#allocation7 + $0x68] sm:$0xff]
    %v105 = vld [vmem:[#allocation7 + $0x70] sm:$0xff]
    %v106 = vld [vmem:[#allocation7 + $0x78] sm:$0xff]
    %v107 = vld [vmem:[#allocation7 + $0x80] sm:$0xff]
    %v108 = vld [vmem:[#allocation7 + $0x88] sm:$0xff]
    %v109 = vld [vmem:[#allocation7 + $0x90] sm:$0xff]
    %v110 = vld [vmem:[#allocation7 + $0x98] sm:$0xff]
    %v111 = vld [vmem:[#allocation7 + $0xa0] sm:$0xff]
    %v112 = vld [vmem:[#allocation7 + $0xa8] sm:$0xff]
    %v113 = vld [vmem:[#allocation7 + $0xb0] sm:$0xff]
    %v114 = vld [vmem:[#allocation7 + $0xb8] sm:$0xff]
    %v115 = vld [vmem:[#allocation7 + $0xc0] sm:$0xff]
    %v116 = vld [vmem:[#allocation7 + $0xc8] sm:$0xff]
    %v117 = vld [vmem:[#allocation7 + $0xd0] sm:$0xff]
    %v118 = vld [vmem:[#allocation7 + $0xd8] sm:$0xff]
    %v119 = vld [vmem:[#allocation7 + $0xe0] sm:$0xff]
    %v120 = vld [vmem:[#allocation7 + $0xe8] sm:$0xff]
    %v121 = vld [vmem:[#allocation7 + $0xf0] sm:$0xff]
    %v122 = vld [vmem:[#allocation7 + $0xf8] sm:$0xff]
    %v123 = vld [vmem:[#allocation7 + $0x100] sm:$0xff]
    %v124 = vld [vmem:[#allocation7 + $0x108] sm:$0xff]
    %v125 = vld [vmem:[#allocation7 + $0x110] sm:$0xff]
    %v126 = vld [vmem:[#allocation7 + $0x118] sm:$0xff]
    %v127 = vld [vmem:[#allocation7 + $0x120] sm:$0xff]
    %v128 = vld [vmem:[#allocation7 + $0x128] sm:$0xff]
    %v129 = vld [vmem:[#allocation7 + $0x130] sm:$0xff]
    %v130 = vld [vmem:[#allocation7 + $0x138] sm:$0xff]
    %v131 = vld [vmem:[#allocation7 + $0x140] sm:$0xff]
    %v132 = vld [vmem:[#allocation7 + $0x148] sm:$0xff]
    %v133 = vld [vmem:[#allocation7 + $0x150] sm:$0xff]
    %v134 = vld [vmem:[#allocation7 + $0x158] sm:$0xff]
    %v135 = vld [vmem:[#allocation7 + $0x160] sm:$0xff]
    %v136 = vld [vmem:[#allocation7 + $0x168] sm:$0xff]
    %v137 = vld [vmem:[#allocation7 + $0x170] sm:$0xff]
    %v138 = vld [vmem:[#allocation7 + $0x178] sm:$0xff]
    %v139 = vld [vmem:[#allocation7 + $0x180] sm:$0xff]
    %v140 = vld [vmem:[#allocation7 + $0x188] sm:$0xff]
    %v141 = vld [vmem:[#allocation7 + $0x190] sm:$0xff]
    %v142 = vld [vmem:[#allocation7 + $0x198] sm:$0xff]
    %v143 = vld [vmem:[#allocation7 + $0x1a0] sm:$0xff]
    %v144 = vld [vmem:[#allocation7 + $0x1a8] sm:$0xff]
    %v145 = vld [vmem:[#allocation7 + $0x1b0] sm:$0xff]
    %v146 = vld [vmem:[#allocation7 + $0x1b8] sm:$0xff]
    %v147 = vld [vmem:[#allocation7 + $0x1c0] sm:$0xff]
    %v148 = vld [vmem:[#allocation7 + $0x1c8] sm:$0xff]
    %v149 = vld [vmem:[#allocation7 + $0x1d0] sm:$0xff]
    %v150 = vld [vmem:[#allocation7 + $0x1d8] sm:$0xff]
    %v151 = vld [vmem:[#allocation7 + $0x1e0] sm:$0xff]
    %v152 = vld [vmem:[#allocation7 + $0x1e8] sm:$0xff]
    %v153 = vld [vmem:[#allocation7 + $0x1f0] sm:$0xff]
    %v154 = vld [vmem:[#allocation7 + $0x1f8] sm:$0xff]
    %v155 = vld [vmem:[#allocation10] sm:$0xff]
    %v156 = vld [vmem:[#allocation10 + $0x8] sm:$0xff]
    %v157 = vld [vmem:[#allocation10 + $0x10] sm:$0xff]
    %v158 = vld [vmem:[#allocation10 + $0x18] sm:$0xff]
    %v159 = vld [vmem:[#allocation10 + $0x20] sm:$0xff]
    %v160 = vld [vmem:[#allocation10 + $0x28] sm:$0xff]
    %v161 = vld [vmem:[#allocation10 + $0x30] sm:$0xff]
    %v162 = vld [vmem:[#allocation10 + $0x38] sm:$0xff]
    %v163 = vadd.f32 %v91, %v155
    %v164 = vadd.f32 %v92, %v156
    %v165 = vadd.f32 %v93, %v157
    %v166 = vadd.f32 %v94, %v158
    %v167 = vadd.f32 %v95, %v159
    %v168 = vadd.f32 %v96, %v160
    %v169 = vadd.f32 %v97, %v161
    %v170 = vadd.f32 %v98, %v162
    %v171 = vadd.f32 %v99, %v155
    %v172 = vadd.f32 %v100, %v156
    %v173 = vadd.f32 %v101, %v157
    %v174 = vadd.f32 %v102, %v158
    %v175 = vadd.f32 %v103, %v159
    %v176 = vadd.f32 %v104, %v160
    %v177 = vadd.f32 %v105, %v161
    %v178 = vadd.f32 %v106, %v162
    %v179 = vadd.f32 %v107, %v155
    %v180 = vadd.f32 %v108, %v156
    %v181 = vadd.f32 %v109, %v157
    %v182 = vadd.f32 %v110, %v158
    %v183 = vadd.f32 %v111, %v159
    %v184 = vadd.f32 %v112, %v160
    %v185 = vadd.f32 %v113, %v161
    %v186 = vadd.f32 %v114, %v162
    %v187 = vadd.f32 %v115, %v155
    %v188 = vadd.f32 %v116, %v156
    %v189 = vadd.f32 %v117, %v157
    %v190 = vadd.f32 %v118, %v158
    %v191 = vadd.f32 %v119, %v159
    %v192 = vadd.f32 %v120, %v160
    %v193 = vadd.f32 %v121, %v161
    %v194 = vadd.f32 %v122, %v162
    %v195 = vadd.f32 %v123, %v155
    %v196 = vadd.f32 %v124, %v156
    %v197 = vadd.f32 %v125, %v157
    %v198 = vadd.f32 %v126, %v158
    %v199 = vadd.f32 %v127, %v159
    %v200 = vadd.f32 %v128, %v160
    %v201 = vadd.f32 %v129, %v161
    %v202 = vadd.f32 %v130, %v162
    %v203 = vadd.f32 %v131, %v155
    %v204 = vadd.f32 %v132, %v156
    %v205 = vadd.f32 %v133, %v157
    %v206 = vadd.f32 %v134, %v158
    %v207 = vadd.f32 %v135, %v159
    %v208 = vadd.f32 %v136, %v160
    %v209 = vadd.f32 %v137, %v161
    %v210 = vadd.f32 %v138, %v162
    %v211 = vadd.f32 %v139, %v155
    %v212 = vadd.f32 %v140, %v156
    %v213 = vadd.f32 %v141, %v157
    %v214 = vadd.f32 %v142, %v158
    %v215 = vadd.f32 %v143, %v159
    %v216 = vadd.f32 %v144, %v160
    %v217 = vadd.f32 %v145, %v161
    %v218 = vadd.f32 %v146, %v162
    %v219 = vadd.f32 %v147, %v155
    %v220 = vadd.f32 %v148, %v156
    %v221 = vadd.f32 %v149, %v157
    %v222 = vadd.f32 %v150, %v158
    %v223 = vadd.f32 %v151, %v159
    %v224 = vadd.f32 %v152, %v160
    %v225 = vadd.f32 %v153, %v161
    %v226 = vadd.f32 %v154, %v162
    %v227 = vpack.c.bf16 %v165, %v163
    %v228 = vpack.c.bf16 %v166, %v164
    %v229 = vpack.c.bf16 %v169, %v167
    %v230 = vpack.c.bf16 %v170, %v168
    %v231 = vpack.c.bf16 %v173, %v171
    %v232 = vpack.c.bf16 %v174, %v172
    %v233 = vpack.c.bf16 %v177, %v175
    %v234 = vpack.c.bf16 %v178, %v176
    %v235 = vpack.c.bf16 %v181, %v179
    %v236 = vpack.c.bf16 %v182, %v180
    %v237 = vpack.c.bf16 %v185, %v183
    %v238 = vpack.c.bf16 %v186, %v184
    %v239 = vpack.c.bf16 %v189, %v187
    %v240 = vpack.c.bf16 %v190, %v188
    %v241 = vpack.c.bf16 %v193, %v191
    %v242 = vpack.c.bf16 %v194, %v192
    %v243 = vpack.c.bf16 %v197, %v195
    %v244 = vpack.c.bf16 %v198, %v196
    %v245 = vpack.c.bf16 %v201, %v199
    %v246 = vpack.c.bf16 %v202, %v200
    %v247 = vpack.c.bf16 %v205, %v203
    %v248 = vpack.c.bf16 %v206, %v204
    %v249 = vpack.c.bf16 %v209, %v207
    %v250 = vpack.c.bf16 %v210, %v208
    %v251 = vpack.c.bf16 %v213, %v211
    %v252 = vpack.c.bf16 %v214, %v212
    %v253 = vpack.c.bf16 %v217, %v215
    %v254 = vpack.c.bf16 %v218, %v216
    %v255 = vpack.c.bf16 %v221, %v219
    %v256 = vpack.c.bf16 %v222, %v220
    %v257 = vpack.c.bf16 %v225, %v223
    %v258 = vpack.c.bf16 %v226, %v224
    %v259 = vld [vmem:[#allocation12] sm:$0xff]
    %v260 = vld [vmem:[#allocation12 + $0x8] sm:$0xff]
    %v261 = vld [vmem:[#allocation12 + $0x10] sm:$0xff]
    %v262 = vld [vmem:[#allocation12 + $0x18] sm:$0xff]
    %v263 = vld [vmem:[#allocation12 + $0x20] sm:$0xff]
    %v264 = vld [vmem:[#allocation12 + $0x28] sm:$0xff]
    %v265 = vld [vmem:[#allocation12 + $0x30] sm:$0xff]
    %v266 = vld [vmem:[#allocation12 + $0x38] sm:$0xff]
    %v267 = vld [vmem:[#allocation12 + $0x40] sm:$0xff]
    %v268 = vld [vmem:[#allocation12 + $0x48] sm:$0xff]
    %v269 = vld [vmem:[#allocation12 + $0x50] sm:$0xff]
    %v270 = vld [vmem:[#allocation12 + $0x58] sm:$0xff]
    %v271 = vld [vmem:[#allocation12 + $0x60] sm:$0xff]
    %v272 = vld [vmem:[#allocation12 + $0x68] sm:$0xff]
    %v273 = vld [vmem:[#allocation12 + $0x70] sm:$0xff]
    %v274 = vld [vmem:[#allocation12 + $0x78] sm:$0xff]
    %v275 = vld [vmem:[#allocation12 + $0x80] sm:$0xff]
    %v276 = vld [vmem:[#allocation12 + $0x88] sm:$0xff]
    %v277 = vld [vmem:[#allocation12 + $0x90] sm:$0xff]
    %v278 = vld [vmem:[#allocation12 + $0x98] sm:$0xff]
    %v279 = vld [vmem:[#allocation12 + $0xa0] sm:$0xff]
    %v280 = vld [vmem:[#allocation12 + $0xa8] sm:$0xff]
    %v281 = vld [vmem:[#allocation12 + $0xb0] sm:$0xff]
    %v282 = vld [vmem:[#allocation12 + $0xb8] sm:$0xff]
    %v283 = vld [vmem:[#allocation12 + $0xc0] sm:$0xff]
    %v284 = vld [vmem:[#allocation12 + $0xc8] sm:$0xff]
    %v285 = vld [vmem:[#allocation12 + $0xd0] sm:$0xff]
    %v286 = vld [vmem:[#allocation12 + $0xd8] sm:$0xff]
    %v287 = vld [vmem:[#allocation12 + $0xe0] sm:$0xff]
    %v288 = vld [vmem:[#allocation12 + $0xe8] sm:$0xff]
    %v289 = vld [vmem:[#allocation12 + $0xf0] sm:$0xff]
    %v290 = vld [vmem:[#allocation12 + $0xf8] sm:$0xff]
    %v291 = vld [vmem:[#allocation12 + $0x100] sm:$0xff]
    %v292 = vld [vmem:[#allocation12 + $0x108] sm:$0xff]
    %v293 = vld [vmem:[#allocation12 + $0x110] sm:$0xff]
    %v294 = vld [vmem:[#allocation12 + $0x118] sm:$0xff]
    %v295 = vld [vmem:[#allocation12 + $0x120] sm:$0xff]
    %v296 = vld [vmem:[#allocation12 + $0x128] sm:$0xff]
    %v297 = vld [vmem:[#allocation12 + $0x130] sm:$0xff]
    %v298 = vld [vmem:[#allocation12 + $0x138] sm:$0xff]
    %v299 = vld [vmem:[#allocation12 + $0x140] sm:$0xff]
    %v300 = vld [vmem:[#allocation12 + $0x148] sm:$0xff]
    %v301 = vld [vmem:[#allocation12 + $0x150] sm:$0xff]
    %v302 = vld [vmem:[#allocation12 + $0x158] sm:$0xff]
    %v303 = vld [vmem:[#allocation12 + $0x160] sm:$0xff]
    %v304 = vld [vmem:[#allocation12 + $0x168] sm:$0xff]
    %v305 = vld [vmem:[#allocation12 + $0x170] sm:$0xff]
    %v306 = vld [vmem:[#allocation12 + $0x178] sm:$0xff]
    %v307 = vld [vmem:[#allocation12 + $0x180] sm:$0xff]
    %v308 = vld [vmem:[#allocation12 + $0x188] sm:$0xff]
    %v309 = vld [vmem:[#allocation12 + $0x190] sm:$0xff]
    %v310 = vld [vmem:[#allocation12 + $0x198] sm:$0xff]
    %v311 = vld [vmem:[#allocation12 + $0x1a0] sm:$0xff]
    %v312 = vld [vmem:[#allocation12 + $0x1a8] sm:$0xff]
    %v313 = vld [vmem:[#allocation12 + $0x1b0] sm:$0xff]
    %v314 = vld [vmem:[#allocation12 + $0x1b8] sm:$0xff]
    %v315 = vld [vmem:[#allocation12 + $0x1c0] sm:$0xff]
    %v316 = vld [vmem:[#allocation12 + $0x1c8] sm:$0xff]
    %v317 = vld [vmem:[#allocation12 + $0x1d0] sm:$0xff]
    %v318 = vld [vmem:[#allocation12 + $0x1d8] sm:$0xff]
    %v319 = vld [vmem:[#allocation12 + $0x1e0] sm:$0xff]
    %v320 = vld [vmem:[#allocation12 + $0x1e8] sm:$0xff]
    %v321 = vld [vmem:[#allocation12 + $0x1f0] sm:$0xff]
    %v322 = vld [vmem:[#allocation12 + $0x1f8] sm:$0xff]
    %v323 = vld [vmem:[#allocation12 + $0x200] sm:$0xff]
    %v324 = vld [vmem:[#allocation12 + $0x208] sm:$0xff]
    %v325 = vld [vmem:[#allocation12 + $0x210] sm:$0xff]
    %v326 = vld [vmem:[#allocation12 + $0x218] sm:$0xff]
    %v327 = vld [vmem:[#allocation12 + $0x220] sm:$0xff]
    %v328 = vld [vmem:[#allocation12 + $0x228] sm:$0xff]
    %v329 = vld [vmem:[#allocation12 + $0x230] sm:$0xff]
    %v330 = vld [vmem:[#allocation12 + $0x238] sm:$0xff]
    %v331 = vld [vmem:[#allocation12 + $0x240] sm:$0xff]
    %v332 = vld [vmem:[#allocation12 + $0x248] sm:$0xff]
    %v333 = vld [vmem:[#allocation12 + $0x250] sm:$0xff]
    %v334 = vld [vmem:[#allocation12 + $0x258] sm:$0xff]
    %v335 = vld [vmem:[#allocation12 + $0x260] sm:$0xff]
    %v336 = vld [vmem:[#allocation12 + $0x268] sm:$0xff]
    %v337 = vld [vmem:[#allocation12 + $0x270] sm:$0xff]
    %v338 = vld [vmem:[#allocation12 + $0x278] sm:$0xff]
    %v339 = vld [vmem:[#allocation12 + $0x280] sm:$0xff]
    %v340 = vld [vmem:[#allocation12 + $0x288] sm:$0xff]
    %v341 = vld [vmem:[#allocation12 + $0x290] sm:$0xff]
    %v342 = vld [vmem:[#allocation12 + $0x298] sm:$0xff]
    %v343 = vld [vmem:[#allocation12 + $0x2a0] sm:$0xff]
    %v344 = vld [vmem:[#allocation12 + $0x2a8] sm:$0xff]
    %v345 = vld [vmem:[#allocation12 + $0x2b0] sm:$0xff]
    %v346 = vld [vmem:[#allocation12 + $0x2b8] sm:$0xff]
    %v347 = vld [vmem:[#allocation12 + $0x2c0] sm:$0xff]
    %v348 = vld [vmem:[#allocation12 + $0x2c8] sm:$0xff]
    %v349 = vld [vmem:[#allocation12 + $0x2d0] sm:$0xff]
    %v350 = vld [vmem:[#allocation12 + $0x2d8] sm:$0xff]
    %v351 = vld [vmem:[#allocation12 + $0x2e0] sm:$0xff]
    %v352 = vld [vmem:[#allocation12 + $0x2e8] sm:$0xff]
    %v353 = vld [vmem:[#allocation12 + $0x2f0] sm:$0xff]
    %v354 = vld [vmem:[#allocation12 + $0x2f8] sm:$0xff]
    %v355 = vld [vmem:[#allocation13] sm:$0x3f]
    %v357 = vlaneseq
    %v358 = vshrl.u32 %v357, 7
    %v359 = vsub.s32 0, %v358
    %v360 = vrot.slane %v355, %v359
    %v361 = vlaneseq
    %v362 = vshrl.u32 %v361, 7
    %v363 = vsub.s32 1, %v362
    %v364 = vrot.slane %v355, %v363
    %v365 = vlaneseq
    %v366 = vshrl.u32 %v365, 7
    %v367 = vsub.s32 2, %v366
    %v368 = vrot.slane %v355, %v367
    %v369 = vlaneseq
    %v370 = vshrl.u32 %v369, 7
    %v371 = vsub.s32 3, %v370
    %v372 = vrot.slane %v355, %v371
    %v373 = vlaneseq
    %v374 = vshrl.u32 %v373, 7
    %v375 = vsub.s32 4, %v374
    %v376 = vrot.slane %v355, %v375
    %v377 = vlaneseq
    %v378 = vshrl.u32 %v377, 7
    %v379 = vsub.s32 5, %v378
    %v380 = vrot.slane %v355, %v379
    %v483 = vunpack.c.l.b16 %v259
    %v484 = vunpack.c.h.b16 %v259
    %v485 = vunpack.c.l.b16 %v260
    %v486 = vunpack.c.h.b16 %v260
    %v487 = vunpack.c.l.b16 %v261
    %v488 = vunpack.c.h.b16 %v261
    %v489 = vunpack.c.l.b16 %v262
    %v490 = vunpack.c.h.b16 %v262
    %v491 = vunpack.c.l.b16 %v263
    %v492 = vunpack.c.h.b16 %v263
    %v493 = vunpack.c.l.b16 %v264
    %v494 = vunpack.c.h.b16 %v264
    %v495 = vunpack.c.l.b16 %v265
    %v496 = vunpack.c.h.b16 %v265
    %v497 = vunpack.c.l.b16 %v266
    %v498 = vunpack.c.h.b16 %v266
    %v499 = vunpack.c.l.b16 %v267
    %v500 = vunpack.c.h.b16 %v267
    %v501 = vunpack.c.l.b16 %v268
    %v502 = vunpack.c.h.b16 %v268
    %v503 = vunpack.c.l.b16 %v269
    %v504 = vunpack.c.h.b16 %v269
    %v505 = vunpack.c.l.b16 %v270
    %v506 = vunpack.c.h.b16 %v270
    %v507 = vunpack.c.l.b16 %v271
    %v508 = vunpack.c.h.b16 %v271
    %v509 = vunpack.c.l.b16 %v272
    %v510 = vunpack.c.h.b16 %v272
    %v511 = vunpack.c.l.b16 %v273
    %v512 = vunpack.c.h.b16 %v273
    %v513 = vunpack.c.l.b16 %v274
    %v514 = vunpack.c.h.b16 %v274
    %v515 = vunpack.c.l.b16 %v275
    %v516 = vunpack.c.h.b16 %v275
    %v517 = vunpack.c.l.b16 %v276
    %v518 = vunpack.c.h.b16 %v276
    %v519 = vunpack.c.l.b16 %v277
    %v520 = vunpack.c.h.b16 %v277
    %v521 = vunpack.c.l.b16 %v278
    %v522 = vunpack.c.h.b16 %v278
    %v523 = vunpack.c.l.b16 %v279
    %v524 = vunpack.c.h.b16 %v279
    %v525 = vunpack.c.l.b16 %v280
    %v526 = vunpack.c.h.b16 %v280
    %v527 = vunpack.c.l.b16 %v281
    %v528 = vunpack.c.h.b16 %v281
    %v529 = vunpack.c.l.b16 %v282
    %v530 = vunpack.c.h.b16 %v282
    %v531 = vunpack.c.l.b16 %v283
    %v532 = vunpack.c.h.b16 %v283
    %v533 = vunpack.c.l.b16 %v284
    %v534 = vunpack.c.h.b16 %v284
    %v535 = vunpack.c.l.b16 %v285
    %v536 = vunpack.c.h.b16 %v285
    %v537 = vunpack.c.l.b16 %v286
    %v538 = vunpack.c.h.b16 %v286
    %v539 = vunpack.c.l.b16 %v287
    %v540 = vunpack.c.h.b16 %v287
    %v541 = vunpack.c.l.b16 %v288
    %v542 = vunpack.c.h.b16 %v288
    %v543 = vunpack.c.l.b16 %v289
    %v544 = vunpack.c.h.b16 %v289
    %v545 = vunpack.c.l.b16 %v290
    %v546 = vunpack.c.h.b16 %v290
    %v547 = vunpack.c.l.b16 %v291
    %v548 = vunpack.c.h.b16 %v291
    %v549 = vunpack.c.l.b16 %v292
    %v550 = vunpack.c.h.b16 %v292
    %v551 = vunpack.c.l.b16 %v293
    %v552 = vunpack.c.h.b16 %v293
    %v553 = vunpack.c.l.b16 %v294
    %v554 = vunpack.c.h.b16 %v294
    %v555 = vunpack.c.l.b16 %v295
    %v556 = vunpack.c.h.b16 %v295
    %v557 = vunpack.c.l.b16 %v296
    %v558 = vunpack.c.h.b16 %v296
    %v559 = vunpack.c.l.b16 %v297
    %v560 = vunpack.c.h.b16 %v297
    %v561 = vunpack.c.l.b16 %v298
    %v562 = vunpack.c.h.b16 %v298
    %v563 = vunpack.c.l.b16 %v299
    %v564 = vunpack.c.h.b16 %v299
    %v565 = vunpack.c.l.b16 %v300
    %v566 = vunpack.c.h.b16 %v300
    %v567 = vunpack.c.l.b16 %v301
    %v568 = vunpack.c.h.b16 %v301
    %v569 = vunpack.c.l.b16 %v302
    %v570 = vunpack.c.h.b16 %v302
    %v571 = vunpack.c.l.b16 %v303
    %v572 = vunpack.c.h.b16 %v303
    %v573 = vunpack.c.l.b16 %v304
    %v574 = vunpack.c.h.b16 %v304
    %v575 = vunpack.c.l.b16 %v305
    %v576 = vunpack.c.h.b16 %v305
    %v577 = vunpack.c.l.b16 %v306
    %v578 = vunpack.c.h.b16 %v306
    %v579 = vunpack.c.l.b16 %v307
    %v580 = vunpack.c.h.b16 %v307
    %v581 = vunpack.c.l.b16 %v308
    %v582 = vunpack.c.h.b16 %v308
    %v583 = vunpack.c.l.b16 %v309
    %v584 = vunpack.c.h.b16 %v309
    %v585 = vunpack.c.l.b16 %v310
    %v586 = vunpack.c.h.b16 %v310
    %v587 = vunpack.c.l.b16 %v311
    %v588 = vunpack.c.h.b16 %v311
    %v589 = vunpack.c.l.b16 %v312
    %v590 = vunpack.c.h.b16 %v312
    %v591 = vunpack.c.l.b16 %v313
    %v592 = vunpack.c.h.b16 %v313
    %v593 = vunpack.c.l.b16 %v314
    %v594 = vunpack.c.h.b16 %v314
    %v595 = vunpack.c.l.b16 %v315
    %v596 = vunpack.c.h.b16 %v315
    %v597 = vunpack.c.l.b16 %v316
    %v598 = vunpack.c.h.b16 %v316
    %v599 = vunpack.c.l.b16 %v317
    %v600 = vunpack.c.h.b16 %v317
    %v601 = vunpack.c.l.b16 %v318
    %v602 = vunpack.c.h.b16 %v318
    %v603 = vunpack.c.l.b16 %v319
    %v604 = vunpack.c.h.b16 %v319
    %v605 = vunpack.c.l.b16 %v320
    %v606 = vunpack.c.h.b16 %v320
    %v607 = vunpack.c.l.b16 %v321
    %v608 = vunpack.c.h.b16 %v321
    %v609 = vunpack.c.l.b16 %v322
    %v610 = vunpack.c.h.b16 %v322
    %v611 = vunpack.c.l.b16 %v323
    %v612 = vunpack.c.h.b16 %v323
    %v613 = vunpack.c.l.b16 %v324
    %v614 = vunpack.c.h.b16 %v324
    %v615 = vunpack.c.l.b16 %v325
    %v616 = vunpack.c.h.b16 %v325
    %v617 = vunpack.c.l.b16 %v326
    %v618 = vunpack.c.h.b16 %v326
    %v619 = vunpack.c.l.b16 %v327
    %v620 = vunpack.c.h.b16 %v327
    %v621 = vunpack.c.l.b16 %v328
    %v622 = vunpack.c.h.b16 %v328
    %v623 = vunpack.c.l.b16 %v329
    %v624 = vunpack.c.h.b16 %v329
    %v625 = vunpack.c.l.b16 %v330
    %v626 = vunpack.c.h.b16 %v330
    %v627 = vunpack.c.l.b16 %v331
    %v628 = vunpack.c.h.b16 %v331
    %v629 = vunpack.c.l.b16 %v332
    %v630 = vunpack.c.h.b16 %v332
    %v631 = vunpack.c.l.b16 %v333
    %v632 = vunpack.c.h.b16 %v333
    %v633 = vunpack.c.l.b16 %v334
    %v634 = vunpack.c.h.b16 %v334
    %v635 = vunpack.c.l.b16 %v335
    %v636 = vunpack.c.h.b16 %v335
    %v637 = vunpack.c.l.b16 %v336
    %v638 = vunpack.c.h.b16 %v336
    %v639 = vunpack.c.l.b16 %v337
    %v640 = vunpack.c.h.b16 %v337
    %v641 = vunpack.c.l.b16 %v338
    %v642 = vunpack.c.h.b16 %v338
    %v643 = vunpack.c.l.b16 %v339
    %v644 = vunpack.c.h.b16 %v339
    %v645 = vunpack.c.l.b16 %v340
    %v646 = vunpack.c.h.b16 %v340
    %v647 = vunpack.c.l.b16 %v341
    %v648 = vunpack.c.h.b16 %v341
    %v649 = vunpack.c.l.b16 %v342
    %v650 = vunpack.c.h.b16 %v342
    %v651 = vunpack.c.l.b16 %v343
    %v652 = vunpack.c.h.b16 %v343
    %v653 = vunpack.c.l.b16 %v344
    %v654 = vunpack.c.h.b16 %v344
    %v655 = vunpack.c.l.b16 %v345
    %v656 = vunpack.c.h.b16 %v345
    %v657 = vunpack.c.l.b16 %v346
    %v658 = vunpack.c.h.b16 %v346
    %v659 = vunpack.c.l.b16 %v347
    %v660 = vunpack.c.h.b16 %v347
    %v661 = vunpack.c.l.b16 %v348
    %v662 = vunpack.c.h.b16 %v348
    %v663 = vunpack.c.l.b16 %v349
    %v664 = vunpack.c.h.b16 %v349
    %v665 = vunpack.c.l.b16 %v350
    %v666 = vunpack.c.h.b16 %v350
    %v667 = vunpack.c.l.b16 %v351
    %v668 = vunpack.c.h.b16 %v351
    %v669 = vunpack.c.l.b16 %v352
    %v670 = vunpack.c.h.b16 %v352
    %v671 = vunpack.c.l.b16 %v353
    %v672 = vunpack.c.h.b16 %v353
    %v673 = vunpack.c.l.b16 %v354
    %v674 = vunpack.c.h.b16 %v354
    %v675 = vpack.c.b16 %v489, %v483
    %v676 = vpack.c.b16 %v490, %v484
    %v677 = vpack.c.b16 %v491, %v485
    %v678 = vpack.c.b16 %v492, %v486
    %v679 = vpack.c.b16 %v493, %v487
    %v680 = vpack.c.b16 %v494, %v488
    %v681 = vpack.c.b16 %v501, %v495
    %v682 = vpack.c.b16 %v502, %v496
    %v683 = vpack.c.b16 %v503, %v497
    %v684 = vpack.c.b16 %v504, %v498
    %v685 = vpack.c.b16 %v505, %v499
    %v686 = vpack.c.b16 %v506, %v500
    %v687 = vpack.c.b16 %v513, %v507
    %v688 = vpack.c.b16 %v514, %v508
    %v689 = vpack.c.b16 %v515, %v509
    %v690 = vpack.c.b16 %v516, %v510
    %v691 = vpack.c.b16 %v517, %v511
    %v692 = vpack.c.b16 %v518, %v512
    %v693 = vpack.c.b16 %v525, %v519
    %v694 = vpack.c.b16 %v526, %v520
    %v695 = vpack.c.b16 %v527, %v521
    %v696 = vpack.c.b16 %v528, %v522
    %v697 = vpack.c.b16 %v529, %v523
    %v698 = vpack.c.b16 %v530, %v524
    %v699 = vpack.c.b16 %v537, %v531
    %v700 = vpack.c.b16 %v538, %v532
    %v701 = vpack.c.b16 %v539, %v533
    %v702 = vpack.c.b16 %v540, %v534
    %v703 = vpack.c.b16 %v541, %v535
    %v704 = vpack.c.b16 %v542, %v536
    %v705 = vpack.c.b16 %v549, %v543
    %v706 = vpack.c.b16 %v550, %v544
    %v707 = vpack.c.b16 %v551, %v545
    %v708 = vpack.c.b16 %v552, %v546
    %v709 = vpack.c.b16 %v553, %v547
    %v710 = vpack.c.b16 %v554, %v548
    %v711 = vpack.c.b16 %v561, %v555
    %v712 = vpack.c.b16 %v562, %v556
    %v713 = vpack.c.b16 %v563, %v557
    %v714 = vpack.c.b16 %v564, %v558
    %v715 = vpack.c.b16 %v565, %v559
    %v716 = vpack.c.b16 %v566, %v560
    %v717 = vpack.c.b16 %v573, %v567
    %v718 = vpack.c.b16 %v574, %v568
    %v719 = vpack.c.b16 %v575, %v569
    %v720 = vpack.c.b16 %v576, %v570
    %v721 = vpack.c.b16 %v577, %v571
    %v722 = vpack.c.b16 %v578, %v572
    %v723 = vpack.c.b16 %v585, %v579
    %v724 = vpack.c.b16 %v586, %v580
    %v725 = vpack.c.b16 %v587, %v581
    %v726 = vpack.c.b16 %v588, %v582
    %v727 = vpack.c.b16 %v589, %v583
    %v728 = vpack.c.b16 %v590, %v584
    %v729 = vpack.c.b16 %v597, %v591
    %v730 = vpack.c.b16 %v598, %v592
    %v731 = vpack.c.b16 %v599, %v593
    %v732 = vpack.c.b16 %v600, %v594
    %v733 = vpack.c.b16 %v601, %v595
    %v734 = vpack.c.b16 %v602, %v596
    %v735 = vpack.c.b16 %v609, %v603
    %v736 = vpack.c.b16 %v610, %v604
    %v737 = vpack.c.b16 %v611, %v605
    %v738 = vpack.c.b16 %v612, %v606
    %v739 = vpack.c.b16 %v613, %v607
    %v740 = vpack.c.b16 %v614, %v608
    %v741 = vpack.c.b16 %v621, %v615
    %v742 = vpack.c.b16 %v622, %v616
    %v743 = vpack.c.b16 %v623, %v617
    %v744 = vpack.c.b16 %v624, %v618
    %v745 = vpack.c.b16 %v625, %v619
    %v746 = vpack.c.b16 %v626, %v620
    %v747 = vpack.c.b16 %v633, %v627
    %v748 = vpack.c.b16 %v634, %v628
    %v749 = vpack.c.b16 %v635, %v629
    %v750 = vpack.c.b16 %v636, %v630
    %v751 = vpack.c.b16 %v637, %v631
    %v752 = vpack.c.b16 %v638, %v632
    %v753 = vpack.c.b16 %v645, %v639
    %v754 = vpack.c.b16 %v646, %v640
    %v755 = vpack.c.b16 %v647, %v641
    %v756 = vpack.c.b16 %v648, %v642
    %v757 = vpack.c.b16 %v649, %v643
    %v758 = vpack.c.b16 %v650, %v644
    %v759 = vpack.c.b16 %v657, %v651
    %v760 = vpack.c.b16 %v658, %v652
    %v761 = vpack.c.b16 %v659, %v653
    %v762 = vpack.c.b16 %v660, %v654
    %v763 = vpack.c.b16 %v661, %v655
    %v764 = vpack.c.b16 %v662, %v656
    %v765 = vpack.c.b16 %v669, %v663
    %v766 = vpack.c.b16 %v670, %v664
    %v767 = vpack.c.b16 %v671, %v665
    %v768 = vpack.c.b16 %v672, %v666
    %v769 = vpack.c.b16 %v673, %v667
    %v770 = vpack.c.b16 %v674, %v668
    %867 = vmatprep.subr.bf16.mxu0 %v718
    %868 = vmatpush1.bf16.msra.mxu0 %v717
    %869 = vmatprep.subr.bf16.mxu0 %v712
    %870 = vmatpush1.bf16.msra.mxu0 %v711
    %871 = vmatprep.subr.bf16.mxu0 %v706
    %872 = vmatpush1.bf16.msra.mxu0 %v705
    %873 = vmatprep.subr.bf16.mxu0 %v700
    %874 = vmatpush1.bf16.msra.mxu0 %v699
    %875 = vmatprep.subr.bf16.mxu0 %v694
    %876 = vmatpush1.bf16.msra.mxu0 %v693
    %877 = vmatprep.subr.bf16.mxu0 %v688
    %878 = vmatpush1.bf16.msra.mxu0 %v687
    %879 = vmatprep.subr.bf16.mxu0 %v682
    %880 = vmatpush1.bf16.msra.mxu0 %v681
    %881 = vmatprep.subr.bf16.mxu0 %v676
    %882 = vmatpush1.bf16.msra.mxu0 %v675
    %883 = vmatprep.subr.bf16.mxu0 %v766
    %884 = vmatpush2.bf16.msra.mxu0 %v765
    %885 = vmatprep.subr.bf16.mxu0 %v760
    %886 = vmatpush2.bf16.msra.mxu0 %v759
    %887 = vmatprep.subr.bf16.mxu0 %v754
    %888 = vmatpush2.bf16.msra.mxu0 %v753
    %889 = vmatprep.subr.bf16.mxu0 %v748
    %890 = vmatpush2.bf16.msra.mxu0 %v747
    %891 = vmatprep.subr.bf16.mxu0 %v742
    %892 = vmatpush2.bf16.msra.mxu0 %v741
    %893 = vmatprep.subr.bf16.mxu0 %v736
    %894 = vmatpush2.bf16.msra.mxu0 %v735
    %895 = vmatprep.subr.bf16.mxu0 %v730
    %896 = vmatpush2.bf16.msra.mxu0 %v729
    %897 = vmatprep.subr.bf16.mxu0 %v724
    %898 = vmatpush2.bf16.msra.mxu0 %v723
    %899 = vmatprep.mubr.bf16.mxu0 %v228
    %900 = vmatmul.mubr.bf16.gmra.mxu0 %v227
    %v901 = vpop.f32.mrf.mxu0
    %v902 = vadd.f32 %v360, %v901
    %v903 = vpop.f32.mrf.mxu0
    %v904 = vadd.f32 %v364, %v903
    %v905 = vpop.f32.mrf.mxu0
    %v906 = vadd.f32 %v360, %v905
    %v907 = vpop.f32.mrf.mxu0
    %v908 = vadd.f32 %v364, %v907
    %909 = vmatprep.mubr.bf16.mxu0 %v230
    %910 = vmatmul.mubr.bf16.gmra.mxu0 %v229
    %v911 = vpop.f32.mrf.mxu0
    %v912 = vadd.f32 %v360, %v911
    %v913 = vpop.f32.mrf.mxu0
    %v914 = vadd.f32 %v364, %v913
    %v915 = vpop.f32.mrf.mxu0
    %v916 = vadd.f32 %v360, %v915
    %v917 = vpop.f32.mrf.mxu0
    %v918 = vadd.f32 %v364, %v917
    %919 = vmatprep.mubr.bf16.mxu0 %v232
    %920 = vmatmul.mubr.bf16.gmra.mxu0 %v231
    %v921 = vpop.f32.mrf.mxu0
    %v922 = vadd.f32 %v360, %v921
    %v923 = vpop.f32.mrf.mxu0
    %v924 = vadd.f32 %v364, %v923
    %v925 = vpop.f32.mrf.mxu0
    %v926 = vadd.f32 %v360, %v925
    %v927 = vpop.f32.mrf.mxu0
    %v928 = vadd.f32 %v364, %v927
    %929 = vmatprep.mubr.bf16.mxu0 %v234
    %930 = vmatmul.mubr.bf16.gmra.mxu0 %v233
    %v931 = vpop.f32.mrf.mxu0
    %v932 = vadd.f32 %v360, %v931
    %v933 = vpop.f32.mrf.mxu0
    %v934 = vadd.f32 %v364, %v933
    %v935 = vpop.f32.mrf.mxu0
    %v936 = vadd.f32 %v360, %v935
    %v937 = vpop.f32.mrf.mxu0
    %v938 = vadd.f32 %v364, %v937
    %939 = vmatprep.mubr.bf16.mxu0 %v236
    %940 = vmatmul.mubr.bf16.gmra.mxu0 %v235
    %v941 = vpop.f32.mrf.mxu0
    %v942 = vadd.f32 %v360, %v941
    %v943 = vpop.f32.mrf.mxu0
    %v944 = vadd.f32 %v364, %v943
    %v945 = vpop.f32.mrf.mxu0
    %v946 = vadd.f32 %v360, %v945
    %v947 = vpop.f32.mrf.mxu0
    %v948 = vadd.f32 %v364, %v947
    %949 = vmatprep.mubr.bf16.mxu0 %v238
    %950 = vmatmul.mubr.bf16.gmra.mxu0 %v237
    %v951 = vpop.f32.mrf.mxu0
    %v952 = vadd.f32 %v360, %v951
    %v953 = vpop.f32.mrf.mxu0
    %v954 = vadd.f32 %v364, %v953
    %v955 = vpop.f32.mrf.mxu0
    %v956 = vadd.f32 %v360, %v955
    %v957 = vpop.f32.mrf.mxu0
    %v958 = vadd.f32 %v364, %v957
    %959 = vmatprep.mubr.bf16.mxu0 %v240
    %960 = vmatmul.mubr.bf16.gmra.mxu0 %v239
    %v961 = vpop.f32.mrf.mxu0
    %v962 = vadd.f32 %v360, %v961
    %v963 = vpop.f32.mrf.mxu0
    %v964 = vadd.f32 %v364, %v963
    %v965 = vpop.f32.mrf.mxu0
    %v966 = vadd.f32 %v360, %v965
    %v967 = vpop.f32.mrf.mxu0
    %v968 = vadd.f32 %v364, %v967
    %969 = vmatprep.mubr.bf16.mxu0 %v242
    %970 = vmatmul.mubr.bf16.gmra.mxu0 %v241
    %v971 = vpop.f32.mrf.mxu0
    %v972 = vadd.f32 %v360, %v971
    %v973 = vpop.f32.mrf.mxu0
    %v974 = vadd.f32 %v364, %v973
    %v975 = vpop.f32.mrf.mxu0
    %v976 = vadd.f32 %v360, %v975
    %v977 = vpop.f32.mrf.mxu0
    %v978 = vadd.f32 %v364, %v977
    %979 = vmatprep.mubr.bf16.mxu0 %v244
    %980 = vmatmul.mubr.bf16.gmra.mxu0 %v243
    %v981 = vpop.f32.mrf.mxu0
    %v982 = vadd.f32 %v360, %v981
    %v983 = vpop.f32.mrf.mxu0
    %v984 = vadd.f32 %v364, %v983
    %v985 = vpop.f32.mrf.mxu0
    %v986 = vadd.f32 %v360, %v985
    %v987 = vpop.f32.mrf.mxu0
    %v988 = vadd.f32 %v364, %v987
    %989 = vmatprep.mubr.bf16.mxu0 %v246
    %990 = vmatmul.mubr.bf16.gmra.mxu0 %v245
    %v991 = vpop.f32.mrf.mxu0
    %v992 = vadd.f32 %v360, %v991
    %v993 = vpop.f32.mrf.mxu0
    %v994 = vadd.f32 %v364, %v993
    %v995 = vpop.f32.mrf.mxu0
    %v996 = vadd.f32 %v360, %v995
    %v997 = vpop.f32.mrf.mxu0
    %v998 = vadd.f32 %v364, %v997
    %999 = vmatprep.mubr.bf16.mxu0 %v248
    %1000 = vmatmul.mubr.bf16.gmra.mxu0 %v247
    %v1001 = vpop.f32.mrf.mxu0
    %v1002 = vadd.f32 %v360, %v1001
    %v1003 = vpop.f32.mrf.mxu0
    %v1004 = vadd.f32 %v364, %v1003
    %v1005 = vpop.f32.mrf.mxu0
    %v1006 = vadd.f32 %v360, %v1005
    %v1007 = vpop.f32.mrf.mxu0
    %v1008 = vadd.f32 %v364, %v1007
    %1009 = vmatprep.mubr.bf16.mxu0 %v250
    %1010 = vmatmul.mubr.bf16.gmra.mxu0 %v249
    %v1011 = vpop.f32.mrf.mxu0
    %v1012 = vadd.f32 %v360, %v1011
    %v1013 = vpop.f32.mrf.mxu0
    %v1014 = vadd.f32 %v364, %v1013
    %v1015 = vpop.f32.mrf.mxu0
    %v1016 = vadd.f32 %v360, %v1015
    %v1017 = vpop.f32.mrf.mxu0
    %v1018 = vadd.f32 %v364, %v1017
    %1019 = vmatprep.mubr.bf16.mxu0 %v252
    %1020 = vmatmul.mubr.bf16.gmra.mxu0 %v251
    %v1021 = vpop.f32.mrf.mxu0
    %v1022 = vadd.f32 %v360, %v1021
    %v1023 = vpop.f32.mrf.mxu0
    %v1024 = vadd.f32 %v364, %v1023
    %v1025 = vpop.f32.mrf.mxu0
    %v1026 = vadd.f32 %v360, %v1025
    %v1027 = vpop.f32.mrf.mxu0
    %v1028 = vadd.f32 %v364, %v1027
    %1029 = vmatprep.mubr.bf16.mxu0 %v254
    %1030 = vmatmul.mubr.bf16.gmra.mxu0 %v253
    %v1031 = vpop.f32.mrf.mxu0
    %v1032 = vadd.f32 %v360, %v1031
    %v1033 = vpop.f32.mrf.mxu0
    %v1034 = vadd.f32 %v364, %v1033
    %v1035 = vpop.f32.mrf.mxu0
    %v1036 = vadd.f32 %v360, %v1035
    %v1037 = vpop.f32.mrf.mxu0
    %v1038 = vadd.f32 %v364, %v1037
    %1039 = vmatprep.mubr.bf16.mxu0 %v256
    %1040 = vmatmul.mubr.bf16.gmra.mxu0 %v255
    %v1041 = vpop.f32.mrf.mxu0
    %v1042 = vadd.f32 %v360, %v1041
    %v1043 = vpop.f32.mrf.mxu0
    %v1044 = vadd.f32 %v364, %v1043
    %v1045 = vpop.f32.mrf.mxu0
    %v1046 = vadd.f32 %v360, %v1045
    %v1047 = vpop.f32.mrf.mxu0
    %v1048 = vadd.f32 %v364, %v1047
    %1049 = vmatprep.mubr.bf16.mxu0 %v258
    %1050 = vmatmul.mubr.bf16.gmra.mxu0 %v257
    %v1051 = vpop.f32.mrf.mxu0
    %v1052 = vadd.f32 %v360, %v1051
    %v1053 = vpop.f32.mrf.mxu0
    %v1054 = vadd.f32 %v364, %v1053
    %v1055 = vpop.f32.mrf.mxu0
    %v1056 = vadd.f32 %v360, %v1055
    %v1057 = vpop.f32.mrf.mxu0
    %v1058 = vadd.f32 %v364, %v1057
    %1059 = vdwg.mxu0
    %1060 = vmatprep.subr.bf16.mxu0 %v720
    %1061 = vmatpush1.bf16.msra.mxu0 %v719
    %1062 = vmatprep.subr.bf16.mxu0 %v714
    %1063 = vmatpush1.bf16.msra.mxu0 %v713
    %1064 = vmatprep.subr.bf16.mxu0 %v708
    %1065 = vmatpush1.bf16.msra.mxu0 %v707
    %1066 = vmatprep.subr.bf16.mxu0 %v702
    %1067 = vmatpush1.bf16.msra.mxu0 %v701
    %1068 = vmatprep.subr.bf16.mxu0 %v696
    %1069 = vmatpush1.bf16.msra.mxu0 %v695
    %1070 = vmatprep.subr.bf16.mxu0 %v690
    %1071 = vmatpush1.bf16.msra.mxu0 %v689
    %1072 = vmatprep.subr.bf16.mxu0 %v684
    %1073 = vmatpush1.bf16.msra.mxu0 %v683
    %1074 = vmatprep.subr.bf16.mxu0 %v678
    %1075 = vmatpush1.bf16.msra.mxu0 %v677
    %1076 = vmatprep.subr.bf16.mxu0 %v768
    %1077 = vmatpush2.bf16.msra.mxu0 %v767
    %1078 = vmatprep.subr.bf16.mxu0 %v762
    %1079 = vmatpush2.bf16.msra.mxu0 %v761
    %1080 = vmatprep.subr.bf16.mxu0 %v756
    %1081 = vmatpush2.bf16.msra.mxu0 %v755
    %1082 = vmatprep.subr.bf16.mxu0 %v750
    %1083 = vmatpush2.bf16.msra.mxu0 %v749
    %1084 = vmatprep.subr.bf16.mxu0 %v744
    %1085 = vmatpush2.bf16.msra.mxu0 %v743
    %1086 = vmatprep.subr.bf16.mxu0 %v738
    %1087 = vmatpush2.bf16.msra.mxu0 %v737
    %1088 = vmatprep.subr.bf16.mxu0 %v732
    %1089 = vmatpush2.bf16.msra.mxu0 %v731
    %1090 = vmatprep.subr.bf16.mxu0 %v726
    %1091 = vmatpush2.bf16.msra.mxu0 %v725
    %1092 = vmatprep.mubr.bf16.mxu0 %v228
    %1093 = vmatmul.mubr.bf16.gmra.mxu0 %v227
    %v1094 = vpop.f32.mrf.mxu0
    %v1095 = vadd.f32 %v368, %v1094
    %v1096 = vpop.f32.mrf.mxu0
    %v1097 = vadd.f32 %v372, %v1096
    %v1098 = vpop.f32.mrf.mxu0
    %v1099 = vadd.f32 %v368, %v1098
    %v1100 = vpop.f32.mrf.mxu0
    %v1101 = vadd.f32 %v372, %v1100
    %1102 = vmatprep.mubr.bf16.mxu0 %v230
    %1103 = vmatmul.mubr.bf16.gmra.mxu0 %v229
    %v1104 = vpop.f32.mrf.mxu0
    %v1105 = vadd.f32 %v368, %v1104
    %v1106 = vpop.f32.mrf.mxu0
    %v1107 = vadd.f32 %v372, %v1106
    %v1108 = vpop.f32.mrf.mxu0
    %v1109 = vadd.f32 %v368, %v1108
    %v1110 = vpop.f32.mrf.mxu0
    %v1111 = vadd.f32 %v372, %v1110
    %1112 = vmatprep.mubr.bf16.mxu0 %v232
    %1113 = vmatmul.mubr.bf16.gmra.mxu0 %v231
    %v1114 = vpop.f32.mrf.mxu0
    %v1115 = vadd.f32 %v368, %v1114
    %v1116 = vpop.f32.mrf.mxu0
    %v1117 = vadd.f32 %v372, %v1116
    %v1118 = vpop.f32.mrf.mxu0
    %v1119 = vadd.f32 %v368, %v1118
    %v1120 = vpop.f32.mrf.mxu0
    %v1121 = vadd.f32 %v372, %v1120
    %1122 = vmatprep.mubr.bf16.mxu0 %v234
    %1123 = vmatmul.mubr.bf16.gmra.mxu0 %v233
    %v1124 = vpop.f32.mrf.mxu0
    %v1125 = vadd.f32 %v368, %v1124
    %v1126 = vpop.f32.mrf.mxu0
    %v1127 = vadd.f32 %v372, %v1126
    %v1128 = vpop.f32.mrf.mxu0
    %v1129 = vadd.f32 %v368, %v1128
    %v1130 = vpop.f32.mrf.mxu0
    %v1131 = vadd.f32 %v372, %v1130
    %1132 = vmatprep.mubr.bf16.mxu0 %v236
    %1133 = vmatmul.mubr.bf16.gmra.mxu0 %v235
    %v1134 = vpop.f32.mrf.mxu0
    %v1135 = vadd.f32 %v368, %v1134
    %v1136 = vpop.f32.mrf.mxu0
    %v1137 = vadd.f32 %v372, %v1136
    %v1138 = vpop.f32.mrf.mxu0
    %v1139 = vadd.f32 %v368, %v1138
    %v1140 = vpop.f32.mrf.mxu0
    %v1141 = vadd.f32 %v372, %v1140
    %1142 = vmatprep.mubr.bf16.mxu0 %v238
    %1143 = vmatmul.mubr.bf16.gmra.mxu0 %v237
    %v1144 = vpop.f32.mrf.mxu0
    %v1145 = vadd.f32 %v368, %v1144
    %v1146 = vpop.f32.mrf.mxu0
    %v1147 = vadd.f32 %v372, %v1146
    %v1148 = vpop.f32.mrf.mxu0
    %v1149 = vadd.f32 %v368, %v1148
    %v1150 = vpop.f32.mrf.mxu0
    %v1151 = vadd.f32 %v372, %v1150
    %1152 = vmatprep.mubr.bf16.mxu0 %v240
    %1153 = vmatmul.mubr.bf16.gmra.mxu0 %v239
    %v1154 = vpop.f32.mrf.mxu0
    %v1155 = vadd.f32 %v368, %v1154
    %v1156 = vpop.f32.mrf.mxu0
    %v1157 = vadd.f32 %v372, %v1156
    %v1158 = vpop.f32.mrf.mxu0
    %v1159 = vadd.f32 %v368, %v1158
    %v1160 = vpop.f32.mrf.mxu0
    %v1161 = vadd.f32 %v372, %v1160
    %1162 = vmatprep.mubr.bf16.mxu0 %v242
    %1163 = vmatmul.mubr.bf16.gmra.mxu0 %v241
    %v1164 = vpop.f32.mrf.mxu0
    %v1165 = vadd.f32 %v368, %v1164
    %v1166 = vpop.f32.mrf.mxu0
    %v1167 = vadd.f32 %v372, %v1166
    %v1168 = vpop.f32.mrf.mxu0
    %v1169 = vadd.f32 %v368, %v1168
    %v1170 = vpop.f32.mrf.mxu0
    %v1171 = vadd.f32 %v372, %v1170
    %1172 = vmatprep.mubr.bf16.mxu0 %v244
    %1173 = vmatmul.mubr.bf16.gmra.mxu0 %v243
    %v1174 = vpop.f32.mrf.mxu0
    %v1175 = vadd.f32 %v368, %v1174
    %v1176 = vpop.f32.mrf.mxu0
    %v1177 = vadd.f32 %v372, %v1176
    %v1178 = vpop.f32.mrf.mxu0
    %v1179 = vadd.f32 %v368, %v1178
    %v1180 = vpop.f32.mrf.mxu0
    %v1181 = vadd.f32 %v372, %v1180
    %1182 = vmatprep.mubr.bf16.mxu0 %v246
    %1183 = vmatmul.mubr.bf16.gmra.mxu0 %v245
    %v1184 = vpop.f32.mrf.mxu0
    %v1185 = vadd.f32 %v368, %v1184
    %v1186 = vpop.f32.mrf.mxu0
    %v1187 = vadd.f32 %v372, %v1186
    %v1188 = vpop.f32.mrf.mxu0
    %v1189 = vadd.f32 %v368, %v1188
    %v1190 = vpop.f32.mrf.mxu0
    %v1191 = vadd.f32 %v372, %v1190
    %1192 = vmatprep.mubr.bf16.mxu0 %v248
    %1193 = vmatmul.mubr.bf16.gmra.mxu0 %v247
    %v1194 = vpop.f32.mrf.mxu0
    %v1195 = vadd.f32 %v368, %v1194
    %v1196 = vpop.f32.mrf.mxu0
    %v1197 = vadd.f32 %v372, %v1196
    %v1198 = vpop.f32.mrf.mxu0
    %v1199 = vadd.f32 %v368, %v1198
    %v1200 = vpop.f32.mrf.mxu0
    %v1201 = vadd.f32 %v372, %v1200
    %1202 = vmatprep.mubr.bf16.mxu0 %v250
    %1203 = vmatmul.mubr.bf16.gmra.mxu0 %v249
    %v1204 = vpop.f32.mrf.mxu0
    %v1205 = vadd.f32 %v368, %v1204
    %v1206 = vpop.f32.mrf.mxu0
    %v1207 = vadd.f32 %v372, %v1206
    %v1208 = vpop.f32.mrf.mxu0
    %v1209 = vadd.f32 %v368, %v1208
    %v1210 = vpop.f32.mrf.mxu0
    %v1211 = vadd.f32 %v372, %v1210
    %1212 = vmatprep.mubr.bf16.mxu0 %v252
    %1213 = vmatmul.mubr.bf16.gmra.mxu0 %v251
    %v1214 = vpop.f32.mrf.mxu0
    %v1215 = vadd.f32 %v368, %v1214
    %v1216 = vpop.f32.mrf.mxu0
    %v1217 = vadd.f32 %v372, %v1216
    %v1218 = vpop.f32.mrf.mxu0
    %v1219 = vadd.f32 %v368, %v1218
    %v1220 = vpop.f32.mrf.mxu0
    %v1221 = vadd.f32 %v372, %v1220
    %1222 = vmatprep.mubr.bf16.mxu0 %v254
    %1223 = vmatmul.mubr.bf16.gmra.mxu0 %v253
    %v1224 = vpop.f32.mrf.mxu0
    %v1225 = vadd.f32 %v368, %v1224
    %v1226 = vpop.f32.mrf.mxu0
    %v1227 = vadd.f32 %v372, %v1226
    %v1228 = vpop.f32.mrf.mxu0
    %v1229 = vadd.f32 %v368, %v1228
    %v1230 = vpop.f32.mrf.mxu0
    %v1231 = vadd.f32 %v372, %v1230
    %1232 = vmatprep.mubr.bf16.mxu0 %v256
    %1233 = vmatmul.mubr.bf16.gmra.mxu0 %v255
    %v1234 = vpop.f32.mrf.mxu0
    %v1235 = vadd.f32 %v368, %v1234
    %v1236 = vpop.f32.mrf.mxu0
    %v1237 = vadd.f32 %v372, %v1236
    %v1238 = vpop.f32.mrf.mxu0
    %v1239 = vadd.f32 %v368, %v1238
    %v1240 = vpop.f32.mrf.mxu0
    %v1241 = vadd.f32 %v372, %v1240
    %1242 = vmatprep.mubr.bf16.mxu0 %v258
    %1243 = vmatmul.mubr.bf16.gmra.mxu0 %v257
    %v1244 = vpop.f32.mrf.mxu0
    %v1245 = vadd.f32 %v368, %v1244
    %v1246 = vpop.f32.mrf.mxu0
    %v1247 = vadd.f32 %v372, %v1246
    %v1248 = vpop.f32.mrf.mxu0
    %v1249 = vadd.f32 %v368, %v1248
    %v1250 = vpop.f32.mrf.mxu0
    %v1251 = vadd.f32 %v372, %v1250
    %1252 = vdwg.mxu0
    %1253 = vmatprep.subr.bf16.mxu0 %v722
    %1254 = vmatpush1.bf16.msra.mxu0 %v721
    %1255 = vmatprep.subr.bf16.mxu0 %v716
    %1256 = vmatpush1.bf16.msra.mxu0 %v715
    %1257 = vmatprep.subr.bf16.mxu0 %v710
    %1258 = vmatpush1.bf16.msra.mxu0 %v709
    %1259 = vmatprep.subr.bf16.mxu0 %v704
    %1260 = vmatpush1.bf16.msra.mxu0 %v703
    %1261 = vmatprep.subr.bf16.mxu0 %v698
    %1262 = vmatpush1.bf16.msra.mxu0 %v697
    %1263 = vmatprep.subr.bf16.mxu0 %v692
    %1264 = vmatpush1.bf16.msra.mxu0 %v691
    %1265 = vmatprep.subr.bf16.mxu0 %v686
    %1266 = vmatpush1.bf16.msra.mxu0 %v685
    %1267 = vmatprep.subr.bf16.mxu0 %v680
    %1268 = vmatpush1.bf16.msra.mxu0 %v679
    %1269 = vmatprep.subr.bf16.mxu0 %v770
    %1270 = vmatpush2.bf16.msra.mxu0 %v769
    %1271 = vmatprep.subr.bf16.mxu0 %v764
    %1272 = vmatpush2.bf16.msra.mxu0 %v763
    %1273 = vmatprep.subr.bf16.mxu0 %v758
    %1274 = vmatpush2.bf16.msra.mxu0 %v757
    %1275 = vmatprep.subr.bf16.mxu0 %v752
    %1276 = vmatpush2.bf16.msra.mxu0 %v751
    %1277 = vmatprep.subr.bf16.mxu0 %v746
    %1278 = vmatpush2.bf16.msra.mxu0 %v745
    %1279 = vmatprep.subr.bf16.mxu0 %v740
    %1280 = vmatpush2.bf16.msra.mxu0 %v739
    %1281 = vmatprep.subr.bf16.mxu0 %v734
    %1282 = vmatpush2.bf16.msra.mxu0 %v733
    %1283 = vmatprep.subr.bf16.mxu0 %v728
    %1284 = vmatpush2.bf16.msra.mxu0 %v727
    %1285 = vmatprep.mubr.bf16.mxu0 %v228
    %1286 = vmatmul.mubr.bf16.gmra.mxu0 %v227
    %v1287 = vpop.f32.mrf.mxu0
    %v1288 = vadd.f32 %v376, %v1287
    %v1289 = vpop.f32.mrf.mxu0
    %v1290 = vadd.f32 %v380, %v1289
    %v1291 = vpop.f32.mrf.mxu0
    %v1292 = vadd.f32 %v376, %v1291
    %v1293 = vpop.f32.mrf.mxu0
    %v1294 = vadd.f32 %v380, %v1293
    %1295 = vmatprep.mubr.bf16.mxu0 %v230
    %1296 = vmatmul.mubr.bf16.gmra.mxu0 %v229
    %v1297 = vpop.f32.mrf.mxu0
    %v1298 = vadd.f32 %v376, %v1297
    %v1299 = vpop.f32.mrf.mxu0
    %v1300 = vadd.f32 %v380, %v1299
    %v1301 = vpop.f32.mrf.mxu0
    %v1302 = vadd.f32 %v376, %v1301
    %v1303 = vpop.f32.mrf.mxu0
    %v1304 = vadd.f32 %v380, %v1303
    %1305 = vmatprep.mubr.bf16.mxu0 %v232
    %1306 = vmatmul.mubr.bf16.gmra.mxu0 %v231
    %v1307 = vpop.f32.mrf.mxu0
    %v1308 = vadd.f32 %v376, %v1307
    %v1309 = vpop.f32.mrf.mxu0
    %v1310 = vadd.f32 %v380, %v1309
    %v1311 = vpop.f32.mrf.mxu0
    %v1312 = vadd.f32 %v376, %v1311
    %v1313 = vpop.f32.mrf.mxu0
    %v1314 = vadd.f32 %v380, %v1313
    %1315 = vmatprep.mubr.bf16.mxu0 %v234
    %1316 = vmatmul.mubr.bf16.gmra.mxu0 %v233
    %v1317 = vpop.f32.mrf.mxu0
    %v1318 = vadd.f32 %v376, %v1317
    %v1319 = vpop.f32.mrf.mxu0
    %v1320 = vadd.f32 %v380, %v1319
    %v1321 = vpop.f32.mrf.mxu0
    %v1322 = vadd.f32 %v376, %v1321
    %v1323 = vpop.f32.mrf.mxu0
    %v1324 = vadd.f32 %v380, %v1323
    %1325 = vmatprep.mubr.bf16.mxu0 %v236
    %1326 = vmatmul.mubr.bf16.gmra.mxu0 %v235
    %v1327 = vpop.f32.mrf.mxu0
    %v1328 = vadd.f32 %v376, %v1327
    %v1329 = vpop.f32.mrf.mxu0
    %v1330 = vadd.f32 %v380, %v1329
    %v1331 = vpop.f32.mrf.mxu0
    %v1332 = vadd.f32 %v376, %v1331
    %v1333 = vpop.f32.mrf.mxu0
    %v1334 = vadd.f32 %v380, %v1333
    %1335 = vmatprep.mubr.bf16.mxu0 %v238
    %1336 = vmatmul.mubr.bf16.gmra.mxu0 %v237
    %v1337 = vpop.f32.mrf.mxu0
    %v1338 = vadd.f32 %v376, %v1337
    %v1339 = vpop.f32.mrf.mxu0
    %v1340 = vadd.f32 %v380, %v1339
    %v1341 = vpop.f32.mrf.mxu0
    %v1342 = vadd.f32 %v376, %v1341
    %v1343 = vpop.f32.mrf.mxu0
    %v1344 = vadd.f32 %v380, %v1343
    %1345 = vmatprep.mubr.bf16.mxu0 %v240
    %1346 = vmatmul.mubr.bf16.gmra.mxu0 %v239
    %v1347 = vpop.f32.mrf.mxu0
    %v1348 = vadd.f32 %v376, %v1347
    %v1349 = vpop.f32.mrf.mxu0
    %v1350 = vadd.f32 %v380, %v1349
    %v1351 = vpop.f32.mrf.mxu0
    %v1352 = vadd.f32 %v376, %v1351
    %v1353 = vpop.f32.mrf.mxu0
    %v1354 = vadd.f32 %v380, %v1353
    %1355 = vmatprep.mubr.bf16.mxu0 %v242
    %1356 = vmatmul.mubr.bf16.gmra.mxu0 %v241
    %v1357 = vpop.f32.mrf.mxu0
    %v1358 = vadd.f32 %v376, %v1357
    %v1359 = vpop.f32.mrf.mxu0
    %v1360 = vadd.f32 %v380, %v1359
    %v1361 = vpop.f32.mrf.mxu0
    %v1362 = vadd.f32 %v376, %v1361
    %v1363 = vpop.f32.mrf.mxu0
    %v1364 = vadd.f32 %v380, %v1363
    %1365 = vmatprep.mubr.bf16.mxu0 %v244
    %1366 = vmatmul.mubr.bf16.gmra.mxu0 %v243
    %v1367 = vpop.f32.mrf.mxu0
    %v1368 = vadd.f32 %v376, %v1367
    %v1369 = vpop.f32.mrf.mxu0
    %v1370 = vadd.f32 %v380, %v1369
    %v1371 = vpop.f32.mrf.mxu0
    %v1372 = vadd.f32 %v376, %v1371
    %v1373 = vpop.f32.mrf.mxu0
    %v1374 = vadd.f32 %v380, %v1373
    %1375 = vmatprep.mubr.bf16.mxu0 %v246
    %1376 = vmatmul.mubr.bf16.gmra.mxu0 %v245
    %v1377 = vpop.f32.mrf.mxu0
    %v1378 = vadd.f32 %v376, %v1377
    %v1379 = vpop.f32.mrf.mxu0
    %v1380 = vadd.f32 %v380, %v1379
    %v1381 = vpop.f32.mrf.mxu0
    %v1382 = vadd.f32 %v376, %v1381
    %v1383 = vpop.f32.mrf.mxu0
    %v1384 = vadd.f32 %v380, %v1383
    %1385 = vmatprep.mubr.bf16.mxu0 %v248
    %1386 = vmatmul.mubr.bf16.gmra.mxu0 %v247
    %v1387 = vpop.f32.mrf.mxu0
    %v1388 = vadd.f32 %v376, %v1387
    %v1389 = vpop.f32.mrf.mxu0
    %v1390 = vadd.f32 %v380, %v1389
    %v1391 = vpop.f32.mrf.mxu0
    %v1392 = vadd.f32 %v376, %v1391
    %v1393 = vpop.f32.mrf.mxu0
    %v1394 = vadd.f32 %v380, %v1393
    %1395 = vmatprep.mubr.bf16.mxu0 %v250
    %1396 = vmatmul.mubr.bf16.gmra.mxu0 %v249
    %v1397 = vpop.f32.mrf.mxu0
    %v1398 = vadd.f32 %v376, %v1397
    %v1399 = vpop.f32.mrf.mxu0
    %v1400 = vadd.f32 %v380, %v1399
    %v1401 = vpop.f32.mrf.mxu0
    %v1402 = vadd.f32 %v376, %v1401
    %v1403 = vpop.f32.mrf.mxu0
    %v1404 = vadd.f32 %v380, %v1403
    %1405 = vmatprep.mubr.bf16.mxu0 %v252
    %1406 = vmatmul.mubr.bf16.gmra.mxu0 %v251
    %v1407 = vpop.f32.mrf.mxu0
    %v1408 = vadd.f32 %v376, %v1407
    %v1409 = vpop.f32.mrf.mxu0
    %v1410 = vadd.f32 %v380, %v1409
    %v1411 = vpop.f32.mrf.mxu0
    %v1412 = vadd.f32 %v376, %v1411
    %v1413 = vpop.f32.mrf.mxu0
    %v1414 = vadd.f32 %v380, %v1413
    %1415 = vmatprep.mubr.bf16.mxu0 %v254
    %1416 = vmatmul.mubr.bf16.gmra.mxu0 %v253
    %v1417 = vpop.f32.mrf.mxu0
    %v1418 = vadd.f32 %v376, %v1417
    %v1419 = vpop.f32.mrf.mxu0
    %v1420 = vadd.f32 %v380, %v1419
    %v1421 = vpop.f32.mrf.mxu0
    %v1422 = vadd.f32 %v376, %v1421
    %v1423 = vpop.f32.mrf.mxu0
    %v1424 = vadd.f32 %v380, %v1423
    %1425 = vmatprep.mubr.bf16.mxu0 %v256
    %1426 = vmatmul.mubr.bf16.gmra.mxu0 %v255
    %v1427 = vpop.f32.mrf.mxu0
    %v1428 = vadd.f32 %v376, %v1427
    %v1429 = vpop.f32.mrf.mxu0
    %v1430 = vadd.f32 %v380, %v1429
    %v1431 = vpop.f32.mrf.mxu0
    %v1432 = vadd.f32 %v376, %v1431
    %v1433 = vpop.f32.mrf.mxu0
    %v1434 = vadd.f32 %v380, %v1433
    %1435 = vmatprep.mubr.bf16.mxu0 %v258
    %1436 = vmatmul.mubr.bf16.gmra.mxu0 %v257
    %v1437 = vpop.f32.mrf.mxu0
    %v1438 = vadd.f32 %v376, %v1437
    %v1439 = vpop.f32.mrf.mxu0
    %v1440 = vadd.f32 %v380, %v1439
    %v1441 = vpop.f32.mrf.mxu0
    %v1442 = vadd.f32 %v376, %v1441
    %v1443 = vpop.f32.mrf.mxu0
    %v1444 = vadd.f32 %v380, %v1443
    %1445 = vdwg.mxu0
    %v1446 = vpack.c.bf16 %v906, %v902
    %v1447 = vpack.c.bf16 %v916, %v912
    %v1448 = vpack.c.bf16 %v926, %v922
    %v1449 = vpack.c.bf16 %v936, %v932
    %v1450 = vpack.c.bf16 %v946, %v942
    %v1451 = vpack.c.bf16 %v956, %v952
    %v1452 = vpack.c.bf16 %v966, %v962
    %v1453 = vpack.c.bf16 %v976, %v972
    %v1454 = vpack.c.bf16 %v986, %v982
    %v1455 = vpack.c.bf16 %v996, %v992
    %v1456 = vpack.c.bf16 %v1006, %v1002
    %v1457 = vpack.c.bf16 %v1016, %v1012
    %v1458 = vpack.c.bf16 %v1026, %v1022
    %v1459 = vpack.c.bf16 %v1036, %v1032
    %v1460 = vpack.c.bf16 %v1046, %v1042
    %v1461 = vpack.c.bf16 %v1056, %v1052
    %v1462 = vpack.c.bf16 %v908, %v904
    %v1463 = vpack.c.bf16 %v918, %v914
    %v1464 = vpack.c.bf16 %v928, %v924
    %v1465 = vpack.c.bf16 %v938, %v934
    %v1466 = vpack.c.bf16 %v948, %v944
    %v1467 = vpack.c.bf16 %v958, %v954
    %v1468 = vpack.c.bf16 %v968, %v964
    %v1469 = vpack.c.bf16 %v978, %v974
    %v1470 = vpack.c.bf16 %v988, %v984
    %v1471 = vpack.c.bf16 %v998, %v994
    %v1472 = vpack.c.bf16 %v1008, %v1004
    %v1473 = vpack.c.bf16 %v1018, %v1014
    %v1474 = vpack.c.bf16 %v1028, %v1024
    %v1475 = vpack.c.bf16 %v1038, %v1034
    %v1476 = vpack.c.bf16 %v1048, %v1044
    %v1477 = vpack.c.bf16 %v1058, %v1054
    %v1478 = vpack.c.bf16 %v1099, %v1095
    %v1479 = vpack.c.bf16 %v1109, %v1105
    %v1480 = vpack.c.bf16 %v1119, %v1115
    %v1481 = vpack.c.bf16 %v1129, %v1125
    %v1482 = vpack.c.bf16 %v1139, %v1135
    %v1483 = vpack.c.bf16 %v1149, %v1145
    %v1484 = vpack.c.bf16 %v1159, %v1155
    %v1485 = vpack.c.bf16 %v1169, %v1165
    %v1486 = vpack.c.bf16 %v1179, %v1175
    %v1487 = vpack.c.bf16 %v1189, %v1185
    %v1488 = vpack.c.bf16 %v1199, %v1195
    %v1489 = vpack.c.bf16 %v1209, %v1205
    %v1490 = vpack.c.bf16 %v1219, %v1215
    %v1491 = vpack.c.bf16 %v1229, %v1225
    %v1492 = vpack.c.bf16 %v1239, %v1235
    %v1493 = vpack.c.bf16 %v1249, %v1245
    %v1494 = vpack.c.bf16 %v1101, %v1097
    %v1495 = vpack.c.bf16 %v1111, %v1107
    %v1496 = vpack.c.bf16 %v1121, %v1117
    %v1497 = vpack.c.bf16 %v1131, %v1127
    %v1498 = vpack.c.bf16 %v1141, %v1137
    %v1499 = vpack.c.bf16 %v1151, %v1147
    %v1500 = vpack.c.bf16 %v1161, %v1157
    %v1501 = vpack.c.bf16 %v1171, %v1167
    %v1502 = vpack.c.bf16 %v1181, %v1177
    %v1503 = vpack.c.bf16 %v1191, %v1187
    %v1504 = vpack.c.bf16 %v1201, %v1197
    %v1505 = vpack.c.bf16 %v1211, %v1207
    %v1506 = vpack.c.bf16 %v1221, %v1217
    %v1507 = vpack.c.bf16 %v1231, %v1227
    %v1508 = vpack.c.bf16 %v1241, %v1237
    %v1509 = vpack.c.bf16 %v1251, %v1247
    %v1542 = vunpack.c.l.b16 %v1478
    %v1543 = vunpack.c.h.b16 %v1478
    %v1544 = vunpack.c.l.b16 %v1479
    %v1545 = vunpack.c.h.b16 %v1479
    %v1546 = vunpack.c.l.b16 %v1480
    %v1547 = vunpack.c.h.b16 %v1480
    %v1548 = vunpack.c.l.b16 %v1481
    %v1549 = vunpack.c.h.b16 %v1481
    %v1550 = vunpack.c.l.b16 %v1482
    %v1551 = vunpack.c.h.b16 %v1482
    %v1552 = vunpack.c.l.b16 %v1483
    %v1553 = vunpack.c.h.b16 %v1483
    %v1554 = vunpack.c.l.b16 %v1484
    %v1555 = vunpack.c.h.b16 %v1484
    %v1556 = vunpack.c.l.b16 %v1485
    %v1557 = vunpack.c.h.b16 %v1485
    %v1558 = vunpack.c.l.b16 %v1486
    %v1559 = vunpack.c.h.b16 %v1486
    %v1560 = vunpack.c.l.b16 %v1487
    %v1561 = vunpack.c.h.b16 %v1487
    %v1562 = vunpack.c.l.b16 %v1488
    %v1563 = vunpack.c.h.b16 %v1488
    %v1564 = vunpack.c.l.b16 %v1489
    %v1565 = vunpack.c.h.b16 %v1489
    %v1566 = vunpack.c.l.b16 %v1490
    %v1567 = vunpack.c.h.b16 %v1490
    %v1568 = vunpack.c.l.b16 %v1491
    %v1569 = vunpack.c.h.b16 %v1491
    %v1570 = vunpack.c.l.b16 %v1492
    %v1571 = vunpack.c.h.b16 %v1492
    %v1572 = vunpack.c.l.b16 %v1493
    %v1573 = vunpack.c.h.b16 %v1493
    %v1574 = vunpack.c.l.b16 %v1494
    %v1575 = vunpack.c.h.b16 %v1494
    %v1576 = vunpack.c.l.b16 %v1495
    %v1577 = vunpack.c.h.b16 %v1495
    %v1578 = vunpack.c.l.b16 %v1496
    %v1579 = vunpack.c.h.b16 %v1496
    %v1580 = vunpack.c.l.b16 %v1497
    %v1581 = vunpack.c.h.b16 %v1497
    %v1582 = vunpack.c.l.b16 %v1498
    %v1583 = vunpack.c.h.b16 %v1498
    %v1584 = vunpack.c.l.b16 %v1499
    %v1585 = vunpack.c.h.b16 %v1499
    %v1586 = vunpack.c.l.b16 %v1500
    %v1587 = vunpack.c.h.b16 %v1500
    %v1588 = vunpack.c.l.b16 %v1501
    %v1589 = vunpack.c.h.b16 %v1501
    %v1590 = vunpack.c.l.b16 %v1502
    %v1591 = vunpack.c.h.b16 %v1502
    %v1592 = vunpack.c.l.b16 %v1503
    %v1593 = vunpack.c.h.b16 %v1503
    %v1594 = vunpack.c.l.b16 %v1504
    %v1595 = vunpack.c.h.b16 %v1504
    %v1596 = vunpack.c.l.b16 %v1505
    %v1597 = vunpack.c.h.b16 %v1505
    %v1598 = vunpack.c.l.b16 %v1506
    %v1599 = vunpack.c.h.b16 %v1506
    %v1600 = vunpack.c.l.b16 %v1507
    %v1601 = vunpack.c.h.b16 %v1507
    %v1602 = vunpack.c.l.b16 %v1508
    %v1603 = vunpack.c.h.b16 %v1508
    %v1604 = vunpack.c.l.b16 %v1509
    %v1605 = vunpack.c.h.b16 %v1509
    %v1606 = vpack.c.b16 %v1542, %v1542
    %v1607 = vpack.c.b16 %v1543, %v1543
    %v1608 = vpack.c.b16 %v1544, %v1544
    %v1609 = vpack.c.b16 %v1545, %v1545
    %v1610 = vpack.c.b16 %v1546, %v1546
    %v1611 = vpack.c.b16 %v1547, %v1547
    %v1612 = vpack.c.b16 %v1548, %v1548
    %v1613 = vpack.c.b16 %v1549, %v1549
    %v1614 = vpack.c.b16 %v1550, %v1550
    %v1615 = vpack.c.b16 %v1551, %v1551
    %v1616 = vpack.c.b16 %v1552, %v1552
    %v1617 = vpack.c.b16 %v1553, %v1553
    %v1618 = vpack.c.b16 %v1554, %v1554
    %v1619 = vpack.c.b16 %v1555, %v1555
    %v1620 = vpack.c.b16 %v1556, %v1556
    %v1621 = vpack.c.b16 %v1557, %v1557
    %v1622 = vpack.c.b16 %v1558, %v1558
    %v1623 = vpack.c.b16 %v1559, %v1559
    %v1624 = vpack.c.b16 %v1560, %v1560
    %v1625 = vpack.c.b16 %v1561, %v1561
    %v1626 = vpack.c.b16 %v1562, %v1562
    %v1627 = vpack.c.b16 %v1563, %v1563
    %v1628 = vpack.c.b16 %v1564, %v1564
    %v1629 = vpack.c.b16 %v1565, %v1565
    %v1630 = vpack.c.b16 %v1566, %v1566
    %v1631 = vpack.c.b16 %v1567, %v1567
    %v1632 = vpack.c.b16 %v1568, %v1568
    %v1633 = vpack.c.b16 %v1569, %v1569
    %v1634 = vpack.c.b16 %v1570, %v1570
    %v1635 = vpack.c.b16 %v1571, %v1571
    %v1636 = vpack.c.b16 %v1572, %v1572
    %v1637 = vpack.c.b16 %v1573, %v1573
    %v1638 = vpack.c.b16 %v1574, %v1574
    %v1639 = vpack.c.b16 %v1575, %v1575
    %v1640 = vpack.c.b16 %v1576, %v1576
    %v1641 = vpack.c.b16 %v1577, %v1577
    %v1642 = vpack.c.b16 %v1578, %v1578
    %v1643 = vpack.c.b16 %v1579, %v1579
    %v1644 = vpack.c.b16 %v1580, %v1580
    %v1645 = vpack.c.b16 %v1581, %v1581
    %v1646 = vpack.c.b16 %v1582, %v1582
    %v1647 = vpack.c.b16 %v1583, %v1583
    %v1648 = vpack.c.b16 %v1584, %v1584
    %v1649 = vpack.c.b16 %v1585, %v1585
    %v1650 = vpack.c.b16 %v1586, %v1586
    %v1651 = vpack.c.b16 %v1587, %v1587
    %v1652 = vpack.c.b16 %v1588, %v1588
    %v1653 = vpack.c.b16 %v1589, %v1589
    %v1654 = vpack.c.b16 %v1590, %v1590
    %v1655 = vpack.c.b16 %v1591, %v1591
    %v1656 = vpack.c.b16 %v1592, %v1592
    %v1657 = vpack.c.b16 %v1593, %v1593
    %v1658 = vpack.c.b16 %v1594, %v1594
    %v1659 = vpack.c.b16 %v1595, %v1595
    %v1660 = vpack.c.b16 %v1596, %v1596
    %v1661 = vpack.c.b16 %v1597, %v1597
    %v1662 = vpack.c.b16 %v1598, %v1598
    %v1663 = vpack.c.b16 %v1599, %v1599
    %v1664 = vpack.c.b16 %v1600, %v1600
    %v1665 = vpack.c.b16 %v1601, %v1601
    %v1666 = vpack.c.b16 %v1602, %v1602
    %v1667 = vpack.c.b16 %v1603, %v1603
    %v1668 = vpack.c.b16 %v1604, %v1604
    %v1669 = vpack.c.b16 %v1605, %v1605
    %1734 = vst [vmem:[#allocation2] sm:$0xf] %v1606
    %1735 = vst [vmem:[#allocation2 + $0x4] sm:$0xf] %v1607
    %1736 = vst [vmem:[#allocation2 + $0x8] sm:$0xf] %v1608
    %1737 = vst [vmem:[#allocation2 + $0xc] sm:$0xf] %v1609
    %1738 = vst [vmem:[#allocation2 + $0x10] sm:$0xf] %v1610
    %1739 = vst [vmem:[#allocation2 + $0x14] sm:$0xf] %v1611
    %1740 = vst [vmem:[#allocation2 + $0x18] sm:$0xf] %v1612
    %1741 = vst [vmem:[#allocation2 + $0x1c] sm:$0xf] %v1613
    %1742 = vst [vmem:[#allocation2 + $0x20] sm:$0xf] %v1614
    %1743 = vst [vmem:[#allocation2 + $0x24] sm:$0xf] %v1615
    %1744 = vst [vmem:[#allocation2 + $0x28] sm:$0xf] %v1616
    %1745 = vst [vmem:[#allocation2 + $0x2c] sm:$0xf] %v1617
    %1746 = vst [vmem:[#allocation2 + $0x30] sm:$0xf] %v1618
    %1747 = vst [vmem:[#allocation2 + $0x34] sm:$0xf] %v1619
    %1748 = vst [vmem:[#allocation2 + $0x38] sm:$0xf] %v1620
    %1749 = vst [vmem:[#allocation2 + $0x3c] sm:$0xf] %v1621
    %1750 = vst [vmem:[#allocation2 + $0x40] sm:$0xf] %v1622
    %1751 = vst [vmem:[#allocation2 + $0x44] sm:$0xf] %v1623
    %1752 = vst [vmem:[#allocation2 + $0x48] sm:$0xf] %v1624
    %1753 = vst [vmem:[#allocation2 + $0x4c] sm:$0xf] %v1625
    %1754 = vst [vmem:[#allocation2 + $0x50] sm:$0xf] %v1626
    %1755 = vst [vmem:[#allocation2 + $0x54] sm:$0xf] %v1627
    %1756 = vst [vmem:[#allocation2 + $0x58] sm:$0xf] %v1628
    %1757 = vst [vmem:[#allocation2 + $0x5c] sm:$0xf] %v1629
    %1758 = vst [vmem:[#allocation2 + $0x60] sm:$0xf] %v1630
    %1759 = vst [vmem:[#allocation2 + $0x64] sm:$0xf] %v1631
    %1760 = vst [vmem:[#allocation2 + $0x68] sm:$0xf] %v1632
    %1761 = vst [vmem:[#allocation2 + $0x6c] sm:$0xf] %v1633
    %1762 = vst [vmem:[#allocation2 + $0x70] sm:$0xf] %v1634
    %1763 = vst [vmem:[#allocation2 + $0x74] sm:$0xf] %v1635
    %1764 = vst [vmem:[#allocation2 + $0x78] sm:$0xf] %v1636
    %1765 = vst [vmem:[#allocation2 + $0x7c] sm:$0xf] %v1637
    %1766 = vst [vmem:[#allocation2 + $0x80] sm:$0xf] %v1638
    %1767 = vst [vmem:[#allocation2 + $0x84] sm:$0xf] %v1639
    %1768 = vst [vmem:[#allocation2 + $0x88] sm:$0xf] %v1640
    %1769 = vst [vmem:[#allocation2 + $0x8c] sm:$0xf] %v1641
    %1770 = vst [vmem:[#allocation2 + $0x90] sm:$0xf] %v1642
    %1771 = vst [vmem:[#allocation2 + $0x94] sm:$0xf] %v1643
    %1772 = vst [vmem:[#allocation2 + $0x98] sm:$0xf] %v1644
    %1773 = vst [vmem:[#allocation2 + $0x9c] sm:$0xf] %v1645
    %1774 = vst [vmem:[#allocation2 + $0xa0] sm:$0xf] %v1646
    %1775 = vst [vmem:[#allocation2 + $0xa4] sm:$0xf] %v1647
    %1776 = vst [vmem:[#allocation2 + $0xa8] sm:$0xf] %v1648
    %1777 = vst [vmem:[#allocation2 + $0xac] sm:$0xf] %v1649
    %1778 = vst [vmem:[#allocation2 + $0xb0] sm:$0xf] %v1650
    %1779 = vst [vmem:[#allocation2 + $0xb4] sm:$0xf] %v1651
    %1780 = vst [vmem:[#allocation2 + $0xb8] sm:$0xf] %v1652
    %1781 = vst [vmem:[#allocation2 + $0xbc] sm:$0xf] %v1653
    %1782 = vst [vmem:[#allocation2 + $0xc0] sm:$0xf] %v1654
    %1783 = vst [vmem:[#allocation2 + $0xc4] sm:$0xf] %v1655
    %1784 = vst [vmem:[#allocation2 + $0xc8] sm:$0xf] %v1656
    %1785 = vst [vmem:[#allocation2 + $0xcc] sm:$0xf] %v1657
    %1786 = vst [vmem:[#allocation2 + $0xd0] sm:$0xf] %v1658
    %1787 = vst [vmem:[#allocation2 + $0xd4] sm:$0xf] %v1659
    %1788 = vst [vmem:[#allocation2 + $0xd8] sm:$0xf] %v1660
    %1789 = vst [vmem:[#allocation2 + $0xdc] sm:$0xf] %v1661
    %1790 = vst [vmem:[#allocation2 + $0xe0] sm:$0xf] %v1662
    %1791 = vst [vmem:[#allocation2 + $0xe4] sm:$0xf] %v1663
    %1792 = vst [vmem:[#allocation2 + $0xe8] sm:$0xf] %v1664
    %1793 = vst [vmem:[#allocation2 + $0xec] sm:$0xf] %v1665
    %1794 = vst [vmem:[#allocation2 + $0xf0] sm:$0xf] %v1666
    %1795 = vst [vmem:[#allocation2 + $0xf4] sm:$0xf] %v1667
    %1796 = vst [vmem:[#allocation2 + $0xf8] sm:$0xf] %v1668
    %1797 = vst [vmem:[#allocation2 + $0xfc] sm:$0xf] %v1669
    %v1798 = vpack.c.bf16 %v1292, %v1288
    %v1799 = vpack.c.bf16 %v1302, %v1298
    %v1800 = vpack.c.bf16 %v1312, %v1308
    %v1801 = vpack.c.bf16 %v1322, %v1318
    %v1802 = vpack.c.bf16 %v1332, %v1328
    %v1803 = vpack.c.bf16 %v1342, %v1338
    %v1804 = vpack.c.bf16 %v1352, %v1348
    %v1805 = vpack.c.bf16 %v1362, %v1358
    %v1806 = vpack.c.bf16 %v1372, %v1368
    %v1807 = vpack.c.bf16 %v1382, %v1378
    %v1808 = vpack.c.bf16 %v1392, %v1388
    %v1809 = vpack.c.bf16 %v1402, %v1398
    %v1810 = vpack.c.bf16 %v1412, %v1408
    %v1811 = vpack.c.bf16 %v1422, %v1418
    %v1812 = vpack.c.bf16 %v1432, %v1428
    %v1813 = vpack.c.bf16 %v1442, %v1438
    %v1814 = vpack.c.bf16 %v1294, %v1290
    %v1815 = vpack.c.bf16 %v1304, %v1300
    %v1816 = vpack.c.bf16 %v1314, %v1310
    %v1817 = vpack.c.bf16 %v1324, %v1320
    %v1818 = vpack.c.bf16 %v1334, %v1330
    %v1819 = vpack.c.bf16 %v1344, %v1340
    %v1820 = vpack.c.bf16 %v1354, %v1350
    %v1821 = vpack.c.bf16 %v1364, %v1360
    %v1822 = vpack.c.bf16 %v1374, %v1370
    %v1823 = vpack.c.bf16 %v1384, %v1380
    %v1824 = vpack.c.bf16 %v1394, %v1390
    %v1825 = vpack.c.bf16 %v1404, %v1400
    %v1826 = vpack.c.bf16 %v1414, %v1410
    %v1827 = vpack.c.bf16 %v1424, %v1420
    %v1828 = vpack.c.bf16 %v1434, %v1430
    %v1829 = vpack.c.bf16 %v1444, %v1440
    %v1862 = vunpack.c.l.b16 %v1798
    %v1863 = vunpack.c.h.b16 %v1798
    %v1864 = vunpack.c.l.b16 %v1799
    %v1865 = vunpack.c.h.b16 %v1799
    %v1866 = vunpack.c.l.b16 %v1800
    %v1867 = vunpack.c.h.b16 %v1800
    %v1868 = vunpack.c.l.b16 %v1801
    %v1869 = vunpack.c.h.b16 %v1801
    %v1870 = vunpack.c.l.b16 %v1802
    %v1871 = vunpack.c.h.b16 %v1802
    %v1872 = vunpack.c.l.b16 %v1803
    %v1873 = vunpack.c.h.b16 %v1803
    %v1874 = vunpack.c.l.b16 %v1804
    %v1875 = vunpack.c.h.b16 %v1804
    %v1876 = vunpack.c.l.b16 %v1805
    %v1877 = vunpack.c.h.b16 %v1805
    %v1878 = vunpack.c.l.b16 %v1806
    %v1879 = vunpack.c.h.b16 %v1806
    %v1880 = vunpack.c.l.b16 %v1807
    %v1881 = vunpack.c.h.b16 %v1807
    %v1882 = vunpack.c.l.b16 %v1808
    %v1883 = vunpack.c.h.b16 %v1808
    %v1884 = vunpack.c.l.b16 %v1809
    %v1885 = vunpack.c.h.b16 %v1809
    %v1886 = vunpack.c.l.b16 %v1810
    %v1887 = vunpack.c.h.b16 %v1810
    %v1888 = vunpack.c.l.b16 %v1811
    %v1889 = vunpack.c.h.b16 %v1811
    %v1890 = vunpack.c.l.b16 %v1812
    %v1891 = vunpack.c.h.b16 %v1812
    %v1892 = vunpack.c.l.b16 %v1813
    %v1893 = vunpack.c.h.b16 %v1813
    %v1894 = vunpack.c.l.b16 %v1814
    %v1895 = vunpack.c.h.b16 %v1814
    %v1896 = vunpack.c.l.b16 %v1815
    %v1897 = vunpack.c.h.b16 %v1815
    %v1898 = vunpack.c.l.b16 %v1816
    %v1899 = vunpack.c.h.b16 %v1816
    %v1900 = vunpack.c.l.b16 %v1817
    %v1901 = vunpack.c.h.b16 %v1817
    %v1902 = vunpack.c.l.b16 %v1818
    %v1903 = vunpack.c.h.b16 %v1818
    %v1904 = vunpack.c.l.b16 %v1819
    %v1905 = vunpack.c.h.b16 %v1819
    %v1906 = vunpack.c.l.b16 %v1820
    %v1907 = vunpack.c.h.b16 %v1820
    %v1908 = vunpack.c.l.b16 %v1821
    %v1909 = vunpack.c.h.b16 %v1821
    %v1910 = vunpack.c.l.b16 %v1822
    %v1911 = vunpack.c.h.b16 %v1822
    %v1912 = vunpack.c.l.b16 %v1823
    %v1913 = vunpack.c.h.b16 %v1823
    %v1914 = vunpack.c.l.b16 %v1824
    %v1915 = vunpack.c.h.b16 %v1824
    %v1916 = vunpack.c.l.b16 %v1825
    %v1917 = vunpack.c.h.b16 %v1825
    %v1918 = vunpack.c.l.b16 %v1826
    %v1919 = vunpack.c.h.b16 %v1826
    %v1920 = vunpack.c.l.b16 %v1827
    %v1921 = vunpack.c.h.b16 %v1827
    %v1922 = vunpack.c.l.b16 %v1828
    %v1923 = vunpack.c.h.b16 %v1828
    %v1924 = vunpack.c.l.b16 %v1829
    %v1925 = vunpack.c.h.b16 %v1829
    %v1926 = vpack.c.b16 %v1862, %v1862
    %v1927 = vpack.c.b16 %v1863, %v1863
    %v1928 = vpack.c.b16 %v1864, %v1864
    %v1929 = vpack.c.b16 %v1865, %v1865
    %v1930 = vpack.c.b16 %v1866, %v1866
    %v1931 = vpack.c.b16 %v1867, %v1867
    %v1932 = vpack.c.b16 %v1868, %v1868
    %v1933 = vpack.c.b16 %v1869, %v1869
    %v1934 = vpack.c.b16 %v1870, %v1870
    %v1935 = vpack.c.b16 %v1871, %v1871
    %v1936 = vpack.c.b16 %v1872, %v1872
    %v1937 = vpack.c.b16 %v1873, %v1873
    %v1938 = vpack.c.b16 %v1874, %v1874
    %v1939 = vpack.c.b16 %v1875, %v1875
    %v1940 = vpack.c.b16 %v1876, %v1876
    %v1941 = vpack.c.b16 %v1877, %v1877
    %v1942 = vpack.c.b16 %v1878, %v1878
    %v1943 = vpack.c.b16 %v1879, %v1879
    %v1944 = vpack.c.b16 %v1880, %v1880
    %v1945 = vpack.c.b16 %v1881, %v1881
    %v1946 = vpack.c.b16 %v1882, %v1882
    %v1947 = vpack.c.b16 %v1883, %v1883
    %v1948 = vpack.c.b16 %v1884, %v1884
    %v1949 = vpack.c.b16 %v1885, %v1885
    %v1950 = vpack.c.b16 %v1886, %v1886
    %v1951 = vpack.c.b16 %v1887, %v1887
    %v1952 = vpack.c.b16 %v1888, %v1888
    %v1953 = vpack.c.b16 %v1889, %v1889
    %v1954 = vpack.c.b16 %v1890, %v1890
    %v1955 = vpack.c.b16 %v1891, %v1891
    %v1956 = vpack.c.b16 %v1892, %v1892
    %v1957 = vpack.c.b16 %v1893, %v1893
    %v1958 = vpack.c.b16 %v1894, %v1894
    %v1959 = vpack.c.b16 %v1895, %v1895
    %v1960 = vpack.c.b16 %v1896, %v1896
    %v1961 = vpack.c.b16 %v1897, %v1897
    %v1962 = vpack.c.b16 %v1898, %v1898
    %v1963 = vpack.c.b16 %v1899, %v1899
    %v1964 = vpack.c.b16 %v1900, %v1900
    %v1965 = vpack.c.b16 %v1901, %v1901
    %v1966 = vpack.c.b16 %v1902, %v1902
    %v1967 = vpack.c.b16 %v1903, %v1903
    %v1968 = vpack.c.b16 %v1904, %v1904
    %v1969 = vpack.c.b16 %v1905, %v1905
    %v1970 = vpack.c.b16 %v1906, %v1906
    %v1971 = vpack.c.b16 %v1907, %v1907
    %v1972 = vpack.c.b16 %v1908, %v1908
    %v1973 = vpack.c.b16 %v1909, %v1909
    %v1974 = vpack.c.b16 %v1910, %v1910
    %v1975 = vpack.c.b16 %v1911, %v1911
    %v1976 = vpack.c.b16 %v1912, %v1912
    %v1977 = vpack.c.b16 %v1913, %v1913
    %v1978 = vpack.c.b16 %v1914, %v1914
    %v1979 = vpack.c.b16 %v1915, %v1915
    %v1980 = vpack.c.b16 %v1916, %v1916
    %v1981 = vpack.c.b16 %v1917, %v1917
    %v1982 = vpack.c.b16 %v1918, %v1918
    %v1983 = vpack.c.b16 %v1919, %v1919
    %v1984 = vpack.c.b16 %v1920, %v1920
    %v1985 = vpack.c.b16 %v1921, %v1921
    %v1986 = vpack.c.b16 %v1922, %v1922
    %v1987 = vpack.c.b16 %v1923, %v1923
    %v1988 = vpack.c.b16 %v1924, %v1924
    %v1989 = vpack.c.b16 %v1925, %v1925
    %2054 = vst [vmem:[#allocation3] sm:$0xf] %v1926
    %2055 = vst [vmem:[#allocation3 + $0x4] sm:$0xf] %v1927
    %2056 = vst [vmem:[#allocation3 + $0x8] sm:$0xf] %v1928
    %2057 = vst [vmem:[#allocation3 + $0xc] sm:$0xf] %v1929
    %2058 = vst [vmem:[#allocation3 + $0x10] sm:$0xf] %v1930
    %2059 = vst [vmem:[#allocation3 + $0x14] sm:$0xf] %v1931
    %2060 = vst [vmem:[#allocation3 + $0x18] sm:$0xf] %v1932
    %2061 = vst [vmem:[#allocation3 + $0x1c] sm:$0xf] %v1933
    %2062 = vst [vmem:[#allocation3 + $0x20] sm:$0xf] %v1934
    %2063 = vst [vmem:[#allocation3 + $0x24] sm:$0xf] %v1935
    %2064 = vst [vmem:[#allocation3 + $0x28] sm:$0xf] %v1936
    %2065 = vst [vmem:[#allocation3 + $0x2c] sm:$0xf] %v1937
    %2066 = vst [vmem:[#allocation3 + $0x30] sm:$0xf] %v1938
    %2067 = vst [vmem:[#allocation3 + $0x34] sm:$0xf] %v1939
    %2068 = vst [vmem:[#allocation3 + $0x38] sm:$0xf] %v1940
    %2069 = vst [vmem:[#allocation3 + $0x3c] sm:$0xf] %v1941
    %2070 = vst [vmem:[#allocation3 + $0x40] sm:$0xf] %v1942
    %2071 = vst [vmem:[#allocation3 + $0x44] sm:$0xf] %v1943
    %2072 = vst [vmem:[#allocation3 + $0x48] sm:$0xf] %v1944
    %2073 = vst [vmem:[#allocation3 + $0x4c] sm:$0xf] %v1945
    %2074 = vst [vmem:[#allocation3 + $0x50] sm:$0xf] %v1946
    %2075 = vst [vmem:[#allocation3 + $0x54] sm:$0xf] %v1947
    %2076 = vst [vmem:[#allocation3 + $0x58] sm:$0xf] %v1948
    %2077 = vst [vmem:[#allocation3 + $0x5c] sm:$0xf] %v1949
    %2078 = vst [vmem:[#allocation3 + $0x60] sm:$0xf] %v1950
    %2079 = vst [vmem:[#allocation3 + $0x64] sm:$0xf] %v1951
    %2080 = vst [vmem:[#allocation3 + $0x68] sm:$0xf] %v1952
    %2081 = vst [vmem:[#allocation3 + $0x6c] sm:$0xf] %v1953
    %2082 = vst [vmem:[#allocation3 + $0x70] sm:$0xf] %v1954
    %2083 = vst [vmem:[#allocation3 + $0x74] sm:$0xf] %v1955
    %2084 = vst [vmem:[#allocation3 + $0x78] sm:$0xf] %v1956
    %2085 = vst [vmem:[#allocation3 + $0x7c] sm:$0xf] %v1957
    %2086 = vst [vmem:[#allocation3 + $0x80] sm:$0xf] %v1958
    %2087 = vst [vmem:[#allocation3 + $0x84] sm:$0xf] %v1959
    %2088 = vst [vmem:[#allocation3 + $0x88] sm:$0xf] %v1960
    %2089 = vst [vmem:[#allocation3 + $0x8c] sm:$0xf] %v1961
    %2090 = vst [vmem:[#allocation3 + $0x90] sm:$0xf] %v1962
    %2091 = vst [vmem:[#allocation3 + $0x94] sm:$0xf] %v1963
    %2092 = vst [vmem:[#allocation3 + $0x98] sm:$0xf] %v1964
    %2093 = vst [vmem:[#allocation3 + $0x9c] sm:$0xf] %v1965
    %2094 = vst [vmem:[#allocation3 + $0xa0] sm:$0xf] %v1966
    %2095 = vst [vmem:[#allocation3 + $0xa4] sm:$0xf] %v1967
    %2096 = vst [vmem:[#allocation3 + $0xa8] sm:$0xf] %v1968
    %2097 = vst [vmem:[#allocation3 + $0xac] sm:$0xf] %v1969
    %2098 = vst [vmem:[#allocation3 + $0xb0] sm:$0xf] %v1970
    %2099 = vst [vmem:[#allocation3 + $0xb4] sm:$0xf] %v1971
    %2100 = vst [vmem:[#allocation3 + $0xb8] sm:$0xf] %v1972
    %2101 = vst [vmem:[#allocation3 + $0xbc] sm:$0xf] %v1973
    %2102 = vst [vmem:[#allocation3 + $0xc0] sm:$0xf] %v1974
    %2103 = vst [vmem:[#allocation3 + $0xc4] sm:$0xf] %v1975
    %2104 = vst [vmem:[#allocation3 + $0xc8] sm:$0xf] %v1976
    %2105 = vst [vmem:[#allocation3 + $0xcc] sm:$0xf] %v1977
    %2106 = vst [vmem:[#allocation3 + $0xd0] sm:$0xf] %v1978
    %2107 = vst [vmem:[#allocation3 + $0xd4] sm:$0xf] %v1979
    %2108 = vst [vmem:[#allocation3 + $0xd8] sm:$0xf] %v1980
    %2109 = vst [vmem:[#allocation3 + $0xdc] sm:$0xf] %v1981
    %2110 = vst [vmem:[#allocation3 + $0xe0] sm:$0xf] %v1982
    %2111 = vst [vmem:[#allocation3 + $0xe4] sm:$0xf] %v1983
    %2112 = vst [vmem:[#allocation3 + $0xe8] sm:$0xf] %v1984
    %2113 = vst [vmem:[#allocation3 + $0xec] sm:$0xf] %v1985
    %2114 = vst [vmem:[#allocation3 + $0xf0] sm:$0xf] %v1986
    %2115 = vst [vmem:[#allocation3 + $0xf4] sm:$0xf] %v1987
    %2116 = vst [vmem:[#allocation3 + $0xf8] sm:$0xf] %v1988
    %2117 = vst [vmem:[#allocation3 + $0xfc] sm:$0xf] %v1989
    %vm2118 = vcmask 7168
    %2119 = vst.msk [vmem:[#allocation4] sm:$0xff] %vm2118, -inf
    %2120 = vst.msk [vmem:[#allocation4 + $0x8] sm:$0xff] %vm2118, -inf
    %2121 = vst.msk [vmem:[#allocation4 + $0x10] sm:$0xff] %vm2118, -inf
    %2122 = vst.msk [vmem:[#allocation4 + $0x18] sm:$0xff] %vm2118, -inf
    %2123 = vst.msk [vmem:[#allocation4 + $0x20] sm:$0xff] %vm2118, -inf
    %2124 = vst.msk [vmem:[#allocation4 + $0x28] sm:$0xff] %vm2118, -inf
    %2125 = vst.msk [vmem:[#allocation4 + $0x30] sm:$0xff] %vm2118, -inf
    %2126 = vst.msk [vmem:[#allocation4 + $0x38] sm:$0xff] %vm2118, -inf
    %2127 = vst.msk [vmem:[#allocation4 + $0x40] sm:$0xff] %vm2118, -inf
    %2128 = vst.msk [vmem:[#allocation4 + $0x48] sm:$0xff] %vm2118, -inf
    %2129 = vst.msk [vmem:[#allocation4 + $0x50] sm:$0xff] %vm2118, -inf
    %2130 = vst.msk [vmem:[#allocation4 + $0x58] sm:$0xff] %vm2118, -inf
    %2131 = vst.msk [vmem:[#allocation4 + $0x60] sm:$0xff] %vm2118, -inf
    %2132 = vst.msk [vmem:[#allocation4 + $0x68] sm:$0xff] %vm2118, -inf
    %2133 = vst.msk [vmem:[#allocation4 + $0x70] sm:$0xff] %vm2118, -inf
    %2134 = vst.msk [vmem:[#allocation4 + $0x78] sm:$0xff] %vm2118, -inf
    %2135 = vst.msk [vmem:[#allocation4 + $0x80] sm:$0xff] %vm2118, -inf
    %2136 = vst.msk [vmem:[#allocation4 + $0x88] sm:$0xff] %vm2118, -inf
    %2137 = vst.msk [vmem:[#allocation4 + $0x90] sm:$0xff] %vm2118, -inf
    %2138 = vst.msk [vmem:[#allocation4 + $0x98] sm:$0xff] %vm2118, -inf
    %2139 = vst.msk [vmem:[#allocation4 + $0xa0] sm:$0xff] %vm2118, -inf
    %2140 = vst.msk [vmem:[#allocation4 + $0xa8] sm:$0xff] %vm2118, -inf
    %2141 = vst.msk [vmem:[#allocation4 + $0xb0] sm:$0xff] %vm2118, -inf
    %2142 = vst.msk [vmem:[#allocation4 + $0xb8] sm:$0xff] %vm2118, -inf
    %2143 = vst.msk [vmem:[#allocation4 + $0xc0] sm:$0xff] %vm2118, -inf
    %2144 = vst.msk [vmem:[#allocation4 + $0xc8] sm:$0xff] %vm2118, -inf
    %2145 = vst.msk [vmem:[#allocation4 + $0xd0] sm:$0xff] %vm2118, -inf
    %2146 = vst.msk [vmem:[#allocation4 + $0xd8] sm:$0xff] %vm2118, -inf
    %2147 = vst.msk [vmem:[#allocation4 + $0xe0] sm:$0xff] %vm2118, -inf
    %2148 = vst.msk [vmem:[#allocation4 + $0xe8] sm:$0xff] %vm2118, -inf
    %2149 = vst.msk [vmem:[#allocation4 + $0xf0] sm:$0xff] %vm2118, -inf
    %2150 = vst.msk [vmem:[#allocation4 + $0xf8] sm:$0xff] %vm2118, -inf
    %2151 = vst.msk [vmem:[#allocation4 + $0x100] sm:$0xff] %vm2118, -inf
    %2152 = vst.msk [vmem:[#allocation4 + $0x108] sm:$0xff] %vm2118, -inf
    %2153 = vst.msk [vmem:[#allocation4 + $0x110] sm:$0xff] %vm2118, -inf
    %2154 = vst.msk [vmem:[#allocation4 + $0x118] sm:$0xff] %vm2118, -inf
    %2155 = vst.msk [vmem:[#allocation4 + $0x120] sm:$0xff] %vm2118, -inf
    %2156 = vst.msk [vmem:[#allocation4 + $0x128] sm:$0xff] %vm2118, -inf
    %2157 = vst.msk [vmem:[#allocation4 + $0x130] sm:$0xff] %vm2118, -inf
    %2158 = vst.msk [vmem:[#allocation4 + $0x138] sm:$0xff] %vm2118, -inf
    %2159 = vst.msk [vmem:[#allocation4 + $0x140] sm:$0xff] %vm2118, -inf
    %2160 = vst.msk [vmem:[#allocation4 + $0x148] sm:$0xff] %vm2118, -inf
    %2161 = vst.msk [vmem:[#allocation4 + $0x150] sm:$0xff] %vm2118, -inf
    %2162 = vst.msk [vmem:[#allocation4 + $0x158] sm:$0xff] %vm2118, -inf
    %2163 = vst.msk [vmem:[#allocation4 + $0x160] sm:$0xff] %vm2118, -inf
    %2164 = vst.msk [vmem:[#allocation4 + $0x168] sm:$0xff] %vm2118, -inf
    %2165 = vst.msk [vmem:[#allocation4 + $0x170] sm:$0xff] %vm2118, -inf
    %2166 = vst.msk [vmem:[#allocation4 + $0x178] sm:$0xff] %vm2118, -inf
    %2167 = vst.msk [vmem:[#allocation4 + $0x180] sm:$0xff] %vm2118, -inf
    %2168 = vst.msk [vmem:[#allocation4 + $0x188] sm:$0xff] %vm2118, -inf
    %2169 = vst.msk [vmem:[#allocation4 + $0x190] sm:$0xff] %vm2118, -inf
    %2170 = vst.msk [vmem:[#allocation4 + $0x198] sm:$0xff] %vm2118, -inf
    %2171 = vst.msk [vmem:[#allocation4 + $0x1a0] sm:$0xff] %vm2118, -inf
    %2172 = vst.msk [vmem:[#allocation4 + $0x1a8] sm:$0xff] %vm2118, -inf
    %2173 = vst.msk [vmem:[#allocation4 + $0x1b0] sm:$0xff] %vm2118, -inf
    %2174 = vst.msk [vmem:[#allocation4 + $0x1b8] sm:$0xff] %vm2118, -inf
    %2175 = vst.msk [vmem:[#allocation4 + $0x1c0] sm:$0xff] %vm2118, -inf
    %2176 = vst.msk [vmem:[#allocation4 + $0x1c8] sm:$0xff] %vm2118, -inf
    %2177 = vst.msk [vmem:[#allocation4 + $0x1d0] sm:$0xff] %vm2118, -inf
    %2178 = vst.msk [vmem:[#allocation4 + $0x1d8] sm:$0xff] %vm2118, -inf
    %2179 = vst.msk [vmem:[#allocation4 + $0x1e0] sm:$0xff] %vm2118, -inf
    %2180 = vst.msk [vmem:[#allocation4 + $0x1e8] sm:$0xff] %vm2118, -inf
    %2181 = vst.msk [vmem:[#allocation4 + $0x1f0] sm:$0xff] %vm2118, -inf
    %2182 = vst.msk [vmem:[#allocation4 + $0x1f8] sm:$0xff] %vm2118, -inf
    %2183 = vst.msk [vmem:[#allocation5] sm:$0xff] %vm2118, 0.0
    %2184 = vst.msk [vmem:[#allocation5 + $0x8] sm:$0xff] %vm2118, 0.0
    %2185 = vst.msk [vmem:[#allocation5 + $0x10] sm:$0xff] %vm2118, 0.0
    %2186 = vst.msk [vmem:[#allocation5 + $0x18] sm:$0xff] %vm2118, 0.0
    %2187 = vst.msk [vmem:[#allocation5 + $0x20] sm:$0xff] %vm2118, 0.0
    %2188 = vst.msk [vmem:[#allocation5 + $0x28] sm:$0xff] %vm2118, 0.0
    %2189 = vst.msk [vmem:[#allocation5 + $0x30] sm:$0xff] %vm2118, 0.0
    %2190 = vst.msk [vmem:[#allocation5 + $0x38] sm:$0xff] %vm2118, 0.0
    %2191 = vst.msk [vmem:[#allocation5 + $0x40] sm:$0xff] %vm2118, 0.0
    %2192 = vst.msk [vmem:[#allocation5 + $0x48] sm:$0xff] %vm2118, 0.0
    %2193 = vst.msk [vmem:[#allocation5 + $0x50] sm:$0xff] %vm2118, 0.0
    %2194 = vst.msk [vmem:[#allocation5 + $0x58] sm:$0xff] %vm2118, 0.0
    %2195 = vst.msk [vmem:[#allocation5 + $0x60] sm:$0xff] %vm2118, 0.0
    %2196 = vst.msk [vmem:[#allocation5 + $0x68] sm:$0xff] %vm2118, 0.0
    %2197 = vst.msk [vmem:[#allocation5 + $0x70] sm:$0xff] %vm2118, 0.0
    %2198 = vst.msk [vmem:[#allocation5 + $0x78] sm:$0xff] %vm2118, 0.0
    %2199 = vst.msk [vmem:[#allocation5 + $0x80] sm:$0xff] %vm2118, 0.0
    %2200 = vst.msk [vmem:[#allocation5 + $0x88] sm:$0xff] %vm2118, 0.0
    %2201 = vst.msk [vmem:[#allocation5 + $0x90] sm:$0xff] %vm2118, 0.0
    %2202 = vst.msk [vmem:[#allocation5 + $0x98] sm:$0xff] %vm2118, 0.0
    %2203 = vst.msk [vmem:[#allocation5 + $0xa0] sm:$0xff] %vm2118, 0.0
    %2204 = vst.msk [vmem:[#allocation5 + $0xa8] sm:$0xff] %vm2118, 0.0
    %2205 = vst.msk [vmem:[#allocation5 + $0xb0] sm:$0xff] %vm2118, 0.0
    %2206 = vst.msk [vmem:[#allocation5 + $0xb8] sm:$0xff] %vm2118, 0.0
    %2207 = vst.msk [vmem:[#allocation5 + $0xc0] sm:$0xff] %vm2118, 0.0
    %2208 = vst.msk [vmem:[#allocation5 + $0xc8] sm:$0xff] %vm2118, 0.0
    %2209 = vst.msk [vmem:[#allocation5 + $0xd0] sm:$0xff] %vm2118, 0.0
    %2210 = vst.msk [vmem:[#allocation5 + $0xd8] sm:$0xff] %vm2118, 0.0
    %2211 = vst.msk [vmem:[#allocation5 + $0xe0] sm:$0xff] %vm2118, 0.0
    %2212 = vst.msk [vmem:[#allocation5 + $0xe8] sm:$0xff] %vm2118, 0.0
    %2213 = vst.msk [vmem:[#allocation5 + $0xf0] sm:$0xff] %vm2118, 0.0
    %2214 = vst.msk [vmem:[#allocation5 + $0xf8] sm:$0xff] %vm2118, 0.0
    %2215 = vst.msk [vmem:[#allocation5 + $0x100] sm:$0xff] %vm2118, 0.0
    %2216 = vst.msk [vmem:[#allocation5 + $0x108] sm:$0xff] %vm2118, 0.0
    %2217 = vst.msk [vmem:[#allocation5 + $0x110] sm:$0xff] %vm2118, 0.0
    %2218 = vst.msk [vmem:[#allocation5 + $0x118] sm:$0xff] %vm2118, 0.0
    %2219 = vst.msk [vmem:[#allocation5 + $0x120] sm:$0xff] %vm2118, 0.0
    %2220 = vst.msk [vmem:[#allocation5 + $0x128] sm:$0xff] %vm2118, 0.0
    %2221 = vst.msk [vmem:[#allocation5 + $0x130] sm:$0xff] %vm2118, 0.0
    %2222 = vst.msk [vmem:[#allocation5 + $0x138] sm:$0xff] %vm2118, 0.0
    %2223 = vst.msk [vmem:[#allocation5 + $0x140] sm:$0xff] %vm2118, 0.0
    %2224 = vst.msk [vmem:[#allocation5 + $0x148] sm:$0xff] %vm2118, 0.0
    %2225 = vst.msk [vmem:[#allocation5 + $0x150] sm:$0xff] %vm2118, 0.0
    %2226 = vst.msk [vmem:[#allocation5 + $0x158] sm:$0xff] %vm2118, 0.0
    %2227 = vst.msk [vmem:[#allocation5 + $0x160] sm:$0xff] %vm2118, 0.0
    %2228 = vst.msk [vmem:[#allocation5 + $0x168] sm:$0xff] %vm2118, 0.0
    %2229 = vst.msk [vmem:[#allocation5 + $0x170] sm:$0xff] %vm2118, 0.0
    %2230 = vst.msk [vmem:[#allocation5 + $0x178] sm:$0xff] %vm2118, 0.0
    %2231 = vst.msk [vmem:[#allocation5 + $0x180] sm:$0xff] %vm2118, 0.0
    %2232 = vst.msk [vmem:[#allocation5 + $0x188] sm:$0xff] %vm2118, 0.0
    %2233 = vst.msk [vmem:[#allocation5 + $0x190] sm:$0xff] %vm2118, 0.0
    %2234 = vst.msk [vmem:[#allocation5 + $0x198] sm:$0xff] %vm2118, 0.0
    %2235 = vst.msk [vmem:[#allocation5 + $0x1a0] sm:$0xff] %vm2118, 0.0
    %2236 = vst.msk [vmem:[#allocation5 + $0x1a8] sm:$0xff] %vm2118, 0.0
    %2237 = vst.msk [vmem:[#allocation5 + $0x1b0] sm:$0xff] %vm2118, 0.0
    %2238 = vst.msk [vmem:[#allocation5 + $0x1b8] sm:$0xff] %vm2118, 0.0
    %2239 = vst.msk [vmem:[#allocation5 + $0x1c0] sm:$0xff] %vm2118, 0.0
    %2240 = vst.msk [vmem:[#allocation5 + $0x1c8] sm:$0xff] %vm2118, 0.0
    %2241 = vst.msk [vmem:[#allocation5 + $0x1d0] sm:$0xff] %vm2118, 0.0
    %2242 = vst.msk [vmem:[#allocation5 + $0x1d8] sm:$0xff] %vm2118, 0.0
    %2243 = vst.msk [vmem:[#allocation5 + $0x1e0] sm:$0xff] %vm2118, 0.0
    %2244 = vst.msk [vmem:[#allocation5 + $0x1e8] sm:$0xff] %vm2118, 0.0
    %2245 = vst.msk [vmem:[#allocation5 + $0x1f0] sm:$0xff] %vm2118, 0.0
    %2246 = vst.msk [vmem:[#allocation5 + $0x1f8] sm:$0xff] %vm2118, 0.0
    %2247 = vst [vmem:[#allocation6] sm:$0xff] 0.0
    %2248 = vst [vmem:[#allocation6 + $0x8] sm:$0xff] 0.0
    %2249 = vst [vmem:[#allocation6 + $0x10] sm:$0xff] 0.0
    %2250 = vst [vmem:[#allocation6 + $0x18] sm:$0xff] 0.0
    %2251 = vst [vmem:[#allocation6 + $0x20] sm:$0xff] 0.0
    %2252 = vst [vmem:[#allocation6 + $0x28] sm:$0xff] 0.0
    %2253 = vst [vmem:[#allocation6 + $0x30] sm:$0xff] 0.0
    %2254 = vst [vmem:[#allocation6 + $0x38] sm:$0xff] 0.0
    %2255 = vst [vmem:[#allocation6 + $0x40] sm:$0xff] 0.0
    %2256 = vst [vmem:[#allocation6 + $0x48] sm:$0xff] 0.0
    %2257 = vst [vmem:[#allocation6 + $0x50] sm:$0xff] 0.0
    %2258 = vst [vmem:[#allocation6 + $0x58] sm:$0xff] 0.0
    %2259 = vst [vmem:[#allocation6 + $0x60] sm:$0xff] 0.0
    %2260 = vst [vmem:[#allocation6 + $0x68] sm:$0xff] 0.0
    %2261 = vst [vmem:[#allocation6 + $0x70] sm:$0xff] 0.0
    %2262 = vst [vmem:[#allocation6 + $0x78] sm:$0xff] 0.0
    %2263 = vst [vmem:[#allocation6 + $0x80] sm:$0xff] 0.0
    %2264 = vst [vmem:[#allocation6 + $0x88] sm:$0xff] 0.0
    %2265 = vst [vmem:[#allocation6 + $0x90] sm:$0xff] 0.0
    %2266 = vst [vmem:[#allocation6 + $0x98] sm:$0xff] 0.0
    %2267 = vst [vmem:[#allocation6 + $0xa0] sm:$0xff] 0.0
    %2268 = vst [vmem:[#allocation6 + $0xa8] sm:$0xff] 0.0
    %2269 = vst [vmem:[#allocation6 + $0xb0] sm:$0xff] 0.0
    %2270 = vst [vmem:[#allocation6 + $0xb8] sm:$0xff] 0.0
    %2271 = vst [vmem:[#allocation6 + $0xc0] sm:$0xff] 0.0
    %2272 = vst [vmem:[#allocation6 + $0xc8] sm:$0xff] 0.0
    %2273 = vst [vmem:[#allocation6 + $0xd0] sm:$0xff] 0.0
    %2274 = vst [vmem:[#allocation6 + $0xd8] sm:$0xff] 0.0
    %2275 = vst [vmem:[#allocation6 + $0xe0] sm:$0xff] 0.0
    %2276 = vst [vmem:[#allocation6 + $0xe8] sm:$0xff] 0.0
    %2277 = vst [vmem:[#allocation6 + $0xf0] sm:$0xff] 0.0
    %2278 = vst [vmem:[#allocation6 + $0xf8] sm:$0xff] 0.0
    %2279 = vst [vmem:[#allocation6 + $0x100] sm:$0xff] 0.0
    %2280 = vst [vmem:[#allocation6 + $0x108] sm:$0xff] 0.0
    %2281 = vst [vmem:[#allocation6 + $0x110] sm:$0xff] 0.0
    %2282 = vst [vmem:[#allocation6 + $0x118] sm:$0xff] 0.0
    %2283 = vst [vmem:[#allocation6 + $0x120] sm:$0xff] 0.0
    %2284 = vst [vmem:[#allocation6 + $0x128] sm:$0xff] 0.0
    %2285 = vst [vmem:[#allocation6 + $0x130] sm:$0xff] 0.0
    %2286 = vst [vmem:[#allocation6 + $0x138] sm:$0xff] 0.0
    %2287 = vst [vmem:[#allocation6 + $0x140] sm:$0xff] 0.0
    %2288 = vst [vmem:[#allocation6 + $0x148] sm:$0xff] 0.0
    %2289 = vst [vmem:[#allocation6 + $0x150] sm:$0xff] 0.0
    %2290 = vst [vmem:[#allocation6 + $0x158] sm:$0xff] 0.0
    %2291 = vst [vmem:[#allocation6 + $0x160] sm:$0xff] 0.0
    %2292 = vst [vmem:[#allocation6 + $0x168] sm:$0xff] 0.0
    %2293 = vst [vmem:[#allocation6 + $0x170] sm:$0xff] 0.0
    %2294 = vst [vmem:[#allocation6 + $0x178] sm:$0xff] 0.0
    %2295 = vst [vmem:[#allocation6 + $0x180] sm:$0xff] 0.0
    %2296 = vst [vmem:[#allocation6 + $0x188] sm:$0xff] 0.0
    %2297 = vst [vmem:[#allocation6 + $0x190] sm:$0xff] 0.0
    %2298 = vst [vmem:[#allocation6 + $0x198] sm:$0xff] 0.0
    %2299 = vst [vmem:[#allocation6 + $0x1a0] sm:$0xff] 0.0
    %2300 = vst [vmem:[#allocation6 + $0x1a8] sm:$0xff] 0.0
    %2301 = vst [vmem:[#allocation6 + $0x1b0] sm:$0xff] 0.0
    %2302 = vst [vmem:[#allocation6 + $0x1b8] sm:$0xff] 0.0
    %2303 = vst [vmem:[#allocation6 + $0x1c0] sm:$0xff] 0.0
    %2304 = vst [vmem:[#allocation6 + $0x1c8] sm:$0xff] 0.0
    %2305 = vst [vmem:[#allocation6 + $0x1d0] sm:$0xff] 0.0
    %2306 = vst [vmem:[#allocation6 + $0x1d8] sm:$0xff] 0.0
    %2307 = vst [vmem:[#allocation6 + $0x1e0] sm:$0xff] 0.0
    %2308 = vst [vmem:[#allocation6 + $0x1e8] sm:$0xff] 0.0
    %2309 = vst [vmem:[#allocation6 + $0x1f0] sm:$0xff] 0.0
    %2310 = vst [vmem:[#allocation6 + $0x1f8] sm:$0xff] 0.0
    loop: start=0, step=1, limit=2
    $region46: #{tpu_custom_call.1} parent=1 // loop_pre_header
      _
    $region47: #{tpu_custom_call.1} parent=1 // loop_header
      %s2312 = sphi 0, %s2316
      %p2313 = scmp.ge.s32.totalorder %s2312, 2
    $region48: #{tpu_custom_call.1} parent=1 // loop_header_branch
      %2315 = sbr.rel (%p2313) target = $region52
    $region49: #{tpu_custom_call.1} parent=1 // loop_body
      %s2317 = smul.u32 %s2312, 16
      %s2318 = sshra.s32 %s2317, 3
      %s2319 = sand.u32 %s2317, 7
      %s2320 = smul.addr %s2318, 4
      %s2321 = scalar_lea.vmem [#allocation2], %s2320
      %v2322 = vld [vmem:[%s2321] sm:$0xf]
      %v2323 = vld [vmem:[%s2321 + $0x4] sm:$0xf]
      %v2324 = vld [vmem:[%s2321 + $0x10] sm:$0xf]
      %v2325 = vld [vmem:[%s2321 + $0x14] sm:$0xf]
      %v2326 = vld [vmem:[%s2321 + $0x20] sm:$0xf]
      %v2327 = vld [vmem:[%s2321 + $0x24] sm:$0xf]
      %v2328 = vld [vmem:[%s2321 + $0x30] sm:$0xf]
      %v2329 = vld [vmem:[%s2321 + $0x34] sm:$0xf]
      %v2330 = vld [vmem:[%s2321 + $0x40] sm:$0xf]
      %v2331 = vld [vmem:[%s2321 + $0x44] sm:$0xf]
      %v2332 = vld [vmem:[%s2321 + $0x50] sm:$0xf]
      %v2333 = vld [vmem:[%s2321 + $0x54] sm:$0xf]
      %v2334 = vld [vmem:[%s2321 + $0x60] sm:$0xf]
      %v2335 = vld [vmem:[%s2321 + $0x64] sm:$0xf]
      %v2336 = vld [vmem:[%s2321 + $0x70] sm:$0xf]
      %v2337 = vld [vmem:[%s2321 + $0x74] sm:$0xf]
      %v2338 = vld [vmem:[%s2321 + $0x80] sm:$0xf]
      %v2339 = vld [vmem:[%s2321 + $0x84] sm:$0xf]
      %v2340 = vld [vmem:[%s2321 + $0x90] sm:$0xf]
      %v2341 = vld [vmem:[%s2321 + $0x94] sm:$0xf]
      %v2342 = vld [vmem:[%s2321 + $0xa0] sm:$0xf]
      %v2343 = vld [vmem:[%s2321 + $0xa4] sm:$0xf]
      %v2344 = vld [vmem:[%s2321 + $0xb0] sm:$0xf]
      %v2345 = vld [vmem:[%s2321 + $0xb4] sm:$0xf]
      %v2346 = vld [vmem:[%s2321 + $0xc0] sm:$0xf]
      %v2347 = vld [vmem:[%s2321 + $0xc4] sm:$0xf]
      %v2348 = vld [vmem:[%s2321 + $0xd0] sm:$0xf]
      %v2349 = vld [vmem:[%s2321 + $0xd4] sm:$0xf]
      %v2350 = vld [vmem:[%s2321 + $0xe0] sm:$0xf]
      %v2351 = vld [vmem:[%s2321 + $0xe4] sm:$0xf]
      %v2352 = vld [vmem:[%s2321 + $0xf0] sm:$0xf]
      %v2353 = vld [vmem:[%s2321 + $0xf4] sm:$0xf]
      %s2354 = smul.addr %s2318, 4
      %s2355 = scalar_lea.vmem [#allocation3], %s2354
      %v2356 = vld [vmem:[%s2355] sm:$0xf]
      %v2357 = vld [vmem:[%s2355 + $0x4] sm:$0xf]
      %v2358 = vld [vmem:[%s2355 + $0x10] sm:$0xf]
      %v2359 = vld [vmem:[%s2355 + $0x14] sm:$0xf]
      %v2360 = vld [vmem:[%s2355 + $0x20] sm:$0xf]
      %v2361 = vld [vmem:[%s2355 + $0x24] sm:$0xf]
      %v2362 = vld [vmem:[%s2355 + $0x30] sm:$0xf]
      %v2363 = vld [vmem:[%s2355 + $0x34] sm:$0xf]
      %v2364 = vld [vmem:[%s2355 + $0x40] sm:$0xf]
      %v2365 = vld [vmem:[%s2355 + $0x44] sm:$0xf]
      %v2366 = vld [vmem:[%s2355 + $0x50] sm:$0xf]
      %v2367 = vld [vmem:[%s2355 + $0x54] sm:$0xf]
      %v2368 = vld [vmem:[%s2355 + $0x60] sm:$0xf]
      %v2369 = vld [vmem:[%s2355 + $0x64] sm:$0xf]
      %v2370 = vld [vmem:[%s2355 + $0x70] sm:$0xf]
      %v2371 = vld [vmem:[%s2355 + $0x74] sm:$0xf]
      %v2372 = vld [vmem:[%s2355 + $0x80] sm:$0xf]
      %v2373 = vld [vmem:[%s2355 + $0x84] sm:$0xf]
      %v2374 = vld [vmem:[%s2355 + $0x90] sm:$0xf]
      %v2375 = vld [vmem:[%s2355 + $0x94] sm:$0xf]
      %v2376 = vld [vmem:[%s2355 + $0xa0] sm:$0xf]
      %v2377 = vld [vmem:[%s2355 + $0xa4] sm:$0xf]
      %v2378 = vld [vmem:[%s2355 + $0xb0] sm:$0xf]
      %v2379 = vld [vmem:[%s2355 + $0xb4] sm:$0xf]
      %v2380 = vld [vmem:[%s2355 + $0xc0] sm:$0xf]
      %v2381 = vld [vmem:[%s2355 + $0xc4] sm:$0xf]
      %v2382 = vld [vmem:[%s2355 + $0xd0] sm:$0xf]
      %v2383 = vld [vmem:[%s2355 + $0xd4] sm:$0xf]
      %v2384 = vld [vmem:[%s2355 + $0xe0] sm:$0xf]
      %v2385 = vld [vmem:[%s2355 + $0xe4] sm:$0xf]
      %v2386 = vld [vmem:[%s2355 + $0xf0] sm:$0xf]
      %v2387 = vld [vmem:[%s2355 + $0xf4] sm:$0xf]
      %v2390 = vunpack.c.l.b16 %v2322
      %v2391 = vunpack.c.l.b16 %v2323
      %v2392 = vpack.c.b16 %v2391, %v2390
      %2394 = vmatprep.subr.bf16.mxu0 0
      %2395 = vmatpush1.bf16.xpose.msra.mxu0 0
      %2396 = vmatprep.subr.bf16.mxu0 0
      %2397 = vmatpush1.bf16.xpose.msra.mxu0 0
      %2398 = vmatprep.subr.bf16.mxu0 0
      %2399 = vmatpush1.bf16.xpose.msra.mxu0 0
      %2400 = vmatprep.subr.bf16.mxu0 0
      %2401 = vmatpush1.bf16.xpose.msra.mxu0 0
      %2402 = vmatprep.subr.bf16.mxu0 0
      %2403 = vmatpush1.bf16.xpose.msra.mxu0 0
      %2404 = vmatprep.subr.bf16.mxu0 0
      %2405 = vmatpush1.bf16.xpose.msra.mxu0 0
      %2406 = vmatprep.subr.bf16.mxu0 0
      %2407 = vmatpush1.bf16.xpose.msra.mxu0 0
      %2408 = vmatprep.subr.bf16.mxu0 0
      %2409 = vmatpush1.bf16.xpose.msra.mxu0 %v2392
      %2410 = vmatprep.subr.bf16.mxu0 0
      %2411 = vmatpush2.bf16.xpose.msra.mxu0 0
      %2412 = vmatprep.subr.bf16.mxu0 0
      %2413 = vmatpush2.bf16.xpose.msra.mxu0 0
      %2414 = vmatprep.subr.bf16.mxu0 0
      %2415 = vmatpush2.bf16.xpose.msra.mxu0 0
      %2416 = vmatprep.subr.bf16.mxu0 0
      %2417 = vmatpush2.bf16.xpose.msra.mxu0 0
      %2418 = vmatprep.subr.bf16.mxu0 0
      %2419 = vmatpush2.bf16.xpose.msra.mxu0 0
      %2420 = vmatprep.subr.bf16.mxu0 0
      %2421 = vmatpush2.bf16.xpose.msra.mxu0 0
      %2422 = vmatprep.subr.bf16.mxu0 0
      %2423 = vmatpush2.bf16.xpose.msra.mxu0 0
      %2424 = vmatprep.subr.bf16.mxu0 0
      %2425 = vmatpush2.bf16.xpose.msra.mxu0 0
      %2426 = vmatprep.mubr.bf16.mxu0 0
      %2427 = vmatmul.mubr.bf16.gmra.mxu0 %v1446
      %v2428 = vpop.f32.mrf.mxu0
      %v2429 = vadd.f32 0.0, %v2428
      %v2430 = vpop.f32.mrf.mxu0
      %v2431 = vpop.f32.mrf.mxu0
      %v2432 = vadd.f32 0.0, %v2431
      %v2433 = vpop.f32.mrf.mxu0
      %2434 = vmatprep.mubr.bf16.mxu0 0
      %2435 = vmatmul.mubr.bf16.gmra.mxu0 %v1447
      %v2436 = vpop.f32.mrf.mxu0
      %v2437 = vadd.f32 0.0, %v2436
      %v2438 = vpop.f32.mrf.mxu0
      %v2439 = vpop.f32.mrf.mxu0
      %v2440 = vadd.f32 0.0, %v2439
      %v2441 = vpop.f32.mrf.mxu0
      %2442 = vdwg.mxu0
      %v2445 = vunpack.c.l.b16 %v2324
      %v2446 = vunpack.c.l.b16 %v2325
      %v2447 = vpack.c.b16 %v2446, %v2445
      %2449 = vmatprep.subr.bf16.mxu0 0
      %2450 = vmatpush1.bf16.xpose.msra.mxu0 0
      %2451 = vmatprep.subr.bf16.mxu0 0
      %2452 = vmatpush1.bf16.xpose.msra.mxu0 0
      %2453 = vmatprep.subr.bf16.mxu0 0
      %2454 = vmatpush1.bf16.xpose.msra.mxu0 0
      %2455 = vmatprep.subr.bf16.mxu0 0
      %2456 = vmatpush1.bf16.xpose.msra.mxu0 0
      %2457 = vmatprep.subr.bf16.mxu0 0
      %2458 = vmatpush1.bf16.xpose.msra.mxu0 0
      %2459 = vmatprep.subr.bf16.mxu0 0
      %2460 = vmatpush1.bf16.xpose.msra.mxu0 0
      %2461 = vmatprep.subr.bf16.mxu0 0
      %2462 = vmatpush1.bf16.xpose.msra.mxu0 0
      %2463 = vmatprep.subr.bf16.mxu0 0
      %2464 = vmatpush1.bf16.xpose.msra.mxu0 %v2447
      %2465 = vmatprep.subr.bf16.mxu0 0
      %2466 = vmatpush2.bf16.xpose.msra.mxu0 0
      %2467 = vmatprep.subr.bf16.mxu0 0
      %2468 = vmatpush2.bf16.xpose.msra.mxu0 0
      %2469 = vmatprep.subr.bf16.mxu0 0
      %2470 = vmatpush2.bf16.xpose.msra.mxu0 0
      %2471 = vmatprep.subr.bf16.mxu0 0
      %2472 = vmatpush2.bf16.xpose.msra.mxu0 0
      %2473 = vmatprep.subr.bf16.mxu0 0
      %2474 = vmatpush2.bf16.xpose.msra.mxu0 0
      %2475 = vmatprep.subr.bf16.mxu0 0
      %2476 = vmatpush2.bf16.xpose.msra.mxu0 0
      %2477 = vmatprep.subr.bf16.mxu0 0
      %2478 = vmatpush2.bf16.xpose.msra.mxu0 0
      %2479 = vmatprep.subr.bf16.mxu0 0
      %2480 = vmatpush2.bf16.xpose.msra.mxu0 0
      %2481 = vmatprep.mubr.bf16.mxu0 0
      %2482 = vmatmul.mubr.bf16.gmra.mxu0 %v1448
      %v2483 = vpop.f32.mrf.mxu0
      %v2484 = vadd.f32 0.0, %v2483
      %v2485 = vpop.f32.mrf.mxu0
      %v2486 = vpop.f32.mrf.mxu0
      %v2487 = vadd.f32 0.0, %v2486
      %v2488 = vpop.f32.mrf.mxu0
      %2489 = vmatprep.mubr.bf16.mxu0 0
      %2490 = vmatmul.mubr.bf16.gmra.mxu0 %v1449
      %v2491 = vpop.f32.mrf.mxu0
      %v2492 = vadd.f32 0.0, %v2491
      %v2493 = vpop.f32.mrf.mxu0
      %v2494 = vpop.f32.mrf.mxu0
      %v2495 = vadd.f32 0.0, %v2494
      %v2496 = vpop.f32.mrf.mxu0
      %2497 = vdwg.mxu0
      %v2500 = vunpack.c.l.b16 %v2326
      %v2501 = vunpack.c.l.b16 %v2327
      %v2502 = vpack.c.b16 %v2501, %v2500
      %2504 = vmatprep.subr.bf16.mxu0 0
      %2505 = vmatpush1.bf16.xpose.msra.mxu0 0
      %2506 = vmatprep.subr.bf16.mxu0 0
      %2507 = vmatpush1.bf16.xpose.msra.mxu0 0
      %2508 = vmatprep.subr.bf16.mxu0 0
      %2509 = vmatpush1.bf16.xpose.msra.mxu0 0
      %2510 = vmatprep.subr.bf16.mxu0 0
      %2511 = vmatpush1.bf16.xpose.msra.mxu0 0
      %2512 = vmatprep.subr.bf16.mxu0 0
      %2513 = vmatpush1.bf16.xpose.msra.mxu0 0
      %2514 = vmatprep.subr.bf16.mxu0 0
      %2515 = vmatpush1.bf16.xpose.msra.mxu0 0
      %2516 = vmatprep.subr.bf16.mxu0 0
      %2517 = vmatpush1.bf16.xpose.msra.mxu0 0
      %2518 = vmatprep.subr.bf16.mxu0 0
      %2519 = vmatpush1.bf16.xpose.msra.mxu0 %v2502
      %2520 = vmatprep.subr.bf16.mxu0 0
      %2521 = vmatpush2.bf16.xpose.msra.mxu0 0
      %2522 = vmatprep.subr.bf16.mxu0 0
      %2523 = vmatpush2.bf16.xpose.msra.mxu0 0
      %2524 = vmatprep.subr.bf16.mxu0 0
      %2525 = vmatpush2.bf16.xpose.msra.mxu0 0
      %2526 = vmatprep.subr.bf16.mxu0 0
      %2527 = vmatpush2.bf16.xpose.msra.mxu0 0
      %2528 = vmatprep.subr.bf16.mxu0 0
      %2529 = vmatpush2.bf16.xpose.msra.mxu0 0
      %2530 = vmatprep.subr.bf16.mxu0 0
      %2531 = vmatpush2.bf16.xpose.msra.mxu0 0
      %2532 = vmatprep.subr.bf16.mxu0 0
      %2533 = vmatpush2.bf16.xpose.msra.mxu0 0
      %2534 = vmatprep.subr.bf16.mxu0 0
      %2535 = vmatpush2.bf16.xpose.msra.mxu0 0
      %2536 = vmatprep.mubr.bf16.mxu0 0
      %2537 = vmatmul.mubr.bf16.gmra.mxu0 %v1450
      %v2538 = vpop.f32.mrf.mxu0
      %v2539 = vadd.f32 0.0, %v2538
      %v2540 = vpop.f32.mrf.mxu0
      %v2541 = vpop.f32.mrf.mxu0
      %v2542 = vadd.f32 0.0, %v2541
      %v2543 = vpop.f32.mrf.mxu0
      %2544 = vmatprep.mubr.bf16.mxu0 0
      %2545 = vmatmul.mubr.bf16.gmra.mxu0 %v1451
      %v2546 = vpop.f32.mrf.mxu0
      %v2547 = vadd.f32 0.0, %v2546
      %v2548 = vpop.f32.mrf.mxu0
      %v2549 = vpop.f32.mrf.mxu0
      %v2550 = vadd.f32 0.0, %v2549
      %v2551 = vpop.f32.mrf.mxu0
      %2552 = vdwg.mxu0
      %v2555 = vunpack.c.l.b16 %v2328
      %v2556 = vunpack.c.l.b16 %v2329
      %v2557 = vpack.c.b16 %v2556, %v2555
      %2559 = vmatprep.subr.bf16.mxu0 0
      %2560 = vmatpush1.bf16.xpose.msra.mxu0 0
      %2561 = vmatprep.subr.bf16.mxu0 0
      %2562 = vmatpush1.bf16.xpose.msra.mxu0 0
      %2563 = vmatprep.subr.bf16.mxu0 0
      %2564 = vmatpush1.bf16.xpose.msra.mxu0 0
      %2565 = vmatprep.subr.bf16.mxu0 0
      %2566 = vmatpush1.bf16.xpose.msra.mxu0 0
      %2567 = vmatprep.subr.bf16.mxu0 0
      %2568 = vmatpush1.bf16.xpose.msra.mxu0 0
      %2569 = vmatprep.subr.bf16.mxu0 0
      %2570 = vmatpush1.bf16.xpose.msra.mxu0 0
      %2571 = vmatprep.subr.bf16.mxu0 0
      %2572 = vmatpush1.bf16.xpose.msra.mxu0 0
      %2573 = vmatprep.subr.bf16.mxu0 0
      %2574 = vmatpush1.bf16.xpose.msra.mxu0 %v2557
      %2575 = vmatprep.subr.bf16.mxu0 0
      %2576 = vmatpush2.bf16.xpose.msra.mxu0 0
      %2577 = vmatprep.subr.bf16.mxu0 0
      %2578 = vmatpush2.bf16.xpose.msra.mxu0 0
      %2579 = vmatprep.subr.bf16.mxu0 0
      %2580 = vmatpush2.bf16.xpose.msra.mxu0 0
      %2581 = vmatprep.subr.bf16.mxu0 0
      %2582 = vmatpush2.bf16.xpose.msra.mxu0 0
      %2583 = vmatprep.subr.bf16.mxu0 0
      %2584 = vmatpush2.bf16.xpose.msra.mxu0 0
      %2585 = vmatprep.subr.bf16.mxu0 0
      %2586 = vmatpush2.bf16.xpose.msra.mxu0 0
      %2587 = vmatprep.subr.bf16.mxu0 0
      %2588 = vmatpush2.bf16.xpose.msra.mxu0 0
      %2589 = vmatprep.subr.bf16.mxu0 0
      %2590 = vmatpush2.bf16.xpose.msra.mxu0 0
      %2591 = vmatprep.mubr.bf16.mxu0 0
      %2592 = vmatmul.mubr.bf16.gmra.mxu0 %v1452
      %v2593 = vpop.f32.mrf.mxu0
      %v2594 = vadd.f32 0.0, %v2593
      %v2595 = vpop.f32.mrf.mxu0
      %v2596 = vpop.f32.mrf.mxu0
      %v2597 = vadd.f32 0.0, %v2596
      %v2598 = vpop.f32.mrf.mxu0
      %2599 = vmatprep.mubr.bf16.mxu0 0
      %2600 = vmatmul.mubr.bf16.gmra.mxu0 %v1453
      %v2601 = vpop.f32.mrf.mxu0
      %v2602 = vadd.f32 0.0, %v2601
      %v2603 = vpop.f32.mrf.mxu0
      %v2604 = vpop.f32.mrf.mxu0
      %v2605 = vadd.f32 0.0, %v2604
      %v2606 = vpop.f32.mrf.mxu0
      %2607 = vdwg.mxu0
      %v2610 = vunpack.c.l.b16 %v2330
      %v2611 = vunpack.c.l.b16 %v2331
      %v2612 = vpack.c.b16 %v2611, %v2610
      %2614 = vmatprep.subr.bf16.mxu0 0
      %2615 = vmatpush1.bf16.xpose.msra.mxu0 0
      %2616 = vmatprep.subr.bf16.mxu0 0
      %2617 = vmatpush1.bf16.xpose.msra.mxu0 0
      %2618 = vmatprep.subr.bf16.mxu0 0
      %2619 = vmatpush1.bf16.xpose.msra.mxu0 0
      %2620 = vmatprep.subr.bf16.mxu0 0
      %2621 = vmatpush1.bf16.xpose.msra.mxu0 0
      %2622 = vmatprep.subr.bf16.mxu0 0
      %2623 = vmatpush1.bf16.xpose.msra.mxu0 0
      %2624 = vmatprep.subr.bf16.mxu0 0
      %2625 = vmatpush1.bf16.xpose.msra.mxu0 0
      %2626 = vmatprep.subr.bf16.mxu0 0
      %2627 = vmatpush1.bf16.xpose.msra.mxu0 0
      %2628 = vmatprep.subr.bf16.mxu0 0
      %2629 = vmatpush1.bf16.xpose.msra.mxu0 %v2612
      %2630 = vmatprep.subr.bf16.mxu0 0
      %2631 = vmatpush2.bf16.xpose.msra.mxu0 0
      %2632 = vmatprep.subr.bf16.mxu0 0
      %2633 = vmatpush2.bf16.xpose.msra.mxu0 0
      %2634 = vmatprep.subr.bf16.mxu0 0
      %2635 = vmatpush2.bf16.xpose.msra.mxu0 0
      %2636 = vmatprep.subr.bf16.mxu0 0
      %2637 = vmatpush2.bf16.xpose.msra.mxu0 0
      %2638 = vmatprep.subr.bf16.mxu0 0
      %2639 = vmatpush2.bf16.xpose.msra.mxu0 0
      %2640 = vmatprep.subr.bf16.mxu0 0
      %2641 = vmatpush2.bf16.xpose.msra.mxu0 0
      %2642 = vmatprep.subr.bf16.mxu0 0
      %2643 = vmatpush2.bf16.xpose.msra.mxu0 0
      %2644 = vmatprep.subr.bf16.mxu0 0
      %2645 = vmatpush2.bf16.xpose.msra.mxu0 0
      %2646 = vmatprep.mubr.bf16.mxu0 0
      %2647 = vmatmul.mubr.bf16.gmra.mxu0 %v1454
      %v2648 = vpop.f32.mrf.mxu0
      %v2649 = vadd.f32 0.0, %v2648
      %v2650 = vpop.f32.mrf.mxu0
      %v2651 = vpop.f32.mrf.mxu0
      %v2652 = vadd.f32 0.0, %v2651
      %v2653 = vpop.f32.mrf.mxu0
      %2654 = vmatprep.mubr.bf16.mxu0 0
      %2655 = vmatmul.mubr.bf16.gmra.mxu0 %v1455
      %v2656 = vpop.f32.mrf.mxu0
      %v2657 = vadd.f32 0.0, %v2656
      %v2658 = vpop.f32.mrf.mxu0
      %v2659 = vpop.f32.mrf.mxu0
      %v2660 = vadd.f32 0.0, %v2659
      %v2661 = vpop.f32.mrf.mxu0
      %2662 = vdwg.mxu0
      %v2665 = vunpack.c.l.b16 %v2332
      %v2666 = vunpack.c.l.b16 %v2333
      %v2667 = vpack.c.b16 %v2666, %v2665
      %2669 = vmatprep.subr.bf16.mxu0 0
      %2670 = vmatpush1.bf16.xpose.msra.mxu0 0
      %2671 = vmatprep.subr.bf16.mxu0 0
      %2672 = vmatpush1.bf16.xpose.msra.mxu0 0
      %2673 = vmatprep.subr.bf16.mxu0 0
      %2674 = vmatpush1.bf16.xpose.msra.mxu0 0
      %2675 = vmatprep.subr.bf16.mxu0 0
      %2676 = vmatpush1.bf16.xpose.msra.mxu0 0
      %2677 = vmatprep.subr.bf16.mxu0 0
      %2678 = vmatpush1.bf16.xpose.msra.mxu0 0
      %2679 = vmatprep.subr.bf16.mxu0 0
      %2680 = vmatpush1.bf16.xpose.msra.mxu0 0
      %2681 = vmatprep.subr.bf16.mxu0 0
      %2682 = vmatpush1.bf16.xpose.msra.mxu0 0
      %2683 = vmatprep.subr.bf16.mxu0 0
      %2684 = vmatpush1.bf16.xpose.msra.mxu0 %v2667
      %2685 = vmatprep.subr.bf16.mxu0 0
      %2686 = vmatpush2.bf16.xpose.msra.mxu0 0
      %2687 = vmatprep.subr.bf16.mxu0 0
      %2688 = vmatpush2.bf16.xpose.msra.mxu0 0
      %2689 = vmatprep.subr.bf16.mxu0 0
      %2690 = vmatpush2.bf16.xpose.msra.mxu0 0
      %2691 = vmatprep.subr.bf16.mxu0 0
      %2692 = vmatpush2.bf16.xpose.msra.mxu0 0
      %2693 = vmatprep.subr.bf16.mxu0 0
      %2694 = vmatpush2.bf16.xpose.msra.mxu0 0
      %2695 = vmatprep.subr.bf16.mxu0 0
      %2696 = vmatpush2.bf16.xpose.msra.mxu0 0
      %2697 = vmatprep.subr.bf16.mxu0 0
      %2698 = vmatpush2.bf16.xpose.msra.mxu0 0
      %2699 = vmatprep.subr.bf16.mxu0 0
      %2700 = vmatpush2.bf16.xpose.msra.mxu0 0
      %2701 = vmatprep.mubr.bf16.mxu0 0
      %2702 = vmatmul.mubr.bf16.gmra.mxu0 %v1456
      %v2703 = vpop.f32.mrf.mxu0
      %v2704 = vadd.f32 0.0, %v2703
      %v2705 = vpop.f32.mrf.mxu0
      %v2706 = vpop.f32.mrf.mxu0
      %v2707 = vadd.f32 0.0, %v2706
      %v2708 = vpop.f32.mrf.mxu0
      %2709 = vmatprep.mubr.bf16.mxu0 0
      %2710 = vmatmul.mubr.bf16.gmra.mxu0 %v1457
      %v2711 = vpop.f32.mrf.mxu0
      %v2712 = vadd.f32 0.0, %v2711
      %v2713 = vpop.f32.mrf.mxu0
      %v2714 = vpop.f32.mrf.mxu0
      %v2715 = vadd.f32 0.0, %v2714
      %v2716 = vpop.f32.mrf.mxu0
      %2717 = vdwg.mxu0
      %v2720 = vunpack.c.l.b16 %v2334
      %v2721 = vunpack.c.l.b16 %v2335
      %v2722 = vpack.c.b16 %v2721, %v2720
      %2724 = vmatprep.subr.bf16.mxu0 0
      %2725 = vmatpush1.bf16.xpose.msra.mxu0 0
      %2726 = vmatprep.subr.bf16.mxu0 0
      %2727 = vmatpush1.bf16.xpose.msra.mxu0 0
      %2728 = vmatprep.subr.bf16.mxu0 0
      %2729 = vmatpush1.bf16.xpose.msra.mxu0 0
      %2730 = vmatprep.subr.bf16.mxu0 0
      %2731 = vmatpush1.bf16.xpose.msra.mxu0 0
      %2732 = vmatprep.subr.bf16.mxu0 0
      %2733 = vmatpush1.bf16.xpose.msra.mxu0 0
      %2734 = vmatprep.subr.bf16.mxu0 0
      %2735 = vmatpush1.bf16.xpose.msra.mxu0 0
      %2736 = vmatprep.subr.bf16.mxu0 0
      %2737 = vmatpush1.bf16.xpose.msra.mxu0 0
      %2738 = vmatprep.subr.bf16.mxu0 0
      %2739 = vmatpush1.bf16.xpose.msra.mxu0 %v2722
      %2740 = vmatprep.subr.bf16.mxu0 0
      %2741 = vmatpush2.bf16.xpose.msra.mxu0 0
      %2742 = vmatprep.subr.bf16.mxu0 0
      %2743 = vmatpush2.bf16.xpose.msra.mxu0 0
      %2744 = vmatprep.subr.bf16.mxu0 0
      %2745 = vmatpush2.bf16.xpose.msra.mxu0 0
      %2746 = vmatprep.subr.bf16.mxu0 0
      %2747 = vmatpush2.bf16.xpose.msra.mxu0 0
      %2748 = vmatprep.subr.bf16.mxu0 0
      %2749 = vmatpush2.bf16.xpose.msra.mxu0 0
      %2750 = vmatprep.subr.bf16.mxu0 0
      %2751 = vmatpush2.bf16.xpose.msra.mxu0 0
      %2752 = vmatprep.subr.bf16.mxu0 0
      %2753 = vmatpush2.bf16.xpose.msra.mxu0 0
      %2754 = vmatprep.subr.bf16.mxu0 0
      %2755 = vmatpush2.bf16.xpose.msra.mxu0 0
      %2756 = vmatprep.mubr.bf16.mxu0 0
      %2757 = vmatmul.mubr.bf16.gmra.mxu0 %v1458
      %v2758 = vpop.f32.mrf.mxu0
      %v2759 = vadd.f32 0.0, %v2758
      %v2760 = vpop.f32.mrf.mxu0
      %v2761 = vpop.f32.mrf.mxu0
      %v2762 = vadd.f32 0.0, %v2761
      %v2763 = vpop.f32.mrf.mxu0
      %2764 = vmatprep.mubr.bf16.mxu0 0
      %2765 = vmatmul.mubr.bf16.gmra.mxu0 %v1459
      %v2766 = vpop.f32.mrf.mxu0
      %v2767 = vadd.f32 0.0, %v2766
      %v2768 = vpop.f32.mrf.mxu0
      %v2769 = vpop.f32.mrf.mxu0
      %v2770 = vadd.f32 0.0, %v2769
      %v2771 = vpop.f32.mrf.mxu0
      %2772 = vdwg.mxu0
      %v2775 = vunpack.c.l.b16 %v2336
      %v2776 = vunpack.c.l.b16 %v2337
      %v2777 = vpack.c.b16 %v2776, %v2775
      %2779 = vmatprep.subr.bf16.mxu0 0
      %2780 = vmatpush1.bf16.xpose.msra.mxu0 0
      %2781 = vmatprep.subr.bf16.mxu0 0
      %2782 = vmatpush1.bf16.xpose.msra.mxu0 0
      %2783 = vmatprep.subr.bf16.mxu0 0
      %2784 = vmatpush1.bf16.xpose.msra.mxu0 0
      %2785 = vmatprep.subr.bf16.mxu0 0
      %2786 = vmatpush1.bf16.xpose.msra.mxu0 0
      %2787 = vmatprep.subr.bf16.mxu0 0
      %2788 = vmatpush1.bf16.xpose.msra.mxu0 0
      %2789 = vmatprep.subr.bf16.mxu0 0
      %2790 = vmatpush1.bf16.xpose.msra.mxu0 0
      %2791 = vmatprep.subr.bf16.mxu0 0
      %2792 = vmatpush1.bf16.xpose.msra.mxu0 0
      %2793 = vmatprep.subr.bf16.mxu0 0
      %2794 = vmatpush1.bf16.xpose.msra.mxu0 %v2777
      %2795 = vmatprep.subr.bf16.mxu0 0
      %2796 = vmatpush2.bf16.xpose.msra.mxu0 0
      %2797 = vmatprep.subr.bf16.mxu0 0
      %2798 = vmatpush2.bf16.xpose.msra.mxu0 0
      %2799 = vmatprep.subr.bf16.mxu0 0
      %2800 = vmatpush2.bf16.xpose.msra.mxu0 0
      %2801 = vmatprep.subr.bf16.mxu0 0
      %2802 = vmatpush2.bf16.xpose.msra.mxu0 0
      %2803 = vmatprep.subr.bf16.mxu0 0
      %2804 = vmatpush2.bf16.xpose.msra.mxu0 0
      %2805 = vmatprep.subr.bf16.mxu0 0
      %2806 = vmatpush2.bf16.xpose.msra.mxu0 0
      %2807 = vmatprep.subr.bf16.mxu0 0
      %2808 = vmatpush2.bf16.xpose.msra.mxu0 0
      %2809 = vmatprep.subr.bf16.mxu0 0
      %2810 = vmatpush2.bf16.xpose.msra.mxu0 0
      %2811 = vmatprep.mubr.bf16.mxu0 0
      %2812 = vmatmul.mubr.bf16.gmra.mxu0 %v1460
      %v2813 = vpop.f32.mrf.mxu0
      %v2814 = vadd.f32 0.0, %v2813
      %v2815 = vpop.f32.mrf.mxu0
      %v2816 = vpop.f32.mrf.mxu0
      %v2817 = vadd.f32 0.0, %v2816
      %v2818 = vpop.f32.mrf.mxu0
      %2819 = vmatprep.mubr.bf16.mxu0 0
      %2820 = vmatmul.mubr.bf16.gmra.mxu0 %v1461
      %v2821 = vpop.f32.mrf.mxu0
      %v2822 = vadd.f32 0.0, %v2821
      %v2823 = vpop.f32.mrf.mxu0
      %v2824 = vpop.f32.mrf.mxu0
      %v2825 = vadd.f32 0.0, %v2824
      %v2826 = vpop.f32.mrf.mxu0
      %2827 = vdwg.mxu0
      %v2830 = vunpack.c.l.b16 %v2338
      %v2831 = vunpack.c.l.b16 %v2339
      %v2832 = vpack.c.b16 %v2831, %v2830
      %2834 = vmatprep.subr.bf16.mxu0 0
      %2835 = vmatpush1.bf16.xpose.msra.mxu0 0
      %2836 = vmatprep.subr.bf16.mxu0 0
      %2837 = vmatpush1.bf16.xpose.msra.mxu0 0
      %2838 = vmatprep.subr.bf16.mxu0 0
      %2839 = vmatpush1.bf16.xpose.msra.mxu0 0
      %2840 = vmatprep.subr.bf16.mxu0 0
      %2841 = vmatpush1.bf16.xpose.msra.mxu0 0
      %2842 = vmatprep.subr.bf16.mxu0 0
      %2843 = vmatpush1.bf16.xpose.msra.mxu0 0
      %2844 = vmatprep.subr.bf16.mxu0 0
      %2845 = vmatpush1.bf16.xpose.msra.mxu0 0
      %2846 = vmatprep.subr.bf16.mxu0 0
      %2847 = vmatpush1.bf16.xpose.msra.mxu0 0
      %2848 = vmatprep.subr.bf16.mxu0 0
      %2849 = vmatpush1.bf16.xpose.msra.mxu0 %v2832
      %2850 = vmatprep.subr.bf16.mxu0 0
      %2851 = vmatpush2.bf16.xpose.msra.mxu0 0
      %2852 = vmatprep.subr.bf16.mxu0 0
      %2853 = vmatpush2.bf16.xpose.msra.mxu0 0
      %2854 = vmatprep.subr.bf16.mxu0 0
      %2855 = vmatpush2.bf16.xpose.msra.mxu0 0
      %2856 = vmatprep.subr.bf16.mxu0 0
      %2857 = vmatpush2.bf16.xpose.msra.mxu0 0
      %2858 = vmatprep.subr.bf16.mxu0 0
      %2859 = vmatpush2.bf16.xpose.msra.mxu0 0
      %2860 = vmatprep.subr.bf16.mxu0 0
      %2861 = vmatpush2.bf16.xpose.msra.mxu0 0
      %2862 = vmatprep.subr.bf16.mxu0 0
      %2863 = vmatpush2.bf16.xpose.msra.mxu0 0
      %2864 = vmatprep.subr.bf16.mxu0 0
      %2865 = vmatpush2.bf16.xpose.msra.mxu0 0
      %2866 = vmatprep.mubr.bf16.mxu0 0
      %2867 = vmatmul.mubr.bf16.gmra.mxu0 %v1462
      %v2868 = vpop.f32.mrf.mxu0
      %v2869 = vadd.f32 0.0, %v2868
      %v2870 = vpop.f32.mrf.mxu0
      %v2871 = vpop.f32.mrf.mxu0
      %v2872 = vadd.f32 0.0, %v2871
      %v2873 = vpop.f32.mrf.mxu0
      %2874 = vmatprep.mubr.bf16.mxu0 0
      %2875 = vmatmul.mubr.bf16.gmra.mxu0 %v1463
      %v2876 = vpop.f32.mrf.mxu0
      %v2877 = vadd.f32 0.0, %v2876
      %v2878 = vpop.f32.mrf.mxu0
      %v2879 = vpop.f32.mrf.mxu0
      %v2880 = vadd.f32 0.0, %v2879
      %v2881 = vpop.f32.mrf.mxu0
      %2882 = vdwg.mxu0
      %v2885 = vunpack.c.l.b16 %v2340
      %v2886 = vunpack.c.l.b16 %v2341
      %v2887 = vpack.c.b16 %v2886, %v2885
      %2889 = vmatprep.subr.bf16.mxu0 0
      %2890 = vmatpush1.bf16.xpose.msra.mxu0 0
      %2891 = vmatprep.subr.bf16.mxu0 0
      %2892 = vmatpush1.bf16.xpose.msra.mxu0 0
      %2893 = vmatprep.subr.bf16.mxu0 0
      %2894 = vmatpush1.bf16.xpose.msra.mxu0 0
      %2895 = vmatprep.subr.bf16.mxu0 0
      %2896 = vmatpush1.bf16.xpose.msra.mxu0 0
      %2897 = vmatprep.subr.bf16.mxu0 0
      %2898 = vmatpush1.bf16.xpose.msra.mxu0 0
      %2899 = vmatprep.subr.bf16.mxu0 0
      %2900 = vmatpush1.bf16.xpose.msra.mxu0 0
      %2901 = vmatprep.subr.bf16.mxu0 0
      %2902 = vmatpush1.bf16.xpose.msra.mxu0 0
      %2903 = vmatprep.subr.bf16.mxu0 0
      %2904 = vmatpush1.bf16.xpose.msra.mxu0 %v2887
      %2905 = vmatprep.subr.bf16.mxu0 0
      %2906 = vmatpush2.bf16.xpose.msra.mxu0 0
      %2907 = vmatprep.subr.bf16.mxu0 0
      %2908 = vmatpush2.bf16.xpose.msra.mxu0 0
      %2909 = vmatprep.subr.bf16.mxu0 0
      %2910 = vmatpush2.bf16.xpose.msra.mxu0 0
      %2911 = vmatprep.subr.bf16.mxu0 0
      %2912 = vmatpush2.bf16.xpose.msra.mxu0 0
      %2913 = vmatprep.subr.bf16.mxu0 0
      %2914 = vmatpush2.bf16.xpose.msra.mxu0 0
      %2915 = vmatprep.subr.bf16.mxu0 0
      %2916 = vmatpush2.bf16.xpose.msra.mxu0 0
      %2917 = vmatprep.subr.bf16.mxu0 0
      %2918 = vmatpush2.bf16.xpose.msra.mxu0 0
      %2919 = vmatprep.subr.bf16.mxu0 0
      %2920 = vmatpush2.bf16.xpose.msra.mxu0 0
      %2921 = vmatprep.mubr.bf16.mxu0 0
      %2922 = vmatmul.mubr.bf16.gmra.mxu0 %v1464
      %v2923 = vpop.f32.mrf.mxu0
      %v2924 = vadd.f32 0.0, %v2923
      %v2925 = vpop.f32.mrf.mxu0
      %v2926 = vpop.f32.mrf.mxu0
      %v2927 = vadd.f32 0.0, %v2926
      %v2928 = vpop.f32.mrf.mxu0
      %2929 = vmatprep.mubr.bf16.mxu0 0
      %2930 = vmatmul.mubr.bf16.gmra.mxu0 %v1465
      %v2931 = vpop.f32.mrf.mxu0
      %v2932 = vadd.f32 0.0, %v2931
      %v2933 = vpop.f32.mrf.mxu0
      %v2934 = vpop.f32.mrf.mxu0
      %v2935 = vadd.f32 0.0, %v2934
      %v2936 = vpop.f32.mrf.mxu0
      %2937 = vdwg.mxu0
      %v2940 = vunpack.c.l.b16 %v2342
      %v2941 = vunpack.c.l.b16 %v2343
      %v2942 = vpack.c.b16 %v2941, %v2940
      %2944 = vmatprep.subr.bf16.mxu0 0
      %2945 = vmatpush1.bf16.xpose.msra.mxu0 0
      %2946 = vmatprep.subr.bf16.mxu0 0
      %2947 = vmatpush1.bf16.xpose.msra.mxu0 0
      %2948 = vmatprep.subr.bf16.mxu0 0
      %2949 = vmatpush1.bf16.xpose.msra.mxu0 0
      %2950 = vmatprep.subr.bf16.mxu0 0
      %2951 = vmatpush1.bf16.xpose.msra.mxu0 0
      %2952 = vmatprep.subr.bf16.mxu0 0
      %2953 = vmatpush1.bf16.xpose.msra.mxu0 0
      %2954 = vmatprep.subr.bf16.mxu0 0
      %2955 = vmatpush1.bf16.xpose.msra.mxu0 0
      %2956 = vmatprep.subr.bf16.mxu0 0
      %2957 = vmatpush1.bf16.xpose.msra.mxu0 0
      %2958 = vmatprep.subr.bf16.mxu0 0
      %2959 = vmatpush1.bf16.xpose.msra.mxu0 %v2942
      %2960 = vmatprep.subr.bf16.mxu0 0
      %2961 = vmatpush2.bf16.xpose.msra.mxu0 0
      %2962 = vmatprep.subr.bf16.mxu0 0
      %2963 = vmatpush2.bf16.xpose.msra.mxu0 0
      %2964 = vmatprep.subr.bf16.mxu0 0
      %2965 = vmatpush2.bf16.xpose.msra.mxu0 0
      %2966 = vmatprep.subr.bf16.mxu0 0
      %2967 = vmatpush2.bf16.xpose.msra.mxu0 0
      %2968 = vmatprep.subr.bf16.mxu0 0
      %2969 = vmatpush2.bf16.xpose.msra.mxu0 0
      %2970 = vmatprep.subr.bf16.mxu0 0
      %2971 = vmatpush2.bf16.xpose.msra.mxu0 0
      %2972 = vmatprep.subr.bf16.mxu0 0
      %2973 = vmatpush2.bf16.xpose.msra.mxu0 0
      %2974 = vmatprep.subr.bf16.mxu0 0
      %2975 = vmatpush2.bf16.xpose.msra.mxu0 0
      %2976 = vmatprep.mubr.bf16.mxu0 0
      %2977 = vmatmul.mubr.bf16.gmra.mxu0 %v1466
      %v2978 = vpop.f32.mrf.mxu0
      %v2979 = vadd.f32 0.0, %v2978
      %v2980 = vpop.f32.mrf.mxu0
      %v2981 = vpop.f32.mrf.mxu0
      %v2982 = vadd.f32 0.0, %v2981
      %v2983 = vpop.f32.mrf.mxu0
      %2984 = vmatprep.mubr.bf16.mxu0 0
      %2985 = vmatmul.mubr.bf16.gmra.mxu0 %v1467
      %v2986 = vpop.f32.mrf.mxu0
      %v2987 = vadd.f32 0.0, %v2986
      %v2988 = vpop.f32.mrf.mxu0
      %v2989 = vpop.f32.mrf.mxu0
      %v2990 = vadd.f32 0.0, %v2989
      %v2991 = vpop.f32.mrf.mxu0
      %2992 = vdwg.mxu0
      %v2995 = vunpack.c.l.b16 %v2344
      %v2996 = vunpack.c.l.b16 %v2345
      %v2997 = vpack.c.b16 %v2996, %v2995
      %2999 = vmatprep.subr.bf16.mxu0 0
      %3000 = vmatpush1.bf16.xpose.msra.mxu0 0
      %3001 = vmatprep.subr.bf16.mxu0 0
      %3002 = vmatpush1.bf16.xpose.msra.mxu0 0
      %3003 = vmatprep.subr.bf16.mxu0 0
      %3004 = vmatpush1.bf16.xpose.msra.mxu0 0
      %3005 = vmatprep.subr.bf16.mxu0 0
      %3006 = vmatpush1.bf16.xpose.msra.mxu0 0
      %3007 = vmatprep.subr.bf16.mxu0 0
      %3008 = vmatpush1.bf16.xpose.msra.mxu0 0
      %3009 = vmatprep.subr.bf16.mxu0 0
      %3010 = vmatpush1.bf16.xpose.msra.mxu0 0
      %3011 = vmatprep.subr.bf16.mxu0 0
      %3012 = vmatpush1.bf16.xpose.msra.mxu0 0
      %3013 = vmatprep.subr.bf16.mxu0 0
      %3014 = vmatpush1.bf16.xpose.msra.mxu0 %v2997
      %3015 = vmatprep.subr.bf16.mxu0 0
      %3016 = vmatpush2.bf16.xpose.msra.mxu0 0
      %3017 = vmatprep.subr.bf16.mxu0 0
      %3018 = vmatpush2.bf16.xpose.msra.mxu0 0
      %3019 = vmatprep.subr.bf16.mxu0 0
      %3020 = vmatpush2.bf16.xpose.msra.mxu0 0
      %3021 = vmatprep.subr.bf16.mxu0 0
      %3022 = vmatpush2.bf16.xpose.msra.mxu0 0
      %3023 = vmatprep.subr.bf16.mxu0 0
      %3024 = vmatpush2.bf16.xpose.msra.mxu0 0
      %3025 = vmatprep.subr.bf16.mxu0 0
      %3026 = vmatpush2.bf16.xpose.msra.mxu0 0
      %3027 = vmatprep.subr.bf16.mxu0 0
      %3028 = vmatpush2.bf16.xpose.msra.mxu0 0
      %3029 = vmatprep.subr.bf16.mxu0 0
      %3030 = vmatpush2.bf16.xpose.msra.mxu0 0
      %3031 = vmatprep.mubr.bf16.mxu0 0
      %3032 = vmatmul.mubr.bf16.gmra.mxu0 %v1468
      %v3033 = vpop.f32.mrf.mxu0
      %v3034 = vadd.f32 0.0, %v3033
      %v3035 = vpop.f32.mrf.mxu0
      %v3036 = vpop.f32.mrf.mxu0
      %v3037 = vadd.f32 0.0, %v3036
      %v3038 = vpop.f32.mrf.mxu0
      %3039 = vmatprep.mubr.bf16.mxu0 0
      %3040 = vmatmul.mubr.bf16.gmra.mxu0 %v1469
      %v3041 = vpop.f32.mrf.mxu0
      %v3042 = vadd.f32 0.0, %v3041
      %v3043 = vpop.f32.mrf.mxu0
      %v3044 = vpop.f32.mrf.mxu0
      %v3045 = vadd.f32 0.0, %v3044
      %v3046 = vpop.f32.mrf.mxu0
      %3047 = vdwg.mxu0
      %v3050 = vunpack.c.l.b16 %v2346
      %v3051 = vunpack.c.l.b16 %v2347
      %v3052 = vpack.c.b16 %v3051, %v3050
      %3054 = vmatprep.subr.bf16.mxu0 0
      %3055 = vmatpush1.bf16.xpose.msra.mxu0 0
      %3056 = vmatprep.subr.bf16.mxu0 0
      %3057 = vmatpush1.bf16.xpose.msra.mxu0 0
      %3058 = vmatprep.subr.bf16.mxu0 0
      %3059 = vmatpush1.bf16.xpose.msra.mxu0 0
      %3060 = vmatprep.subr.bf16.mxu0 0
      %3061 = vmatpush1.bf16.xpose.msra.mxu0 0
      %3062 = vmatprep.subr.bf16.mxu0 0
      %3063 = vmatpush1.bf16.xpose.msra.mxu0 0
      %3064 = vmatprep.subr.bf16.mxu0 0
      %3065 = vmatpush1.bf16.xpose.msra.mxu0 0
      %3066 = vmatprep.subr.bf16.mxu0 0
      %3067 = vmatpush1.bf16.xpose.msra.mxu0 0
      %3068 = vmatprep.subr.bf16.mxu0 0
      %3069 = vmatpush1.bf16.xpose.msra.mxu0 %v3052
      %3070 = vmatprep.subr.bf16.mxu0 0
      %3071 = vmatpush2.bf16.xpose.msra.mxu0 0
      %3072 = vmatprep.subr.bf16.mxu0 0
      %3073 = vmatpush2.bf16.xpose.msra.mxu0 0
      %3074 = vmatprep.subr.bf16.mxu0 0
      %3075 = vmatpush2.bf16.xpose.msra.mxu0 0
      %3076 = vmatprep.subr.bf16.mxu0 0
      %3077 = vmatpush2.bf16.xpose.msra.mxu0 0
      %3078 = vmatprep.subr.bf16.mxu0 0
      %3079 = vmatpush2.bf16.xpose.msra.mxu0 0
      %3080 = vmatprep.subr.bf16.mxu0 0
      %3081 = vmatpush2.bf16.xpose.msra.mxu0 0
      %3082 = vmatprep.subr.bf16.mxu0 0
      %3083 = vmatpush2.bf16.xpose.msra.mxu0 0
      %3084 = vmatprep.subr.bf16.mxu0 0
      %3085 = vmatpush2.bf16.xpose.msra.mxu0 0
      %3086 = vmatprep.mubr.bf16.mxu0 0
      %3087 = vmatmul.mubr.bf16.gmra.mxu0 %v1470
      %v3088 = vpop.f32.mrf.mxu0
      %v3089 = vadd.f32 0.0, %v3088
      %v3090 = vpop.f32.mrf.mxu0
      %v3091 = vpop.f32.mrf.mxu0
      %v3092 = vadd.f32 0.0, %v3091
      %v3093 = vpop.f32.mrf.mxu0
      %3094 = vmatprep.mubr.bf16.mxu0 0
      %3095 = vmatmul.mubr.bf16.gmra.mxu0 %v1471
      %v3096 = vpop.f32.mrf.mxu0
      %v3097 = vadd.f32 0.0, %v3096
      %v3098 = vpop.f32.mrf.mxu0
      %v3099 = vpop.f32.mrf.mxu0
      %v3100 = vadd.f32 0.0, %v3099
      %v3101 = vpop.f32.mrf.mxu0
      %3102 = vdwg.mxu0
      %v3105 = vunpack.c.l.b16 %v2348
      %v3106 = vunpack.c.l.b16 %v2349
      %v3107 = vpack.c.b16 %v3106, %v3105
      %3109 = vmatprep.subr.bf16.mxu0 0
      %3110 = vmatpush1.bf16.xpose.msra.mxu0 0
      %3111 = vmatprep.subr.bf16.mxu0 0
      %3112 = vmatpush1.bf16.xpose.msra.mxu0 0
      %3113 = vmatprep.subr.bf16.mxu0 0
      %3114 = vmatpush1.bf16.xpose.msra.mxu0 0
      %3115 = vmatprep.subr.bf16.mxu0 0
      %3116 = vmatpush1.bf16.xpose.msra.mxu0 0
      %3117 = vmatprep.subr.bf16.mxu0 0
      %3118 = vmatpush1.bf16.xpose.msra.mxu0 0
      %3119 = vmatprep.subr.bf16.mxu0 0
      %3120 = vmatpush1.bf16.xpose.msra.mxu0 0
      %3121 = vmatprep.subr.bf16.mxu0 0
      %3122 = vmatpush1.bf16.xpose.msra.mxu0 0
      %3123 = vmatprep.subr.bf16.mxu0 0
      %3124 = vmatpush1.bf16.xpose.msra.mxu0 %v3107
      %3125 = vmatprep.subr.bf16.mxu0 0
      %3126 = vmatpush2.bf16.xpose.msra.mxu0 0
      %3127 = vmatprep.subr.bf16.mxu0 0
      %3128 = vmatpush2.bf16.xpose.msra.mxu0 0
      %3129 = vmatprep.subr.bf16.mxu0 0
      %3130 = vmatpush2.bf16.xpose.msra.mxu0 0
      %3131 = vmatprep.subr.bf16.mxu0 0
      %3132 = vmatpush2.bf16.xpose.msra.mxu0 0
      %3133 = vmatprep.subr.bf16.mxu0 0
      %3134 = vmatpush2.bf16.xpose.msra.mxu0 0
      %3135 = vmatprep.subr.bf16.mxu0 0
      %3136 = vmatpush2.bf16.xpose.msra.mxu0 0
      %3137 = vmatprep.subr.bf16.mxu0 0
      %3138 = vmatpush2.bf16.xpose.msra.mxu0 0
      %3139 = vmatprep.subr.bf16.mxu0 0
      %3140 = vmatpush2.bf16.xpose.msra.mxu0 0
      %3141 = vmatprep.mubr.bf16.mxu0 0
      %3142 = vmatmul.mubr.bf16.gmra.mxu0 %v1472
      %v3143 = vpop.f32.mrf.mxu0
      %v3144 = vadd.f32 0.0, %v3143
      %v3145 = vpop.f32.mrf.mxu0
      %v3146 = vpop.f32.mrf.mxu0
      %v3147 = vadd.f32 0.0, %v3146
      %v3148 = vpop.f32.mrf.mxu0
      %3149 = vmatprep.mubr.bf16.mxu0 0
      %3150 = vmatmul.mubr.bf16.gmra.mxu0 %v1473
      %v3151 = vpop.f32.mrf.mxu0
      %v3152 = vadd.f32 0.0, %v3151
      %v3153 = vpop.f32.mrf.mxu0
      %v3154 = vpop.f32.mrf.mxu0
      %v3155 = vadd.f32 0.0, %v3154
      %v3156 = vpop.f32.mrf.mxu0
      %3157 = vdwg.mxu0
      %v3160 = vunpack.c.l.b16 %v2350
      %v3161 = vunpack.c.l.b16 %v2351
      %v3162 = vpack.c.b16 %v3161, %v3160
      %3164 = vmatprep.subr.bf16.mxu0 0
      %3165 = vmatpush1.bf16.xpose.msra.mxu0 0
      %3166 = vmatprep.subr.bf16.mxu0 0
      %3167 = vmatpush1.bf16.xpose.msra.mxu0 0
      %3168 = vmatprep.subr.bf16.mxu0 0
      %3169 = vmatpush1.bf16.xpose.msra.mxu0 0
      %3170 = vmatprep.subr.bf16.mxu0 0
      %3171 = vmatpush1.bf16.xpose.msra.mxu0 0
      %3172 = vmatprep.subr.bf16.mxu0 0
      %3173 = vmatpush1.bf16.xpose.msra.mxu0 0
      %3174 = vmatprep.subr.bf16.mxu0 0
      %3175 = vmatpush1.bf16.xpose.msra.mxu0 0
      %3176 = vmatprep.subr.bf16.mxu0 0
      %3177 = vmatpush1.bf16.xpose.msra.mxu0 0
      %3178 = vmatprep.subr.bf16.mxu0 0
      %3179 = vmatpush1.bf16.xpose.msra.mxu0 %v3162
      %3180 = vmatprep.subr.bf16.mxu0 0
      %3181 = vmatpush2.bf16.xpose.msra.mxu0 0
      %3182 = vmatprep.subr.bf16.mxu0 0
      %3183 = vmatpush2.bf16.xpose.msra.mxu0 0
      %3184 = vmatprep.subr.bf16.mxu0 0
      %3185 = vmatpush2.bf16.xpose.msra.mxu0 0
      %3186 = vmatprep.subr.bf16.mxu0 0
      %3187 = vmatpush2.bf16.xpose.msra.mxu0 0
      %3188 = vmatprep.subr.bf16.mxu0 0
      %3189 = vmatpush2.bf16.xpose.msra.mxu0 0
      %3190 = vmatprep.subr.bf16.mxu0 0
      %3191 = vmatpush2.bf16.xpose.msra.mxu0 0
      %3192 = vmatprep.subr.bf16.mxu0 0
      %3193 = vmatpush2.bf16.xpose.msra.mxu0 0
      %3194 = vmatprep.subr.bf16.mxu0 0
      %3195 = vmatpush2.bf16.xpose.msra.mxu0 0
      %3196 = vmatprep.mubr.bf16.mxu0 0
      %3197 = vmatmul.mubr.bf16.gmra.mxu0 %v1474
      %v3198 = vpop.f32.mrf.mxu0
      %v3199 = vadd.f32 0.0, %v3198
      %v3200 = vpop.f32.mrf.mxu0
      %v3201 = vpop.f32.mrf.mxu0
      %v3202 = vadd.f32 0.0, %v3201
      %v3203 = vpop.f32.mrf.mxu0
      %3204 = vmatprep.mubr.bf16.mxu0 0
      %3205 = vmatmul.mubr.bf16.gmra.mxu0 %v1475
      %v3206 = vpop.f32.mrf.mxu0
      %v3207 = vadd.f32 0.0, %v3206
      %v3208 = vpop.f32.mrf.mxu0
      %v3209 = vpop.f32.mrf.mxu0
      %v3210 = vadd.f32 0.0, %v3209
      %v3211 = vpop.f32.mrf.mxu0
      %3212 = vdwg.mxu0
      %v3215 = vunpack.c.l.b16 %v2352
      %v3216 = vunpack.c.l.b16 %v2353
      %v3217 = vpack.c.b16 %v3216, %v3215
      %3219 = vmatprep.subr.bf16.mxu0 0
      %3220 = vmatpush1.bf16.xpose.msra.mxu0 0
      %3221 = vmatprep.subr.bf16.mxu0 0
      %3222 = vmatpush1.bf16.xpose.msra.mxu0 0
      %3223 = vmatprep.subr.bf16.mxu0 0
      %3224 = vmatpush1.bf16.xpose.msra.mxu0 0
      %3225 = vmatprep.subr.bf16.mxu0 0
      %3226 = vmatpush1.bf16.xpose.msra.mxu0 0
      %3227 = vmatprep.subr.bf16.mxu0 0
      %3228 = vmatpush1.bf16.xpose.msra.mxu0 0
      %3229 = vmatprep.subr.bf16.mxu0 0
      %3230 = vmatpush1.bf16.xpose.msra.mxu0 0
      %3231 = vmatprep.subr.bf16.mxu0 0
      %3232 = vmatpush1.bf16.xpose.msra.mxu0 0
      %3233 = vmatprep.subr.bf16.mxu0 0
      %3234 = vmatpush1.bf16.xpose.msra.mxu0 %v3217
      %3235 = vmatprep.subr.bf16.mxu0 0
      %3236 = vmatpush2.bf16.xpose.msra.mxu0 0
      %3237 = vmatprep.subr.bf16.mxu0 0
      %3238 = vmatpush2.bf16.xpose.msra.mxu0 0
      %3239 = vmatprep.subr.bf16.mxu0 0
      %3240 = vmatpush2.bf16.xpose.msra.mxu0 0
      %3241 = vmatprep.subr.bf16.mxu0 0
      %3242 = vmatpush2.bf16.xpose.msra.mxu0 0
      %3243 = vmatprep.subr.bf16.mxu0 0
      %3244 = vmatpush2.bf16.xpose.msra.mxu0 0
      %3245 = vmatprep.subr.bf16.mxu0 0
      %3246 = vmatpush2.bf16.xpose.msra.mxu0 0
      %3247 = vmatprep.subr.bf16.mxu0 0
      %3248 = vmatpush2.bf16.xpose.msra.mxu0 0
      %3249 = vmatprep.subr.bf16.mxu0 0
      %3250 = vmatpush2.bf16.xpose.msra.mxu0 0
      %3251 = vmatprep.mubr.bf16.mxu0 0
      %3252 = vmatmul.mubr.bf16.gmra.mxu0 %v1476
      %v3253 = vpop.f32.mrf.mxu0
      %v3254 = vadd.f32 0.0, %v3253
      %v3255 = vpop.f32.mrf.mxu0
      %v3256 = vpop.f32.mrf.mxu0
      %v3257 = vadd.f32 0.0, %v3256
      %v3258 = vpop.f32.mrf.mxu0
      %3259 = vmatprep.mubr.bf16.mxu0 0
      %3260 = vmatmul.mubr.bf16.gmra.mxu0 %v1477
      %v3261 = vpop.f32.mrf.mxu0
      %v3262 = vadd.f32 0.0, %v3261
      %v3263 = vpop.f32.mrf.mxu0
      %v3264 = vpop.f32.mrf.mxu0
      %v3265 = vadd.f32 0.0, %v3264
      %v3266 = vpop.f32.mrf.mxu0
      %3267 = vdwg.mxu0
      %v3268 = vld [vmem:[#allocation4] sm:$0xff]
      %v3269 = vld [vmem:[#allocation4 + $0x8] sm:$0xff]
      %v3270 = vld [vmem:[#allocation4 + $0x10] sm:$0xff]
      %v3271 = vld [vmem:[#allocation4 + $0x18] sm:$0xff]
      %v3272 = vld [vmem:[#allocation4 + $0x20] sm:$0xff]
      %v3273 = vld [vmem:[#allocation4 + $0x28] sm:$0xff]
      %v3274 = vld [vmem:[#allocation4 + $0x30] sm:$0xff]
      %v3275 = vld [vmem:[#allocation4 + $0x38] sm:$0xff]
      %v3276 = vld [vmem:[#allocation4 + $0x40] sm:$0xff]
      %v3277 = vld [vmem:[#allocation4 + $0x48] sm:$0xff]
      %v3278 = vld [vmem:[#allocation4 + $0x50] sm:$0xff]
      %v3279 = vld [vmem:[#allocation4 + $0x58] sm:$0xff]
      %v3280 = vld [vmem:[#allocation4 + $0x60] sm:$0xff]
      %v3281 = vld [vmem:[#allocation4 + $0x68] sm:$0xff]
      %v3282 = vld [vmem:[#allocation4 + $0x70] sm:$0xff]
      %v3283 = vld [vmem:[#allocation4 + $0x78] sm:$0xff]
      %v3284 = vld [vmem:[#allocation4 + $0x80] sm:$0xff]
      %v3285 = vld [vmem:[#allocation4 + $0x88] sm:$0xff]
      %v3286 = vld [vmem:[#allocation4 + $0x90] sm:$0xff]
      %v3287 = vld [vmem:[#allocation4 + $0x98] sm:$0xff]
      %v3288 = vld [vmem:[#allocation4 + $0xa0] sm:$0xff]
      %v3289 = vld [vmem:[#allocation4 + $0xa8] sm:$0xff]
      %v3290 = vld [vmem:[#allocation4 + $0xb0] sm:$0xff]
      %v3291 = vld [vmem:[#allocation4 + $0xb8] sm:$0xff]
      %v3292 = vld [vmem:[#allocation4 + $0xc0] sm:$0xff]
      %v3293 = vld [vmem:[#allocation4 + $0xc8] sm:$0xff]
      %v3294 = vld [vmem:[#allocation4 + $0xd0] sm:$0xff]
      %v3295 = vld [vmem:[#allocation4 + $0xd8] sm:$0xff]
      %v3296 = vld [vmem:[#allocation4 + $0xe0] sm:$0xff]
      %v3297 = vld [vmem:[#allocation4 + $0xe8] sm:$0xff]
      %v3298 = vld [vmem:[#allocation4 + $0xf0] sm:$0xff]
      %v3299 = vld [vmem:[#allocation4 + $0xf8] sm:$0xff]
      %v3300 = vld [vmem:[#allocation4 + $0x100] sm:$0xff]
      %v3301 = vld [vmem:[#allocation4 + $0x108] sm:$0xff]
      %v3302 = vld [vmem:[#allocation4 + $0x110] sm:$0xff]
      %v3303 = vld [vmem:[#allocation4 + $0x118] sm:$0xff]
      %v3304 = vld [vmem:[#allocation4 + $0x120] sm:$0xff]
      %v3305 = vld [vmem:[#allocation4 + $0x128] sm:$0xff]
      %v3306 = vld [vmem:[#allocation4 + $0x130] sm:$0xff]
      %v3307 = vld [vmem:[#allocation4 + $0x138] sm:$0xff]
      %v3308 = vld [vmem:[#allocation4 + $0x140] sm:$0xff]
      %v3309 = vld [vmem:[#allocation4 + $0x148] sm:$0xff]
      %v3310 = vld [vmem:[#allocation4 + $0x150] sm:$0xff]
      %v3311 = vld [vmem:[#allocation4 + $0x158] sm:$0xff]
      %v3312 = vld [vmem:[#allocation4 + $0x160] sm:$0xff]
      %v3313 = vld [vmem:[#allocation4 + $0x168] sm:$0xff]
      %v3314 = vld [vmem:[#allocation4 + $0x170] sm:$0xff]
      %v3315 = vld [vmem:[#allocation4 + $0x178] sm:$0xff]
      %v3316 = vld [vmem:[#allocation4 + $0x180] sm:$0xff]
      %v3317 = vld [vmem:[#allocation4 + $0x188] sm:$0xff]
      %v3318 = vld [vmem:[#allocation4 + $0x190] sm:$0xff]
      %v3319 = vld [vmem:[#allocation4 + $0x198] sm:$0xff]
      %v3320 = vld [vmem:[#allocation4 + $0x1a0] sm:$0xff]
      %v3321 = vld [vmem:[#allocation4 + $0x1a8] sm:$0xff]
      %v3322 = vld [vmem:[#allocation4 + $0x1b0] sm:$0xff]
      %v3323 = vld [vmem:[#allocation4 + $0x1b8] sm:$0xff]
      %v3324 = vld [vmem:[#allocation4 + $0x1c0] sm:$0xff]
      %v3325 = vld [vmem:[#allocation4 + $0x1c8] sm:$0xff]
      %v3326 = vld [vmem:[#allocation4 + $0x1d0] sm:$0xff]
      %v3327 = vld [vmem:[#allocation4 + $0x1d8] sm:$0xff]
      %v3328 = vld [vmem:[#allocation4 + $0x1e0] sm:$0xff]
      %v3329 = vld [vmem:[#allocation4 + $0x1e8] sm:$0xff]
      %v3330 = vld [vmem:[#allocation4 + $0x1f0] sm:$0xff]
      %v3331 = vld [vmem:[#allocation4 + $0x1f8] sm:$0xff]
      %vm3332 = vcmask 130048
      %v3333 = vsel %vm3332, %v2429, -inf
      %3334 = vmax.xlane.f32.xlu0 %v3333
      %v3335 = vpop.xlane.xlu0 %3334
      %v3336 = vsel %vm3332, %v2432, -inf
      %3337 = vmax.xlane.f32.xlu0 %v3336
      %v3338 = vpop.xlane.xlu0 %3337
      %v3339 = vsel %vm3332, %v2437, -inf
      %3340 = vmax.xlane.f32.xlu0 %v3339
      %v3341 = vpop.xlane.xlu0 %3340
      %v3342 = vsel %vm3332, %v2440, -inf
      %3343 = vmax.xlane.f32.xlu0 %v3342
      %v3344 = vpop.xlane.xlu0 %3343
      %v3345 = vsel %vm3332, %v2484, -inf
      %3346 = vmax.xlane.f32.xlu0 %v3345
      %v3347 = vpop.xlane.xlu0 %3346
      %v3348 = vsel %vm3332, %v2487, -inf
      %3349 = vmax.xlane.f32.xlu0 %v3348
      %v3350 = vpop.xlane.xlu0 %3349
      %v3351 = vsel %vm3332, %v2492, -inf
      %3352 = vmax.xlane.f32.xlu0 %v3351
      %v3353 = vpop.xlane.xlu0 %3352
      %v3354 = vsel %vm3332, %v2495, -inf
      %3355 = vmax.xlane.f32.xlu0 %v3354
      %v3356 = vpop.xlane.xlu0 %3355
      %v3357 = vsel %vm3332, %v2539, -inf
      %3358 = vmax.xlane.f32.xlu0 %v3357
      %v3359 = vpop.xlane.xlu0 %3358
      %v3360 = vsel %vm3332, %v2542, -inf
      %3361 = vmax.xlane.f32.xlu0 %v3360
      %v3362 = vpop.xlane.xlu0 %3361
      %v3363 = vsel %vm3332, %v2547, -inf
      %3364 = vmax.xlane.f32.xlu0 %v3363
      %v3365 = vpop.xlane.xlu0 %3364
      %v3366 = vsel %vm3332, %v2550, -inf
      %3367 = vmax.xlane.f32.xlu0 %v3366
      %v3368 = vpop.xlane.xlu0 %3367
      %v3369 = vsel %vm3332, %v2594, -inf
      %3370 = vmax.xlane.f32.xlu0 %v3369
      %v3371 = vpop.xlane.xlu0 %3370
      %v3372 = vsel %vm3332, %v2597, -inf
      %3373 = vmax.xlane.f32.xlu0 %v3372
      %v3374 = vpop.xlane.xlu0 %3373
      %v3375 = vsel %vm3332, %v2602, -inf
      %3376 = vmax.xlane.f32.xlu0 %v3375
      %v3377 = vpop.xlane.xlu0 %3376
      %v3378 = vsel %vm3332, %v2605, -inf
      %3379 = vmax.xlane.f32.xlu0 %v3378
      %v3380 = vpop.xlane.xlu0 %3379
      %v3381 = vsel %vm3332, %v2649, -inf
      %3382 = vmax.xlane.f32.xlu0 %v3381
      %v3383 = vpop.xlane.xlu0 %3382
      %v3384 = vsel %vm3332, %v2652, -inf
      %3385 = vmax.xlane.f32.xlu0 %v3384
      %v3386 = vpop.xlane.xlu0 %3385
      %v3387 = vsel %vm3332, %v2657, -inf
      %3388 = vmax.xlane.f32.xlu0 %v3387
      %v3389 = vpop.xlane.xlu0 %3388
      %v3390 = vsel %vm3332, %v2660, -inf
      %3391 = vmax.xlane.f32.xlu0 %v3390
      %v3392 = vpop.xlane.xlu0 %3391
      %v3393 = vsel %vm3332, %v2704, -inf
      %3394 = vmax.xlane.f32.xlu0 %v3393
      %v3395 = vpop.xlane.xlu0 %3394
      %v3396 = vsel %vm3332, %v2707, -inf
      %3397 = vmax.xlane.f32.xlu0 %v3396
      %v3398 = vpop.xlane.xlu0 %3397
      %v3399 = vsel %vm3332, %v2712, -inf
      %3400 = vmax.xlane.f32.xlu0 %v3399
      %v3401 = vpop.xlane.xlu0 %3400
      %v3402 = vsel %vm3332, %v2715, -inf
      %3403 = vmax.xlane.f32.xlu0 %v3402
      %v3404 = vpop.xlane.xlu0 %3403
      %v3405 = vsel %vm3332, %v2759, -inf
      %3406 = vmax.xlane.f32.xlu0 %v3405
      %v3407 = vpop.xlane.xlu0 %3406
      %v3408 = vsel %vm3332, %v2762, -inf
      %3409 = vmax.xlane.f32.xlu0 %v3408
      %v3410 = vpop.xlane.xlu0 %3409
      %v3411 = vsel %vm3332, %v2767, -inf
      %3412 = vmax.xlane.f32.xlu0 %v3411
      %v3413 = vpop.xlane.xlu0 %3412
      %v3414 = vsel %vm3332, %v2770, -inf
      %3415 = vmax.xlane.f32.xlu0 %v3414
      %v3416 = vpop.xlane.xlu0 %3415
      %v3417 = vsel %vm3332, %v2814, -inf
      %3418 = vmax.xlane.f32.xlu0 %v3417
      %v3419 = vpop.xlane.xlu0 %3418
      %v3420 = vsel %vm3332, %v2817, -inf
      %3421 = vmax.xlane.f32.xlu0 %v3420
      %v3422 = vpop.xlane.xlu0 %3421
      %v3423 = vsel %vm3332, %v2822, -inf
      %3424 = vmax.xlane.f32.xlu0 %v3423
      %v3425 = vpop.xlane.xlu0 %3424
      %v3426 = vsel %vm3332, %v2825, -inf
      %3427 = vmax.xlane.f32.xlu0 %v3426
      %v3428 = vpop.xlane.xlu0 %3427
      %v3429 = vsel %vm3332, %v2869, -inf
      %3430 = vmax.xlane.f32.xlu0 %v3429
      %v3431 = vpop.xlane.xlu0 %3430
      %v3432 = vsel %vm3332, %v2872, -inf
      %3433 = vmax.xlane.f32.xlu0 %v3432
      %v3434 = vpop.xlane.xlu0 %3433
      %v3435 = vsel %vm3332, %v2877, -inf
      %3436 = vmax.xlane.f32.xlu0 %v3435
      %v3437 = vpop.xlane.xlu0 %3436
      %v3438 = vsel %vm3332, %v2880, -inf
      %3439 = vmax.xlane.f32.xlu0 %v3438
      %v3440 = vpop.xlane.xlu0 %3439
      %v3441 = vsel %vm3332, %v2924, -inf
      %3442 = vmax.xlane.f32.xlu0 %v3441
      %v3443 = vpop.xlane.xlu0 %3442
      %v3444 = vsel %vm3332, %v2927, -inf
      %3445 = vmax.xlane.f32.xlu0 %v3444
      %v3446 = vpop.xlane.xlu0 %3445
      %v3447 = vsel %vm3332, %v2932, -inf
      %3448 = vmax.xlane.f32.xlu0 %v3447
      %v3449 = vpop.xlane.xlu0 %3448
      %v3450 = vsel %vm3332, %v2935, -inf
      %3451 = vmax.xlane.f32.xlu0 %v3450
      %v3452 = vpop.xlane.xlu0 %3451
      %v3453 = vsel %vm3332, %v2979, -inf
      %3454 = vmax.xlane.f32.xlu0 %v3453
      %v3455 = vpop.xlane.xlu0 %3454
      %v3456 = vsel %vm3332, %v2982, -inf
      %3457 = vmax.xlane.f32.xlu0 %v3456
      %v3458 = vpop.xlane.xlu0 %3457
      %v3459 = vsel %vm3332, %v2987, -inf
      %3460 = vmax.xlane.f32.xlu0 %v3459
      %v3461 = vpop.xlane.xlu0 %3460
      %v3462 = vsel %vm3332, %v2990, -inf
      %3463 = vmax.xlane.f32.xlu0 %v3462
      %v3464 = vpop.xlane.xlu0 %3463
      %v3465 = vsel %vm3332, %v3034, -inf
      %3466 = vmax.xlane.f32.xlu0 %v3465
      %v3467 = vpop.xlane.xlu0 %3466
      %v3468 = vsel %vm3332, %v3037, -inf
      %3469 = vmax.xlane.f32.xlu0 %v3468
      %v3470 = vpop.xlane.xlu0 %3469
      %v3471 = vsel %vm3332, %v3042, -inf
      %3472 = vmax.xlane.f32.xlu0 %v3471
      %v3473 = vpop.xlane.xlu0 %3472
      %v3474 = vsel %vm3332, %v3045, -inf
      %3475 = vmax.xlane.f32.xlu0 %v3474
      %v3476 = vpop.xlane.xlu0 %3475
      %v3477 = vsel %vm3332, %v3089, -inf
      %3478 = vmax.xlane.f32.xlu0 %v3477
      %v3479 = vpop.xlane.xlu0 %3478
      %v3480 = vsel %vm3332, %v3092, -inf
      %3481 = vmax.xlane.f32.xlu0 %v3480
      %v3482 = vpop.xlane.xlu0 %3481
      %v3483 = vsel %vm3332, %v3097, -inf
      %3484 = vmax.xlane.f32.xlu0 %v3483
      %v3485 = vpop.xlane.xlu0 %3484
      %v3486 = vsel %vm3332, %v3100, -inf
      %3487 = vmax.xlane.f32.xlu0 %v3486
      %v3488 = vpop.xlane.xlu0 %3487
      %v3489 = vsel %vm3332, %v3144, -inf
      %3490 = vmax.xlane.f32.xlu0 %v3489
      %v3491 = vpop.xlane.xlu0 %3490
      %v3492 = vsel %vm3332, %v3147, -inf
      %3493 = vmax.xlane.f32.xlu0 %v3492
      %v3494 = vpop.xlane.xlu0 %3493
      %v3495 = vsel %vm3332, %v3152, -inf
      %3496 = vmax.xlane.f32.xlu0 %v3495
      %v3497 = vpop.xlane.xlu0 %3496
      %v3498 = vsel %vm3332, %v3155, -inf
      %3499 = vmax.xlane.f32.xlu0 %v3498
      %v3500 = vpop.xlane.xlu0 %3499
      %v3501 = vsel %vm3332, %v3199, -inf
      %3502 = vmax.xlane.f32.xlu0 %v3501
      %v3503 = vpop.xlane.xlu0 %3502
      %v3504 = vsel %vm3332, %v3202, -inf
      %3505 = vmax.xlane.f32.xlu0 %v3504
      %v3506 = vpop.xlane.xlu0 %3505
      %v3507 = vsel %vm3332, %v3207, -inf
      %3508 = vmax.xlane.f32.xlu0 %v3507
      %v3509 = vpop.xlane.xlu0 %3508
      %v3510 = vsel %vm3332, %v3210, -inf
      %3511 = vmax.xlane.f32.xlu0 %v3510
      %v3512 = vpop.xlane.xlu0 %3511
      %v3513 = vsel %vm3332, %v3254, -inf
      %3514 = vmax.xlane.f32.xlu0 %v3513
      %v3515 = vpop.xlane.xlu0 %3514
      %v3516 = vsel %vm3332, %v3257, -inf
      %3517 = vmax.xlane.f32.xlu0 %v3516
      %v3518 = vpop.xlane.xlu0 %3517
      %v3519 = vsel %vm3332, %v3262, -inf
      %3520 = vmax.xlane.f32.xlu0 %v3519
      %v3521 = vpop.xlane.xlu0 %3520
      %v3522 = vsel %vm3332, %v3265, -inf
      %3523 = vmax.xlane.f32.xlu0 %v3522
      %v3524 = vpop.xlane.xlu0 %3523
      %v3525 = vmax.f32 %v3268, %v3335
      %v3526 = vmax.f32 %v3269, %v3338
      %v3527 = vmax.f32 %v3270, %v3341
      %v3528 = vmax.f32 %v3271, %v3344
      %v3529 = vmax.f32 %v3272, %v3347
      %v3530 = vmax.f32 %v3273, %v3350
      %v3531 = vmax.f32 %v3274, %v3353
      %v3532 = vmax.f32 %v3275, %v3356
      %v3533 = vmax.f32 %v3276, %v3359
      %v3534 = vmax.f32 %v3277, %v3362
      %v3535 = vmax.f32 %v3278, %v3365
      %v3536 = vmax.f32 %v3279, %v3368
      %v3537 = vmax.f32 %v3280, %v3371
      %v3538 = vmax.f32 %v3281, %v3374
      %v3539 = vmax.f32 %v3282, %v3377
      %v3540 = vmax.f32 %v3283, %v3380
      %v3541 = vmax.f32 %v3284, %v3383
      %v3542 = vmax.f32 %v3285, %v3386
      %v3543 = vmax.f32 %v3286, %v3389
      %v3544 = vmax.f32 %v3287, %v3392
      %v3545 = vmax.f32 %v3288, %v3395
      %v3546 = vmax.f32 %v3289, %v3398
      %v3547 = vmax.f32 %v3290, %v3401
      %v3548 = vmax.f32 %v3291, %v3404
      %v3549 = vmax.f32 %v3292, %v3407
      %v3550 = vmax.f32 %v3293, %v3410
      %v3551 = vmax.f32 %v3294, %v3413
      %v3552 = vmax.f32 %v3295, %v3416
      %v3553 = vmax.f32 %v3296, %v3419
      %v3554 = vmax.f32 %v3297, %v3422
      %v3555 = vmax.f32 %v3298, %v3425
      %v3556 = vmax.f32 %v3299, %v3428
      %v3557 = vmax.f32 %v3300, %v3431
      %v3558 = vmax.f32 %v3301, %v3434
      %v3559 = vmax.f32 %v3302, %v3437
      %v3560 = vmax.f32 %v3303, %v3440
      %v3561 = vmax.f32 %v3304, %v3443
      %v3562 = vmax.f32 %v3305, %v3446
      %v3563 = vmax.f32 %v3306, %v3449
      %v3564 = vmax.f32 %v3307, %v3452
      %v3565 = vmax.f32 %v3308, %v3455
      %v3566 = vmax.f32 %v3309, %v3458
      %v3567 = vmax.f32 %v3310, %v3461
      %v3568 = vmax.f32 %v3311, %v3464
      %v3569 = vmax.f32 %v3312, %v3467
      %v3570 = vmax.f32 %v3313, %v3470
      %v3571 = vmax.f32 %v3314, %v3473
      %v3572 = vmax.f32 %v3315, %v3476
      %v3573 = vmax.f32 %v3316, %v3479
      %v3574 = vmax.f32 %v3317, %v3482
      %v3575 = vmax.f32 %v3318, %v3485
      %v3576 = vmax.f32 %v3319, %v3488
      %v3577 = vmax.f32 %v3320, %v3491
      %v3578 = vmax.f32 %v3321, %v3494
      %v3579 = vmax.f32 %v3322, %v3497
      %v3580 = vmax.f32 %v3323, %v3500
      %v3581 = vmax.f32 %v3324, %v3503
      %v3582 = vmax.f32 %v3325, %v3506
      %v3583 = vmax.f32 %v3326, %v3509
      %v3584 = vmax.f32 %v3327, %v3512
      %v3585 = vmax.f32 %v3328, %v3515
      %v3586 = vmax.f32 %v3329, %v3518
      %v3587 = vmax.f32 %v3330, %v3521
      %v3588 = vmax.f32 %v3331, %v3524
      %v3589 = vsub.f32 %v3268, %v3525
      %v3590 = vsub.f32 %v3269, %v3526
      %v3591 = vsub.f32 %v3270, %v3527
      %v3592 = vsub.f32 %v3271, %v3528
      %v3593 = vsub.f32 %v3272, %v3529
      %v3594 = vsub.f32 %v3273, %v3530
      %v3595 = vsub.f32 %v3274, %v3531
      %v3596 = vsub.f32 %v3275, %v3532
      %v3597 = vsub.f32 %v3276, %v3533
      %v3598 = vsub.f32 %v3277, %v3534
      %v3599 = vsub.f32 %v3278, %v3535
      %v3600 = vsub.f32 %v3279, %v3536
      %v3601 = vsub.f32 %v3280, %v3537
      %v3602 = vsub.f32 %v3281, %v3538
      %v3603 = vsub.f32 %v3282, %v3539
      %v3604 = vsub.f32 %v3283, %v3540
      %v3605 = vsub.f32 %v3284, %v3541
      %v3606 = vsub.f32 %v3285, %v3542
      %v3607 = vsub.f32 %v3286, %v3543
      %v3608 = vsub.f32 %v3287, %v3544
      %v3609 = vsub.f32 %v3288, %v3545
      %v3610 = vsub.f32 %v3289, %v3546
      %v3611 = vsub.f32 %v3290, %v3547
      %v3612 = vsub.f32 %v3291, %v3548
      %v3613 = vsub.f32 %v3292, %v3549
      %v3614 = vsub.f32 %v3293, %v3550
      %v3615 = vsub.f32 %v3294, %v3551
      %v3616 = vsub.f32 %v3295, %v3552
      %v3617 = vsub.f32 %v3296, %v3553
      %v3618 = vsub.f32 %v3297, %v3554
      %v3619 = vsub.f32 %v3298, %v3555
      %v3620 = vsub.f32 %v3299, %v3556
      %v3621 = vsub.f32 %v3300, %v3557
      %v3622 = vsub.f32 %v3301, %v3558
      %v3623 = vsub.f32 %v3302, %v3559
      %v3624 = vsub.f32 %v3303, %v3560
      %v3625 = vsub.f32 %v3304, %v3561
      %v3626 = vsub.f32 %v3305, %v3562
      %v3627 = vsub.f32 %v3306, %v3563
      %v3628 = vsub.f32 %v3307, %v3564
      %v3629 = vsub.f32 %v3308, %v3565
      %v3630 = vsub.f32 %v3309, %v3566
      %v3631 = vsub.f32 %v3310, %v3567
      %v3632 = vsub.f32 %v3311, %v3568
      %v3633 = vsub.f32 %v3312, %v3569
      %v3634 = vsub.f32 %v3313, %v3570
      %v3635 = vsub.f32 %v3314, %v3571
      %v3636 = vsub.f32 %v3315, %v3572
      %v3637 = vsub.f32 %v3316, %v3573
      %v3638 = vsub.f32 %v3317, %v3574
      %v3639 = vsub.f32 %v3318, %v3575
      %v3640 = vsub.f32 %v3319, %v3576
      %v3641 = vsub.f32 %v3320, %v3577
      %v3642 = vsub.f32 %v3321, %v3578
      %v3643 = vsub.f32 %v3322, %v3579
      %v3644 = vsub.f32 %v3323, %v3580
      %v3645 = vsub.f32 %v3324, %v3581
      %v3646 = vsub.f32 %v3325, %v3582
      %v3647 = vsub.f32 %v3326, %v3583
      %v3648 = vsub.f32 %v3327, %v3584
      %v3649 = vsub.f32 %v3328, %v3585
      %v3650 = vsub.f32 %v3329, %v3586
      %v3651 = vsub.f32 %v3330, %v3587
      %v3652 = vsub.f32 %v3331, %v3588
      %v3653 = vmul.f32 %v3589, 1.442695
      %v3654 = vpow.pop %v3653
      %v3655 = vmul.f32 %v3590, 1.442695
      %v3656 = vpow.pop %v3655
      %v3657 = vmul.f32 %v3591, 1.442695
      %v3658 = vpow.pop %v3657
      %v3659 = vmul.f32 %v3592, 1.442695
      %v3660 = vpow.pop %v3659
      %v3661 = vmul.f32 %v3593, 1.442695
      %v3662 = vpow.pop %v3661
      %v3663 = vmul.f32 %v3594, 1.442695
      %v3664 = vpow.pop %v3663
      %v3665 = vmul.f32 %v3595, 1.442695
      %v3666 = vpow.pop %v3665
      %v3667 = vmul.f32 %v3596, 1.442695
      %v3668 = vpow.pop %v3667
      %v3669 = vmul.f32 %v3597, 1.442695
      %v3670 = vpow.pop %v3669
      %v3671 = vmul.f32 %v3598, 1.442695
      %v3672 = vpow.pop %v3671
      %v3673 = vmul.f32 %v3599, 1.442695
      %v3674 = vpow.pop %v3673
      %v3675 = vmul.f32 %v3600, 1.442695
      %v3676 = vpow.pop %v3675
      %v3677 = vmul.f32 %v3601, 1.442695
      %v3678 = vpow.pop %v3677
      %v3679 = vmul.f32 %v3602, 1.442695
      %v3680 = vpow.pop %v3679
      %v3681 = vmul.f32 %v3603, 1.442695
      %v3682 = vpow.pop %v3681
      %v3683 = vmul.f32 %v3604, 1.442695
      %v3684 = vpow.pop %v3683
      %v3685 = vmul.f32 %v3605, 1.442695
      %v3686 = vpow.pop %v3685
      %v3687 = vmul.f32 %v3606, 1.442695
      %v3688 = vpow.pop %v3687
      %v3689 = vmul.f32 %v3607, 1.442695
      %v3690 = vpow.pop %v3689
      %v3691 = vmul.f32 %v3608, 1.442695
      %v3692 = vpow.pop %v3691
      %v3693 = vmul.f32 %v3609, 1.442695
      %v3694 = vpow.pop %v3693
      %v3695 = vmul.f32 %v3610, 1.442695
      %v3696 = vpow.pop %v3695
      %v3697 = vmul.f32 %v3611, 1.442695
      %v3698 = vpow.pop %v3697
      %v3699 = vmul.f32 %v3612, 1.442695
      %v3700 = vpow.pop %v3699
      %v3701 = vmul.f32 %v3613, 1.442695
      %v3702 = vpow.pop %v3701
      %v3703 = vmul.f32 %v3614, 1.442695
      %v3704 = vpow.pop %v3703
      %v3705 = vmul.f32 %v3615, 1.442695
      %v3706 = vpow.pop %v3705
      %v3707 = vmul.f32 %v3616, 1.442695
      %v3708 = vpow.pop %v3707
      %v3709 = vmul.f32 %v3617, 1.442695
      %v3710 = vpow.pop %v3709
      %v3711 = vmul.f32 %v3618, 1.442695
      %v3712 = vpow.pop %v3711
      %v3713 = vmul.f32 %v3619, 1.442695
      %v3714 = vpow.pop %v3713
      %v3715 = vmul.f32 %v3620, 1.442695
      %v3716 = vpow.pop %v3715
      %v3717 = vmul.f32 %v3621, 1.442695
      %v3718 = vpow.pop %v3717
      %v3719 = vmul.f32 %v3622, 1.442695
      %v3720 = vpow.pop %v3719
      %v3721 = vmul.f32 %v3623, 1.442695
      %v3722 = vpow.pop %v3721
      %v3723 = vmul.f32 %v3624, 1.442695
      %v3724 = vpow.pop %v3723
      %v3725 = vmul.f32 %v3625, 1.442695
      %v3726 = vpow.pop %v3725
      %v3727 = vmul.f32 %v3626, 1.442695
      %v3728 = vpow.pop %v3727
      %v3729 = vmul.f32 %v3627, 1.442695
      %v3730 = vpow.pop %v3729
      %v3731 = vmul.f32 %v3628, 1.442695
      %v3732 = vpow.pop %v3731
      %v3733 = vmul.f32 %v3629, 1.442695
      %v3734 = vpow.pop %v3733
      %v3735 = vmul.f32 %v3630, 1.442695
      %v3736 = vpow.pop %v3735
      %v3737 = vmul.f32 %v3631, 1.442695
      %v3738 = vpow.pop %v3737
      %v3739 = vmul.f32 %v3632, 1.442695
      %v3740 = vpow.pop %v3739
      %v3741 = vmul.f32 %v3633, 1.442695
      %v3742 = vpow.pop %v3741
      %v3743 = vmul.f32 %v3634, 1.442695
      %v3744 = vpow.pop %v3743
      %v3745 = vmul.f32 %v3635, 1.442695
      %v3746 = vpow.pop %v3745
      %v3747 = vmul.f32 %v3636, 1.442695
      %v3748 = vpow.pop %v3747
      %v3749 = vmul.f32 %v3637, 1.442695
      %v3750 = vpow.pop %v3749
      %v3751 = vmul.f32 %v3638, 1.442695
      %v3752 = vpow.pop %v3751
      %v3753 = vmul.f32 %v3639, 1.442695
      %v3754 = vpow.pop %v3753
      %v3755 = vmul.f32 %v3640, 1.442695
      %v3756 = vpow.pop %v3755
      %v3757 = vmul.f32 %v3641, 1.442695
      %v3758 = vpow.pop %v3757
      %v3759 = vmul.f32 %v3642, 1.442695
      %v3760 = vpow.pop %v3759
      %v3761 = vmul.f32 %v3643, 1.442695
      %v3762 = vpow.pop %v3761
      %v3763 = vmul.f32 %v3644, 1.442695
      %v3764 = vpow.pop %v3763
      %v3765 = vmul.f32 %v3645, 1.442695
      %v3766 = vpow.pop %v3765
      %v3767 = vmul.f32 %v3646, 1.442695
      %v3768 = vpow.pop %v3767
      %v3769 = vmul.f32 %v3647, 1.442695
      %v3770 = vpow.pop %v3769
      %v3771 = vmul.f32 %v3648, 1.442695
      %v3772 = vpow.pop %v3771
      %v3773 = vmul.f32 %v3649, 1.442695
      %v3774 = vpow.pop %v3773
      %v3775 = vmul.f32 %v3650, 1.442695
      %v3776 = vpow.pop %v3775
      %v3777 = vmul.f32 %v3651, 1.442695
      %v3778 = vpow.pop %v3777
      %v3779 = vmul.f32 %v3652, 1.442695
      %v3780 = vpow.pop %v3779
      %3782 = vset.pattern.permute.xlu0 0
      %3783 = vperm.xlu0 %3782, %v3525
      %v3784 = vpop.permute.xlu0 %3783
      %3787 = vset.pattern.permute.xlu0 0
      %3788 = vperm.xlu0 %3787, %v3526
      %v3789 = vpop.permute.xlu0 %3788
      %3792 = vset.pattern.permute.xlu0 0
      %3793 = vperm.xlu0 %3792, %v3527
      %v3794 = vpop.permute.xlu0 %3793
      %3797 = vset.pattern.permute.xlu0 0
      %3798 = vperm.xlu0 %3797, %v3528
      %v3799 = vpop.permute.xlu0 %3798
      %3802 = vset.pattern.permute.xlu0 0
      %3803 = vperm.xlu0 %3802, %v3529
      %v3804 = vpop.permute.xlu0 %3803
      %3807 = vset.pattern.permute.xlu0 0
      %3808 = vperm.xlu0 %3807, %v3530
      %v3809 = vpop.permute.xlu0 %3808
      %3812 = vset.pattern.permute.xlu0 0
      %3813 = vperm.xlu0 %3812, %v3531
      %v3814 = vpop.permute.xlu0 %3813
      %3817 = vset.pattern.permute.xlu0 0
      %3818 = vperm.xlu0 %3817, %v3532
      %v3819 = vpop.permute.xlu0 %3818
      %3822 = vset.pattern.permute.xlu0 0
      %3823 = vperm.xlu0 %3822, %v3533
      %v3824 = vpop.permute.xlu0 %3823
      %3827 = vset.pattern.permute.xlu0 0
      %3828 = vperm.xlu0 %3827, %v3534
      %v3829 = vpop.permute.xlu0 %3828
      %3832 = vset.pattern.permute.xlu0 0
      %3833 = vperm.xlu0 %3832, %v3535
      %v3834 = vpop.permute.xlu0 %3833
      %3837 = vset.pattern.permute.xlu0 0
      %3838 = vperm.xlu0 %3837, %v3536
      %v3839 = vpop.permute.xlu0 %3838
      %3842 = vset.pattern.permute.xlu0 0
      %3843 = vperm.xlu0 %3842, %v3537
      %v3844 = vpop.permute.xlu0 %3843
      %3847 = vset.pattern.permute.xlu0 0
      %3848 = vperm.xlu0 %3847, %v3538
      %v3849 = vpop.permute.xlu0 %3848
      %3852 = vset.pattern.permute.xlu0 0
      %3853 = vperm.xlu0 %3852, %v3539
      %v3854 = vpop.permute.xlu0 %3853
      %3857 = vset.pattern.permute.xlu0 0
      %3858 = vperm.xlu0 %3857, %v3540
      %v3859 = vpop.permute.xlu0 %3858
      %3862 = vset.pattern.permute.xlu0 0
      %3863 = vperm.xlu0 %3862, %v3541
      %v3864 = vpop.permute.xlu0 %3863
      %3867 = vset.pattern.permute.xlu0 0
      %3868 = vperm.xlu0 %3867, %v3542
      %v3869 = vpop.permute.xlu0 %3868
      %3872 = vset.pattern.permute.xlu0 0
      %3873 = vperm.xlu0 %3872, %v3543
      %v3874 = vpop.permute.xlu0 %3873
      %3877 = vset.pattern.permute.xlu0 0
      %3878 = vperm.xlu0 %3877, %v3544
      %v3879 = vpop.permute.xlu0 %3878
      %3882 = vset.pattern.permute.xlu0 0
      %3883 = vperm.xlu0 %3882, %v3545
      %v3884 = vpop.permute.xlu0 %3883
      %3887 = vset.pattern.permute.xlu0 0
      %3888 = vperm.xlu0 %3887, %v3546
      %v3889 = vpop.permute.xlu0 %3888
      %3892 = vset.pattern.permute.xlu0 0
      %3893 = vperm.xlu0 %3892, %v3547
      %v3894 = vpop.permute.xlu0 %3893
      %3897 = vset.pattern.permute.xlu0 0
      %3898 = vperm.xlu0 %3897, %v3548
      %v3899 = vpop.permute.xlu0 %3898
      %3902 = vset.pattern.permute.xlu0 0
      %3903 = vperm.xlu0 %3902, %v3549
      %v3904 = vpop.permute.xlu0 %3903
      %3907 = vset.pattern.permute.xlu0 0
      %3908 = vperm.xlu0 %3907, %v3550
      %v3909 = vpop.permute.xlu0 %3908
      %3912 = vset.pattern.permute.xlu0 0
      %3913 = vperm.xlu0 %3912, %v3551
      %v3914 = vpop.permute.xlu0 %3913
      %3917 = vset.pattern.permute.xlu0 0
      %3918 = vperm.xlu0 %3917, %v3552
      %v3919 = vpop.permute.xlu0 %3918
      %3922 = vset.pattern.permute.xlu0 0
      %3923 = vperm.xlu0 %3922, %v3553
      %v3924 = vpop.permute.xlu0 %3923
      %3927 = vset.pattern.permute.xlu0 0
      %3928 = vperm.xlu0 %3927, %v3554
      %v3929 = vpop.permute.xlu0 %3928
      %3932 = vset.pattern.permute.xlu0 0
      %3933 = vperm.xlu0 %3932, %v3555
      %v3934 = vpop.permute.xlu0 %3933
      %3937 = vset.pattern.permute.xlu0 0
      %3938 = vperm.xlu0 %3937, %v3556
      %v3939 = vpop.permute.xlu0 %3938
      %3942 = vset.pattern.permute.xlu0 0
      %3943 = vperm.xlu0 %3942, %v3557
      %v3944 = vpop.permute.xlu0 %3943
      %3947 = vset.pattern.permute.xlu0 0
      %3948 = vperm.xlu0 %3947, %v3558
      %v3949 = vpop.permute.xlu0 %3948
      %3952 = vset.pattern.permute.xlu0 0
      %3953 = vperm.xlu0 %3952, %v3559
      %v3954 = vpop.permute.xlu0 %3953
      %3957 = vset.pattern.permute.xlu0 0
      %3958 = vperm.xlu0 %3957, %v3560
      %v3959 = vpop.permute.xlu0 %3958
      %3962 = vset.pattern.permute.xlu0 0
      %3963 = vperm.xlu0 %3962, %v3561
      %v3964 = vpop.permute.xlu0 %3963
      %3967 = vset.pattern.permute.xlu0 0
      %3968 = vperm.xlu0 %3967, %v3562
      %v3969 = vpop.permute.xlu0 %3968
      %3972 = vset.pattern.permute.xlu0 0
      %3973 = vperm.xlu0 %3972, %v3563
      %v3974 = vpop.permute.xlu0 %3973
      %3977 = vset.pattern.permute.xlu0 0
      %3978 = vperm.xlu0 %3977, %v3564
      %v3979 = vpop.permute.xlu0 %3978
      %3982 = vset.pattern.permute.xlu0 0
      %3983 = vperm.xlu0 %3982, %v3565
      %v3984 = vpop.permute.xlu0 %3983
      %3987 = vset.pattern.permute.xlu0 0
      %3988 = vperm.xlu0 %3987, %v3566
      %v3989 = vpop.permute.xlu0 %3988
      %3992 = vset.pattern.permute.xlu0 0
      %3993 = vperm.xlu0 %3992, %v3567
      %v3994 = vpop.permute.xlu0 %3993
      %3997 = vset.pattern.permute.xlu0 0
      %3998 = vperm.xlu0 %3997, %v3568
      %v3999 = vpop.permute.xlu0 %3998
      %4002 = vset.pattern.permute.xlu0 0
      %4003 = vperm.xlu0 %4002, %v3569
      %v4004 = vpop.permute.xlu0 %4003
      %4007 = vset.pattern.permute.xlu0 0
      %4008 = vperm.xlu0 %4007, %v3570
      %v4009 = vpop.permute.xlu0 %4008
      %4012 = vset.pattern.permute.xlu0 0
      %4013 = vperm.xlu0 %4012, %v3571
      %v4014 = vpop.permute.xlu0 %4013
      %4017 = vset.pattern.permute.xlu0 0
      %4018 = vperm.xlu0 %4017, %v3572
      %v4019 = vpop.permute.xlu0 %4018
      %4022 = vset.pattern.permute.xlu0 0
      %4023 = vperm.xlu0 %4022, %v3573
      %v4024 = vpop.permute.xlu0 %4023
      %4027 = vset.pattern.permute.xlu0 0
      %4028 = vperm.xlu0 %4027, %v3574
      %v4029 = vpop.permute.xlu0 %4028
      %4032 = vset.pattern.permute.xlu0 0
      %4033 = vperm.xlu0 %4032, %v3575
      %v4034 = vpop.permute.xlu0 %4033
      %4037 = vset.pattern.permute.xlu0 0
      %4038 = vperm.xlu0 %4037, %v3576
      %v4039 = vpop.permute.xlu0 %4038
      %4042 = vset.pattern.permute.xlu0 0
      %4043 = vperm.xlu0 %4042, %v3577
      %v4044 = vpop.permute.xlu0 %4043
      %4047 = vset.pattern.permute.xlu0 0
      %4048 = vperm.xlu0 %4047, %v3578
      %v4049 = vpop.permute.xlu0 %4048
      %4052 = vset.pattern.permute.xlu0 0
      %4053 = vperm.xlu0 %4052, %v3579
      %v4054 = vpop.permute.xlu0 %4053
      %4057 = vset.pattern.permute.xlu0 0
      %4058 = vperm.xlu0 %4057, %v3580
      %v4059 = vpop.permute.xlu0 %4058
      %4062 = vset.pattern.permute.xlu0 0
      %4063 = vperm.xlu0 %4062, %v3581
      %v4064 = vpop.permute.xlu0 %4063
      %4067 = vset.pattern.permute.xlu0 0
      %4068 = vperm.xlu0 %4067, %v3582
      %v4069 = vpop.permute.xlu0 %4068
      %4072 = vset.pattern.permute.xlu0 0
      %4073 = vperm.xlu0 %4072, %v3583
      %v4074 = vpop.permute.xlu0 %4073
      %4077 = vset.pattern.permute.xlu0 0
      %4078 = vperm.xlu0 %4077, %v3584
      %v4079 = vpop.permute.xlu0 %4078
      %4082 = vset.pattern.permute.xlu0 0
      %4083 = vperm.xlu0 %4082, %v3585
      %v4084 = vpop.permute.xlu0 %4083
      %4087 = vset.pattern.permute.xlu0 0
      %4088 = vperm.xlu0 %4087, %v3586
      %v4089 = vpop.permute.xlu0 %4088
      %4092 = vset.pattern.permute.xlu0 0
      %4093 = vperm.xlu0 %4092, %v3587
      %v4094 = vpop.permute.xlu0 %4093
      %4097 = vset.pattern.permute.xlu0 0
      %4098 = vperm.xlu0 %4097, %v3588
      %v4099 = vpop.permute.xlu0 %4098
      %v4101 = vsub.f32 %v2429, %v3784
      %v4102 = vsub.f32 %v2432, %v3789
      %v4103 = vsub.f32 %v2437, %v3794
      %v4104 = vsub.f32 %v2440, %v3799
      %v4105 = vsub.f32 %v2484, %v3804
      %v4106 = vsub.f32 %v2487, %v3809
      %v4107 = vsub.f32 %v2492, %v3814
      %v4108 = vsub.f32 %v2495, %v3819
      %v4109 = vsub.f32 %v2539, %v3824
      %v4110 = vsub.f32 %v2542, %v3829
      %v4111 = vsub.f32 %v2547, %v3834
      %v4112 = vsub.f32 %v2550, %v3839
      %v4113 = vsub.f32 %v2594, %v3844
      %v4114 = vsub.f32 %v2597, %v3849
      %v4115 = vsub.f32 %v2602, %v3854
      %v4116 = vsub.f32 %v2605, %v3859
      %v4117 = vsub.f32 %v2649, %v3864
      %v4118 = vsub.f32 %v2652, %v3869
      %v4119 = vsub.f32 %v2657, %v3874
      %v4120 = vsub.f32 %v2660, %v3879
      %v4121 = vsub.f32 %v2704, %v3884
      %v4122 = vsub.f32 %v2707, %v3889
      %v4123 = vsub.f32 %v2712, %v3894
      %v4124 = vsub.f32 %v2715, %v3899
      %v4125 = vsub.f32 %v2759, %v3904
      %v4126 = vsub.f32 %v2762, %v3909
      %v4127 = vsub.f32 %v2767, %v3914
      %v4128 = vsub.f32 %v2770, %v3919
      %v4129 = vsub.f32 %v2814, %v3924
      %v4130 = vsub.f32 %v2817, %v3929
      %v4131 = vsub.f32 %v2822, %v3934
      %v4132 = vsub.f32 %v2825, %v3939
      %v4133 = vsub.f32 %v2869, %v3944
      %v4134 = vsub.f32 %v2872, %v3949
      %v4135 = vsub.f32 %v2877, %v3954
      %v4136 = vsub.f32 %v2880, %v3959
      %v4137 = vsub.f32 %v2924, %v3964
      %v4138 = vsub.f32 %v2927, %v3969
      %v4139 = vsub.f32 %v2932, %v3974
      %v4140 = vsub.f32 %v2935, %v3979
      %v4141 = vsub.f32 %v2979, %v3984
      %v4142 = vsub.f32 %v2982, %v3989
      %v4143 = vsub.f32 %v2987, %v3994
      %v4144 = vsub.f32 %v2990, %v3999
      %v4145 = vsub.f32 %v3034, %v4004
      %v4146 = vsub.f32 %v3037, %v4009
      %v4147 = vsub.f32 %v3042, %v4014
      %v4148 = vsub.f32 %v3045, %v4019
      %v4149 = vsub.f32 %v3089, %v4024
      %v4150 = vsub.f32 %v3092, %v4029
      %v4151 = vsub.f32 %v3097, %v4034
      %v4152 = vsub.f32 %v3100, %v4039
      %v4153 = vsub.f32 %v3144, %v4044
      %v4154 = vsub.f32 %v3147, %v4049
      %v4155 = vsub.f32 %v3152, %v4054
      %v4156 = vsub.f32 %v3155, %v4059
      %v4157 = vsub.f32 %v3199, %v4064
      %v4158 = vsub.f32 %v3202, %v4069
      %v4159 = vsub.f32 %v3207, %v4074
      %v4160 = vsub.f32 %v3210, %v4079
      %v4161 = vsub.f32 %v3254, %v4084
      %v4162 = vsub.f32 %v3257, %v4089
      %v4163 = vsub.f32 %v3262, %v4094
      %v4164 = vsub.f32 %v3265, %v4099
      %v4165 = vmul.f32 %v4101, 1.442695
      %v4166 = vpow.pop %v4165
      %v4167 = vmul.f32 %v4102, 1.442695
      %v4168 = vpow.pop %v4167
      %v4169 = vmul.f32 %v4103, 1.442695
      %v4170 = vpow.pop %v4169
      %v4171 = vmul.f32 %v4104, 1.442695
      %v4172 = vpow.pop %v4171
      %v4173 = vmul.f32 %v4105, 1.442695
      %v4174 = vpow.pop %v4173
      %v4175 = vmul.f32 %v4106, 1.442695
      %v4176 = vpow.pop %v4175
      %v4177 = vmul.f32 %v4107, 1.442695
      %v4178 = vpow.pop %v4177
      %v4179 = vmul.f32 %v4108, 1.442695
      %v4180 = vpow.pop %v4179
      %v4181 = vmul.f32 %v4109, 1.442695
      %v4182 = vpow.pop %v4181
      %v4183 = vmul.f32 %v4110, 1.442695
      %v4184 = vpow.pop %v4183
      %v4185 = vmul.f32 %v4111, 1.442695
      %v4186 = vpow.pop %v4185
      %v4187 = vmul.f32 %v4112, 1.442695
      %v4188 = vpow.pop %v4187
      %v4189 = vmul.f32 %v4113, 1.442695
      %v4190 = vpow.pop %v4189
      %v4191 = vmul.f32 %v4114, 1.442695
      %v4192 = vpow.pop %v4191
      %v4193 = vmul.f32 %v4115, 1.442695
      %v4194 = vpow.pop %v4193
      %v4195 = vmul.f32 %v4116, 1.442695
      %v4196 = vpow.pop %v4195
      %v4197 = vmul.f32 %v4117, 1.442695
      %v4198 = vpow.pop %v4197
      %v4199 = vmul.f32 %v4118, 1.442695
      %v4200 = vpow.pop %v4199
      %v4201 = vmul.f32 %v4119, 1.442695
      %v4202 = vpow.pop %v4201
      %v4203 = vmul.f32 %v4120, 1.442695
      %v4204 = vpow.pop %v4203
      %v4205 = vmul.f32 %v4121, 1.442695
      %v4206 = vpow.pop %v4205
      %v4207 = vmul.f32 %v4122, 1.442695
      %v4208 = vpow.pop %v4207
      %v4209 = vmul.f32 %v4123, 1.442695
      %v4210 = vpow.pop %v4209
      %v4211 = vmul.f32 %v4124, 1.442695
      %v4212 = vpow.pop %v4211
      %v4213 = vmul.f32 %v4125, 1.442695
      %v4214 = vpow.pop %v4213
      %v4215 = vmul.f32 %v4126, 1.442695
      %v4216 = vpow.pop %v4215
      %v4217 = vmul.f32 %v4127, 1.442695
      %v4218 = vpow.pop %v4217
      %v4219 = vmul.f32 %v4128, 1.442695
      %v4220 = vpow.pop %v4219
      %v4221 = vmul.f32 %v4129, 1.442695
      %v4222 = vpow.pop %v4221
      %v4223 = vmul.f32 %v4130, 1.442695
      %v4224 = vpow.pop %v4223
      %v4225 = vmul.f32 %v4131, 1.442695
      %v4226 = vpow.pop %v4225
      %v4227 = vmul.f32 %v4132, 1.442695
      %v4228 = vpow.pop %v4227
      %v4229 = vmul.f32 %v4133, 1.442695
      %v4230 = vpow.pop %v4229
      %v4231 = vmul.f32 %v4134, 1.442695
      %v4232 = vpow.pop %v4231
      %v4233 = vmul.f32 %v4135, 1.442695
      %v4234 = vpow.pop %v4233
      %v4235 = vmul.f32 %v4136, 1.442695
      %v4236 = vpow.pop %v4235
      %v4237 = vmul.f32 %v4137, 1.442695
      %v4238 = vpow.pop %v4237
      %v4239 = vmul.f32 %v4138, 1.442695
      %v4240 = vpow.pop %v4239
      %v4241 = vmul.f32 %v4139, 1.442695
      %v4242 = vpow.pop %v4241
      %v4243 = vmul.f32 %v4140, 1.442695
      %v4244 = vpow.pop %v4243
      %v4245 = vmul.f32 %v4141, 1.442695
      %v4246 = vpow.pop %v4245
      %v4247 = vmul.f32 %v4142, 1.442695
      %v4248 = vpow.pop %v4247
      %v4249 = vmul.f32 %v4143, 1.442695
      %v4250 = vpow.pop %v4249
      %v4251 = vmul.f32 %v4144, 1.442695
      %v4252 = vpow.pop %v4251
      %v4253 = vmul.f32 %v4145, 1.442695
      %v4254 = vpow.pop %v4253
      %v4255 = vmul.f32 %v4146, 1.442695
      %v4256 = vpow.pop %v4255
      %v4257 = vmul.f32 %v4147, 1.442695
      %v4258 = vpow.pop %v4257
      %v4259 = vmul.f32 %v4148, 1.442695
      %v4260 = vpow.pop %v4259
      %v4261 = vmul.f32 %v4149, 1.442695
      %v4262 = vpow.pop %v4261
      %v4263 = vmul.f32 %v4150, 1.442695
      %v4264 = vpow.pop %v4263
      %v4265 = vmul.f32 %v4151, 1.442695
      %v4266 = vpow.pop %v4265
      %v4267 = vmul.f32 %v4152, 1.442695
      %v4268 = vpow.pop %v4267
      %v4269 = vmul.f32 %v4153, 1.442695
      %v4270 = vpow.pop %v4269
      %v4271 = vmul.f32 %v4154, 1.442695
      %v4272 = vpow.pop %v4271
      %v4273 = vmul.f32 %v4155, 1.442695
      %v4274 = vpow.pop %v4273
      %v4275 = vmul.f32 %v4156, 1.442695
      %v4276 = vpow.pop %v4275
      %v4277 = vmul.f32 %v4157, 1.442695
      %v4278 = vpow.pop %v4277
      %v4279 = vmul.f32 %v4158, 1.442695
      %v4280 = vpow.pop %v4279
      %v4281 = vmul.f32 %v4159, 1.442695
      %v4282 = vpow.pop %v4281
      %v4283 = vmul.f32 %v4160, 1.442695
      %v4284 = vpow.pop %v4283
      %v4285 = vmul.f32 %v4161, 1.442695
      %v4286 = vpow.pop %v4285
      %v4287 = vmul.f32 %v4162, 1.442695
      %v4288 = vpow.pop %v4287
      %v4289 = vmul.f32 %v4163, 1.442695
      %v4290 = vpow.pop %v4289
      %v4291 = vmul.f32 %v4164, 1.442695
      %v4292 = vpow.pop %v4291
      %v4293 = vld [vmem:[#allocation5] sm:$0xff]
      %v4294 = vld [vmem:[#allocation5 + $0x8] sm:$0xff]
      %v4295 = vld [vmem:[#allocation5 + $0x10] sm:$0xff]
      %v4296 = vld [vmem:[#allocation5 + $0x18] sm:$0xff]
      %v4297 = vld [vmem:[#allocation5 + $0x20] sm:$0xff]
      %v4298 = vld [vmem:[#allocation5 + $0x28] sm:$0xff]
      %v4299 = vld [vmem:[#allocation5 + $0x30] sm:$0xff]
      %v4300 = vld [vmem:[#allocation5 + $0x38] sm:$0xff]
      %v4301 = vld [vmem:[#allocation5 + $0x40] sm:$0xff]
      %v4302 = vld [vmem:[#allocation5 + $0x48] sm:$0xff]
      %v4303 = vld [vmem:[#allocation5 + $0x50] sm:$0xff]
      %v4304 = vld [vmem:[#allocation5 + $0x58] sm:$0xff]
      %v4305 = vld [vmem:[#allocation5 + $0x60] sm:$0xff]
      %v4306 = vld [vmem:[#allocation5 + $0x68] sm:$0xff]
      %v4307 = vld [vmem:[#allocation5 + $0x70] sm:$0xff]
      %v4308 = vld [vmem:[#allocation5 + $0x78] sm:$0xff]
      %v4309 = vld [vmem:[#allocation5 + $0x80] sm:$0xff]
      %v4310 = vld [vmem:[#allocation5 + $0x88] sm:$0xff]
      %v4311 = vld [vmem:[#allocation5 + $0x90] sm:$0xff]
      %v4312 = vld [vmem:[#allocation5 + $0x98] sm:$0xff]
      %v4313 = vld [vmem:[#allocation5 + $0xa0] sm:$0xff]
      %v4314 = vld [vmem:[#allocation5 + $0xa8] sm:$0xff]
      %v4315 = vld [vmem:[#allocation5 + $0xb0] sm:$0xff]
      %v4316 = vld [vmem:[#allocation5 + $0xb8] sm:$0xff]
      %v4317 = vld [vmem:[#allocation5 + $0xc0] sm:$0xff]
      %v4318 = vld [vmem:[#allocation5 + $0xc8] sm:$0xff]
      %v4319 = vld [vmem:[#allocation5 + $0xd0] sm:$0xff]
      %v4320 = vld [vmem:[#allocation5 + $0xd8] sm:$0xff]
      %v4321 = vld [vmem:[#allocation5 + $0xe0] sm:$0xff]
      %v4322 = vld [vmem:[#allocation5 + $0xe8] sm:$0xff]
      %v4323 = vld [vmem:[#allocation5 + $0xf0] sm:$0xff]
      %v4324 = vld [vmem:[#allocation5 + $0xf8] sm:$0xff]
      %v4325 = vld [vmem:[#allocation5 + $0x100] sm:$0xff]
      %v4326 = vld [vmem:[#allocation5 + $0x108] sm:$0xff]
      %v4327 = vld [vmem:[#allocation5 + $0x110] sm:$0xff]
      %v4328 = vld [vmem:[#allocation5 + $0x118] sm:$0xff]
      %v4329 = vld [vmem:[#allocation5 + $0x120] sm:$0xff]
      %v4330 = vld [vmem:[#allocation5 + $0x128] sm:$0xff]
      %v4331 = vld [vmem:[#allocation5 + $0x130] sm:$0xff]
      %v4332 = vld [vmem:[#allocation5 + $0x138] sm:$0xff]
      %v4333 = vld [vmem:[#allocation5 + $0x140] sm:$0xff]
      %v4334 = vld [vmem:[#allocation5 + $0x148] sm:$0xff]
      %v4335 = vld [vmem:[#allocation5 + $0x150] sm:$0xff]
      %v4336 = vld [vmem:[#allocation5 + $0x158] sm:$0xff]
      %v4337 = vld [vmem:[#allocation5 + $0x160] sm:$0xff]
      %v4338 = vld [vmem:[#allocation5 + $0x168] sm:$0xff]
      %v4339 = vld [vmem:[#allocation5 + $0x170] sm:$0xff]
      %v4340 = vld [vmem:[#allocation5 + $0x178] sm:$0xff]
      %v4341 = vld [vmem:[#allocation5 + $0x180] sm:$0xff]
      %v4342 = vld [vmem:[#allocation5 + $0x188] sm:$0xff]
      %v4343 = vld [vmem:[#allocation5 + $0x190] sm:$0xff]
      %v4344 = vld [vmem:[#allocation5 + $0x198] sm:$0xff]
      %v4345 = vld [vmem:[#allocation5 + $0x1a0] sm:$0xff]
      %v4346 = vld [vmem:[#allocation5 + $0x1a8] sm:$0xff]
      %v4347 = vld [vmem:[#allocation5 + $0x1b0] sm:$0xff]
      %v4348 = vld [vmem:[#allocation5 + $0x1b8] sm:$0xff]
      %v4349 = vld [vmem:[#allocation5 + $0x1c0] sm:$0xff]
      %v4350 = vld [vmem:[#allocation5 + $0x1c8] sm:$0xff]
      %v4351 = vld [vmem:[#allocation5 + $0x1d0] sm:$0xff]
      %v4352 = vld [vmem:[#allocation5 + $0x1d8] sm:$0xff]
      %v4353 = vld [vmem:[#allocation5 + $0x1e0] sm:$0xff]
      %v4354 = vld [vmem:[#allocation5 + $0x1e8] sm:$0xff]
      %v4355 = vld [vmem:[#allocation5 + $0x1f0] sm:$0xff]
      %v4356 = vld [vmem:[#allocation5 + $0x1f8] sm:$0xff]
      %v4357 = vmul.f32 %v3654, %v4293
      %v4358 = vmul.f32 %v3656, %v4294
      %v4359 = vmul.f32 %v3658, %v4295
      %v4360 = vmul.f32 %v3660, %v4296
      %v4361 = vmul.f32 %v3662, %v4297
      %v4362 = vmul.f32 %v3664, %v4298
      %v4363 = vmul.f32 %v3666, %v4299
      %v4364 = vmul.f32 %v3668, %v4300
      %v4365 = vmul.f32 %v3670, %v4301
      %v4366 = vmul.f32 %v3672, %v4302
      %v4367 = vmul.f32 %v3674, %v4303
      %v4368 = vmul.f32 %v3676, %v4304
      %v4369 = vmul.f32 %v3678, %v4305
      %v4370 = vmul.f32 %v3680, %v4306
      %v4371 = vmul.f32 %v3682, %v4307
      %v4372 = vmul.f32 %v3684, %v4308
      %v4373 = vmul.f32 %v3686, %v4309
      %v4374 = vmul.f32 %v3688, %v4310
      %v4375 = vmul.f32 %v3690, %v4311
      %v4376 = vmul.f32 %v3692, %v4312
      %v4377 = vmul.f32 %v3694, %v4313
      %v4378 = vmul.f32 %v3696, %v4314
      %v4379 = vmul.f32 %v3698, %v4315
      %v4380 = vmul.f32 %v3700, %v4316
      %v4381 = vmul.f32 %v3702, %v4317
      %v4382 = vmul.f32 %v3704, %v4318
      %v4383 = vmul.f32 %v3706, %v4319
      %v4384 = vmul.f32 %v3708, %v4320
      %v4385 = vmul.f32 %v3710, %v4321
      %v4386 = vmul.f32 %v3712, %v4322
      %v4387 = vmul.f32 %v3714, %v4323
      %v4388 = vmul.f32 %v3716, %v4324
      %v4389 = vmul.f32 %v3718, %v4325
      %v4390 = vmul.f32 %v3720, %v4326
      %v4391 = vmul.f32 %v3722, %v4327
      %v4392 = vmul.f32 %v3724, %v4328
      %v4393 = vmul.f32 %v3726, %v4329
      %v4394 = vmul.f32 %v3728, %v4330
      %v4395 = vmul.f32 %v3730, %v4331
      %v4396 = vmul.f32 %v3732, %v4332
      %v4397 = vmul.f32 %v3734, %v4333
      %v4398 = vmul.f32 %v3736, %v4334
      %v4399 = vmul.f32 %v3738, %v4335
      %v4400 = vmul.f32 %v3740, %v4336
      %v4401 = vmul.f32 %v3742, %v4337
      %v4402 = vmul.f32 %v3744, %v4338
      %v4403 = vmul.f32 %v3746, %v4339
      %v4404 = vmul.f32 %v3748, %v4340
      %v4405 = vmul.f32 %v3750, %v4341
      %v4406 = vmul.f32 %v3752, %v4342
      %v4407 = vmul.f32 %v3754, %v4343
      %v4408 = vmul.f32 %v3756, %v4344
      %v4409 = vmul.f32 %v3758, %v4345
      %v4410 = vmul.f32 %v3760, %v4346
      %v4411 = vmul.f32 %v3762, %v4347
      %v4412 = vmul.f32 %v3764, %v4348
      %v4413 = vmul.f32 %v3766, %v4349
      %v4414 = vmul.f32 %v3768, %v4350
      %v4415 = vmul.f32 %v3770, %v4351
      %v4416 = vmul.f32 %v3772, %v4352
      %v4417 = vmul.f32 %v3774, %v4353
      %v4418 = vmul.f32 %v3776, %v4354
      %v4419 = vmul.f32 %v3778, %v4355
      %v4420 = vmul.f32 %v3780, %v4356
      %v4421 = vsel %vm3332, %v4166, 0.0
      %4422 = vadd.xlane.f32.xlu0 %v4421
      %v4423 = vpop.xlane.xlu0 %4422
      %v4424 = vsel %vm3332, %v4168, 0.0
      %4425 = vadd.xlane.f32.xlu0 %v4424
      %v4426 = vpop.xlane.xlu0 %4425
      %v4427 = vsel %vm3332, %v4170, 0.0
      %4428 = vadd.xlane.f32.xlu0 %v4427
      %v4429 = vpop.xlane.xlu0 %4428
      %v4430 = vsel %vm3332, %v4172, 0.0
      %4431 = vadd.xlane.f32.xlu0 %v4430
      %v4432 = vpop.xlane.xlu0 %4431
      %v4433 = vsel %vm3332, %v4174, 0.0
      %4434 = vadd.xlane.f32.xlu0 %v4433
      %v4435 = vpop.xlane.xlu0 %4434
      %v4436 = vsel %vm3332, %v4176, 0.0
      %4437 = vadd.xlane.f32.xlu0 %v4436
      %v4438 = vpop.xlane.xlu0 %4437
      %v4439 = vsel %vm3332, %v4178, 0.0
      %4440 = vadd.xlane.f32.xlu0 %v4439
      %v4441 = vpop.xlane.xlu0 %4440
      %v4442 = vsel %vm3332, %v4180, 0.0
      %4443 = vadd.xlane.f32.xlu0 %v4442
      %v4444 = vpop.xlane.xlu0 %4443
      %v4445 = vsel %vm3332, %v4182, 0.0
      %4446 = vadd.xlane.f32.xlu0 %v4445
      %v4447 = vpop.xlane.xlu0 %4446
      %v4448 = vsel %vm3332, %v4184, 0.0
      %4449 = vadd.xlane.f32.xlu0 %v4448
      %v4450 = vpop.xlane.xlu0 %4449
      %v4451 = vsel %vm3332, %v4186, 0.0
      %4452 = vadd.xlane.f32.xlu0 %v4451
      %v4453 = vpop.xlane.xlu0 %4452
      %v4454 = vsel %vm3332, %v4188, 0.0
      %4455 = vadd.xlane.f32.xlu0 %v4454
      %v4456 = vpop.xlane.xlu0 %4455
      %v4457 = vsel %vm3332, %v4190, 0.0
      %4458 = vadd.xlane.f32.xlu0 %v4457
      %v4459 = vpop.xlane.xlu0 %4458
      %v4460 = vsel %vm3332, %v4192, 0.0
      %4461 = vadd.xlane.f32.xlu0 %v4460
      %v4462 = vpop.xlane.xlu0 %4461
      %v4463 = vsel %vm3332, %v4194, 0.0
      %4464 = vadd.xlane.f32.xlu0 %v4463
      %v4465 = vpop.xlane.xlu0 %4464
      %v4466 = vsel %vm3332, %v4196, 0.0
      %4467 = vadd.xlane.f32.xlu0 %v4466
      %v4468 = vpop.xlane.xlu0 %4467
      %v4469 = vsel %vm3332, %v4198, 0.0
      %4470 = vadd.xlane.f32.xlu0 %v4469
      %v4471 = vpop.xlane.xlu0 %4470
      %v4472 = vsel %vm3332, %v4200, 0.0
      %4473 = vadd.xlane.f32.xlu0 %v4472
      %v4474 = vpop.xlane.xlu0 %4473
      %v4475 = vsel %vm3332, %v4202, 0.0
      %4476 = vadd.xlane.f32.xlu0 %v4475
      %v4477 = vpop.xlane.xlu0 %4476
      %v4478 = vsel %vm3332, %v4204, 0.0
      %4479 = vadd.xlane.f32.xlu0 %v4478
      %v4480 = vpop.xlane.xlu0 %4479
      %v4481 = vsel %vm3332, %v4206, 0.0
      %4482 = vadd.xlane.f32.xlu0 %v4481
      %v4483 = vpop.xlane.xlu0 %4482
      %v4484 = vsel %vm3332, %v4208, 0.0
      %4485 = vadd.xlane.f32.xlu0 %v4484
      %v4486 = vpop.xlane.xlu0 %4485
      %v4487 = vsel %vm3332, %v4210, 0.0
      %4488 = vadd.xlane.f32.xlu0 %v4487
      %v4489 = vpop.xlane.xlu0 %4488
      %v4490 = vsel %vm3332, %v4212, 0.0
      %4491 = vadd.xlane.f32.xlu0 %v4490
      %v4492 = vpop.xlane.xlu0 %4491
      %v4493 = vsel %vm3332, %v4214, 0.0
      %4494 = vadd.xlane.f32.xlu0 %v4493
      %v4495 = vpop.xlane.xlu0 %4494
      %v4496 = vsel %vm3332, %v4216, 0.0
      %4497 = vadd.xlane.f32.xlu0 %v4496
      %v4498 = vpop.xlane.xlu0 %4497
      %v4499 = vsel %vm3332, %v4218, 0.0
      %4500 = vadd.xlane.f32.xlu0 %v4499
      %v4501 = vpop.xlane.xlu0 %4500
      %v4502 = vsel %vm3332, %v4220, 0.0
      %4503 = vadd.xlane.f32.xlu0 %v4502
      %v4504 = vpop.xlane.xlu0 %4503
      %v4505 = vsel %vm3332, %v4222, 0.0
      %4506 = vadd.xlane.f32.xlu0 %v4505
      %v4507 = vpop.xlane.xlu0 %4506
      %v4508 = vsel %vm3332, %v4224, 0.0
      %4509 = vadd.xlane.f32.xlu0 %v4508
      %v4510 = vpop.xlane.xlu0 %4509
      %v4511 = vsel %vm3332, %v4226, 0.0
      %4512 = vadd.xlane.f32.xlu0 %v4511
      %v4513 = vpop.xlane.xlu0 %4512
      %v4514 = vsel %vm3332, %v4228, 0.0
      %4515 = vadd.xlane.f32.xlu0 %v4514
      %v4516 = vpop.xlane.xlu0 %4515
      %v4517 = vsel %vm3332, %v4230, 0.0
      %4518 = vadd.xlane.f32.xlu0 %v4517
      %v4519 = vpop.xlane.xlu0 %4518
      %v4520 = vsel %vm3332, %v4232, 0.0
      %4521 = vadd.xlane.f32.xlu0 %v4520
      %v4522 = vpop.xlane.xlu0 %4521
      %v4523 = vsel %vm3332, %v4234, 0.0
      %4524 = vadd.xlane.f32.xlu0 %v4523
      %v4525 = vpop.xlane.xlu0 %4524
      %v4526 = vsel %vm3332, %v4236, 0.0
      %4527 = vadd.xlane.f32.xlu0 %v4526
      %v4528 = vpop.xlane.xlu0 %4527
      %v4529 = vsel %vm3332, %v4238, 0.0
      %4530 = vadd.xlane.f32.xlu0 %v4529
      %v4531 = vpop.xlane.xlu0 %4530
      %v4532 = vsel %vm3332, %v4240, 0.0
      %4533 = vadd.xlane.f32.xlu0 %v4532
      %v4534 = vpop.xlane.xlu0 %4533
      %v4535 = vsel %vm3332, %v4242, 0.0
      %4536 = vadd.xlane.f32.xlu0 %v4535
      %v4537 = vpop.xlane.xlu0 %4536
      %v4538 = vsel %vm3332, %v4244, 0.0
      %4539 = vadd.xlane.f32.xlu0 %v4538
      %v4540 = vpop.xlane.xlu0 %4539
      %v4541 = vsel %vm3332, %v4246, 0.0
      %4542 = vadd.xlane.f32.xlu0 %v4541
      %v4543 = vpop.xlane.xlu0 %4542
      %v4544 = vsel %vm3332, %v4248, 0.0
      %4545 = vadd.xlane.f32.xlu0 %v4544
      %v4546 = vpop.xlane.xlu0 %4545
      %v4547 = vsel %vm3332, %v4250, 0.0
      %4548 = vadd.xlane.f32.xlu0 %v4547
      %v4549 = vpop.xlane.xlu0 %4548
      %v4550 = vsel %vm3332, %v4252, 0.0
      %4551 = vadd.xlane.f32.xlu0 %v4550
      %v4552 = vpop.xlane.xlu0 %4551
      %v4553 = vsel %vm3332, %v4254, 0.0
      %4554 = vadd.xlane.f32.xlu0 %v4553
      %v4555 = vpop.xlane.xlu0 %4554
      %v4556 = vsel %vm3332, %v4256, 0.0
      %4557 = vadd.xlane.f32.xlu0 %v4556
      %v4558 = vpop.xlane.xlu0 %4557
      %v4559 = vsel %vm3332, %v4258, 0.0
      %4560 = vadd.xlane.f32.xlu0 %v4559
      %v4561 = vpop.xlane.xlu0 %4560
      %v4562 = vsel %vm3332, %v4260, 0.0
      %4563 = vadd.xlane.f32.xlu0 %v4562
      %v4564 = vpop.xlane.xlu0 %4563
      %v4565 = vsel %vm3332, %v4262, 0.0
      %4566 = vadd.xlane.f32.xlu0 %v4565
      %v4567 = vpop.xlane.xlu0 %4566
      %v4568 = vsel %vm3332, %v4264, 0.0
      %4569 = vadd.xlane.f32.xlu0 %v4568
      %v4570 = vpop.xlane.xlu0 %4569
      %v4571 = vsel %vm3332, %v4266, 0.0
      %4572 = vadd.xlane.f32.xlu0 %v4571
      %v4573 = vpop.xlane.xlu0 %4572
      %v4574 = vsel %vm3332, %v4268, 0.0
      %4575 = vadd.xlane.f32.xlu0 %v4574
      %v4576 = vpop.xlane.xlu0 %4575
      %v4577 = vsel %vm3332, %v4270, 0.0
      %4578 = vadd.xlane.f32.xlu0 %v4577
      %v4579 = vpop.xlane.xlu0 %4578
      %v4580 = vsel %vm3332, %v4272, 0.0
      %4581 = vadd.xlane.f32.xlu0 %v4580
      %v4582 = vpop.xlane.xlu0 %4581
      %v4583 = vsel %vm3332, %v4274, 0.0
      %4584 = vadd.xlane.f32.xlu0 %v4583
      %v4585 = vpop.xlane.xlu0 %4584
      %v4586 = vsel %vm3332, %v4276, 0.0
      %4587 = vadd.xlane.f32.xlu0 %v4586
      %v4588 = vpop.xlane.xlu0 %4587
      %v4589 = vsel %vm3332, %v4278, 0.0
      %4590 = vadd.xlane.f32.xlu0 %v4589
      %v4591 = vpop.xlane.xlu0 %4590
      %v4592 = vsel %vm3332, %v4280, 0.0
      %4593 = vadd.xlane.f32.xlu0 %v4592
      %v4594 = vpop.xlane.xlu0 %4593
      %v4595 = vsel %vm3332, %v4282, 0.0
      %4596 = vadd.xlane.f32.xlu0 %v4595
      %v4597 = vpop.xlane.xlu0 %4596
      %v4598 = vsel %vm3332, %v4284, 0.0
      %4599 = vadd.xlane.f32.xlu0 %v4598
      %v4600 = vpop.xlane.xlu0 %4599
      %v4601 = vsel %vm3332, %v4286, 0.0
      %4602 = vadd.xlane.f32.xlu0 %v4601
      %v4603 = vpop.xlane.xlu0 %4602
      %v4604 = vsel %vm3332, %v4288, 0.0
      %4605 = vadd.xlane.f32.xlu0 %v4604
      %v4606 = vpop.xlane.xlu0 %4605
      %v4607 = vsel %vm3332, %v4290, 0.0
      %4608 = vadd.xlane.f32.xlu0 %v4607
      %v4609 = vpop.xlane.xlu0 %4608
      %v4610 = vsel %vm3332, %v4292, 0.0
      %4611 = vadd.xlane.f32.xlu0 %v4610
      %v4612 = vpop.xlane.xlu0 %4611
      %v4613 = vadd.f32 %v4357, %v4423
      %v4614 = vadd.f32 %v4358, %v4426
      %v4615 = vadd.f32 %v4359, %v4429
      %v4616 = vadd.f32 %v4360, %v4432
      %v4617 = vadd.f32 %v4361, %v4435
      %v4618 = vadd.f32 %v4362, %v4438
      %v4619 = vadd.f32 %v4363, %v4441
      %v4620 = vadd.f32 %v4364, %v4444
      %v4621 = vadd.f32 %v4365, %v4447
      %v4622 = vadd.f32 %v4366, %v4450
      %v4623 = vadd.f32 %v4367, %v4453
      %v4624 = vadd.f32 %v4368, %v4456
      %v4625 = vadd.f32 %v4369, %v4459
      %v4626 = vadd.f32 %v4370, %v4462
      %v4627 = vadd.f32 %v4371, %v4465
      %v4628 = vadd.f32 %v4372, %v4468
      %v4629 = vadd.f32 %v4373, %v4471
      %v4630 = vadd.f32 %v4374, %v4474
      %v4631 = vadd.f32 %v4375, %v4477
      %v4632 = vadd.f32 %v4376, %v4480
      %v4633 = vadd.f32 %v4377, %v4483
      %v4634 = vadd.f32 %v4378, %v4486
      %v4635 = vadd.f32 %v4379, %v4489
      %v4636 = vadd.f32 %v4380, %v4492
      %v4637 = vadd.f32 %v4381, %v4495
      %v4638 = vadd.f32 %v4382, %v4498
      %v4639 = vadd.f32 %v4383, %v4501
      %v4640 = vadd.f32 %v4384, %v4504
      %v4641 = vadd.f32 %v4385, %v4507
      %v4642 = vadd.f32 %v4386, %v4510
      %v4643 = vadd.f32 %v4387, %v4513
      %v4644 = vadd.f32 %v4388, %v4516
      %v4645 = vadd.f32 %v4389, %v4519
      %v4646 = vadd.f32 %v4390, %v4522
      %v4647 = vadd.f32 %v4391, %v4525
      %v4648 = vadd.f32 %v4392, %v4528
      %v4649 = vadd.f32 %v4393, %v4531
      %v4650 = vadd.f32 %v4394, %v4534
      %v4651 = vadd.f32 %v4395, %v4537
      %v4652 = vadd.f32 %v4396, %v4540
      %v4653 = vadd.f32 %v4397, %v4543
      %v4654 = vadd.f32 %v4398, %v4546
      %v4655 = vadd.f32 %v4399, %v4549
      %v4656 = vadd.f32 %v4400, %v4552
      %v4657 = vadd.f32 %v4401, %v4555
      %v4658 = vadd.f32 %v4402, %v4558
      %v4659 = vadd.f32 %v4403, %v4561
      %v4660 = vadd.f32 %v4404, %v4564
      %v4661 = vadd.f32 %v4405, %v4567
      %v4662 = vadd.f32 %v4406, %v4570
      %v4663 = vadd.f32 %v4407, %v4573
      %v4664 = vadd.f32 %v4408, %v4576
      %v4665 = vadd.f32 %v4409, %v4579
      %v4666 = vadd.f32 %v4410, %v4582
      %v4667 = vadd.f32 %v4411, %v4585
      %v4668 = vadd.f32 %v4412, %v4588
      %v4669 = vadd.f32 %v4413, %v4591
      %v4670 = vadd.f32 %v4414, %v4594
      %v4671 = vadd.f32 %v4415, %v4597
      %v4672 = vadd.f32 %v4416, %v4600
      %v4673 = vadd.f32 %v4417, %v4603
      %v4674 = vadd.f32 %v4418, %v4606
      %v4675 = vadd.f32 %v4419, %v4609
      %v4676 = vadd.f32 %v4420, %v4612
      %4677 = vst.msk [vmem:[#allocation5] sm:$0xff] %vm2118, %v4613
      %4678 = vst.msk [vmem:[#allocation5 + $0x8] sm:$0xff] %vm2118, %v4614
      %4679 = vst.msk [vmem:[#allocation5 + $0x10] sm:$0xff] %vm2118, %v4615
      %4680 = vst.msk [vmem:[#allocation5 + $0x18] sm:$0xff] %vm2118, %v4616
      %4681 = vst.msk [vmem:[#allocation5 + $0x20] sm:$0xff] %vm2118, %v4617
      %4682 = vst.msk [vmem:[#allocation5 + $0x28] sm:$0xff] %vm2118, %v4618
      %4683 = vst.msk [vmem:[#allocation5 + $0x30] sm:$0xff] %vm2118, %v4619
      %4684 = vst.msk [vmem:[#allocation5 + $0x38] sm:$0xff] %vm2118, %v4620
      %4685 = vst.msk [vmem:[#allocation5 + $0x40] sm:$0xff] %vm2118, %v4621
      %4686 = vst.msk [vmem:[#allocation5 + $0x48] sm:$0xff] %vm2118, %v4622
      %4687 = vst.msk [vmem:[#allocation5 + $0x50] sm:$0xff] %vm2118, %v4623
      %4688 = vst.msk [vmem:[#allocation5 + $0x58] sm:$0xff] %vm2118, %v4624
      %4689 = vst.msk [vmem:[#allocation5 + $0x60] sm:$0xff] %vm2118, %v4625
      %4690 = vst.msk [vmem:[#allocation5 + $0x68] sm:$0xff] %vm2118, %v4626
      %4691 = vst.msk [vmem:[#allocation5 + $0x70] sm:$0xff] %vm2118, %v4627
      %4692 = vst.msk [vmem:[#allocation5 + $0x78] sm:$0xff] %vm2118, %v4628
      %4693 = vst.msk [vmem:[#allocation5 + $0x80] sm:$0xff] %vm2118, %v4629
      %4694 = vst.msk [vmem:[#allocation5 + $0x88] sm:$0xff] %vm2118, %v4630
      %4695 = vst.msk [vmem:[#allocation5 + $0x90] sm:$0xff] %vm2118, %v4631
      %4696 = vst.msk [vmem:[#allocation5 + $0x98] sm:$0xff] %vm2118, %v4632
      %4697 = vst.msk [vmem:[#allocation5 + $0xa0] sm:$0xff] %vm2118, %v4633
      %4698 = vst.msk [vmem:[#allocation5 + $0xa8] sm:$0xff] %vm2118, %v4634
      %4699 = vst.msk [vmem:[#allocation5 + $0xb0] sm:$0xff] %vm2118, %v4635
      %4700 = vst.msk [vmem:[#allocation5 + $0xb8] sm:$0xff] %vm2118, %v4636
      %4701 = vst.msk [vmem:[#allocation5 + $0xc0] sm:$0xff] %vm2118, %v4637
      %4702 = vst.msk [vmem:[#allocation5 + $0xc8] sm:$0xff] %vm2118, %v4638
      %4703 = vst.msk [vmem:[#allocation5 + $0xd0] sm:$0xff] %vm2118, %v4639
      %4704 = vst.msk [vmem:[#allocation5 + $0xd8] sm:$0xff] %vm2118, %v4640
      %4705 = vst.msk [vmem:[#allocation5 + $0xe0] sm:$0xff] %vm2118, %v4641
      %4706 = vst.msk [vmem:[#allocation5 + $0xe8] sm:$0xff] %vm2118, %v4642
      %4707 = vst.msk [vmem:[#allocation5 + $0xf0] sm:$0xff] %vm2118, %v4643
      %4708 = vst.msk [vmem:[#allocation5 + $0xf8] sm:$0xff] %vm2118, %v4644
      %4709 = vst.msk [vmem:[#allocation5 + $0x100] sm:$0xff] %vm2118, %v4645
      %4710 = vst.msk [vmem:[#allocation5 + $0x108] sm:$0xff] %vm2118, %v4646
      %4711 = vst.msk [vmem:[#allocation5 + $0x110] sm:$0xff] %vm2118, %v4647
      %4712 = vst.msk [vmem:[#allocation5 + $0x118] sm:$0xff] %vm2118, %v4648
      %4713 = vst.msk [vmem:[#allocation5 + $0x120] sm:$0xff] %vm2118, %v4649
      %4714 = vst.msk [vmem:[#allocation5 + $0x128] sm:$0xff] %vm2118, %v4650
      %4715 = vst.msk [vmem:[#allocation5 + $0x130] sm:$0xff] %vm2118, %v4651
      %4716 = vst.msk [vmem:[#allocation5 + $0x138] sm:$0xff] %vm2118, %v4652
      %4717 = vst.msk [vmem:[#allocation5 + $0x140] sm:$0xff] %vm2118, %v4653
      %4718 = vst.msk [vmem:[#allocation5 + $0x148] sm:$0xff] %vm2118, %v4654
      %4719 = vst.msk [vmem:[#allocation5 + $0x150] sm:$0xff] %vm2118, %v4655
      %4720 = vst.msk [vmem:[#allocation5 + $0x158] sm:$0xff] %vm2118, %v4656
      %4721 = vst.msk [vmem:[#allocation5 + $0x160] sm:$0xff] %vm2118, %v4657
      %4722 = vst.msk [vmem:[#allocation5 + $0x168] sm:$0xff] %vm2118, %v4658
      %4723 = vst.msk [vmem:[#allocation5 + $0x170] sm:$0xff] %vm2118, %v4659
      %4724 = vst.msk [vmem:[#allocation5 + $0x178] sm:$0xff] %vm2118, %v4660
      %4725 = vst.msk [vmem:[#allocation5 + $0x180] sm:$0xff] %vm2118, %v4661
      %4726 = vst.msk [vmem:[#allocation5 + $0x188] sm:$0xff] %vm2118, %v4662
      %4727 = vst.msk [vmem:[#allocation5 + $0x190] sm:$0xff] %vm2118, %v4663
      %4728 = vst.msk [vmem:[#allocation5 + $0x198] sm:$0xff] %vm2118, %v4664
      %4729 = vst.msk [vmem:[#allocation5 + $0x1a0] sm:$0xff] %vm2118, %v4665
      %4730 = vst.msk [vmem:[#allocation5 + $0x1a8] sm:$0xff] %vm2118, %v4666
      %4731 = vst.msk [vmem:[#allocation5 + $0x1b0] sm:$0xff] %vm2118, %v4667
      %4732 = vst.msk [vmem:[#allocation5 + $0x1b8] sm:$0xff] %vm2118, %v4668
      %4733 = vst.msk [vmem:[#allocation5 + $0x1c0] sm:$0xff] %vm2118, %v4669
      %4734 = vst.msk [vmem:[#allocation5 + $0x1c8] sm:$0xff] %vm2118, %v4670
      %4735 = vst.msk [vmem:[#allocation5 + $0x1d0] sm:$0xff] %vm2118, %v4671
      %4736 = vst.msk [vmem:[#allocation5 + $0x1d8] sm:$0xff] %vm2118, %v4672
      %4737 = vst.msk [vmem:[#allocation5 + $0x1e0] sm:$0xff] %vm2118, %v4673
      %4738 = vst.msk [vmem:[#allocation5 + $0x1e8] sm:$0xff] %vm2118, %v4674
      %4739 = vst.msk [vmem:[#allocation5 + $0x1f0] sm:$0xff] %vm2118, %v4675
      %4740 = vst.msk [vmem:[#allocation5 + $0x1f8] sm:$0xff] %vm2118, %v4676
      %v4741 = vld [vmem:[#allocation6] sm:$0xff]
      %v4742 = vld [vmem:[#allocation6 + $0x8] sm:$0xff]
      %v4743 = vld [vmem:[#allocation6 + $0x10] sm:$0xff]
      %v4744 = vld [vmem:[#allocation6 + $0x18] sm:$0xff]
      %v4745 = vld [vmem:[#allocation6 + $0x20] sm:$0xff]
      %v4746 = vld [vmem:[#allocation6 + $0x28] sm:$0xff]
      %v4747 = vld [vmem:[#allocation6 + $0x30] sm:$0xff]
      %v4748 = vld [vmem:[#allocation6 + $0x38] sm:$0xff]
      %v4749 = vld [vmem:[#allocation6 + $0x40] sm:$0xff]
      %v4750 = vld [vmem:[#allocation6 + $0x48] sm:$0xff]
      %v4751 = vld [vmem:[#allocation6 + $0x50] sm:$0xff]
      %v4752 = vld [vmem:[#allocation6 + $0x58] sm:$0xff]
      %v4753 = vld [vmem:[#allocation6 + $0x60] sm:$0xff]
      %v4754 = vld [vmem:[#allocation6 + $0x68] sm:$0xff]
      %v4755 = vld [vmem:[#allocation6 + $0x70] sm:$0xff]
      %v4756 = vld [vmem:[#allocation6 + $0x78] sm:$0xff]
      %v4757 = vld [vmem:[#allocation6 + $0x80] sm:$0xff]
      %v4758 = vld [vmem:[#allocation6 + $0x88] sm:$0xff]
      %v4759 = vld [vmem:[#allocation6 + $0x90] sm:$0xff]
      %v4760 = vld [vmem:[#allocation6 + $0x98] sm:$0xff]
      %v4761 = vld [vmem:[#allocation6 + $0xa0] sm:$0xff]
      %v4762 = vld [vmem:[#allocation6 + $0xa8] sm:$0xff]
      %v4763 = vld [vmem:[#allocation6 + $0xb0] sm:$0xff]
      %v4764 = vld [vmem:[#allocation6 + $0xb8] sm:$0xff]
      %v4765 = vld [vmem:[#allocation6 + $0xc0] sm:$0xff]
      %v4766 = vld [vmem:[#allocation6 + $0xc8] sm:$0xff]
      %v4767 = vld [vmem:[#allocation6 + $0xd0] sm:$0xff]
      %v4768 = vld [vmem:[#allocation6 + $0xd8] sm:$0xff]
      %v4769 = vld [vmem:[#allocation6 + $0xe0] sm:$0xff]
      %v4770 = vld [vmem:[#allocation6 + $0xe8] sm:$0xff]
      %v4771 = vld [vmem:[#allocation6 + $0xf0] sm:$0xff]
      %v4772 = vld [vmem:[#allocation6 + $0xf8] sm:$0xff]
      %v4773 = vld [vmem:[#allocation6 + $0x100] sm:$0xff]
      %v4774 = vld [vmem:[#allocation6 + $0x108] sm:$0xff]
      %v4775 = vld [vmem:[#allocation6 + $0x110] sm:$0xff]
      %v4776 = vld [vmem:[#allocation6 + $0x118] sm:$0xff]
      %v4777 = vld [vmem:[#allocation6 + $0x120] sm:$0xff]
      %v4778 = vld [vmem:[#allocation6 + $0x128] sm:$0xff]
      %v4779 = vld [vmem:[#allocation6 + $0x130] sm:$0xff]
      %v4780 = vld [vmem:[#allocation6 + $0x138] sm:$0xff]
      %v4781 = vld [vmem:[#allocation6 + $0x140] sm:$0xff]
      %v4782 = vld [vmem:[#allocation6 + $0x148] sm:$0xff]
      %v4783 = vld [vmem:[#allocation6 + $0x150] sm:$0xff]
      %v4784 = vld [vmem:[#allocation6 + $0x158] sm:$0xff]
      %v4785 = vld [vmem:[#allocation6 + $0x160] sm:$0xff]
      %v4786 = vld [vmem:[#allocation6 + $0x168] sm:$0xff]
      %v4787 = vld [vmem:[#allocation6 + $0x170] sm:$0xff]
      %v4788 = vld [vmem:[#allocation6 + $0x178] sm:$0xff]
      %v4789 = vld [vmem:[#allocation6 + $0x180] sm:$0xff]
      %v4790 = vld [vmem:[#allocation6 + $0x188] sm:$0xff]
      %v4791 = vld [vmem:[#allocation6 + $0x190] sm:$0xff]
      %v4792 = vld [vmem:[#allocation6 + $0x198] sm:$0xff]
      %v4793 = vld [vmem:[#allocation6 + $0x1a0] sm:$0xff]
      %v4794 = vld [vmem:[#allocation6 + $0x1a8] sm:$0xff]
      %v4795 = vld [vmem:[#allocation6 + $0x1b0] sm:$0xff]
      %v4796 = vld [vmem:[#allocation6 + $0x1b8] sm:$0xff]
      %v4797 = vld [vmem:[#allocation6 + $0x1c0] sm:$0xff]
      %v4798 = vld [vmem:[#allocation6 + $0x1c8] sm:$0xff]
      %v4799 = vld [vmem:[#allocation6 + $0x1d0] sm:$0xff]
      %v4800 = vld [vmem:[#allocation6 + $0x1d8] sm:$0xff]
      %v4801 = vld [vmem:[#allocation6 + $0x1e0] sm:$0xff]
      %v4802 = vld [vmem:[#allocation6 + $0x1e8] sm:$0xff]
      %v4803 = vld [vmem:[#allocation6 + $0x1f0] sm:$0xff]
      %v4804 = vld [vmem:[#allocation6 + $0x1f8] sm:$0xff]
      %4806 = vset.pattern.permute.xlu0 0
      %4807 = vperm.xlu0 %4806, %v3654
      %v4808 = vpop.permute.xlu0 %4807
      %4811 = vset.pattern.permute.xlu0 0
      %4812 = vperm.xlu0 %4811, %v3656
      %v4813 = vpop.permute.xlu0 %4812
      %4816 = vset.pattern.permute.xlu0 0
      %4817 = vperm.xlu0 %4816, %v3658
      %v4818 = vpop.permute.xlu0 %4817
      %4821 = vset.pattern.permute.xlu0 0
      %4822 = vperm.xlu0 %4821, %v3660
      %v4823 = vpop.permute.xlu0 %4822
      %4826 = vset.pattern.permute.xlu0 0
      %4827 = vperm.xlu0 %4826, %v3662
      %v4828 = vpop.permute.xlu0 %4827
      %4831 = vset.pattern.permute.xlu0 0
      %4832 = vperm.xlu0 %4831, %v3664
      %v4833 = vpop.permute.xlu0 %4832
      %4836 = vset.pattern.permute.xlu0 0
      %4837 = vperm.xlu0 %4836, %v3666
      %v4838 = vpop.permute.xlu0 %4837
      %4841 = vset.pattern.permute.xlu0 0
      %4842 = vperm.xlu0 %4841, %v3668
      %v4843 = vpop.permute.xlu0 %4842
      %4846 = vset.pattern.permute.xlu0 0
      %4847 = vperm.xlu0 %4846, %v3670
      %v4848 = vpop.permute.xlu0 %4847
      %4851 = vset.pattern.permute.xlu0 0
      %4852 = vperm.xlu0 %4851, %v3672
      %v4853 = vpop.permute.xlu0 %4852
      %4856 = vset.pattern.permute.xlu0 0
      %4857 = vperm.xlu0 %4856, %v3674
      %v4858 = vpop.permute.xlu0 %4857
      %4861 = vset.pattern.permute.xlu0 0
      %4862 = vperm.xlu0 %4861, %v3676
      %v4863 = vpop.permute.xlu0 %4862
      %4866 = vset.pattern.permute.xlu0 0
      %4867 = vperm.xlu0 %4866, %v3678
      %v4868 = vpop.permute.xlu0 %4867
      %4871 = vset.pattern.permute.xlu0 0
      %4872 = vperm.xlu0 %4871, %v3680
      %v4873 = vpop.permute.xlu0 %4872
      %4876 = vset.pattern.permute.xlu0 0
      %4877 = vperm.xlu0 %4876, %v3682
      %v4878 = vpop.permute.xlu0 %4877
      %4881 = vset.pattern.permute.xlu0 0
      %4882 = vperm.xlu0 %4881, %v3684
      %v4883 = vpop.permute.xlu0 %4882
      %4886 = vset.pattern.permute.xlu0 0
      %4887 = vperm.xlu0 %4886, %v3686
      %v4888 = vpop.permute.xlu0 %4887
      %4891 = vset.pattern.permute.xlu0 0
      %4892 = vperm.xlu0 %4891, %v3688
      %v4893 = vpop.permute.xlu0 %4892
      %4896 = vset.pattern.permute.xlu0 0
      %4897 = vperm.xlu0 %4896, %v3690
      %v4898 = vpop.permute.xlu0 %4897
      %4901 = vset.pattern.permute.xlu0 0
      %4902 = vperm.xlu0 %4901, %v3692
      %v4903 = vpop.permute.xlu0 %4902
      %4906 = vset.pattern.permute.xlu0 0
      %4907 = vperm.xlu0 %4906, %v3694
      %v4908 = vpop.permute.xlu0 %4907
      %4911 = vset.pattern.permute.xlu0 0
      %4912 = vperm.xlu0 %4911, %v3696
      %v4913 = vpop.permute.xlu0 %4912
      %4916 = vset.pattern.permute.xlu0 0
      %4917 = vperm.xlu0 %4916, %v3698
      %v4918 = vpop.permute.xlu0 %4917
      %4921 = vset.pattern.permute.xlu0 0
      %4922 = vperm.xlu0 %4921, %v3700
      %v4923 = vpop.permute.xlu0 %4922
      %4926 = vset.pattern.permute.xlu0 0
      %4927 = vperm.xlu0 %4926, %v3702
      %v4928 = vpop.permute.xlu0 %4927
      %4931 = vset.pattern.permute.xlu0 0
      %4932 = vperm.xlu0 %4931, %v3704
      %v4933 = vpop.permute.xlu0 %4932
      %4936 = vset.pattern.permute.xlu0 0
      %4937 = vperm.xlu0 %4936, %v3706
      %v4938 = vpop.permute.xlu0 %4937
      %4941 = vset.pattern.permute.xlu0 0
      %4942 = vperm.xlu0 %4941, %v3708
      %v4943 = vpop.permute.xlu0 %4942
      %4946 = vset.pattern.permute.xlu0 0
      %4947 = vperm.xlu0 %4946, %v3710
      %v4948 = vpop.permute.xlu0 %4947
      %4951 = vset.pattern.permute.xlu0 0
      %4952 = vperm.xlu0 %4951, %v3712
      %v4953 = vpop.permute.xlu0 %4952
      %4956 = vset.pattern.permute.xlu0 0
      %4957 = vperm.xlu0 %4956, %v3714
      %v4958 = vpop.permute.xlu0 %4957
      %4961 = vset.pattern.permute.xlu0 0
      %4962 = vperm.xlu0 %4961, %v3716
      %v4963 = vpop.permute.xlu0 %4962
      %4966 = vset.pattern.permute.xlu0 0
      %4967 = vperm.xlu0 %4966, %v3718
      %v4968 = vpop.permute.xlu0 %4967
      %4971 = vset.pattern.permute.xlu0 0
      %4972 = vperm.xlu0 %4971, %v3720
      %v4973 = vpop.permute.xlu0 %4972
      %4976 = vset.pattern.permute.xlu0 0
      %4977 = vperm.xlu0 %4976, %v3722
      %v4978 = vpop.permute.xlu0 %4977
      %4981 = vset.pattern.permute.xlu0 0
      %4982 = vperm.xlu0 %4981, %v3724
      %v4983 = vpop.permute.xlu0 %4982
      %4986 = vset.pattern.permute.xlu0 0
      %4987 = vperm.xlu0 %4986, %v3726
      %v4988 = vpop.permute.xlu0 %4987
      %4991 = vset.pattern.permute.xlu0 0
      %4992 = vperm.xlu0 %4991, %v3728
      %v4993 = vpop.permute.xlu0 %4992
      %4996 = vset.pattern.permute.xlu0 0
      %4997 = vperm.xlu0 %4996, %v3730
      %v4998 = vpop.permute.xlu0 %4997
      %5001 = vset.pattern.permute.xlu0 0
      %5002 = vperm.xlu0 %5001, %v3732
      %v5003 = vpop.permute.xlu0 %5002
      %5006 = vset.pattern.permute.xlu0 0
      %5007 = vperm.xlu0 %5006, %v3734
      %v5008 = vpop.permute.xlu0 %5007
      %5011 = vset.pattern.permute.xlu0 0
      %5012 = vperm.xlu0 %5011, %v3736
      %v5013 = vpop.permute.xlu0 %5012
      %5016 = vset.pattern.permute.xlu0 0
      %5017 = vperm.xlu0 %5016, %v3738
      %v5018 = vpop.permute.xlu0 %5017
      %5021 = vset.pattern.permute.xlu0 0
      %5022 = vperm.xlu0 %5021, %v3740
      %v5023 = vpop.permute.xlu0 %5022
      %5026 = vset.pattern.permute.xlu0 0
      %5027 = vperm.xlu0 %5026, %v3742
      %v5028 = vpop.permute.xlu0 %5027
      %5031 = vset.pattern.permute.xlu0 0
      %5032 = vperm.xlu0 %5031, %v3744
      %v5033 = vpop.permute.xlu0 %5032
      %5036 = vset.pattern.permute.xlu0 0
      %5037 = vperm.xlu0 %5036, %v3746
      %v5038 = vpop.permute.xlu0 %5037
      %5041 = vset.pattern.permute.xlu0 0
      %5042 = vperm.xlu0 %5041, %v3748
      %v5043 = vpop.permute.xlu0 %5042
      %5046 = vset.pattern.permute.xlu0 0
      %5047 = vperm.xlu0 %5046, %v3750
      %v5048 = vpop.permute.xlu0 %5047
      %5051 = vset.pattern.permute.xlu0 0
      %5052 = vperm.xlu0 %5051, %v3752
      %v5053 = vpop.permute.xlu0 %5052
      %5056 = vset.pattern.permute.xlu0 0
      %5057 = vperm.xlu0 %5056, %v3754
      %v5058 = vpop.permute.xlu0 %5057
      %5061 = vset.pattern.permute.xlu0 0
      %5062 = vperm.xlu0 %5061, %v3756
      %v5063 = vpop.permute.xlu0 %5062
      %5066 = vset.pattern.permute.xlu0 0
      %5067 = vperm.xlu0 %5066, %v3758
      %v5068 = vpop.permute.xlu0 %5067
      %5071 = vset.pattern.permute.xlu0 0
      %5072 = vperm.xlu0 %5071, %v3760
      %v5073 = vpop.permute.xlu0 %5072
      %5076 = vset.pattern.permute.xlu0 0
      %5077 = vperm.xlu0 %5076, %v3762
      %v5078 = vpop.permute.xlu0 %5077
      %5081 = vset.pattern.permute.xlu0 0
      %5082 = vperm.xlu0 %5081, %v3764
      %v5083 = vpop.permute.xlu0 %5082
      %5086 = vset.pattern.permute.xlu0 0
      %5087 = vperm.xlu0 %5086, %v3766
      %v5088 = vpop.permute.xlu0 %5087
      %5091 = vset.pattern.permute.xlu0 0
      %5092 = vperm.xlu0 %5091, %v3768
      %v5093 = vpop.permute.xlu0 %5092
      %5096 = vset.pattern.permute.xlu0 0
      %5097 = vperm.xlu0 %5096, %v3770
      %v5098 = vpop.permute.xlu0 %5097
      %5101 = vset.pattern.permute.xlu0 0
      %5102 = vperm.xlu0 %5101, %v3772
      %v5103 = vpop.permute.xlu0 %5102
      %5106 = vset.pattern.permute.xlu0 0
      %5107 = vperm.xlu0 %5106, %v3774
      %v5108 = vpop.permute.xlu0 %5107
      %5111 = vset.pattern.permute.xlu0 0
      %5112 = vperm.xlu0 %5111, %v3776
      %v5113 = vpop.permute.xlu0 %5112
      %5116 = vset.pattern.permute.xlu0 0
      %5117 = vperm.xlu0 %5116, %v3778
      %v5118 = vpop.permute.xlu0 %5117
      %5121 = vset.pattern.permute.xlu0 0
      %5122 = vperm.xlu0 %5121, %v3780
      %v5123 = vpop.permute.xlu0 %5122
      %v5125 = vmul.f32 %v4808, %v4741
      %v5126 = vmul.f32 %v4813, %v4742
      %v5127 = vmul.f32 %v4818, %v4743
      %v5128 = vmul.f32 %v4823, %v4744
      %v5129 = vmul.f32 %v4828, %v4745
      %v5130 = vmul.f32 %v4833, %v4746
      %v5131 = vmul.f32 %v4838, %v4747
      %v5132 = vmul.f32 %v4843, %v4748
      %v5133 = vmul.f32 %v4848, %v4749
      %v5134 = vmul.f32 %v4853, %v4750
      %v5135 = vmul.f32 %v4858, %v4751
      %v5136 = vmul.f32 %v4863, %v4752
      %v5137 = vmul.f32 %v4868, %v4753
      %v5138 = vmul.f32 %v4873, %v4754
      %v5139 = vmul.f32 %v4878, %v4755
      %v5140 = vmul.f32 %v4883, %v4756
      %v5141 = vmul.f32 %v4888, %v4757
      %v5142 = vmul.f32 %v4893, %v4758
      %v5143 = vmul.f32 %v4898, %v4759
      %v5144 = vmul.f32 %v4903, %v4760
      %v5145 = vmul.f32 %v4908, %v4761
      %v5146 = vmul.f32 %v4913, %v4762
      %v5147 = vmul.f32 %v4918, %v4763
      %v5148 = vmul.f32 %v4923, %v4764
      %v5149 = vmul.f32 %v4928, %v4765
      %v5150 = vmul.f32 %v4933, %v4766
      %v5151 = vmul.f32 %v4938, %v4767
      %v5152 = vmul.f32 %v4943, %v4768
      %v5153 = vmul.f32 %v4948, %v4769
      %v5154 = vmul.f32 %v4953, %v4770
      %v5155 = vmul.f32 %v4958, %v4771
      %v5156 = vmul.f32 %v4963, %v4772
      %v5157 = vmul.f32 %v4968, %v4773
      %v5158 = vmul.f32 %v4973, %v4774
      %v5159 = vmul.f32 %v4978, %v4775
      %v5160 = vmul.f32 %v4983, %v4776
      %v5161 = vmul.f32 %v4988, %v4777
      %v5162 = vmul.f32 %v4993, %v4778
      %v5163 = vmul.f32 %v4998, %v4779
      %v5164 = vmul.f32 %v5003, %v4780
      %v5165 = vmul.f32 %v5008, %v4781
      %v5166 = vmul.f32 %v5013, %v4782
      %v5167 = vmul.f32 %v5018, %v4783
      %v5168 = vmul.f32 %v5023, %v4784
      %v5169 = vmul.f32 %v5028, %v4785
      %v5170 = vmul.f32 %v5033, %v4786
      %v5171 = vmul.f32 %v5038, %v4787
      %v5172 = vmul.f32 %v5043, %v4788
      %v5173 = vmul.f32 %v5048, %v4789
      %v5174 = vmul.f32 %v5053, %v4790
      %v5175 = vmul.f32 %v5058, %v4791
      %v5176 = vmul.f32 %v5063, %v4792
      %v5177 = vmul.f32 %v5068, %v4793
      %v5178 = vmul.f32 %v5073, %v4794
      %v5179 = vmul.f32 %v5078, %v4795
      %v5180 = vmul.f32 %v5083, %v4796
      %v5181 = vmul.f32 %v5088, %v4797
      %v5182 = vmul.f32 %v5093, %v4798
      %v5183 = vmul.f32 %v5098, %v4799
      %v5184 = vmul.f32 %v5103, %v4800
      %v5185 = vmul.f32 %v5108, %v4801
      %v5186 = vmul.f32 %v5113, %v4802
      %v5187 = vmul.f32 %v5118, %v4803
      %v5188 = vmul.f32 %v5123, %v4804
      %v5189 = vpack.c.bf16 %v4168, %v4166
      %v5190 = vpack.c.bf16 %v4172, %v4170
      %v5191 = vpack.c.bf16 %v4176, %v4174
      %v5192 = vpack.c.bf16 %v4180, %v4178
      %v5193 = vpack.c.bf16 %v4184, %v4182
      %v5194 = vpack.c.bf16 %v4188, %v4186
      %v5195 = vpack.c.bf16 %v4192, %v4190
      %v5196 = vpack.c.bf16 %v4196, %v4194
      %v5197 = vpack.c.bf16 %v4200, %v4198
      %v5198 = vpack.c.bf16 %v4204, %v4202
      %v5199 = vpack.c.bf16 %v4208, %v4206
      %v5200 = vpack.c.bf16 %v4212, %v4210
      %v5201 = vpack.c.bf16 %v4216, %v4214
      %v5202 = vpack.c.bf16 %v4220, %v4218
      %v5203 = vpack.c.bf16 %v4224, %v4222
      %v5204 = vpack.c.bf16 %v4228, %v4226
      %v5205 = vpack.c.bf16 %v4232, %v4230
      %v5206 = vpack.c.bf16 %v4236, %v4234
      %v5207 = vpack.c.bf16 %v4240, %v4238
      %v5208 = vpack.c.bf16 %v4244, %v4242
      %v5209 = vpack.c.bf16 %v4248, %v4246
      %v5210 = vpack.c.bf16 %v4252, %v4250
      %v5211 = vpack.c.bf16 %v4256, %v4254
      %v5212 = vpack.c.bf16 %v4260, %v4258
      %v5213 = vpack.c.bf16 %v4264, %v4262
      %v5214 = vpack.c.bf16 %v4268, %v4266
      %v5215 = vpack.c.bf16 %v4272, %v4270
      %v5216 = vpack.c.bf16 %v4276, %v4274
      %v5217 = vpack.c.bf16 %v4280, %v4278
      %v5218 = vpack.c.bf16 %v4284, %v4282
      %v5219 = vpack.c.bf16 %v4288, %v4286
      %v5220 = vpack.c.bf16 %v4292, %v4290
      %v5223 = vunpack.c.l.b16 %v2356
      %v5224 = vunpack.c.l.b16 %v2357
      %v5225 = vpack.c.b16 %v5224, %v5223
      %v5228 = vsel %vm3332, %v5189, 0
      %v5231 = vsel %vm3332, %v5190, 0
      %5233 = vmatprep.subr.bf16.mxu0 0
      %5234 = vmatpush1.bf16.msra.mxu0 0
      %5235 = vmatprep.subr.bf16.mxu0 0
      %5236 = vmatpush1.bf16.msra.mxu0 0
      %5237 = vmatprep.subr.bf16.mxu0 0
      %5238 = vmatpush1.bf16.msra.mxu0 0
      %5239 = vmatprep.subr.bf16.mxu0 0
      %5240 = vmatpush1.bf16.msra.mxu0 0
      %5241 = vmatprep.subr.bf16.mxu0 0
      %5242 = vmatpush1.bf16.msra.mxu0 0
      %5243 = vmatprep.subr.bf16.mxu0 0
      %5244 = vmatpush1.bf16.msra.mxu0 0
      %5245 = vmatprep.subr.bf16.mxu0 0
      %5246 = vmatpush1.bf16.msra.mxu0 0
      %5247 = vmatprep.subr.bf16.mxu0 0
      %5248 = vmatpush1.bf16.msra.mxu0 %v5225
      %5249 = vmatprep.subr.bf16.mxu0 0
      %5250 = vmatpush2.bf16.msra.mxu0 0
      %5251 = vmatprep.subr.bf16.mxu0 0
      %5252 = vmatpush2.bf16.msra.mxu0 0
      %5253 = vmatprep.subr.bf16.mxu0 0
      %5254 = vmatpush2.bf16.msra.mxu0 0
      %5255 = vmatprep.subr.bf16.mxu0 0
      %5256 = vmatpush2.bf16.msra.mxu0 0
      %5257 = vmatprep.subr.bf16.mxu0 0
      %5258 = vmatpush2.bf16.msra.mxu0 0
      %5259 = vmatprep.subr.bf16.mxu0 0
      %5260 = vmatpush2.bf16.msra.mxu0 0
      %5261 = vmatprep.subr.bf16.mxu0 0
      %5262 = vmatpush2.bf16.msra.mxu0 0
      %5263 = vmatprep.subr.bf16.mxu0 0
      %5264 = vmatpush2.bf16.msra.mxu0 0
      %5265 = vmatprep.mubr.bf16.mxu0 0
      %5266 = vmatmul.mubr.bf16.gmra.mxu0 %v5228
      %v5267 = vpop.f32.mrf.mxu0
      %v5268 = vadd.f32 0.0, %v5267
      %v5269 = vpop.f32.mrf.mxu0
      %v5270 = vpop.f32.mrf.mxu0
      %v5271 = vadd.f32 0.0, %v5270
      %v5272 = vpop.f32.mrf.mxu0
      %5273 = vmatprep.mubr.bf16.mxu0 0
      %5274 = vmatmul.mubr.bf16.gmra.mxu0 %v5231
      %v5275 = vpop.f32.mrf.mxu0
      %v5276 = vadd.f32 0.0, %v5275
      %v5277 = vpop.f32.mrf.mxu0
      %v5278 = vpop.f32.mrf.mxu0
      %v5279 = vadd.f32 0.0, %v5278
      %v5280 = vpop.f32.mrf.mxu0
      %5281 = vdwg.mxu0
      %v5284 = vunpack.c.l.b16 %v2358
      %v5285 = vunpack.c.l.b16 %v2359
      %v5286 = vpack.c.b16 %v5285, %v5284
      %v5289 = vsel %vm3332, %v5191, 0
      %v5292 = vsel %vm3332, %v5192, 0
      %5294 = vmatprep.subr.bf16.mxu0 0
      %5295 = vmatpush1.bf16.msra.mxu0 0
      %5296 = vmatprep.subr.bf16.mxu0 0
      %5297 = vmatpush1.bf16.msra.mxu0 0
      %5298 = vmatprep.subr.bf16.mxu0 0
      %5299 = vmatpush1.bf16.msra.mxu0 0
      %5300 = vmatprep.subr.bf16.mxu0 0
      %5301 = vmatpush1.bf16.msra.mxu0 0
      %5302 = vmatprep.subr.bf16.mxu0 0
      %5303 = vmatpush1.bf16.msra.mxu0 0
      %5304 = vmatprep.subr.bf16.mxu0 0
      %5305 = vmatpush1.bf16.msra.mxu0 0
      %5306 = vmatprep.subr.bf16.mxu0 0
      %5307 = vmatpush1.bf16.msra.mxu0 0
      %5308 = vmatprep.subr.bf16.mxu0 0
      %5309 = vmatpush1.bf16.msra.mxu0 %v5286
      %5310 = vmatprep.subr.bf16.mxu0 0
      %5311 = vmatpush2.bf16.msra.mxu0 0
      %5312 = vmatprep.subr.bf16.mxu0 0
      %5313 = vmatpush2.bf16.msra.mxu0 0
      %5314 = vmatprep.subr.bf16.mxu0 0
      %5315 = vmatpush2.bf16.msra.mxu0 0
      %5316 = vmatprep.subr.bf16.mxu0 0
      %5317 = vmatpush2.bf16.msra.mxu0 0
      %5318 = vmatprep.subr.bf16.mxu0 0
      %5319 = vmatpush2.bf16.msra.mxu0 0
      %5320 = vmatprep.subr.bf16.mxu0 0
      %5321 = vmatpush2.bf16.msra.mxu0 0
      %5322 = vmatprep.subr.bf16.mxu0 0
      %5323 = vmatpush2.bf16.msra.mxu0 0
      %5324 = vmatprep.subr.bf16.mxu0 0
      %5325 = vmatpush2.bf16.msra.mxu0 0
      %5326 = vmatprep.mubr.bf16.mxu0 0
      %5327 = vmatmul.mubr.bf16.gmra.mxu0 %v5289
      %v5328 = vpop.f32.mrf.mxu0
      %v5329 = vadd.f32 0.0, %v5328
      %v5330 = vpop.f32.mrf.mxu0
      %v5331 = vpop.f32.mrf.mxu0
      %v5332 = vadd.f32 0.0, %v5331
      %v5333 = vpop.f32.mrf.mxu0
      %5334 = vmatprep.mubr.bf16.mxu0 0
      %5335 = vmatmul.mubr.bf16.gmra.mxu0 %v5292
      %v5336 = vpop.f32.mrf.mxu0
      %v5337 = vadd.f32 0.0, %v5336
      %v5338 = vpop.f32.mrf.mxu0
      %v5339 = vpop.f32.mrf.mxu0
      %v5340 = vadd.f32 0.0, %v5339
      %v5341 = vpop.f32.mrf.mxu0
      %5342 = vdwg.mxu0
      %v5345 = vunpack.c.l.b16 %v2360
      %v5346 = vunpack.c.l.b16 %v2361
      %v5347 = vpack.c.b16 %v5346, %v5345
      %v5350 = vsel %vm3332, %v5193, 0
      %v5353 = vsel %vm3332, %v5194, 0
      %5355 = vmatprep.subr.bf16.mxu0 0
      %5356 = vmatpush1.bf16.msra.mxu0 0
      %5357 = vmatprep.subr.bf16.mxu0 0
      %5358 = vmatpush1.bf16.msra.mxu0 0
      %5359 = vmatprep.subr.bf16.mxu0 0
      %5360 = vmatpush1.bf16.msra.mxu0 0
      %5361 = vmatprep.subr.bf16.mxu0 0
      %5362 = vmatpush1.bf16.msra.mxu0 0
      %5363 = vmatprep.subr.bf16.mxu0 0
      %5364 = vmatpush1.bf16.msra.mxu0 0
      %5365 = vmatprep.subr.bf16.mxu0 0
      %5366 = vmatpush1.bf16.msra.mxu0 0
      %5367 = vmatprep.subr.bf16.mxu0 0
      %5368 = vmatpush1.bf16.msra.mxu0 0
      %5369 = vmatprep.subr.bf16.mxu0 0
      %5370 = vmatpush1.bf16.msra.mxu0 %v5347
      %5371 = vmatprep.subr.bf16.mxu0 0
      %5372 = vmatpush2.bf16.msra.mxu0 0
      %5373 = vmatprep.subr.bf16.mxu0 0
      %5374 = vmatpush2.bf16.msra.mxu0 0
      %5375 = vmatprep.subr.bf16.mxu0 0
      %5376 = vmatpush2.bf16.msra.mxu0 0
      %5377 = vmatprep.subr.bf16.mxu0 0
      %5378 = vmatpush2.bf16.msra.mxu0 0
      %5379 = vmatprep.subr.bf16.mxu0 0
      %5380 = vmatpush2.bf16.msra.mxu0 0
      %5381 = vmatprep.subr.bf16.mxu0 0
      %5382 = vmatpush2.bf16.msra.mxu0 0
      %5383 = vmatprep.subr.bf16.mxu0 0
      %5384 = vmatpush2.bf16.msra.mxu0 0
      %5385 = vmatprep.subr.bf16.mxu0 0
      %5386 = vmatpush2.bf16.msra.mxu0 0
      %5387 = vmatprep.mubr.bf16.mxu0 0
      %5388 = vmatmul.mubr.bf16.gmra.mxu0 %v5350
      %v5389 = vpop.f32.mrf.mxu0
      %v5390 = vadd.f32 0.0, %v5389
      %v5391 = vpop.f32.mrf.mxu0
      %v5392 = vpop.f32.mrf.mxu0
      %v5393 = vadd.f32 0.0, %v5392
      %v5394 = vpop.f32.mrf.mxu0
      %5395 = vmatprep.mubr.bf16.mxu0 0
      %5396 = vmatmul.mubr.bf16.gmra.mxu0 %v5353
      %v5397 = vpop.f32.mrf.mxu0
      %v5398 = vadd.f32 0.0, %v5397
      %v5399 = vpop.f32.mrf.mxu0
      %v5400 = vpop.f32.mrf.mxu0
      %v5401 = vadd.f32 0.0, %v5400
      %v5402 = vpop.f32.mrf.mxu0
      %5403 = vdwg.mxu0
      %v5406 = vunpack.c.l.b16 %v2362
      %v5407 = vunpack.c.l.b16 %v2363
      %v5408 = vpack.c.b16 %v5407, %v5406
      %v5411 = vsel %vm3332, %v5195, 0
      %v5414 = vsel %vm3332, %v5196, 0
      %5416 = vmatprep.subr.bf16.mxu0 0
      %5417 = vmatpush1.bf16.msra.mxu0 0
      %5418 = vmatprep.subr.bf16.mxu0 0
      %5419 = vmatpush1.bf16.msra.mxu0 0
      %5420 = vmatprep.subr.bf16.mxu0 0
      %5421 = vmatpush1.bf16.msra.mxu0 0
      %5422 = vmatprep.subr.bf16.mxu0 0
      %5423 = vmatpush1.bf16.msra.mxu0 0
      %5424 = vmatprep.subr.bf16.mxu0 0
      %5425 = vmatpush1.bf16.msra.mxu0 0
      %5426 = vmatprep.subr.bf16.mxu0 0
      %5427 = vmatpush1.bf16.msra.mxu0 0
      %5428 = vmatprep.subr.bf16.mxu0 0
      %5429 = vmatpush1.bf16.msra.mxu0 0
      %5430 = vmatprep.subr.bf16.mxu0 0
      %5431 = vmatpush1.bf16.msra.mxu0 %v5408
      %5432 = vmatprep.subr.bf16.mxu0 0
      %5433 = vmatpush2.bf16.msra.mxu0 0
      %5434 = vmatprep.subr.bf16.mxu0 0
      %5435 = vmatpush2.bf16.msra.mxu0 0
      %5436 = vmatprep.subr.bf16.mxu0 0
      %5437 = vmatpush2.bf16.msra.mxu0 0
      %5438 = vmatprep.subr.bf16.mxu0 0
      %5439 = vmatpush2.bf16.msra.mxu0 0
      %5440 = vmatprep.subr.bf16.mxu0 0
      %5441 = vmatpush2.bf16.msra.mxu0 0
      %5442 = vmatprep.subr.bf16.mxu0 0
      %5443 = vmatpush2.bf16.msra.mxu0 0
      %5444 = vmatprep.subr.bf16.mxu0 0
      %5445 = vmatpush2.bf16.msra.mxu0 0
      %5446 = vmatprep.subr.bf16.mxu0 0
      %5447 = vmatpush2.bf16.msra.mxu0 0
      %5448 = vmatprep.mubr.bf16.mxu0 0
      %5449 = vmatmul.mubr.bf16.gmra.mxu0 %v5411
      %v5450 = vpop.f32.mrf.mxu0
      %v5451 = vadd.f32 0.0, %v5450
      %v5452 = vpop.f32.mrf.mxu0
      %v5453 = vpop.f32.mrf.mxu0
      %v5454 = vadd.f32 0.0, %v5453
      %v5455 = vpop.f32.mrf.mxu0
      %5456 = vmatprep.mubr.bf16.mxu0 0
      %5457 = vmatmul.mubr.bf16.gmra.mxu0 %v5414
      %v5458 = vpop.f32.mrf.mxu0
      %v5459 = vadd.f32 0.0, %v5458
      %v5460 = vpop.f32.mrf.mxu0
      %v5461 = vpop.f32.mrf.mxu0
      %v5462 = vadd.f32 0.0, %v5461
      %v5463 = vpop.f32.mrf.mxu0
      %5464 = vdwg.mxu0
      %v5467 = vunpack.c.l.b16 %v2364
      %v5468 = vunpack.c.l.b16 %v2365
      %v5469 = vpack.c.b16 %v5468, %v5467
      %v5472 = vsel %vm3332, %v5197, 0
      %v5475 = vsel %vm3332, %v5198, 0
      %5477 = vmatprep.subr.bf16.mxu0 0
      %5478 = vmatpush1.bf16.msra.mxu0 0
      %5479 = vmatprep.subr.bf16.mxu0 0
      %5480 = vmatpush1.bf16.msra.mxu0 0
      %5481 = vmatprep.subr.bf16.mxu0 0
      %5482 = vmatpush1.bf16.msra.mxu0 0
      %5483 = vmatprep.subr.bf16.mxu0 0
      %5484 = vmatpush1.bf16.msra.mxu0 0
      %5485 = vmatprep.subr.bf16.mxu0 0
      %5486 = vmatpush1.bf16.msra.mxu0 0
      %5487 = vmatprep.subr.bf16.mxu0 0
      %5488 = vmatpush1.bf16.msra.mxu0 0
      %5489 = vmatprep.subr.bf16.mxu0 0
      %5490 = vmatpush1.bf16.msra.mxu0 0
      %5491 = vmatprep.subr.bf16.mxu0 0
      %5492 = vmatpush1.bf16.msra.mxu0 %v5469
      %5493 = vmatprep.subr.bf16.mxu0 0
      %5494 = vmatpush2.bf16.msra.mxu0 0
      %5495 = vmatprep.subr.bf16.mxu0 0
      %5496 = vmatpush2.bf16.msra.mxu0 0
      %5497 = vmatprep.subr.bf16.mxu0 0
      %5498 = vmatpush2.bf16.msra.mxu0 0
      %5499 = vmatprep.subr.bf16.mxu0 0
      %5500 = vmatpush2.bf16.msra.mxu0 0
      %5501 = vmatprep.subr.bf16.mxu0 0
      %5502 = vmatpush2.bf16.msra.mxu0 0
      %5503 = vmatprep.subr.bf16.mxu0 0
      %5504 = vmatpush2.bf16.msra.mxu0 0
      %5505 = vmatprep.subr.bf16.mxu0 0
      %5506 = vmatpush2.bf16.msra.mxu0 0
      %5507 = vmatprep.subr.bf16.mxu0 0
      %5508 = vmatpush2.bf16.msra.mxu0 0
      %5509 = vmatprep.mubr.bf16.mxu0 0
      %5510 = vmatmul.mubr.bf16.gmra.mxu0 %v5472
      %v5511 = vpop.f32.mrf.mxu0
      %v5512 = vadd.f32 0.0, %v5511
      %v5513 = vpop.f32.mrf.mxu0
      %v5514 = vpop.f32.mrf.mxu0
      %v5515 = vadd.f32 0.0, %v5514
      %v5516 = vpop.f32.mrf.mxu0
      %5517 = vmatprep.mubr.bf16.mxu0 0
      %5518 = vmatmul.mubr.bf16.gmra.mxu0 %v5475
      %v5519 = vpop.f32.mrf.mxu0
      %v5520 = vadd.f32 0.0, %v5519
      %v5521 = vpop.f32.mrf.mxu0
      %v5522 = vpop.f32.mrf.mxu0
      %v5523 = vadd.f32 0.0, %v5522
      %v5524 = vpop.f32.mrf.mxu0
      %5525 = vdwg.mxu0
      %v5528 = vunpack.c.l.b16 %v2366
      %v5529 = vunpack.c.l.b16 %v2367
      %v5530 = vpack.c.b16 %v5529, %v5528
      %v5533 = vsel %vm3332, %v5199, 0
      %v5536 = vsel %vm3332, %v5200, 0
      %5538 = vmatprep.subr.bf16.mxu0 0
      %5539 = vmatpush1.bf16.msra.mxu0 0
      %5540 = vmatprep.subr.bf16.mxu0 0
      %5541 = vmatpush1.bf16.msra.mxu0 0
      %5542 = vmatprep.subr.bf16.mxu0 0
      %5543 = vmatpush1.bf16.msra.mxu0 0
      %5544 = vmatprep.subr.bf16.mxu0 0
      %5545 = vmatpush1.bf16.msra.mxu0 0
      %5546 = vmatprep.subr.bf16.mxu0 0
      %5547 = vmatpush1.bf16.msra.mxu0 0
      %5548 = vmatprep.subr.bf16.mxu0 0
      %5549 = vmatpush1.bf16.msra.mxu0 0
      %5550 = vmatprep.subr.bf16.mxu0 0
      %5551 = vmatpush1.bf16.msra.mxu0 0
      %5552 = vmatprep.subr.bf16.mxu0 0
      %5553 = vmatpush1.bf16.msra.mxu0 %v5530
      %5554 = vmatprep.subr.bf16.mxu0 0
      %5555 = vmatpush2.bf16.msra.mxu0 0
      %5556 = vmatprep.subr.bf16.mxu0 0
      %5557 = vmatpush2.bf16.msra.mxu0 0
      %5558 = vmatprep.subr.bf16.mxu0 0
      %5559 = vmatpush2.bf16.msra.mxu0 0
      %5560 = vmatprep.subr.bf16.mxu0 0
      %5561 = vmatpush2.bf16.msra.mxu0 0
      %5562 = vmatprep.subr.bf16.mxu0 0
      %5563 = vmatpush2.bf16.msra.mxu0 0
      %5564 = vmatprep.subr.bf16.mxu0 0
      %5565 = vmatpush2.bf16.msra.mxu0 0
      %5566 = vmatprep.subr.bf16.mxu0 0
      %5567 = vmatpush2.bf16.msra.mxu0 0
      %5568 = vmatprep.subr.bf16.mxu0 0
      %5569 = vmatpush2.bf16.msra.mxu0 0
      %5570 = vmatprep.mubr.bf16.mxu0 0
      %5571 = vmatmul.mubr.bf16.gmra.mxu0 %v5533
      %v5572 = vpop.f32.mrf.mxu0
      %v5573 = vadd.f32 0.0, %v5572
      %v5574 = vpop.f32.mrf.mxu0
      %v5575 = vpop.f32.mrf.mxu0
      %v5576 = vadd.f32 0.0, %v5575
      %v5577 = vpop.f32.mrf.mxu0
      %5578 = vmatprep.mubr.bf16.mxu0 0
      %5579 = vmatmul.mubr.bf16.gmra.mxu0 %v5536
      %v5580 = vpop.f32.mrf.mxu0
      %v5581 = vadd.f32 0.0, %v5580
      %v5582 = vpop.f32.mrf.mxu0
      %v5583 = vpop.f32.mrf.mxu0
      %v5584 = vadd.f32 0.0, %v5583
      %v5585 = vpop.f32.mrf.mxu0
      %5586 = vdwg.mxu0
      %v5589 = vunpack.c.l.b16 %v2368
      %v5590 = vunpack.c.l.b16 %v2369
      %v5591 = vpack.c.b16 %v5590, %v5589
      %v5594 = vsel %vm3332, %v5201, 0
      %v5597 = vsel %vm3332, %v5202, 0
      %5599 = vmatprep.subr.bf16.mxu0 0
      %5600 = vmatpush1.bf16.msra.mxu0 0
      %5601 = vmatprep.subr.bf16.mxu0 0
      %5602 = vmatpush1.bf16.msra.mxu0 0
      %5603 = vmatprep.subr.bf16.mxu0 0
      %5604 = vmatpush1.bf16.msra.mxu0 0
      %5605 = vmatprep.subr.bf16.mxu0 0
      %5606 = vmatpush1.bf16.msra.mxu0 0
      %5607 = vmatprep.subr.bf16.mxu0 0
      %5608 = vmatpush1.bf16.msra.mxu0 0
      %5609 = vmatprep.subr.bf16.mxu0 0
      %5610 = vmatpush1.bf16.msra.mxu0 0
      %5611 = vmatprep.subr.bf16.mxu0 0
      %5612 = vmatpush1.bf16.msra.mxu0 0
      %5613 = vmatprep.subr.bf16.mxu0 0
      %5614 = vmatpush1.bf16.msra.mxu0 %v5591
      %5615 = vmatprep.subr.bf16.mxu0 0
      %5616 = vmatpush2.bf16.msra.mxu0 0
      %5617 = vmatprep.subr.bf16.mxu0 0
      %5618 = vmatpush2.bf16.msra.mxu0 0
      %5619 = vmatprep.subr.bf16.mxu0 0
      %5620 = vmatpush2.bf16.msra.mxu0 0
      %5621 = vmatprep.subr.bf16.mxu0 0
      %5622 = vmatpush2.bf16.msra.mxu0 0
      %5623 = vmatprep.subr.bf16.mxu0 0
      %5624 = vmatpush2.bf16.msra.mxu0 0
      %5625 = vmatprep.subr.bf16.mxu0 0
      %5626 = vmatpush2.bf16.msra.mxu0 0
      %5627 = vmatprep.subr.bf16.mxu0 0
      %5628 = vmatpush2.bf16.msra.mxu0 0
      %5629 = vmatprep.subr.bf16.mxu0 0
      %5630 = vmatpush2.bf16.msra.mxu0 0
      %5631 = vmatprep.mubr.bf16.mxu0 0
      %5632 = vmatmul.mubr.bf16.gmra.mxu0 %v5594
      %v5633 = vpop.f32.mrf.mxu0
      %v5634 = vadd.f32 0.0, %v5633
      %v5635 = vpop.f32.mrf.mxu0
      %v5636 = vpop.f32.mrf.mxu0
      %v5637 = vadd.f32 0.0, %v5636
      %v5638 = vpop.f32.mrf.mxu0
      %5639 = vmatprep.mubr.bf16.mxu0 0
      %5640 = vmatmul.mubr.bf16.gmra.mxu0 %v5597
      %v5641 = vpop.f32.mrf.mxu0
      %v5642 = vadd.f32 0.0, %v5641
      %v5643 = vpop.f32.mrf.mxu0
      %v5644 = vpop.f32.mrf.mxu0
      %v5645 = vadd.f32 0.0, %v5644
      %v5646 = vpop.f32.mrf.mxu0
      %5647 = vdwg.mxu0
      %v5650 = vunpack.c.l.b16 %v2370
      %v5651 = vunpack.c.l.b16 %v2371
      %v5652 = vpack.c.b16 %v5651, %v5650
      %v5655 = vsel %vm3332, %v5203, 0
      %v5658 = vsel %vm3332, %v5204, 0
      %5660 = vmatprep.subr.bf16.mxu0 0
      %5661 = vmatpush1.bf16.msra.mxu0 0
      %5662 = vmatprep.subr.bf16.mxu0 0
      %5663 = vmatpush1.bf16.msra.mxu0 0
      %5664 = vmatprep.subr.bf16.mxu0 0
      %5665 = vmatpush1.bf16.msra.mxu0 0
      %5666 = vmatprep.subr.bf16.mxu0 0
      %5667 = vmatpush1.bf16.msra.mxu0 0
      %5668 = vmatprep.subr.bf16.mxu0 0
      %5669 = vmatpush1.bf16.msra.mxu0 0
      %5670 = vmatprep.subr.bf16.mxu0 0
      %5671 = vmatpush1.bf16.msra.mxu0 0
      %5672 = vmatprep.subr.bf16.mxu0 0
      %5673 = vmatpush1.bf16.msra.mxu0 0
      %5674 = vmatprep.subr.bf16.mxu0 0
      %5675 = vmatpush1.bf16.msra.mxu0 %v5652
      %5676 = vmatprep.subr.bf16.mxu0 0
      %5677 = vmatpush2.bf16.msra.mxu0 0
      %5678 = vmatprep.subr.bf16.mxu0 0
      %5679 = vmatpush2.bf16.msra.mxu0 0
      %5680 = vmatprep.subr.bf16.mxu0 0
      %5681 = vmatpush2.bf16.msra.mxu0 0
      %5682 = vmatprep.subr.bf16.mxu0 0
      %5683 = vmatpush2.bf16.msra.mxu0 0
      %5684 = vmatprep.subr.bf16.mxu0 0
      %5685 = vmatpush2.bf16.msra.mxu0 0
      %5686 = vmatprep.subr.bf16.mxu0 0
      %5687 = vmatpush2.bf16.msra.mxu0 0
      %5688 = vmatprep.subr.bf16.mxu0 0
      %5689 = vmatpush2.bf16.msra.mxu0 0
      %5690 = vmatprep.subr.bf16.mxu0 0
      %5691 = vmatpush2.bf16.msra.mxu0 0
      %5692 = vmatprep.mubr.bf16.mxu0 0
      %5693 = vmatmul.mubr.bf16.gmra.mxu0 %v5655
      %v5694 = vpop.f32.mrf.mxu0
      %v5695 = vadd.f32 0.0, %v5694
      %v5696 = vpop.f32.mrf.mxu0
      %v5697 = vpop.f32.mrf.mxu0
      %v5698 = vadd.f32 0.0, %v5697
      %v5699 = vpop.f32.mrf.mxu0
      %5700 = vmatprep.mubr.bf16.mxu0 0
      %5701 = vmatmul.mubr.bf16.gmra.mxu0 %v5658
      %v5702 = vpop.f32.mrf.mxu0
      %v5703 = vadd.f32 0.0, %v5702
      %v5704 = vpop.f32.mrf.mxu0
      %v5705 = vpop.f32.mrf.mxu0
      %v5706 = vadd.f32 0.0, %v5705
      %v5707 = vpop.f32.mrf.mxu0
      %5708 = vdwg.mxu0
      %v5711 = vunpack.c.l.b16 %v2372
      %v5712 = vunpack.c.l.b16 %v2373
      %v5713 = vpack.c.b16 %v5712, %v5711
      %v5716 = vsel %vm3332, %v5205, 0
      %v5719 = vsel %vm3332, %v5206, 0
      %5721 = vmatprep.subr.bf16.mxu0 0
      %5722 = vmatpush1.bf16.msra.mxu0 0
      %5723 = vmatprep.subr.bf16.mxu0 0
      %5724 = vmatpush1.bf16.msra.mxu0 0
      %5725 = vmatprep.subr.bf16.mxu0 0
      %5726 = vmatpush1.bf16.msra.mxu0 0
      %5727 = vmatprep.subr.bf16.mxu0 0
      %5728 = vmatpush1.bf16.msra.mxu0 0
      %5729 = vmatprep.subr.bf16.mxu0 0
      %5730 = vmatpush1.bf16.msra.mxu0 0
      %5731 = vmatprep.subr.bf16.mxu0 0
      %5732 = vmatpush1.bf16.msra.mxu0 0
      %5733 = vmatprep.subr.bf16.mxu0 0
      %5734 = vmatpush1.bf16.msra.mxu0 0
      %5735 = vmatprep.subr.bf16.mxu0 0
      %5736 = vmatpush1.bf16.msra.mxu0 %v5713
      %5737 = vmatprep.subr.bf16.mxu0 0
      %5738 = vmatpush2.bf16.msra.mxu0 0
      %5739 = vmatprep.subr.bf16.mxu0 0
      %5740 = vmatpush2.bf16.msra.mxu0 0
      %5741 = vmatprep.subr.bf16.mxu0 0
      %5742 = vmatpush2.bf16.msra.mxu0 0
      %5743 = vmatprep.subr.bf16.mxu0 0
      %5744 = vmatpush2.bf16.msra.mxu0 0
      %5745 = vmatprep.subr.bf16.mxu0 0
      %5746 = vmatpush2.bf16.msra.mxu0 0
      %5747 = vmatprep.subr.bf16.mxu0 0
      %5748 = vmatpush2.bf16.msra.mxu0 0
      %5749 = vmatprep.subr.bf16.mxu0 0
      %5750 = vmatpush2.bf16.msra.mxu0 0
      %5751 = vmatprep.subr.bf16.mxu0 0
      %5752 = vmatpush2.bf16.msra.mxu0 0
      %5753 = vmatprep.mubr.bf16.mxu0 0
      %5754 = vmatmul.mubr.bf16.gmra.mxu0 %v5716
      %v5755 = vpop.f32.mrf.mxu0
      %v5756 = vadd.f32 0.0, %v5755
      %v5757 = vpop.f32.mrf.mxu0
      %v5758 = vpop.f32.mrf.mxu0
      %v5759 = vadd.f32 0.0, %v5758
      %v5760 = vpop.f32.mrf.mxu0
      %5761 = vmatprep.mubr.bf16.mxu0 0
      %5762 = vmatmul.mubr.bf16.gmra.mxu0 %v5719
      %v5763 = vpop.f32.mrf.mxu0
      %v5764 = vadd.f32 0.0, %v5763
      %v5765 = vpop.f32.mrf.mxu0
      %v5766 = vpop.f32.mrf.mxu0
      %v5767 = vadd.f32 0.0, %v5766
      %v5768 = vpop.f32.mrf.mxu0
      %5769 = vdwg.mxu0
      %v5772 = vunpack.c.l.b16 %v2374
      %v5773 = vunpack.c.l.b16 %v2375
      %v5774 = vpack.c.b16 %v5773, %v5772
      %v5777 = vsel %vm3332, %v5207, 0
      %v5780 = vsel %vm3332, %v5208, 0
      %5782 = vmatprep.subr.bf16.mxu0 0
      %5783 = vmatpush1.bf16.msra.mxu0 0
      %5784 = vmatprep.subr.bf16.mxu0 0
      %5785 = vmatpush1.bf16.msra.mxu0 0
      %5786 = vmatprep.subr.bf16.mxu0 0
      %5787 = vmatpush1.bf16.msra.mxu0 0
      %5788 = vmatprep.subr.bf16.mxu0 0
      %5789 = vmatpush1.bf16.msra.mxu0 0
      %5790 = vmatprep.subr.bf16.mxu0 0
      %5791 = vmatpush1.bf16.msra.mxu0 0
      %5792 = vmatprep.subr.bf16.mxu0 0
      %5793 = vmatpush1.bf16.msra.mxu0 0
      %5794 = vmatprep.subr.bf16.mxu0 0
      %5795 = vmatpush1.bf16.msra.mxu0 0
      %5796 = vmatprep.subr.bf16.mxu0 0
      %5797 = vmatpush1.bf16.msra.mxu0 %v5774
      %5798 = vmatprep.subr.bf16.mxu0 0
      %5799 = vmatpush2.bf16.msra.mxu0 0
      %5800 = vmatprep.subr.bf16.mxu0 0
      %5801 = vmatpush2.bf16.msra.mxu0 0
      %5802 = vmatprep.subr.bf16.mxu0 0
      %5803 = vmatpush2.bf16.msra.mxu0 0
      %5804 = vmatprep.subr.bf16.mxu0 0
      %5805 = vmatpush2.bf16.msra.mxu0 0
      %5806 = vmatprep.subr.bf16.mxu0 0
      %5807 = vmatpush2.bf16.msra.mxu0 0
      %5808 = vmatprep.subr.bf16.mxu0 0
      %5809 = vmatpush2.bf16.msra.mxu0 0
      %5810 = vmatprep.subr.bf16.mxu0 0
      %5811 = vmatpush2.bf16.msra.mxu0 0
      %5812 = vmatprep.subr.bf16.mxu0 0
      %5813 = vmatpush2.bf16.msra.mxu0 0
      %5814 = vmatprep.mubr.bf16.mxu0 0
      %5815 = vmatmul.mubr.bf16.gmra.mxu0 %v5777
      %v5816 = vpop.f32.mrf.mxu0
      %v5817 = vadd.f32 0.0, %v5816
      %v5818 = vpop.f32.mrf.mxu0
      %v5819 = vpop.f32.mrf.mxu0
      %v5820 = vadd.f32 0.0, %v5819
      %v5821 = vpop.f32.mrf.mxu0
      %5822 = vmatprep.mubr.bf16.mxu0 0
      %5823 = vmatmul.mubr.bf16.gmra.mxu0 %v5780
      %v5824 = vpop.f32.mrf.mxu0
      %v5825 = vadd.f32 0.0, %v5824
      %v5826 = vpop.f32.mrf.mxu0
      %v5827 = vpop.f32.mrf.mxu0
      %v5828 = vadd.f32 0.0, %v5827
      %v5829 = vpop.f32.mrf.mxu0
      %5830 = vdwg.mxu0
      %v5833 = vunpack.c.l.b16 %v2376
      %v5834 = vunpack.c.l.b16 %v2377
      %v5835 = vpack.c.b16 %v5834, %v5833
      %v5838 = vsel %vm3332, %v5209, 0
      %v5841 = vsel %vm3332, %v5210, 0
      %5843 = vmatprep.subr.bf16.mxu0 0
      %5844 = vmatpush1.bf16.msra.mxu0 0
      %5845 = vmatprep.subr.bf16.mxu0 0
      %5846 = vmatpush1.bf16.msra.mxu0 0
      %5847 = vmatprep.subr.bf16.mxu0 0
      %5848 = vmatpush1.bf16.msra.mxu0 0
      %5849 = vmatprep.subr.bf16.mxu0 0
      %5850 = vmatpush1.bf16.msra.mxu0 0
      %5851 = vmatprep.subr.bf16.mxu0 0
      %5852 = vmatpush1.bf16.msra.mxu0 0
      %5853 = vmatprep.subr.bf16.mxu0 0
      %5854 = vmatpush1.bf16.msra.mxu0 0
      %5855 = vmatprep.subr.bf16.mxu0 0
      %5856 = vmatpush1.bf16.msra.mxu0 0
      %5857 = vmatprep.subr.bf16.mxu0 0
      %5858 = vmatpush1.bf16.msra.mxu0 %v5835
      %5859 = vmatprep.subr.bf16.mxu0 0
      %5860 = vmatpush2.bf16.msra.mxu0 0
      %5861 = vmatprep.subr.bf16.mxu0 0
      %5862 = vmatpush2.bf16.msra.mxu0 0
      %5863 = vmatprep.subr.bf16.mxu0 0
      %5864 = vmatpush2.bf16.msra.mxu0 0
      %5865 = vmatprep.subr.bf16.mxu0 0
      %5866 = vmatpush2.bf16.msra.mxu0 0
      %5867 = vmatprep.subr.bf16.mxu0 0
      %5868 = vmatpush2.bf16.msra.mxu0 0
      %5869 = vmatprep.subr.bf16.mxu0 0
      %5870 = vmatpush2.bf16.msra.mxu0 0
      %5871 = vmatprep.subr.bf16.mxu0 0
      %5872 = vmatpush2.bf16.msra.mxu0 0
      %5873 = vmatprep.subr.bf16.mxu0 0
      %5874 = vmatpush2.bf16.msra.mxu0 0
      %5875 = vmatprep.mubr.bf16.mxu0 0
      %5876 = vmatmul.mubr.bf16.gmra.mxu0 %v5838
      %v5877 = vpop.f32.mrf.mxu0
      %v5878 = vadd.f32 0.0, %v5877
      %v5879 = vpop.f32.mrf.mxu0
      %v5880 = vpop.f32.mrf.mxu0
      %v5881 = vadd.f32 0.0, %v5880
      %v5882 = vpop.f32.mrf.mxu0
      %5883 = vmatprep.mubr.bf16.mxu0 0
      %5884 = vmatmul.mubr.bf16.gmra.mxu0 %v5841
      %v5885 = vpop.f32.mrf.mxu0
      %v5886 = vadd.f32 0.0, %v5885
      %v5887 = vpop.f32.mrf.mxu0
      %v5888 = vpop.f32.mrf.mxu0
      %v5889 = vadd.f32 0.0, %v5888
      %v5890 = vpop.f32.mrf.mxu0
      %5891 = vdwg.mxu0
      %v5894 = vunpack.c.l.b16 %v2378
      %v5895 = vunpack.c.l.b16 %v2379
      %v5896 = vpack.c.b16 %v5895, %v5894
      %v5899 = vsel %vm3332, %v5211, 0
      %v5902 = vsel %vm3332, %v5212, 0
      %5904 = vmatprep.subr.bf16.mxu0 0
      %5905 = vmatpush1.bf16.msra.mxu0 0
      %5906 = vmatprep.subr.bf16.mxu0 0
      %5907 = vmatpush1.bf16.msra.mxu0 0
      %5908 = vmatprep.subr.bf16.mxu0 0
      %5909 = vmatpush1.bf16.msra.mxu0 0
      %5910 = vmatprep.subr.bf16.mxu0 0
      %5911 = vmatpush1.bf16.msra.mxu0 0
      %5912 = vmatprep.subr.bf16.mxu0 0
      %5913 = vmatpush1.bf16.msra.mxu0 0
      %5914 = vmatprep.subr.bf16.mxu0 0
      %5915 = vmatpush1.bf16.msra.mxu0 0
      %5916 = vmatprep.subr.bf16.mxu0 0
      %5917 = vmatpush1.bf16.msra.mxu0 0
      %5918 = vmatprep.subr.bf16.mxu0 0
      %5919 = vmatpush1.bf16.msra.mxu0 %v5896
      %5920 = vmatprep.subr.bf16.mxu0 0
      %5921 = vmatpush2.bf16.msra.mxu0 0
      %5922 = vmatprep.subr.bf16.mxu0 0
      %5923 = vmatpush2.bf16.msra.mxu0 0
      %5924 = vmatprep.subr.bf16.mxu0 0
      %5925 = vmatpush2.bf16.msra.mxu0 0
      %5926 = vmatprep.subr.bf16.mxu0 0
      %5927 = vmatpush2.bf16.msra.mxu0 0
      %5928 = vmatprep.subr.bf16.mxu0 0
      %5929 = vmatpush2.bf16.msra.mxu0 0
      %5930 = vmatprep.subr.bf16.mxu0 0
      %5931 = vmatpush2.bf16.msra.mxu0 0
      %5932 = vmatprep.subr.bf16.mxu0 0
      %5933 = vmatpush2.bf16.msra.mxu0 0
      %5934 = vmatprep.subr.bf16.mxu0 0
      %5935 = vmatpush2.bf16.msra.mxu0 0
      %5936 = vmatprep.mubr.bf16.mxu0 0
      %5937 = vmatmul.mubr.bf16.gmra.mxu0 %v5899
      %v5938 = vpop.f32.mrf.mxu0
      %v5939 = vadd.f32 0.0, %v5938
      %v5940 = vpop.f32.mrf.mxu0
      %v5941 = vpop.f32.mrf.mxu0
      %v5942 = vadd.f32 0.0, %v5941
      %v5943 = vpop.f32.mrf.mxu0
      %5944 = vmatprep.mubr.bf16.mxu0 0
      %5945 = vmatmul.mubr.bf16.gmra.mxu0 %v5902
      %v5946 = vpop.f32.mrf.mxu0
      %v5947 = vadd.f32 0.0, %v5946
      %v5948 = vpop.f32.mrf.mxu0
      %v5949 = vpop.f32.mrf.mxu0
      %v5950 = vadd.f32 0.0, %v5949
      %v5951 = vpop.f32.mrf.mxu0
      %5952 = vdwg.mxu0
      %v5955 = vunpack.c.l.b16 %v2380
      %v5956 = vunpack.c.l.b16 %v2381
      %v5957 = vpack.c.b16 %v5956, %v5955
      %v5960 = vsel %vm3332, %v5213, 0
      %v5963 = vsel %vm3332, %v5214, 0
      %5965 = vmatprep.subr.bf16.mxu0 0
      %5966 = vmatpush1.bf16.msra.mxu0 0
      %5967 = vmatprep.subr.bf16.mxu0 0
      %5968 = vmatpush1.bf16.msra.mxu0 0
      %5969 = vmatprep.subr.bf16.mxu0 0
      %5970 = vmatpush1.bf16.msra.mxu0 0
      %5971 = vmatprep.subr.bf16.mxu0 0
      %5972 = vmatpush1.bf16.msra.mxu0 0
      %5973 = vmatprep.subr.bf16.mxu0 0
      %5974 = vmatpush1.bf16.msra.mxu0 0
      %5975 = vmatprep.subr.bf16.mxu0 0
      %5976 = vmatpush1.bf16.msra.mxu0 0
      %5977 = vmatprep.subr.bf16.mxu0 0
      %5978 = vmatpush1.bf16.msra.mxu0 0
      %5979 = vmatprep.subr.bf16.mxu0 0
      %5980 = vmatpush1.bf16.msra.mxu0 %v5957
      %5981 = vmatprep.subr.bf16.mxu0 0
      %5982 = vmatpush2.bf16.msra.mxu0 0
      %5983 = vmatprep.subr.bf16.mxu0 0
      %5984 = vmatpush2.bf16.msra.mxu0 0
      %5985 = vmatprep.subr.bf16.mxu0 0
      %5986 = vmatpush2.bf16.msra.mxu0 0
      %5987 = vmatprep.subr.bf16.mxu0 0
      %5988 = vmatpush2.bf16.msra.mxu0 0
      %5989 = vmatprep.subr.bf16.mxu0 0
      %5990 = vmatpush2.bf16.msra.mxu0 0
      %5991 = vmatprep.subr.bf16.mxu0 0
      %5992 = vmatpush2.bf16.msra.mxu0 0
      %5993 = vmatprep.subr.bf16.mxu0 0
      %5994 = vmatpush2.bf16.msra.mxu0 0
      %5995 = vmatprep.subr.bf16.mxu0 0
      %5996 = vmatpush2.bf16.msra.mxu0 0
      %5997 = vmatprep.mubr.bf16.mxu0 0
      %5998 = vmatmul.mubr.bf16.gmra.mxu0 %v5960
      %v5999 = vpop.f32.mrf.mxu0
      %v6000 = vadd.f32 0.0, %v5999
      %v6001 = vpop.f32.mrf.mxu0
      %v6002 = vpop.f32.mrf.mxu0
      %v6003 = vadd.f32 0.0, %v6002
      %v6004 = vpop.f32.mrf.mxu0
      %6005 = vmatprep.mubr.bf16.mxu0 0
      %6006 = vmatmul.mubr.bf16.gmra.mxu0 %v5963
      %v6007 = vpop.f32.mrf.mxu0
      %v6008 = vadd.f32 0.0, %v6007
      %v6009 = vpop.f32.mrf.mxu0
      %v6010 = vpop.f32.mrf.mxu0
      %v6011 = vadd.f32 0.0, %v6010
      %v6012 = vpop.f32.mrf.mxu0
      %6013 = vdwg.mxu0
      %v6016 = vunpack.c.l.b16 %v2382
      %v6017 = vunpack.c.l.b16 %v2383
      %v6018 = vpack.c.b16 %v6017, %v6016
      %v6021 = vsel %vm3332, %v5215, 0
      %v6024 = vsel %vm3332, %v5216, 0
      %6026 = vmatprep.subr.bf16.mxu0 0
      %6027 = vmatpush1.bf16.msra.mxu0 0
      %6028 = vmatprep.subr.bf16.mxu0 0
      %6029 = vmatpush1.bf16.msra.mxu0 0
      %6030 = vmatprep.subr.bf16.mxu0 0
      %6031 = vmatpush1.bf16.msra.mxu0 0
      %6032 = vmatprep.subr.bf16.mxu0 0
      %6033 = vmatpush1.bf16.msra.mxu0 0
      %6034 = vmatprep.subr.bf16.mxu0 0
      %6035 = vmatpush1.bf16.msra.mxu0 0
      %6036 = vmatprep.subr.bf16.mxu0 0
      %6037 = vmatpush1.bf16.msra.mxu0 0
      %6038 = vmatprep.subr.bf16.mxu0 0
      %6039 = vmatpush1.bf16.msra.mxu0 0
      %6040 = vmatprep.subr.bf16.mxu0 0
      %6041 = vmatpush1.bf16.msra.mxu0 %v6018
      %6042 = vmatprep.subr.bf16.mxu0 0
      %6043 = vmatpush2.bf16.msra.mxu0 0
      %6044 = vmatprep.subr.bf16.mxu0 0
      %6045 = vmatpush2.bf16.msra.mxu0 0
      %6046 = vmatprep.subr.bf16.mxu0 0
      %6047 = vmatpush2.bf16.msra.mxu0 0
      %6048 = vmatprep.subr.bf16.mxu0 0
      %6049 = vmatpush2.bf16.msra.mxu0 0
      %6050 = vmatprep.subr.bf16.mxu0 0
      %6051 = vmatpush2.bf16.msra.mxu0 0
      %6052 = vmatprep.subr.bf16.mxu0 0
      %6053 = vmatpush2.bf16.msra.mxu0 0
      %6054 = vmatprep.subr.bf16.mxu0 0
      %6055 = vmatpush2.bf16.msra.mxu0 0
      %6056 = vmatprep.subr.bf16.mxu0 0
      %6057 = vmatpush2.bf16.msra.mxu0 0
      %6058 = vmatprep.mubr.bf16.mxu0 0
      %6059 = vmatmul.mubr.bf16.gmra.mxu0 %v6021
      %v6060 = vpop.f32.mrf.mxu0
      %v6061 = vadd.f32 0.0, %v6060
      %v6062 = vpop.f32.mrf.mxu0
      %v6063 = vpop.f32.mrf.mxu0
      %v6064 = vadd.f32 0.0, %v6063
      %v6065 = vpop.f32.mrf.mxu0
      %6066 = vmatprep.mubr.bf16.mxu0 0
      %6067 = vmatmul.mubr.bf16.gmra.mxu0 %v6024
      %v6068 = vpop.f32.mrf.mxu0
      %v6069 = vadd.f32 0.0, %v6068
      %v6070 = vpop.f32.mrf.mxu0
      %v6071 = vpop.f32.mrf.mxu0
      %v6072 = vadd.f32 0.0, %v6071
      %v6073 = vpop.f32.mrf.mxu0
      %6074 = vdwg.mxu0
      %v6077 = vunpack.c.l.b16 %v2384
      %v6078 = vunpack.c.l.b16 %v2385
      %v6079 = vpack.c.b16 %v6078, %v6077
      %v6082 = vsel %vm3332, %v5217, 0
      %v6085 = vsel %vm3332, %v5218, 0
      %6087 = vmatprep.subr.bf16.mxu0 0
      %6088 = vmatpush1.bf16.msra.mxu0 0
      %6089 = vmatprep.subr.bf16.mxu0 0
      %6090 = vmatpush1.bf16.msra.mxu0 0
      %6091 = vmatprep.subr.bf16.mxu0 0
      %6092 = vmatpush1.bf16.msra.mxu0 0
      %6093 = vmatprep.subr.bf16.mxu0 0
      %6094 = vmatpush1.bf16.msra.mxu0 0
      %6095 = vmatprep.subr.bf16.mxu0 0
      %6096 = vmatpush1.bf16.msra.mxu0 0
      %6097 = vmatprep.subr.bf16.mxu0 0
      %6098 = vmatpush1.bf16.msra.mxu0 0
      %6099 = vmatprep.subr.bf16.mxu0 0
      %6100 = vmatpush1.bf16.msra.mxu0 0
      %6101 = vmatprep.subr.bf16.mxu0 0
      %6102 = vmatpush1.bf16.msra.mxu0 %v6079
      %6103 = vmatprep.subr.bf16.mxu0 0
      %6104 = vmatpush2.bf16.msra.mxu0 0
      %6105 = vmatprep.subr.bf16.mxu0 0
      %6106 = vmatpush2.bf16.msra.mxu0 0
      %6107 = vmatprep.subr.bf16.mxu0 0
      %6108 = vmatpush2.bf16.msra.mxu0 0
      %6109 = vmatprep.subr.bf16.mxu0 0
      %6110 = vmatpush2.bf16.msra.mxu0 0
      %6111 = vmatprep.subr.bf16.mxu0 0
      %6112 = vmatpush2.bf16.msra.mxu0 0
      %6113 = vmatprep.subr.bf16.mxu0 0
      %6114 = vmatpush2.bf16.msra.mxu0 0
      %6115 = vmatprep.subr.bf16.mxu0 0
      %6116 = vmatpush2.bf16.msra.mxu0 0
      %6117 = vmatprep.subr.bf16.mxu0 0
      %6118 = vmatpush2.bf16.msra.mxu0 0
      %6119 = vmatprep.mubr.bf16.mxu0 0
      %6120 = vmatmul.mubr.bf16.gmra.mxu0 %v6082
      %v6121 = vpop.f32.mrf.mxu0
      %v6122 = vadd.f32 0.0, %v6121
      %v6123 = vpop.f32.mrf.mxu0
      %v6124 = vpop.f32.mrf.mxu0
      %v6125 = vadd.f32 0.0, %v6124
      %v6126 = vpop.f32.mrf.mxu0
      %6127 = vmatprep.mubr.bf16.mxu0 0
      %6128 = vmatmul.mubr.bf16.gmra.mxu0 %v6085
      %v6129 = vpop.f32.mrf.mxu0
      %v6130 = vadd.f32 0.0, %v6129
      %v6131 = vpop.f32.mrf.mxu0
      %v6132 = vpop.f32.mrf.mxu0
      %v6133 = vadd.f32 0.0, %v6132
      %v6134 = vpop.f32.mrf.mxu0
      %6135 = vdwg.mxu0
      %v6138 = vunpack.c.l.b16 %v2386
      %v6139 = vunpack.c.l.b16 %v2387
      %v6140 = vpack.c.b16 %v6139, %v6138
      %v6143 = vsel %vm3332, %v5219, 0
      %v6146 = vsel %vm3332, %v5220, 0
      %6148 = vmatprep.subr.bf16.mxu0 0
      %6149 = vmatpush1.bf16.msra.mxu0 0
      %6150 = vmatprep.subr.bf16.mxu0 0
      %6151 = vmatpush1.bf16.msra.mxu0 0
      %6152 = vmatprep.subr.bf16.mxu0 0
      %6153 = vmatpush1.bf16.msra.mxu0 0
      %6154 = vmatprep.subr.bf16.mxu0 0
      %6155 = vmatpush1.bf16.msra.mxu0 0
      %6156 = vmatprep.subr.bf16.mxu0 0
      %6157 = vmatpush1.bf16.msra.mxu0 0
      %6158 = vmatprep.subr.bf16.mxu0 0
      %6159 = vmatpush1.bf16.msra.mxu0 0
      %6160 = vmatprep.subr.bf16.mxu0 0
      %6161 = vmatpush1.bf16.msra.mxu0 0
      %6162 = vmatprep.subr.bf16.mxu0 0
      %6163 = vmatpush1.bf16.msra.mxu0 %v6140
      %6164 = vmatprep.subr.bf16.mxu0 0
      %6165 = vmatpush2.bf16.msra.mxu0 0
      %6166 = vmatprep.subr.bf16.mxu0 0
      %6167 = vmatpush2.bf16.msra.mxu0 0
      %6168 = vmatprep.subr.bf16.mxu0 0
      %6169 = vmatpush2.bf16.msra.mxu0 0
      %6170 = vmatprep.subr.bf16.mxu0 0
      %6171 = vmatpush2.bf16.msra.mxu0 0
      %6172 = vmatprep.subr.bf16.mxu0 0
      %6173 = vmatpush2.bf16.msra.mxu0 0
      %6174 = vmatprep.subr.bf16.mxu0 0
      %6175 = vmatpush2.bf16.msra.mxu0 0
      %6176 = vmatprep.subr.bf16.mxu0 0
      %6177 = vmatpush2.bf16.msra.mxu0 0
      %6178 = vmatprep.subr.bf16.mxu0 0
      %6179 = vmatpush2.bf16.msra.mxu0 0
      %6180 = vmatprep.mubr.bf16.mxu0 0
      %6181 = vmatmul.mubr.bf16.gmra.mxu0 %v6143
      %v6182 = vpop.f32.mrf.mxu0
      %v6183 = vadd.f32 0.0, %v6182
      %v6184 = vpop.f32.mrf.mxu0
      %v6185 = vpop.f32.mrf.mxu0
      %v6186 = vadd.f32 0.0, %v6185
      %v6187 = vpop.f32.mrf.mxu0
      %6188 = vmatprep.mubr.bf16.mxu0 0
      %6189 = vmatmul.mubr.bf16.gmra.mxu0 %v6146
      %v6190 = vpop.f32.mrf.mxu0
      %v6191 = vadd.f32 0.0, %v6190
      %v6192 = vpop.f32.mrf.mxu0
      %v6193 = vpop.f32.mrf.mxu0
      %v6194 = vadd.f32 0.0, %v6193
      %v6195 = vpop.f32.mrf.mxu0
      %6196 = vdwg.mxu0
      %v6197 = vadd.f32 %v5125, %v5268
      %v6198 = vadd.f32 %v5126, %v5271
      %v6199 = vadd.f32 %v5127, %v5276
      %v6200 = vadd.f32 %v5128, %v5279
      %v6201 = vadd.f32 %v5129, %v5329
      %v6202 = vadd.f32 %v5130, %v5332
      %v6203 = vadd.f32 %v5131, %v5337
      %v6204 = vadd.f32 %v5132, %v5340
      %v6205 = vadd.f32 %v5133, %v5390
      %v6206 = vadd.f32 %v5134, %v5393
      %v6207 = vadd.f32 %v5135, %v5398
      %v6208 = vadd.f32 %v5136, %v5401
      %v6209 = vadd.f32 %v5137, %v5451
      %v6210 = vadd.f32 %v5138, %v5454
      %v6211 = vadd.f32 %v5139, %v5459
      %v6212 = vadd.f32 %v5140, %v5462
      %v6213 = vadd.f32 %v5141, %v5512
      %v6214 = vadd.f32 %v5142, %v5515
      %v6215 = vadd.f32 %v5143, %v5520
      %v6216 = vadd.f32 %v5144, %v5523
      %v6217 = vadd.f32 %v5145, %v5573
      %v6218 = vadd.f32 %v5146, %v5576
      %v6219 = vadd.f32 %v5147, %v5581
      %v6220 = vadd.f32 %v5148, %v5584
      %v6221 = vadd.f32 %v5149, %v5634
      %v6222 = vadd.f32 %v5150, %v5637
      %v6223 = vadd.f32 %v5151, %v5642
      %v6224 = vadd.f32 %v5152, %v5645
      %v6225 = vadd.f32 %v5153, %v5695
      %v6226 = vadd.f32 %v5154, %v5698
      %v6227 = vadd.f32 %v5155, %v5703
      %v6228 = vadd.f32 %v5156, %v5706
      %v6229 = vadd.f32 %v5157, %v5756
      %v6230 = vadd.f32 %v5158, %v5759
      %v6231 = vadd.f32 %v5159, %v5764
      %v6232 = vadd.f32 %v5160, %v5767
      %v6233 = vadd.f32 %v5161, %v5817
      %v6234 = vadd.f32 %v5162, %v5820
      %v6235 = vadd.f32 %v5163, %v5825
      %v6236 = vadd.f32 %v5164, %v5828
      %v6237 = vadd.f32 %v5165, %v5878
      %v6238 = vadd.f32 %v5166, %v5881
      %v6239 = vadd.f32 %v5167, %v5886
      %v6240 = vadd.f32 %v5168, %v5889
      %v6241 = vadd.f32 %v5169, %v5939
      %v6242 = vadd.f32 %v5170, %v5942
      %v6243 = vadd.f32 %v5171, %v5947
      %v6244 = vadd.f32 %v5172, %v5950
      %v6245 = vadd.f32 %v5173, %v6000
      %v6246 = vadd.f32 %v5174, %v6003
      %v6247 = vadd.f32 %v5175, %v6008
      %v6248 = vadd.f32 %v5176, %v6011
      %v6249 = vadd.f32 %v5177, %v6061
      %v6250 = vadd.f32 %v5178, %v6064
      %v6251 = vadd.f32 %v5179, %v6069
      %v6252 = vadd.f32 %v5180, %v6072
      %v6253 = vadd.f32 %v5181, %v6122
      %v6254 = vadd.f32 %v5182, %v6125
      %v6255 = vadd.f32 %v5183, %v6130
      %v6256 = vadd.f32 %v5184, %v6133
      %v6257 = vadd.f32 %v5185, %v6183
      %v6258 = vadd.f32 %v5186, %v6186
      %v6259 = vadd.f32 %v5187, %v6191
      %v6260 = vadd.f32 %v5188, %v6194
      %6261 = vst [vmem:[#allocation6] sm:$0xff] %v6197
      %6262 = vst [vmem:[#allocation6 + $0x8] sm:$0xff] %v6198
      %6263 = vst [vmem:[#allocation6 + $0x10] sm:$0xff] %v6199
      %6264 = vst [vmem:[#allocation6 + $0x18] sm:$0xff] %v6200
      %6265 = vst [vmem:[#allocation6 + $0x20] sm:$0xff] %v6201
      %6266 = vst [vmem:[#allocation6 + $0x28] sm:$0xff] %v6202
      %6267 = vst [vmem:[#allocation6 + $0x30] sm:$0xff] %v6203
      %6268 = vst [vmem:[#allocation6 + $0x38] sm:$0xff] %v6204
      %6269 = vst [vmem:[#allocation6 + $0x40] sm:$0xff] %v6205
      %6270 = vst [vmem:[#allocation6 + $0x48] sm:$0xff] %v6206
      %6271 = vst [vmem:[#allocation6 + $0x50] sm:$0xff] %v6207
      %6272 = vst [vmem:[#allocation6 + $0x58] sm:$0xff] %v6208
      %6273 = vst [vmem:[#allocation6 + $0x60] sm:$0xff] %v6209
      %6274 = vst [vmem:[#allocation6 + $0x68] sm:$0xff] %v6210
      %6275 = vst [vmem:[#allocation6 + $0x70] sm:$0xff] %v6211
      %6276 = vst [vmem:[#allocation6 + $0x78] sm:$0xff] %v6212
      %6277 = vst [vmem:[#allocation6 + $0x80] sm:$0xff] %v6213
      %6278 = vst [vmem:[#allocation6 + $0x88] sm:$0xff] %v6214
      %6279 = vst [vmem:[#allocation6 + $0x90] sm:$0xff] %v6215
      %6280 = vst [vmem:[#allocation6 + $0x98] sm:$0xff] %v6216
      %6281 = vst [vmem:[#allocation6 + $0xa0] sm:$0xff] %v6217
      %6282 = vst [vmem:[#allocation6 + $0xa8] sm:$0xff] %v6218
      %6283 = vst [vmem:[#allocation6 + $0xb0] sm:$0xff] %v6219
      %6284 = vst [vmem:[#allocation6 + $0xb8] sm:$0xff] %v6220
      %6285 = vst [vmem:[#allocation6 + $0xc0] sm:$0xff] %v6221
      %6286 = vst [vmem:[#allocation6 + $0xc8] sm:$0xff] %v6222
      %6287 = vst [vmem:[#allocation6 + $0xd0] sm:$0xff] %v6223
      %6288 = vst [vmem:[#allocation6 + $0xd8] sm:$0xff] %v6224
      %6289 = vst [vmem:[#allocation6 + $0xe0] sm:$0xff] %v6225
      %6290 = vst [vmem:[#allocation6 + $0xe8] sm:$0xff] %v6226
      %6291 = vst [vmem:[#allocation6 + $0xf0] sm:$0xff] %v6227
      %6292 = vst [vmem:[#allocation6 + $0xf8] sm:$0xff] %v6228
      %6293 = vst [vmem:[#allocation6 + $0x100] sm:$0xff] %v6229
      %6294 = vst [vmem:[#allocation6 + $0x108] sm:$0xff] %v6230
      %6295 = vst [vmem:[#allocation6 + $0x110] sm:$0xff] %v6231
      %6296 = vst [vmem:[#allocation6 + $0x118] sm:$0xff] %v6232
      %6297 = vst [vmem:[#allocation6 + $0x120] sm:$0xff] %v6233
      %6298 = vst [vmem:[#allocation6 + $0x128] sm:$0xff] %v6234
      %6299 = vst [vmem:[#allocation6 + $0x130] sm:$0xff] %v6235
      %6300 = vst [vmem:[#allocation6 + $0x138] sm:$0xff] %v6236
      %6301 = vst [vmem:[#allocation6 + $0x140] sm:$0xff] %v6237
      %6302 = vst [vmem:[#allocation6 + $0x148] sm:$0xff] %v6238
      %6303 = vst [vmem:[#allocation6 + $0x150] sm:$0xff] %v6239
      %6304 = vst [vmem:[#allocation6 + $0x158] sm:$0xff] %v6240
      %6305 = vst [vmem:[#allocation6 + $0x160] sm:$0xff] %v6241
      %6306 = vst [vmem:[#allocation6 + $0x168] sm:$0xff] %v6242
      %6307 = vst [vmem:[#allocation6 + $0x170] sm:$0xff] %v6243
      %6308 = vst [vmem:[#allocation6 + $0x178] sm:$0xff] %v6244
      %6309 = vst [vmem:[#allocation6 + $0x180] sm:$0xff] %v6245
      %6310 = vst [vmem:[#allocation6 + $0x188] sm:$0xff] %v6246
      %6311 = vst [vmem:[#allocation6 + $0x190] sm:$0xff] %v6247
      %6312 = vst [vmem:[#allocation6 + $0x198] sm:$0xff] %v6248
      %6313 = vst [vmem:[#allocation6 + $0x1a0] sm:$0xff] %v6249
      %6314 = vst [vmem:[#allocation6 + $0x1a8] sm:$0xff] %v6250
      %6315 = vst [vmem:[#allocation6 + $0x1b0] sm:$0xff] %v6251
      %6316 = vst [vmem:[#allocation6 + $0x1b8] sm:$0xff] %v6252
      %6317 = vst [vmem:[#allocation6 + $0x1c0] sm:$0xff] %v6253
      %6318 = vst [vmem:[#allocation6 + $0x1c8] sm:$0xff] %v6254
      %6319 = vst [vmem:[#allocation6 + $0x1d0] sm:$0xff] %v6255
      %6320 = vst [vmem:[#allocation6 + $0x1d8] sm:$0xff] %v6256
      %6321 = vst [vmem:[#allocation6 + $0x1e0] sm:$0xff] %v6257
      %6322 = vst [vmem:[#allocation6 + $0x1e8] sm:$0xff] %v6258
      %6323 = vst [vmem:[#allocation6 + $0x1f0] sm:$0xff] %v6259
      %6324 = vst [vmem:[#allocation6 + $0x1f8] sm:$0xff] %v6260
      %6325 = vst.msk [vmem:[#allocation4] sm:$0xff] %vm2118, %v3525
      %6326 = vst.msk [vmem:[#allocation4 + $0x8] sm:$0xff] %vm2118, %v3526
      %6327 = vst.msk [vmem:[#allocation4 + $0x10] sm:$0xff] %vm2118, %v3527
      %6328 = vst.msk [vmem:[#allocation4 + $0x18] sm:$0xff] %vm2118, %v3528
      %6329 = vst.msk [vmem:[#allocation4 + $0x20] sm:$0xff] %vm2118, %v3529
      %6330 = vst.msk [vmem:[#allocation4 + $0x28] sm:$0xff] %vm2118, %v3530
      %6331 = vst.msk [vmem:[#allocation4 + $0x30] sm:$0xff] %vm2118, %v3531
      %6332 = vst.msk [vmem:[#allocation4 + $0x38] sm:$0xff] %vm2118, %v3532
      %6333 = vst.msk [vmem:[#allocation4 + $0x40] sm:$0xff] %vm2118, %v3533
      %6334 = vst.msk [vmem:[#allocation4 + $0x48] sm:$0xff] %vm2118, %v3534
      %6335 = vst.msk [vmem:[#allocation4 + $0x50] sm:$0xff] %vm2118, %v3535
      %6336 = vst.msk [vmem:[#allocation4 + $0x58] sm:$0xff] %vm2118, %v3536
      %6337 = vst.msk [vmem:[#allocation4 + $0x60] sm:$0xff] %vm2118, %v3537
      %6338 = vst.msk [vmem:[#allocation4 + $0x68] sm:$0xff] %vm2118, %v3538
      %6339 = vst.msk [vmem:[#allocation4 + $0x70] sm:$0xff] %vm2118, %v3539
      %6340 = vst.msk [vmem:[#allocation4 + $0x78] sm:$0xff] %vm2118, %v3540
      %6341 = vst.msk [vmem:[#allocation4 + $0x80] sm:$0xff] %vm2118, %v3541
      %6342 = vst.msk [vmem:[#allocation4 + $0x88] sm:$0xff] %vm2118, %v3542
      %6343 = vst.msk [vmem:[#allocation4 + $0x90] sm:$0xff] %vm2118, %v3543
      %6344 = vst.msk [vmem:[#allocation4 + $0x98] sm:$0xff] %vm2118, %v3544
      %6345 = vst.msk [vmem:[#allocation4 + $0xa0] sm:$0xff] %vm2118, %v3545
      %6346 = vst.msk [vmem:[#allocation4 + $0xa8] sm:$0xff] %vm2118, %v3546
      %6347 = vst.msk [vmem:[#allocation4 + $0xb0] sm:$0xff] %vm2118, %v3547
      %6348 = vst.msk [vmem:[#allocation4 + $0xb8] sm:$0xff] %vm2118, %v3548
      %6349 = vst.msk [vmem:[#allocation4 + $0xc0] sm:$0xff] %vm2118, %v3549
      %6350 = vst.msk [vmem:[#allocation4 + $0xc8] sm:$0xff] %vm2118, %v3550
      %6351 = vst.msk [vmem:[#allocation4 + $0xd0] sm:$0xff] %vm2118, %v3551
      %6352 = vst.msk [vmem:[#allocation4 + $0xd8] sm:$0xff] %vm2118, %v3552
      %6353 = vst.msk [vmem:[#allocation4 + $0xe0] sm:$0xff] %vm2118, %v3553
      %6354 = vst.msk [vmem:[#allocation4 + $0xe8] sm:$0xff] %vm2118, %v3554
      %6355 = vst.msk [vmem:[#allocation4 + $0xf0] sm:$0xff] %vm2118, %v3555
      %6356 = vst.msk [vmem:[#allocation4 + $0xf8] sm:$0xff] %vm2118, %v3556
      %6357 = vst.msk [vmem:[#allocation4 + $0x100] sm:$0xff] %vm2118, %v3557
      %6358 = vst.msk [vmem:[#allocation4 + $0x108] sm:$0xff] %vm2118, %v3558
      %6359 = vst.msk [vmem:[#allocation4 + $0x110] sm:$0xff] %vm2118, %v3559
      %6360 = vst.msk [vmem:[#allocation4 + $0x118] sm:$0xff] %vm2118, %v3560
      %6361 = vst.msk [vmem:[#allocation4 + $0x120] sm:$0xff] %vm2118, %v3561
      %6362 = vst.msk [vmem:[#allocation4 + $0x128] sm:$0xff] %vm2118, %v3562
      %6363 = vst.msk [vmem:[#allocation4 + $0x130] sm:$0xff] %vm2118, %v3563
      %6364 = vst.msk [vmem:[#allocation4 + $0x138] sm:$0xff] %vm2118, %v3564
      %6365 = vst.msk [vmem:[#allocation4 + $0x140] sm:$0xff] %vm2118, %v3565
      %6366 = vst.msk [vmem:[#allocation4 + $0x148] sm:$0xff] %vm2118, %v3566
      %6367 = vst.msk [vmem:[#allocation4 + $0x150] sm:$0xff] %vm2118, %v3567
      %6368 = vst.msk [vmem:[#allocation4 + $0x158] sm:$0xff] %vm2118, %v3568
      %6369 = vst.msk [vmem:[#allocation4 + $0x160] sm:$0xff] %vm2118, %v3569
      %6370 = vst.msk [vmem:[#allocation4 + $0x168] sm:$0xff] %vm2118, %v3570
      %6371 = vst.msk [vmem:[#allocation4 + $0x170] sm:$0xff] %vm2118, %v3571
      %6372 = vst.msk [vmem:[#allocation4 + $0x178] sm:$0xff] %vm2118, %v3572
      %6373 = vst.msk [vmem:[#allocation4 + $0x180] sm:$0xff] %vm2118, %v3573
      %6374 = vst.msk [vmem:[#allocation4 + $0x188] sm:$0xff] %vm2118, %v3574
      %6375 = vst.msk [vmem:[#allocation4 + $0x190] sm:$0xff] %vm2118, %v3575
      %6376 = vst.msk [vmem:[#allocation4 + $0x198] sm:$0xff] %vm2118, %v3576
      %6377 = vst.msk [vmem:[#allocation4 + $0x1a0] sm:$0xff] %vm2118, %v3577
      %6378 = vst.msk [vmem:[#allocation4 + $0x1a8] sm:$0xff] %vm2118, %v3578
      %6379 = vst.msk [vmem:[#allocation4 + $0x1b0] sm:$0xff] %vm2118, %v3579
      %6380 = vst.msk [vmem:[#allocation4 + $0x1b8] sm:$0xff] %vm2118, %v3580
      %6381 = vst.msk [vmem:[#allocation4 + $0x1c0] sm:$0xff] %vm2118, %v3581
      %6382 = vst.msk [vmem:[#allocation4 + $0x1c8] sm:$0xff] %vm2118, %v3582
      %6383 = vst.msk [vmem:[#allocation4 + $0x1d0] sm:$0xff] %vm2118, %v3583
      %6384 = vst.msk [vmem:[#allocation4 + $0x1d8] sm:$0xff] %vm2118, %v3584
      %6385 = vst.msk [vmem:[#allocation4 + $0x1e0] sm:$0xff] %vm2118, %v3585
      %6386 = vst.msk [vmem:[#allocation4 + $0x1e8] sm:$0xff] %vm2118, %v3586
      %6387 = vst.msk [vmem:[#allocation4 + $0x1f0] sm:$0xff] %vm2118, %v3587
      %6388 = vst.msk [vmem:[#allocation4 + $0x1f8] sm:$0xff] %vm2118, %v3588
    $region50: #{tpu_custom_call.1} parent=1 // loop_footer
      %s2316 = sadd.s32 1, %s2312
    $region51: #{tpu_custom_call.1} parent=1 // loop_footer_branch
      %2311 = sbr.rel target = $region47
    $region52: #{tpu_custom_call.1} parent=1 // loop_exit
      _
    %v6389 = vld [vmem:[#allocation6] sm:$0xff]
    %v6390 = vld [vmem:[#allocation6 + $0x8] sm:$0xff]
    %v6391 = vld [vmem:[#allocation6 + $0x10] sm:$0xff]
    %v6392 = vld [vmem:[#allocation6 + $0x18] sm:$0xff]
    %v6393 = vld [vmem:[#allocation6 + $0x20] sm:$0xff]
    %v6394 = vld [vmem:[#allocation6 + $0x28] sm:$0xff]
    %v6395 = vld [vmem:[#allocation6 + $0x30] sm:$0xff]
    %v6396 = vld [vmem:[#allocation6 + $0x38] sm:$0xff]
    %v6397 = vld [vmem:[#allocation6 + $0x40] sm:$0xff]
    %v6398 = vld [vmem:[#allocation6 + $0x48] sm:$0xff]
    %v6399 = vld [vmem:[#allocation6 + $0x50] sm:$0xff]
    %v6400 = vld [vmem:[#allocation6 + $0x58] sm:$0xff]
    %v6401 = vld [vmem:[#allocation6 + $0x60] sm:$0xff]
    %v6402 = vld [vmem:[#allocation6 + $0x68] sm:$0xff]
    %v6403 = vld [vmem:[#allocation6 + $0x70] sm:$0xff]
    %v6404 = vld [vmem:[#allocation6 + $0x78] sm:$0xff]
    %v6405 = vld [vmem:[#allocation6 + $0x80] sm:$0xff]
    %v6406 = vld [vmem:[#allocation6 + $0x88] sm:$0xff]
    %v6407 = vld [vmem:[#allocation6 + $0x90] sm:$0xff]
    %v6408 = vld [vmem:[#allocation6 + $0x98] sm:$0xff]
    %v6409 = vld [vmem:[#allocation6 + $0xa0] sm:$0xff]
    %v6410 = vld [vmem:[#allocation6 + $0xa8] sm:$0xff]
    %v6411 = vld [vmem:[#allocation6 + $0xb0] sm:$0xff]
    %v6412 = vld [vmem:[#allocation6 + $0xb8] sm:$0xff]
    %v6413 = vld [vmem:[#allocation6 + $0xc0] sm:$0xff]
    %v6414 = vld [vmem:[#allocation6 + $0xc8] sm:$0xff]
    %v6415 = vld [vmem:[#allocation6 + $0xd0] sm:$0xff]
    %v6416 = vld [vmem:[#allocation6 + $0xd8] sm:$0xff]
    %v6417 = vld [vmem:[#allocation6 + $0xe0] sm:$0xff]
    %v6418 = vld [vmem:[#allocation6 + $0xe8] sm:$0xff]
    %v6419 = vld [vmem:[#allocation6 + $0xf0] sm:$0xff]
    %v6420 = vld [vmem:[#allocation6 + $0xf8] sm:$0xff]
    %v6421 = vld [vmem:[#allocation6 + $0x100] sm:$0xff]
    %v6422 = vld [vmem:[#allocation6 + $0x108] sm:$0xff]
    %v6423 = vld [vmem:[#allocation6 + $0x110] sm:$0xff]
    %v6424 = vld [vmem:[#allocation6 + $0x118] sm:$0xff]
    %v6425 = vld [vmem:[#allocation6 + $0x120] sm:$0xff]
    %v6426 = vld [vmem:[#allocation6 + $0x128] sm:$0xff]
    %v6427 = vld [vmem:[#allocation6 + $0x130] sm:$0xff]
    %v6428 = vld [vmem:[#allocation6 + $0x138] sm:$0xff]
    %v6429 = vld [vmem:[#allocation6 + $0x140] sm:$0xff]
    %v6430 = vld [vmem:[#allocation6 + $0x148] sm:$0xff]
    %v6431 = vld [vmem:[#allocation6 + $0x150] sm:$0xff]
    %v6432 = vld [vmem:[#allocation6 + $0x158] sm:$0xff]
    %v6433 = vld [vmem:[#allocation6 + $0x160] sm:$0xff]
    %v6434 = vld [vmem:[#allocation6 + $0x168] sm:$0xff]
    %v6435 = vld [vmem:[#allocation6 + $0x170] sm:$0xff]
    %v6436 = vld [vmem:[#allocation6 + $0x178] sm:$0xff]
    %v6437 = vld [vmem:[#allocation6 + $0x180] sm:$0xff]
    %v6438 = vld [vmem:[#allocation6 + $0x188] sm:$0xff]
    %v6439 = vld [vmem:[#allocation6 + $0x190] sm:$0xff]
    %v6440 = vld [vmem:[#allocation6 + $0x198] sm:$0xff]
    %v6441 = vld [vmem:[#allocation6 + $0x1a0] sm:$0xff]
    %v6442 = vld [vmem:[#allocation6 + $0x1a8] sm:$0xff]
    %v6443 = vld [vmem:[#allocation6 + $0x1b0] sm:$0xff]
    %v6444 = vld [vmem:[#allocation6 + $0x1b8] sm:$0xff]
    %v6445 = vld [vmem:[#allocation6 + $0x1c0] sm:$0xff]
    %v6446 = vld [vmem:[#allocation6 + $0x1c8] sm:$0xff]
    %v6447 = vld [vmem:[#allocation6 + $0x1d0] sm:$0xff]
    %v6448 = vld [vmem:[#allocation6 + $0x1d8] sm:$0xff]
    %v6449 = vld [vmem:[#allocation6 + $0x1e0] sm:$0xff]
    %v6450 = vld [vmem:[#allocation6 + $0x1e8] sm:$0xff]
    %v6451 = vld [vmem:[#allocation6 + $0x1f0] sm:$0xff]
    %v6452 = vld [vmem:[#allocation6 + $0x1f8] sm:$0xff]
    %v6453 = vld [vmem:[#allocation5] sm:$0xff]
    %v6454 = vld [vmem:[#allocation5 + $0x8] sm:$0xff]
    %v6455 = vld [vmem:[#allocation5 + $0x10] sm:$0xff]
    %v6456 = vld [vmem:[#allocation5 + $0x18] sm:$0xff]
    %v6457 = vld [vmem:[#allocation5 + $0x20] sm:$0xff]
    %v6458 = vld [vmem:[#allocation5 + $0x28] sm:$0xff]
    %v6459 = vld [vmem:[#allocation5 + $0x30] sm:$0xff]
    %v6460 = vld [vmem:[#allocation5 + $0x38] sm:$0xff]
    %v6461 = vld [vmem:[#allocation5 + $0x40] sm:$0xff]
    %v6462 = vld [vmem:[#allocation5 + $0x48] sm:$0xff]
    %v6463 = vld [vmem:[#allocation5 + $0x50] sm:$0xff]
    %v6464 = vld [vmem:[#allocation5 + $0x58] sm:$0xff]
    %v6465 = vld [vmem:[#allocation5 + $0x60] sm:$0xff]
    %v6466 = vld [vmem:[#allocation5 + $0x68] sm:$0xff]
    %v6467 = vld [vmem:[#allocation5 + $0x70] sm:$0xff]
    %v6468 = vld [vmem:[#allocation5 + $0x78] sm:$0xff]
    %v6469 = vld [vmem:[#allocation5 + $0x80] sm:$0xff]
    %v6470 = vld [vmem:[#allocation5 + $0x88] sm:$0xff]
    %v6471 = vld [vmem:[#allocation5 + $0x90] sm:$0xff]
    %v6472 = vld [vmem:[#allocation5 + $0x98] sm:$0xff]
    %v6473 = vld [vmem:[#allocation5 + $0xa0] sm:$0xff]
    %v6474 = vld [vmem:[#allocation5 + $0xa8] sm:$0xff]
    %v6475 = vld [vmem:[#allocation5 + $0xb0] sm:$0xff]
    %v6476 = vld [vmem:[#allocation5 + $0xb8] sm:$0xff]
    %v6477 = vld [vmem:[#allocation5 + $0xc0] sm:$0xff]
    %v6478 = vld [vmem:[#allocation5 + $0xc8] sm:$0xff]
    %v6479 = vld [vmem:[#allocation5 + $0xd0] sm:$0xff]
    %v6480 = vld [vmem:[#allocation5 + $0xd8] sm:$0xff]
    %v6481 = vld [vmem:[#allocation5 + $0xe0] sm:$0xff]
    %v6482 = vld [vmem:[#allocation5 + $0xe8] sm:$0xff]
    %v6483 = vld [vmem:[#allocation5 + $0xf0] sm:$0xff]
    %v6484 = vld [vmem:[#allocation5 + $0xf8] sm:$0xff]
    %v6485 = vld [vmem:[#allocation5 + $0x100] sm:$0xff]
    %v6486 = vld [vmem:[#allocation5 + $0x108] sm:$0xff]
    %v6487 = vld [vmem:[#allocation5 + $0x110] sm:$0xff]
    %v6488 = vld [vmem:[#allocation5 + $0x118] sm:$0xff]
    %v6489 = vld [vmem:[#allocation5 + $0x120] sm:$0xff]
    %v6490 = vld [vmem:[#allocation5 + $0x128] sm:$0xff]
    %v6491 = vld [vmem:[#allocation5 + $0x130] sm:$0xff]
    %v6492 = vld [vmem:[#allocation5 + $0x138] sm:$0xff]
    %v6493 = vld [vmem:[#allocation5 + $0x140] sm:$0xff]
    %v6494 = vld [vmem:[#allocation5 + $0x148] sm:$0xff]
    %v6495 = vld [vmem:[#allocation5 + $0x150] sm:$0xff]
    %v6496 = vld [vmem:[#allocation5 + $0x158] sm:$0xff]
    %v6497 = vld [vmem:[#allocation5 + $0x160] sm:$0xff]
    %v6498 = vld [vmem:[#allocation5 + $0x168] sm:$0xff]
    %v6499 = vld [vmem:[#allocation5 + $0x170] sm:$0xff]
    %v6500 = vld [vmem:[#allocation5 + $0x178] sm:$0xff]
    %v6501 = vld [vmem:[#allocation5 + $0x180] sm:$0xff]
    %v6502 = vld [vmem:[#allocation5 + $0x188] sm:$0xff]
    %v6503 = vld [vmem:[#allocation5 + $0x190] sm:$0xff]
    %v6504 = vld [vmem:[#allocation5 + $0x198] sm:$0xff]
    %v6505 = vld [vmem:[#allocation5 + $0x1a0] sm:$0xff]
    %v6506 = vld [vmem:[#allocation5 + $0x1a8] sm:$0xff]
    %v6507 = vld [vmem:[#allocation5 + $0x1b0] sm:$0xff]
    %v6508 = vld [vmem:[#allocation5 + $0x1b8] sm:$0xff]
    %v6509 = vld [vmem:[#allocation5 + $0x1c0] sm:$0xff]
    %v6510 = vld [vmem:[#allocation5 + $0x1c8] sm:$0xff]
    %v6511 = vld [vmem:[#allocation5 + $0x1d0] sm:$0xff]
    %v6512 = vld [vmem:[#allocation5 + $0x1d8] sm:$0xff]
    %v6513 = vld [vmem:[#allocation5 + $0x1e0] sm:$0xff]
    %v6514 = vld [vmem:[#allocation5 + $0x1e8] sm:$0xff]
    %v6515 = vld [vmem:[#allocation5 + $0x1f0] sm:$0xff]
    %v6516 = vld [vmem:[#allocation5 + $0x1f8] sm:$0xff]
    %v6517 = vrcp.pop %v6453
    %v6518 = vrcp.pop %v6454
    %v6519 = vrcp.pop %v6455
    %v6520 = vrcp.pop %v6456
    %v6521 = vrcp.pop %v6457
    %v6522 = vrcp.pop %v6458
    %v6523 = vrcp.pop %v6459
    %v6524 = vrcp.pop %v6460
    %v6525 = vrcp.pop %v6461
    %v6526 = vrcp.pop %v6462
    %v6527 = vrcp.pop %v6463
    %v6528 = vrcp.pop %v6464
    %v6529 = vrcp.pop %v6465
    %v6530 = vrcp.pop %v6466
    %v6531 = vrcp.pop %v6467
    %v6532 = vrcp.pop %v6468
    %v6533 = vrcp.pop %v6469
    %v6534 = vrcp.pop %v6470
    %v6535 = vrcp.pop %v6471
    %v6536 = vrcp.pop %v6472
    %v6537 = vrcp.pop %v6473
    %v6538 = vrcp.pop %v6474
    %v6539 = vrcp.pop %v6475
    %v6540 = vrcp.pop %v6476
    %v6541 = vrcp.pop %v6477
    %v6542 = vrcp.pop %v6478
    %v6543 = vrcp.pop %v6479
    %v6544 = vrcp.pop %v6480
    %v6545 = vrcp.pop %v6481
    %v6546 = vrcp.pop %v6482
    %v6547 = vrcp.pop %v6483
    %v6548 = vrcp.pop %v6484
    %v6549 = vrcp.pop %v6485
    %v6550 = vrcp.pop %v6486
    %v6551 = vrcp.pop %v6487
    %v6552 = vrcp.pop %v6488
    %v6553 = vrcp.pop %v6489
    %v6554 = vrcp.pop %v6490
    %v6555 = vrcp.pop %v6491
    %v6556 = vrcp.pop %v6492
    %v6557 = vrcp.pop %v6493
    %v6558 = vrcp.pop %v6494
    %v6559 = vrcp.pop %v6495
    %v6560 = vrcp.pop %v6496
    %v6561 = vrcp.pop %v6497
    %v6562 = vrcp.pop %v6498
    %v6563 = vrcp.pop %v6499
    %v6564 = vrcp.pop %v6500
    %v6565 = vrcp.pop %v6501
    %v6566 = vrcp.pop %v6502
    %v6567 = vrcp.pop %v6503
    %v6568 = vrcp.pop %v6504
    %v6569 = vrcp.pop %v6505
    %v6570 = vrcp.pop %v6506
    %v6571 = vrcp.pop %v6507
    %v6572 = vrcp.pop %v6508
    %v6573 = vrcp.pop %v6509
    %v6574 = vrcp.pop %v6510
    %v6575 = vrcp.pop %v6511
    %v6576 = vrcp.pop %v6512
    %v6577 = vrcp.pop %v6513
    %v6578 = vrcp.pop %v6514
    %v6579 = vrcp.pop %v6515
    %v6580 = vrcp.pop %v6516
    %6582 = vset.pattern.permute.xlu0 0
    %6583 = vperm.xlu0 %6582, %v6517
    %v6584 = vpop.permute.xlu0 %6583
    %6587 = vset.pattern.permute.xlu0 0
    %6588 = vperm.xlu0 %6587, %v6518
    %v6589 = vpop.permute.xlu0 %6588
    %6592 = vset.pattern.permute.xlu0 0
    %6593 = vperm.xlu0 %6592, %v6519
    %v6594 = vpop.permute.xlu0 %6593
    %6597 = vset.pattern.permute.xlu0 0
    %6598 = vperm.xlu0 %6597, %v6520
    %v6599 = vpop.permute.xlu0 %6598
    %6602 = vset.pattern.permute.xlu0 0
    %6603 = vperm.xlu0 %6602, %v6521
    %v6604 = vpop.permute.xlu0 %6603
    %6607 = vset.pattern.permute.xlu0 0
    %6608 = vperm.xlu0 %6607, %v6522
    %v6609 = vpop.permute.xlu0 %6608
    %6612 = vset.pattern.permute.xlu0 0
    %6613 = vperm.xlu0 %6612, %v6523
    %v6614 = vpop.permute.xlu0 %6613
    %6617 = vset.pattern.permute.xlu0 0
    %6618 = vperm.xlu0 %6617, %v6524
    %v6619 = vpop.permute.xlu0 %6618
    %6622 = vset.pattern.permute.xlu0 0
    %6623 = vperm.xlu0 %6622, %v6525
    %v6624 = vpop.permute.xlu0 %6623
    %6627 = vset.pattern.permute.xlu0 0
    %6628 = vperm.xlu0 %6627, %v6526
    %v6629 = vpop.permute.xlu0 %6628
    %6632 = vset.pattern.permute.xlu0 0
    %6633 = vperm.xlu0 %6632, %v6527
    %v6634 = vpop.permute.xlu0 %6633
    %6637 = vset.pattern.permute.xlu0 0
    %6638 = vperm.xlu0 %6637, %v6528
    %v6639 = vpop.permute.xlu0 %6638
    %6642 = vset.pattern.permute.xlu0 0
    %6643 = vperm.xlu0 %6642, %v6529
    %v6644 = vpop.permute.xlu0 %6643
    %6647 = vset.pattern.permute.xlu0 0
    %6648 = vperm.xlu0 %6647, %v6530
    %v6649 = vpop.permute.xlu0 %6648
    %6652 = vset.pattern.permute.xlu0 0
    %6653 = vperm.xlu0 %6652, %v6531
    %v6654 = vpop.permute.xlu0 %6653
    %6657 = vset.pattern.permute.xlu0 0
    %6658 = vperm.xlu0 %6657, %v6532
    %v6659 = vpop.permute.xlu0 %6658
    %6662 = vset.pattern.permute.xlu0 0
    %6663 = vperm.xlu0 %6662, %v6533
    %v6664 = vpop.permute.xlu0 %6663
    %6667 = vset.pattern.permute.xlu0 0
    %6668 = vperm.xlu0 %6667, %v6534
    %v6669 = vpop.permute.xlu0 %6668
    %6672 = vset.pattern.permute.xlu0 0
    %6673 = vperm.xlu0 %6672, %v6535
    %v6674 = vpop.permute.xlu0 %6673
    %6677 = vset.pattern.permute.xlu0 0
    %6678 = vperm.xlu0 %6677, %v6536
    %v6679 = vpop.permute.xlu0 %6678
    %6682 = vset.pattern.permute.xlu0 0
    %6683 = vperm.xlu0 %6682, %v6537
    %v6684 = vpop.permute.xlu0 %6683
    %6687 = vset.pattern.permute.xlu0 0
    %6688 = vperm.xlu0 %6687, %v6538
    %v6689 = vpop.permute.xlu0 %6688
    %6692 = vset.pattern.permute.xlu0 0
    %6693 = vperm.xlu0 %6692, %v6539
    %v6694 = vpop.permute.xlu0 %6693
    %6697 = vset.pattern.permute.xlu0 0
    %6698 = vperm.xlu0 %6697, %v6540
    %v6699 = vpop.permute.xlu0 %6698
    %6702 = vset.pattern.permute.xlu0 0
    %6703 = vperm.xlu0 %6702, %v6541
    %v6704 = vpop.permute.xlu0 %6703
    %6707 = vset.pattern.permute.xlu0 0
    %6708 = vperm.xlu0 %6707, %v6542
    %v6709 = vpop.permute.xlu0 %6708
    %6712 = vset.pattern.permute.xlu0 0
    %6713 = vperm.xlu0 %6712, %v6543
    %v6714 = vpop.permute.xlu0 %6713
    %6717 = vset.pattern.permute.xlu0 0
    %6718 = vperm.xlu0 %6717, %v6544
    %v6719 = vpop.permute.xlu0 %6718
    %6722 = vset.pattern.permute.xlu0 0
    %6723 = vperm.xlu0 %6722, %v6545
    %v6724 = vpop.permute.xlu0 %6723
    %6727 = vset.pattern.permute.xlu0 0
    %6728 = vperm.xlu0 %6727, %v6546
    %v6729 = vpop.permute.xlu0 %6728
    %6732 = vset.pattern.permute.xlu0 0
    %6733 = vperm.xlu0 %6732, %v6547
    %v6734 = vpop.permute.xlu0 %6733
    %6737 = vset.pattern.permute.xlu0 0
    %6738 = vperm.xlu0 %6737, %v6548
    %v6739 = vpop.permute.xlu0 %6738
    %6742 = vset.pattern.permute.xlu0 0
    %6743 = vperm.xlu0 %6742, %v6549
    %v6744 = vpop.permute.xlu0 %6743
    %6747 = vset.pattern.permute.xlu0 0
    %6748 = vperm.xlu0 %6747, %v6550
    %v6749 = vpop.permute.xlu0 %6748
    %6752 = vset.pattern.permute.xlu0 0
    %6753 = vperm.xlu0 %6752, %v6551
    %v6754 = vpop.permute.xlu0 %6753
    %6757 = vset.pattern.permute.xlu0 0
    %6758 = vperm.xlu0 %6757, %v6552
    %v6759 = vpop.permute.xlu0 %6758
    %6762 = vset.pattern.permute.xlu0 0
    %6763 = vperm.xlu0 %6762, %v6553
    %v6764 = vpop.permute.xlu0 %6763
    %6767 = vset.pattern.permute.xlu0 0
    %6768 = vperm.xlu0 %6767, %v6554
    %v6769 = vpop.permute.xlu0 %6768
    %6772 = vset.pattern.permute.xlu0 0
    %6773 = vperm.xlu0 %6772, %v6555
    %v6774 = vpop.permute.xlu0 %6773
    %6777 = vset.pattern.permute.xlu0 0
    %6778 = vperm.xlu0 %6777, %v6556
    %v6779 = vpop.permute.xlu0 %6778
    %6782 = vset.pattern.permute.xlu0 0
    %6783 = vperm.xlu0 %6782, %v6557
    %v6784 = vpop.permute.xlu0 %6783
    %6787 = vset.pattern.permute.xlu0 0
    %6788 = vperm.xlu0 %6787, %v6558
    %v6789 = vpop.permute.xlu0 %6788
    %6792 = vset.pattern.permute.xlu0 0
    %6793 = vperm.xlu0 %6792, %v6559
    %v6794 = vpop.permute.xlu0 %6793
    %6797 = vset.pattern.permute.xlu0 0
    %6798 = vperm.xlu0 %6797, %v6560
    %v6799 = vpop.permute.xlu0 %6798
    %6802 = vset.pattern.permute.xlu0 0
    %6803 = vperm.xlu0 %6802, %v6561
    %v6804 = vpop.permute.xlu0 %6803
    %6807 = vset.pattern.permute.xlu0 0
    %6808 = vperm.xlu0 %6807, %v6562
    %v6809 = vpop.permute.xlu0 %6808
    %6812 = vset.pattern.permute.xlu0 0
    %6813 = vperm.xlu0 %6812, %v6563
    %v6814 = vpop.permute.xlu0 %6813
    %6817 = vset.pattern.permute.xlu0 0
    %6818 = vperm.xlu0 %6817, %v6564
    %v6819 = vpop.permute.xlu0 %6818
    %6822 = vset.pattern.permute.xlu0 0
    %6823 = vperm.xlu0 %6822, %v6565
    %v6824 = vpop.permute.xlu0 %6823
    %6827 = vset.pattern.permute.xlu0 0
    %6828 = vperm.xlu0 %6827, %v6566
    %v6829 = vpop.permute.xlu0 %6828
    %6832 = vset.pattern.permute.xlu0 0
    %6833 = vperm.xlu0 %6832, %v6567
    %v6834 = vpop.permute.xlu0 %6833
    %6837 = vset.pattern.permute.xlu0 0
    %6838 = vperm.xlu0 %6837, %v6568
    %v6839 = vpop.permute.xlu0 %6838
    %6842 = vset.pattern.permute.xlu0 0
    %6843 = vperm.xlu0 %6842, %v6569
    %v6844 = vpop.permute.xlu0 %6843
    %6847 = vset.pattern.permute.xlu0 0
    %6848 = vperm.xlu0 %6847, %v6570
    %v6849 = vpop.permute.xlu0 %6848
    %6852 = vset.pattern.permute.xlu0 0
    %6853 = vperm.xlu0 %6852, %v6571
    %v6854 = vpop.permute.xlu0 %6853
    %6857 = vset.pattern.permute.xlu0 0
    %6858 = vperm.xlu0 %6857, %v6572
    %v6859 = vpop.permute.xlu0 %6858
    %6862 = vset.pattern.permute.xlu0 0
    %6863 = vperm.xlu0 %6862, %v6573
    %v6864 = vpop.permute.xlu0 %6863
    %6867 = vset.pattern.permute.xlu0 0
    %6868 = vperm.xlu0 %6867, %v6574
    %v6869 = vpop.permute.xlu0 %6868
    %6872 = vset.pattern.permute.xlu0 0
    %6873 = vperm.xlu0 %6872, %v6575
    %v6874 = vpop.permute.xlu0 %6873
    %6877 = vset.pattern.permute.xlu0 0
    %6878 = vperm.xlu0 %6877, %v6576
    %v6879 = vpop.permute.xlu0 %6878
    %6882 = vset.pattern.permute.xlu0 0
    %6883 = vperm.xlu0 %6882, %v6577
    %v6884 = vpop.permute.xlu0 %6883
    %6887 = vset.pattern.permute.xlu0 0
    %6888 = vperm.xlu0 %6887, %v6578
    %v6889 = vpop.permute.xlu0 %6888
    %6892 = vset.pattern.permute.xlu0 0
    %6893 = vperm.xlu0 %6892, %v6579
    %v6894 = vpop.permute.xlu0 %6893
    %6897 = vset.pattern.permute.xlu0 0
    %6898 = vperm.xlu0 %6897, %v6580
    %v6899 = vpop.permute.xlu0 %6898
    %v6901 = vmul.f32 %v6389, %v6584
    %v6902 = vmul.f32 %v6390, %v6589
    %v6903 = vmul.f32 %v6391, %v6594
    %v6904 = vmul.f32 %v6392, %v6599
    %v6905 = vmul.f32 %v6393, %v6604
    %v6906 = vmul.f32 %v6394, %v6609
    %v6907 = vmul.f32 %v6395, %v6614
    %v6908 = vmul.f32 %v6396, %v6619
    %v6909 = vmul.f32 %v6397, %v6624
    %v6910 = vmul.f32 %v6398, %v6629
    %v6911 = vmul.f32 %v6399, %v6634
    %v6912 = vmul.f32 %v6400, %v6639
    %v6913 = vmul.f32 %v6401, %v6644
    %v6914 = vmul.f32 %v6402, %v6649
    %v6915 = vmul.f32 %v6403, %v6654
    %v6916 = vmul.f32 %v6404, %v6659
    %v6917 = vmul.f32 %v6405, %v6664
    %v6918 = vmul.f32 %v6406, %v6669
    %v6919 = vmul.f32 %v6407, %v6674
    %v6920 = vmul.f32 %v6408, %v6679
    %v6921 = vmul.f32 %v6409, %v6684
    %v6922 = vmul.f32 %v6410, %v6689
    %v6923 = vmul.f32 %v6411, %v6694
    %v6924 = vmul.f32 %v6412, %v6699
    %v6925 = vmul.f32 %v6413, %v6704
    %v6926 = vmul.f32 %v6414, %v6709
    %v6927 = vmul.f32 %v6415, %v6714
    %v6928 = vmul.f32 %v6416, %v6719
    %v6929 = vmul.f32 %v6417, %v6724
    %v6930 = vmul.f32 %v6418, %v6729
    %v6931 = vmul.f32 %v6419, %v6734
    %v6932 = vmul.f32 %v6420, %v6739
    %v6933 = vmul.f32 %v6421, %v6744
    %v6934 = vmul.f32 %v6422, %v6749
    %v6935 = vmul.f32 %v6423, %v6754
    %v6936 = vmul.f32 %v6424, %v6759
    %v6937 = vmul.f32 %v6425, %v6764
    %v6938 = vmul.f32 %v6426, %v6769
    %v6939 = vmul.f32 %v6427, %v6774
    %v6940 = vmul.f32 %v6428, %v6779
    %v6941 = vmul.f32 %v6429, %v6784
    %v6942 = vmul.f32 %v6430, %v6789
    %v6943 = vmul.f32 %v6431, %v6794
    %v6944 = vmul.f32 %v6432, %v6799
    %v6945 = vmul.f32 %v6433, %v6804
    %v6946 = vmul.f32 %v6434, %v6809
    %v6947 = vmul.f32 %v6435, %v6814
    %v6948 = vmul.f32 %v6436, %v6819
    %v6949 = vmul.f32 %v6437, %v6824
    %v6950 = vmul.f32 %v6438, %v6829
    %v6951 = vmul.f32 %v6439, %v6834
    %v6952 = vmul.f32 %v6440, %v6839
    %v6953 = vmul.f32 %v6441, %v6844
    %v6954 = vmul.f32 %v6442, %v6849
    %v6955 = vmul.f32 %v6443, %v6854
    %v6956 = vmul.f32 %v6444, %v6859
    %v6957 = vmul.f32 %v6445, %v6864
    %v6958 = vmul.f32 %v6446, %v6869
    %v6959 = vmul.f32 %v6447, %v6874
    %v6960 = vmul.f32 %v6448, %v6879
    %v6961 = vmul.f32 %v6449, %v6884
    %v6962 = vmul.f32 %v6450, %v6889
    %v6963 = vmul.f32 %v6451, %v6894
    %v6964 = vmul.f32 %v6452, %v6899
    %v6965 = vpack.c.bf16 %v6902, %v6901
    %v6966 = vpack.c.bf16 %v6934, %v6933
    %v6967 = vpack.c.bf16 %v6904, %v6903
    %v6968 = vpack.c.bf16 %v6936, %v6935
    %v6969 = vpack.c.bf16 %v6906, %v6905
    %v6970 = vpack.c.bf16 %v6938, %v6937
    %v6971 = vpack.c.bf16 %v6908, %v6907
    %v6972 = vpack.c.bf16 %v6940, %v6939
    %v6973 = vpack.c.bf16 %v6910, %v6909
    %v6974 = vpack.c.bf16 %v6942, %v6941
    %v6975 = vpack.c.bf16 %v6912, %v6911
    %v6976 = vpack.c.bf16 %v6944, %v6943
    %v6977 = vpack.c.bf16 %v6914, %v6913
    %v6978 = vpack.c.bf16 %v6946, %v6945
    %v6979 = vpack.c.bf16 %v6916, %v6915
    %v6980 = vpack.c.bf16 %v6948, %v6947
    %v6981 = vpack.c.bf16 %v6918, %v6917
    %v6982 = vpack.c.bf16 %v6950, %v6949
    %v6983 = vpack.c.bf16 %v6920, %v6919
    %v6984 = vpack.c.bf16 %v6952, %v6951
    %v6985 = vpack.c.bf16 %v6922, %v6921
    %v6986 = vpack.c.bf16 %v6954, %v6953
    %v6987 = vpack.c.bf16 %v6924, %v6923
    %v6988 = vpack.c.bf16 %v6956, %v6955
    %v6989 = vpack.c.bf16 %v6926, %v6925
    %v6990 = vpack.c.bf16 %v6958, %v6957
    %v6991 = vpack.c.bf16 %v6928, %v6927
    %v6992 = vpack.c.bf16 %v6960, %v6959
    %v6993 = vpack.c.bf16 %v6930, %v6929
    %v6994 = vpack.c.bf16 %v6962, %v6961
    %v6995 = vpack.c.bf16 %v6932, %v6931
    %v6996 = vpack.c.bf16 %v6964, %v6963
    %v6997 = vld [vmem:[#allocation15] sm:$0xff]
    %v6998 = vld [vmem:[#allocation15 + $0x8] sm:$0xff]
    %v6999 = vld [vmem:[#allocation15 + $0x10] sm:$0xff]
    %v7000 = vld [vmem:[#allocation15 + $0x18] sm:$0xff]
    %v7001 = vld [vmem:[#allocation15 + $0x20] sm:$0xff]
    %v7002 = vld [vmem:[#allocation15 + $0x28] sm:$0xff]
    %v7003 = vld [vmem:[#allocation15 + $0x30] sm:$0xff]
    %v7004 = vld [vmem:[#allocation15 + $0x38] sm:$0xff]
    %v7005 = vld [vmem:[#allocation15 + $0x40] sm:$0xff]
    %v7006 = vld [vmem:[#allocation15 + $0x48] sm:$0xff]
    %v7007 = vld [vmem:[#allocation15 + $0x50] sm:$0xff]
    %v7008 = vld [vmem:[#allocation15 + $0x58] sm:$0xff]
    %v7009 = vld [vmem:[#allocation15 + $0x60] sm:$0xff]
    %v7010 = vld [vmem:[#allocation15 + $0x68] sm:$0xff]
    %v7011 = vld [vmem:[#allocation15 + $0x70] sm:$0xff]
    %v7012 = vld [vmem:[#allocation15 + $0x78] sm:$0xff]
    %v7013 = vld [vmem:[#allocation15 + $0x80] sm:$0xff]
    %v7014 = vld [vmem:[#allocation15 + $0x88] sm:$0xff]
    %v7015 = vld [vmem:[#allocation15 + $0x90] sm:$0xff]
    %v7016 = vld [vmem:[#allocation15 + $0x98] sm:$0xff]
    %v7017 = vld [vmem:[#allocation15 + $0xa0] sm:$0xff]
    %v7018 = vld [vmem:[#allocation15 + $0xa8] sm:$0xff]
    %v7019 = vld [vmem:[#allocation15 + $0xb0] sm:$0xff]
    %v7020 = vld [vmem:[#allocation15 + $0xb8] sm:$0xff]
    %v7021 = vld [vmem:[#allocation15 + $0xc0] sm:$0xff]
    %v7022 = vld [vmem:[#allocation15 + $0xc8] sm:$0xff]
    %v7023 = vld [vmem:[#allocation15 + $0xd0] sm:$0xff]
    %v7024 = vld [vmem:[#allocation15 + $0xd8] sm:$0xff]
    %v7025 = vld [vmem:[#allocation15 + $0xe0] sm:$0xff]
    %v7026 = vld [vmem:[#allocation15 + $0xe8] sm:$0xff]
    %v7027 = vld [vmem:[#allocation15 + $0xf0] sm:$0xff]
    %v7028 = vld [vmem:[#allocation15 + $0xf8] sm:$0xff]
    %v7029 = vld [vmem:[%s5] sm:$0x3]
    %v7031 = vlaneseq
    %v7032 = vshrl.u32 %v7031, 7
    %v7033 = vsub.s32 0, %v7032
    %v7034 = vrot.slane %v7029, %v7033
    %v7035 = vlaneseq
    %v7036 = vshrl.u32 %v7035, 7
    %v7037 = vsub.s32 1, %v7036
    %v7038 = vrot.slane %v7029, %v7037
    %v7073 = vunpack.c.l.b16 %v6997
    %v7074 = vunpack.c.h.b16 %v6997
    %v7075 = vunpack.c.l.b16 %v6998
    %v7076 = vunpack.c.h.b16 %v6998
    %v7077 = vunpack.c.l.b16 %v6999
    %v7078 = vunpack.c.h.b16 %v6999
    %v7079 = vunpack.c.l.b16 %v7000
    %v7080 = vunpack.c.h.b16 %v7000
    %v7081 = vunpack.c.l.b16 %v7001
    %v7082 = vunpack.c.h.b16 %v7001
    %v7083 = vunpack.c.l.b16 %v7002
    %v7084 = vunpack.c.h.b16 %v7002
    %v7085 = vunpack.c.l.b16 %v7003
    %v7086 = vunpack.c.h.b16 %v7003
    %v7087 = vunpack.c.l.b16 %v7004
    %v7088 = vunpack.c.h.b16 %v7004
    %v7089 = vunpack.c.l.b16 %v7005
    %v7090 = vunpack.c.h.b16 %v7005
    %v7091 = vunpack.c.l.b16 %v7006
    %v7092 = vunpack.c.h.b16 %v7006
    %v7093 = vunpack.c.l.b16 %v7007
    %v7094 = vunpack.c.h.b16 %v7007
    %v7095 = vunpack.c.l.b16 %v7008
    %v7096 = vunpack.c.h.b16 %v7008
    %v7097 = vunpack.c.l.b16 %v7009
    %v7098 = vunpack.c.h.b16 %v7009
    %v7099 = vunpack.c.l.b16 %v7010
    %v7100 = vunpack.c.h.b16 %v7010
    %v7101 = vunpack.c.l.b16 %v7011
    %v7102 = vunpack.c.h.b16 %v7011
    %v7103 = vunpack.c.l.b16 %v7012
    %v7104 = vunpack.c.h.b16 %v7012
    %v7105 = vunpack.c.l.b16 %v7013
    %v7106 = vunpack.c.h.b16 %v7013
    %v7107 = vunpack.c.l.b16 %v7014
    %v7108 = vunpack.c.h.b16 %v7014
    %v7109 = vunpack.c.l.b16 %v7015
    %v7110 = vunpack.c.h.b16 %v7015
    %v7111 = vunpack.c.l.b16 %v7016
    %v7112 = vunpack.c.h.b16 %v7016
    %v7113 = vunpack.c.l.b16 %v7017
    %v7114 = vunpack.c.h.b16 %v7017
    %v7115 = vunpack.c.l.b16 %v7018
    %v7116 = vunpack.c.h.b16 %v7018
    %v7117 = vunpack.c.l.b16 %v7019
    %v7118 = vunpack.c.h.b16 %v7019
    %v7119 = vunpack.c.l.b16 %v7020
    %v7120 = vunpack.c.h.b16 %v7020
    %v7121 = vunpack.c.l.b16 %v7021
    %v7122 = vunpack.c.h.b16 %v7021
    %v7123 = vunpack.c.l.b16 %v7022
    %v7124 = vunpack.c.h.b16 %v7022
    %v7125 = vunpack.c.l.b16 %v7023
    %v7126 = vunpack.c.h.b16 %v7023
    %v7127 = vunpack.c.l.b16 %v7024
    %v7128 = vunpack.c.h.b16 %v7024
    %v7129 = vunpack.c.l.b16 %v7025
    %v7130 = vunpack.c.h.b16 %v7025
    %v7131 = vunpack.c.l.b16 %v7026
    %v7132 = vunpack.c.h.b16 %v7026
    %v7133 = vunpack.c.l.b16 %v7027
    %v7134 = vunpack.c.h.b16 %v7027
    %v7135 = vunpack.c.l.b16 %v7028
    %v7136 = vunpack.c.h.b16 %v7028
    %v7137 = vpack.c.b16 %v7075, %v7073
    %v7138 = vpack.c.b16 %v7076, %v7074
    %v7139 = vpack.c.b16 %v7079, %v7077
    %v7140 = vpack.c.b16 %v7080, %v7078
    %v7141 = vpack.c.b16 %v7083, %v7081
    %v7142 = vpack.c.b16 %v7084, %v7082
    %v7143 = vpack.c.b16 %v7087, %v7085
    %v7144 = vpack.c.b16 %v7088, %v7086
    %v7145 = vpack.c.b16 %v7091, %v7089
    %v7146 = vpack.c.b16 %v7092, %v7090
    %v7147 = vpack.c.b16 %v7095, %v7093
    %v7148 = vpack.c.b16 %v7096, %v7094
    %v7149 = vpack.c.b16 %v7099, %v7097
    %v7150 = vpack.c.b16 %v7100, %v7098
    %v7151 = vpack.c.b16 %v7103, %v7101
    %v7152 = vpack.c.b16 %v7104, %v7102
    %v7153 = vpack.c.b16 %v7107, %v7105
    %v7154 = vpack.c.b16 %v7108, %v7106
    %v7155 = vpack.c.b16 %v7111, %v7109
    %v7156 = vpack.c.b16 %v7112, %v7110
    %v7157 = vpack.c.b16 %v7115, %v7113
    %v7158 = vpack.c.b16 %v7116, %v7114
    %v7159 = vpack.c.b16 %v7119, %v7117
    %v7160 = vpack.c.b16 %v7120, %v7118
    %v7161 = vpack.c.b16 %v7123, %v7121
    %v7162 = vpack.c.b16 %v7124, %v7122
    %v7163 = vpack.c.b16 %v7127, %v7125
    %v7164 = vpack.c.b16 %v7128, %v7126
    %v7165 = vpack.c.b16 %v7131, %v7129
    %v7166 = vpack.c.b16 %v7132, %v7130
    %v7167 = vpack.c.b16 %v7135, %v7133
    %v7168 = vpack.c.b16 %v7136, %v7134
    %7201 = vmatprep.subr.bf16.mxu0 %v7152
    %7202 = vmatpush1.bf16.msra.mxu0 %v7151
    %7203 = vmatprep.subr.bf16.mxu0 %v7150
    %7204 = vmatpush1.bf16.msra.mxu0 %v7149
    %7205 = vmatprep.subr.bf16.mxu0 %v7148
    %7206 = vmatpush1.bf16.msra.mxu0 %v7147
    %7207 = vmatprep.subr.bf16.mxu0 %v7146
    %7208 = vmatpush1.bf16.msra.mxu0 %v7145
    %7209 = vmatprep.subr.bf16.mxu0 %v7144
    %7210 = vmatpush1.bf16.msra.mxu0 %v7143
    %7211 = vmatprep.subr.bf16.mxu0 %v7142
    %7212 = vmatpush1.bf16.msra.mxu0 %v7141
    %7213 = vmatprep.subr.bf16.mxu0 %v7140
    %7214 = vmatpush1.bf16.msra.mxu0 %v7139
    %7215 = vmatprep.subr.bf16.mxu0 %v7138
    %7216 = vmatpush1.bf16.msra.mxu0 %v7137
    %7217 = vmatprep.subr.bf16.mxu0 %v7168
    %7218 = vmatpush2.bf16.msra.mxu0 %v7167
    %7219 = vmatprep.subr.bf16.mxu0 %v7166
    %7220 = vmatpush2.bf16.msra.mxu0 %v7165
    %7221 = vmatprep.subr.bf16.mxu0 %v7164
    %7222 = vmatpush2.bf16.msra.mxu0 %v7163
    %7223 = vmatprep.subr.bf16.mxu0 %v7162
    %7224 = vmatpush2.bf16.msra.mxu0 %v7161
    %7225 = vmatprep.subr.bf16.mxu0 %v7160
    %7226 = vmatpush2.bf16.msra.mxu0 %v7159
    %7227 = vmatprep.subr.bf16.mxu0 %v7158
    %7228 = vmatpush2.bf16.msra.mxu0 %v7157
    %7229 = vmatprep.subr.bf16.mxu0 %v7156
    %7230 = vmatpush2.bf16.msra.mxu0 %v7155
    %7231 = vmatprep.subr.bf16.mxu0 %v7154
    %7232 = vmatpush2.bf16.msra.mxu0 %v7153
    %7233 = vmatprep.mubr.bf16.mxu0 %v6966
    %7234 = vmatmul.mubr.bf16.gmra.mxu0 %v6965
    %v7235 = vpop.f32.mrf.mxu0
    %v7236 = vadd.f32 %v7034, %v7235
    %v7237 = vpop.f32.mrf.mxu0
    %v7238 = vadd.f32 %v7038, %v7237
    %v7239 = vpop.f32.mrf.mxu0
    %v7240 = vadd.f32 %v7034, %v7239
    %v7241 = vpop.f32.mrf.mxu0
    %v7242 = vadd.f32 %v7038, %v7241
    %7243 = vmatprep.mubr.bf16.mxu0 %v6968
    %7244 = vmatmul.mubr.bf16.gmra.mxu0 %v6967
    %v7245 = vpop.f32.mrf.mxu0
    %v7246 = vadd.f32 %v7034, %v7245
    %v7247 = vpop.f32.mrf.mxu0
    %v7248 = vadd.f32 %v7038, %v7247
    %v7249 = vpop.f32.mrf.mxu0
    %v7250 = vadd.f32 %v7034, %v7249
    %v7251 = vpop.f32.mrf.mxu0
    %v7252 = vadd.f32 %v7038, %v7251
    %7253 = vmatprep.mubr.bf16.mxu0 %v6970
    %7254 = vmatmul.mubr.bf16.gmra.mxu0 %v6969
    %v7255 = vpop.f32.mrf.mxu0
    %v7256 = vadd.f32 %v7034, %v7255
    %v7257 = vpop.f32.mrf.mxu0
    %v7258 = vadd.f32 %v7038, %v7257
    %v7259 = vpop.f32.mrf.mxu0
    %v7260 = vadd.f32 %v7034, %v7259
    %v7261 = vpop.f32.mrf.mxu0
    %v7262 = vadd.f32 %v7038, %v7261
    %7263 = vmatprep.mubr.bf16.mxu0 %v6972
    %7264 = vmatmul.mubr.bf16.gmra.mxu0 %v6971
    %v7265 = vpop.f32.mrf.mxu0
    %v7266 = vadd.f32 %v7034, %v7265
    %v7267 = vpop.f32.mrf.mxu0
    %v7268 = vadd.f32 %v7038, %v7267
    %v7269 = vpop.f32.mrf.mxu0
    %v7270 = vadd.f32 %v7034, %v7269
    %v7271 = vpop.f32.mrf.mxu0
    %v7272 = vadd.f32 %v7038, %v7271
    %7273 = vmatprep.mubr.bf16.mxu0 %v6974
    %7274 = vmatmul.mubr.bf16.gmra.mxu0 %v6973
    %v7275 = vpop.f32.mrf.mxu0
    %v7276 = vadd.f32 %v7034, %v7275
    %v7277 = vpop.f32.mrf.mxu0
    %v7278 = vadd.f32 %v7038, %v7277
    %v7279 = vpop.f32.mrf.mxu0
    %v7280 = vadd.f32 %v7034, %v7279
    %v7281 = vpop.f32.mrf.mxu0
    %v7282 = vadd.f32 %v7038, %v7281
    %7283 = vmatprep.mubr.bf16.mxu0 %v6976
    %7284 = vmatmul.mubr.bf16.gmra.mxu0 %v6975
    %v7285 = vpop.f32.mrf.mxu0
    %v7286 = vadd.f32 %v7034, %v7285
    %v7287 = vpop.f32.mrf.mxu0
    %v7288 = vadd.f32 %v7038, %v7287
    %v7289 = vpop.f32.mrf.mxu0
    %v7290 = vadd.f32 %v7034, %v7289
    %v7291 = vpop.f32.mrf.mxu0
    %v7292 = vadd.f32 %v7038, %v7291
    %7293 = vmatprep.mubr.bf16.mxu0 %v6978
    %7294 = vmatmul.mubr.bf16.gmra.mxu0 %v6977
    %v7295 = vpop.f32.mrf.mxu0
    %v7296 = vadd.f32 %v7034, %v7295
    %v7297 = vpop.f32.mrf.mxu0
    %v7298 = vadd.f32 %v7038, %v7297
    %v7299 = vpop.f32.mrf.mxu0
    %v7300 = vadd.f32 %v7034, %v7299
    %v7301 = vpop.f32.mrf.mxu0
    %v7302 = vadd.f32 %v7038, %v7301
    %7303 = vmatprep.mubr.bf16.mxu0 %v6980
    %7304 = vmatmul.mubr.bf16.gmra.mxu0 %v6979
    %v7305 = vpop.f32.mrf.mxu0
    %v7306 = vadd.f32 %v7034, %v7305
    %v7307 = vpop.f32.mrf.mxu0
    %v7308 = vadd.f32 %v7038, %v7307
    %v7309 = vpop.f32.mrf.mxu0
    %v7310 = vadd.f32 %v7034, %v7309
    %v7311 = vpop.f32.mrf.mxu0
    %v7312 = vadd.f32 %v7038, %v7311
    %7313 = vmatprep.mubr.bf16.mxu0 %v6982
    %7314 = vmatmul.mubr.bf16.gmra.mxu0 %v6981
    %v7315 = vpop.f32.mrf.mxu0
    %v7316 = vadd.f32 %v7034, %v7315
    %v7317 = vpop.f32.mrf.mxu0
    %v7318 = vadd.f32 %v7038, %v7317
    %v7319 = vpop.f32.mrf.mxu0
    %v7320 = vadd.f32 %v7034, %v7319
    %v7321 = vpop.f32.mrf.mxu0
    %v7322 = vadd.f32 %v7038, %v7321
    %7323 = vmatprep.mubr.bf16.mxu0 %v6984
    %7324 = vmatmul.mubr.bf16.gmra.mxu0 %v6983
    %v7325 = vpop.f32.mrf.mxu0
    %v7326 = vadd.f32 %v7034, %v7325
    %v7327 = vpop.f32.mrf.mxu0
    %v7328 = vadd.f32 %v7038, %v7327
    %v7329 = vpop.f32.mrf.mxu0
    %v7330 = vadd.f32 %v7034, %v7329
    %v7331 = vpop.f32.mrf.mxu0
    %v7332 = vadd.f32 %v7038, %v7331
    %7333 = vmatprep.mubr.bf16.mxu0 %v6986
    %7334 = vmatmul.mubr.bf16.gmra.mxu0 %v6985
    %v7335 = vpop.f32.mrf.mxu0
    %v7336 = vadd.f32 %v7034, %v7335
    %v7337 = vpop.f32.mrf.mxu0
    %v7338 = vadd.f32 %v7038, %v7337
    %v7339 = vpop.f32.mrf.mxu0
    %v7340 = vadd.f32 %v7034, %v7339
    %v7341 = vpop.f32.mrf.mxu0
    %v7342 = vadd.f32 %v7038, %v7341
    %7343 = vmatprep.mubr.bf16.mxu0 %v6988
    %7344 = vmatmul.mubr.bf16.gmra.mxu0 %v6987
    %v7345 = vpop.f32.mrf.mxu0
    %v7346 = vadd.f32 %v7034, %v7345
    %v7347 = vpop.f32.mrf.mxu0
    %v7348 = vadd.f32 %v7038, %v7347
    %v7349 = vpop.f32.mrf.mxu0
    %v7350 = vadd.f32 %v7034, %v7349
    %v7351 = vpop.f32.mrf.mxu0
    %v7352 = vadd.f32 %v7038, %v7351
    %7353 = vmatprep.mubr.bf16.mxu0 %v6990
    %7354 = vmatmul.mubr.bf16.gmra.mxu0 %v6989
    %v7355 = vpop.f32.mrf.mxu0
    %v7356 = vadd.f32 %v7034, %v7355
    %v7357 = vpop.f32.mrf.mxu0
    %v7358 = vadd.f32 %v7038, %v7357
    %v7359 = vpop.f32.mrf.mxu0
    %v7360 = vadd.f32 %v7034, %v7359
    %v7361 = vpop.f32.mrf.mxu0
    %v7362 = vadd.f32 %v7038, %v7361
    %7363 = vmatprep.mubr.bf16.mxu0 %v6992
    %7364 = vmatmul.mubr.bf16.gmra.mxu0 %v6991
    %v7365 = vpop.f32.mrf.mxu0
    %v7366 = vadd.f32 %v7034, %v7365
    %v7367 = vpop.f32.mrf.mxu0
    %v7368 = vadd.f32 %v7038, %v7367
    %v7369 = vpop.f32.mrf.mxu0
    %v7370 = vadd.f32 %v7034, %v7369
    %v7371 = vpop.f32.mrf.mxu0
    %v7372 = vadd.f32 %v7038, %v7371
    %7373 = vmatprep.mubr.bf16.mxu0 %v6994
    %7374 = vmatmul.mubr.bf16.gmra.mxu0 %v6993
    %v7375 = vpop.f32.mrf.mxu0
    %v7376 = vadd.f32 %v7034, %v7375
    %v7377 = vpop.f32.mrf.mxu0
    %v7378 = vadd.f32 %v7038, %v7377
    %v7379 = vpop.f32.mrf.mxu0
    %v7380 = vadd.f32 %v7034, %v7379
    %v7381 = vpop.f32.mrf.mxu0
    %v7382 = vadd.f32 %v7038, %v7381
    %7383 = vmatprep.mubr.bf16.mxu0 %v6996
    %7384 = vmatmul.mubr.bf16.gmra.mxu0 %v6995
    %v7385 = vpop.f32.mrf.mxu0
    %v7386 = vadd.f32 %v7034, %v7385
    %v7387 = vpop.f32.mrf.mxu0
    %v7388 = vadd.f32 %v7038, %v7387
    %v7389 = vpop.f32.mrf.mxu0
    %v7390 = vadd.f32 %v7034, %v7389
    %v7391 = vpop.f32.mrf.mxu0
    %v7392 = vadd.f32 %v7038, %v7391
    %7393 = vdwg.mxu0
    %7394 = vst [vmem:[#allocation16] sm:$0xff] %v7236
    %7395 = vst [vmem:[#allocation16 + $0x8] sm:$0xff] %v7238
    %7396 = vst [vmem:[#allocation16 + $0x10] sm:$0xff] %v7240
    %7397 = vst [vmem:[#allocation16 + $0x18] sm:$0xff] %v7242
    %7398 = vst [vmem:[#allocation16 + $0x20] sm:$0xff] %v7246
    %7399 = vst [vmem:[#allocation16 + $0x28] sm:$0xff] %v7248
    %7400 = vst [vmem:[#allocation16 + $0x30] sm:$0xff] %v7250
    %7401 = vst [vmem:[#allocation16 + $0x38] sm:$0xff] %v7252
    %7402 = vst [vmem:[#allocation16 + $0x40] sm:$0xff] %v7256
    %7403 = vst [vmem:[#allocation16 + $0x48] sm:$0xff] %v7258
    %7404 = vst [vmem:[#allocation16 + $0x50] sm:$0xff] %v7260
    %7405 = vst [vmem:[#allocation16 + $0x58] sm:$0xff] %v7262
    %7406 = vst [vmem:[#allocation16 + $0x60] sm:$0xff] %v7266
    %7407 = vst [vmem:[#allocation16 + $0x68] sm:$0xff] %v7268
    %7408 = vst [vmem:[#allocation16 + $0x70] sm:$0xff] %v7270
    %7409 = vst [vmem:[#allocation16 + $0x78] sm:$0xff] %v7272
    %7410 = vst [vmem:[#allocation16 + $0x80] sm:$0xff] %v7276
    %7411 = vst [vmem:[#allocation16 + $0x88] sm:$0xff] %v7278
    %7412 = vst [vmem:[#allocation16 + $0x90] sm:$0xff] %v7280
    %7413 = vst [vmem:[#allocation16 + $0x98] sm:$0xff] %v7282
    %7414 = vst [vmem:[#allocation16 + $0xa0] sm:$0xff] %v7286
    %7415 = vst [vmem:[#allocation16 + $0xa8] sm:$0xff] %v7288
    %7416 = vst [vmem:[#allocation16 + $0xb0] sm:$0xff] %v7290
    %7417 = vst [vmem:[#allocation16 + $0xb8] sm:$0xff] %v7292
    %7418 = vst [vmem:[#allocation16 + $0xc0] sm:$0xff] %v7296
    %7419 = vst [vmem:[#allocation16 + $0xc8] sm:$0xff] %v7298
    %7420 = vst [vmem:[#allocation16 + $0xd0] sm:$0xff] %v7300
    %7421 = vst [vmem:[#allocation16 + $0xd8] sm:$0xff] %v7302
    %7422 = vst [vmem:[#allocation16 + $0xe0] sm:$0xff] %v7306
    %7423 = vst [vmem:[#allocation16 + $0xe8] sm:$0xff] %v7308
    %7424 = vst [vmem:[#allocation16 + $0xf0] sm:$0xff] %v7310
    %7425 = vst [vmem:[#allocation16 + $0xf8] sm:$0xff] %v7312
    %7426 = vst [vmem:[#allocation16 + $0x100] sm:$0xff] %v7316
    %7427 = vst [vmem:[#allocation16 + $0x108] sm:$0xff] %v7318
    %7428 = vst [vmem:[#allocation16 + $0x110] sm:$0xff] %v7320
    %7429 = vst [vmem:[#allocation16 + $0x118] sm:$0xff] %v7322
    %7430 = vst [vmem:[#allocation16 + $0x120] sm:$0xff] %v7326
    %7431 = vst [vmem:[#allocation16 + $0x128] sm:$0xff] %v7328
    %7432 = vst [vmem:[#allocation16 + $0x130] sm:$0xff] %v7330
    %7433 = vst [vmem:[#allocation16 + $0x138] sm:$0xff] %v7332
    %7434 = vst [vmem:[#allocation16 + $0x140] sm:$0xff] %v7336
    %7435 = vst [vmem:[#allocation16 + $0x148] sm:$0xff] %v7338
    %7436 = vst [vmem:[#allocation16 + $0x150] sm:$0xff] %v7340
    %7437 = vst [vmem:[#allocation16 + $0x158] sm:$0xff] %v7342
    %7438 = vst [vmem:[#allocation16 + $0x160] sm:$0xff] %v7346
    %7439 = vst [vmem:[#allocation16 + $0x168] sm:$0xff] %v7348
    %7440 = vst [vmem:[#allocation16 + $0x170] sm:$0xff] %v7350
    %7441 = vst [vmem:[#allocation16 + $0x178] sm:$0xff] %v7352
    %7442 = vst [vmem:[#allocation16 + $0x180] sm:$0xff] %v7356
    %7443 = vst [vmem:[#allocation16 + $0x188] sm:$0xff] %v7358
    %7444 = vst [vmem:[#allocation16 + $0x190] sm:$0xff] %v7360
    %7445 = vst [vmem:[#allocation16 + $0x198] sm:$0xff] %v7362
    %7446 = vst [vmem:[#allocation16 + $0x1a0] sm:$0xff] %v7366
    %7447 = vst [vmem:[#allocation16 + $0x1a8] sm:$0xff] %v7368
    %7448 = vst [vmem:[#allocation16 + $0x1b0] sm:$0xff] %v7370
    %7449 = vst [vmem:[#allocation16 + $0x1b8] sm:$0xff] %v7372
    %7450 = vst [vmem:[#allocation16 + $0x1c0] sm:$0xff] %v7376
    %7451 = vst [vmem:[#allocation16 + $0x1c8] sm:$0xff] %v7378
    %7452 = vst [vmem:[#allocation16 + $0x1d0] sm:$0xff] %v7380
    %7453 = vst [vmem:[#allocation16 + $0x1d8] sm:$0xff] %v7382
    %7454 = vst [vmem:[#allocation16 + $0x1e0] sm:$0xff] %v7386
    %7455 = vst [vmem:[#allocation16 + $0x1e8] sm:$0xff] %v7388
    %7456 = vst [vmem:[#allocation16 + $0x1f0] sm:$0xff] %v7390
    %7457 = vst [vmem:[#allocation16 + $0x1f8] sm:$0xff] %v7392
    // Predicated region
    $region53: #{tpu_custom_call.1} parent=1 // pred_check
      _
    $region54: #{tpu_custom_call.1} parent=1 // pred_check_branch
      %7459 = sbr.rel (0) target = $region56
    $region55: #{tpu_custom_call.1} parent=1 // pred_region
      %s7461 = ssub.s32 8192, 8192
      %7462 = vsyncadd [#allocation9], %s7461
      %s7463 = sshll.u32 [#allocation16], 4
      %s7464 = int_to_ptr.vmem [resolvable:$true] %s7463
      %7469 = dma.vmem_to_hbm [thread:$0]  %s7464, 8192, %s6, [#allocation9], 256, 256, 16
    $region56: #{tpu_custom_call.1} parent=1 // pred_fallthru
      _
    // Predicated region
    $region57: #{tpu_custom_call.1} parent=1 // pred_check
      _
    $region58: #{tpu_custom_call.1} parent=1 // pred_check_branch
      %7471 = sbr.rel (0) target = $region60
    $region59: #{tpu_custom_call.1} parent=1 // pred_region
      %7472 = dma.done [#allocation9], 8192
    $region60: #{tpu_custom_call.1} parent=1 // pred_fallthru
      _
    %7473 = vsyncpa [#allocation8], 1
    %7474 = vsyncpa [#allocation11], 1
    %7475 = vsyncpa [#allocation14], 1
    %7476 = vsyncpa [#allocation9], 1

</llo_original>
